<compile_context>
chip_gen: v7x
topology: tpu7x:2x2x1
jax: 0.10.0
libtpu: 0.0.40
codegen_flags: <defaults>
</compile_context>

<pallas_src>
import math
import functools

import jax
import jax.numpy as jnp
from jax.experimental import pallas as pl
from jax.experimental.pallas import tpu as pltpu

# ----------------------------- model config (small, synthetic) --------------
B = 2                 # batch
T = 10                # frame_stack / horizon (docstring: 10 tokens)
X_DIM = 4             # x_shape[-1]
Z_DIM = 64            # z_shape[-1]  (768 in the real model; kept small here)
COND_DIM = 32         # cond_dim     (256 in the real model)
PRIOR_DIM = 4         # prior_dim
N_COND = 10           # n_maps_token (cond tokens)
N_EMB = 64            # transformer width
N_HEAD = 4
HEAD_DIM = N_EMB // N_HEAD
N_LAYERS = 2
FFN_DIM = 4 * N_EMB
LM = 1 + N_COND + T   # conditioning memory length (t_emb + cond + prior)

NUM_TRAIN_TIMESTEPS = 100
BETA_START = 1e-4
BETA_END = 2e-2
PREDICTION_TYPE = "epsilon"

WEIGHT_DTYPE = jnp.bfloat16   # weights resident in VMEM in bf16; f32 accumulation


# ----------------------------- the single fused kernel ----------------------
def _fused_kernel(
    # per-batch data (blocked on the batch grid axis)
    x_ref, noise_ref, z_ref, cond_ref, prior_ref, c0_ref, c1_ref, temb_ref,
    # embedding weights (full blocks, VMEM-resident)
    in_x_w, in_z_w, in_b, pos_emb,
    cond_w, cond_b, prior_w, prior_b, cond_pos,
    # decoder layer weights, stacked over the layer axis
    ln1_g, ln1_b, sa_qkv_w, sa_qkv_b, sa_o_w, sa_o_b,
    ln2_g, ln2_b, ca_q_w, ca_q_b, ca_kv_w, ca_kv_b, ca_o_w, ca_o_b,
    ln3_g, ln3_b, ffn_w1, ffn_b1, ffn_w2, ffn_b2,
    # tail weights
    lnf_g, lnf_b, head_w, head_b, xz_w, xz_b,
    # outputs
    pred_z_ref, pred_x_ref,
):
    f32 = jnp.float32
    bf16 = jnp.bfloat16
    scale = 1.0 / math.sqrt(HEAD_DIM)

    def layer_norm(v, g, b):
        g = g.astype(f32)
        b = b.astype(f32)
        mu = jnp.mean(v, axis=-1, keepdims=True)
        var = jnp.mean(jnp.square(v - mu), axis=-1, keepdims=True)
        return (v - mu) * jax.lax.rsqrt(var + 1e-5) * g + b

    def mm(a, w, bias=None):
        # bf16 x bf16 MXU matmul with f32 accumulation.
        out = jnp.dot(a.astype(bf16), w.astype(bf16), preferred_element_type=f32)
        if bias is not None:
            out = out + bias.astype(f32)
        return out

    def mh_attention(q, k, v, bias):
        # q: (Lq, D), k/v: (Lk, D); heads handled with a static unrolled loop
        # (lane slices of the fused QKV output) — all in-kernel, no transposes.
        outs = []
        for h in range(N_HEAD):
            sl = slice(h * HEAD_DIM, (h + 1) * HEAD_DIM)
            qh = q[:, sl].astype(bf16)
            kh = k[:, sl].astype(bf16)
            vh = v[:, sl].astype(bf16)
            s = jnp.einsum("qd,kd->qk", qh, kh, preferred_element_type=f32) * scale
            if bias is not None:
                s = s + bias
            s = s - jnp.max(s, axis=-1, keepdims=True)
            p = jnp.exp(s)
            p = p / jnp.sum(p, axis=-1, keepdims=True)
            outs.append(jnp.dot(p.astype(bf16), vh, preferred_element_type=f32))
        return jnp.concatenate(outs, axis=-1)   # (Lq, D)

    # ---- DDPM add_noise (fused with the input embedding) --------------------
    x = x_ref[0].astype(f32)                       # (T, X_DIM)
    nz = noise_ref[0].astype(f32)                  # (T, X_DIM)
    noisy = c0_ref[0] * x + c1_ref[0] * nz         # per-batch scalars broadcast

    # ---- input / z / positional embedding -----------------------------------
    zz = z_ref[0].astype(f32)                      # (T, Z_DIM)
    tok = (mm(noisy, in_x_w[...]) + mm(zz, in_z_w[...])
           + in_b[...].astype(f32) + pos_emb[...].astype(f32))   # (T, N_EMB)

    # ---- conditioning memory: [timestep_emb ; cond ; prior] + cond_pos ------
    cond_tok = mm(cond_ref[0].astype(f32), cond_w[...], cond_b[...])    # (N_COND, D)
    prior_tok = mm(prior_ref[0].astype(f32), prior_w[...], prior_b[...])  # (T, D)
    t_tok = temb_ref[0].astype(f32)                                     # (1, D)
    mem = jnp.concatenate([t_tok, cond_tok, prior_tok], axis=0)
    mem = mem + cond_pos[...].astype(f32)                               # (LM, D)

    # ---- causal self-attention mask built in-kernel (iota compare) ----------
    row = jax.lax.broadcasted_iota(jnp.int32, (T, T), 0)
    col = jax.lax.broadcasted_iota(jnp.int32, (T, T), 1)
    causal_bias = jnp.where(col <= row, jnp.float32(0.0), jnp.float32(-1e9))

    # ---- decoder layers (weights indexed from stacked, VMEM-resident refs) --
    # TODO(synk): at the real model size (z=768), stream per-layer weights with
    # a layer grid axis + Buffered(2) instead of keeping all layers resident
    # (v7x has only 64 MiB physical VMEM).
    for l in range(N_LAYERS):
        # pre-norm causal self-attention, fused QKV (192-wide) + output proj.
        h = layer_norm(tok, ln1_g[l], ln1_b[l])
        qkv = mm(h, sa_qkv_w[l], sa_qkv_b[l])                 # (T, 3*D)
        q = qkv[:, 0:N_EMB]
        k = qkv[:, N_EMB:2 * N_EMB]
        v = qkv[:, 2 * N_EMB:3 * N_EMB]
        a = mh_attention(q, k, v, causal_bias)
        tok = tok + mm(a, sa_o_w[l], sa_o_b[l])

        # pre-norm cross-attention over the conditioning memory, fused KV.
        h = layer_norm(tok, ln2_g[l], ln2_b[l])
        qx = mm(h, ca_q_w[l], ca_q_b[l])                      # (T, D)
        kv = mm(mem, ca_kv_w[l], ca_kv_b[l])                  # (LM, 2*D)
        a = mh_attention(qx, kv[:, 0:N_EMB], kv[:, N_EMB:2 * N_EMB], None)
        tok = tok + mm(a, ca_o_w[l], ca_o_b[l])

        # pre-norm FFN.
        h = layer_norm(tok, ln3_g[l], ln3_b[l])
        hid = jax.nn.gelu(mm(h, ffn_w1[l], ffn_b1[l]))        # (T, FFN_DIM)
        tok = tok + mm(hid, ffn_w2[l], ffn_b2[l])

    # ---- final LN + head (pred_z) + x_from_z (pred_x), all fused ------------
    fin = layer_norm(tok, lnf_g[...], lnf_b[...])
    pz = mm(fin, head_w[...], head_b[...])                    # (T, Z_DIM)
    pred_z_ref[0] = pz.astype(pred_z_ref.dtype)
    px = mm(pz, xz_w[...], xz_b[...])                         # (T, X_DIM)
    pred_x_ref[0] = px.astype(pred_x_ref.dtype)


_SHARED_PARAM_ORDER = (
    "in_x_w", "in_z_w", "in_b", "pos_emb",
    "cond_w", "cond_b", "prior_w", "prior_b", "cond_pos",
    "ln1_g", "ln1_b", "sa_qkv_w", "sa_qkv_b", "sa_o_w", "sa_o_b",
    "ln2_g", "ln2_b", "ca_q_w", "ca_q_b", "ca_kv_w", "ca_kv_b",
    "ca_o_w", "ca_o_b", "ln3_g", "ln3_b",
    "ffn_w1", "ffn_b1", "ffn_w2", "ffn_b2",
    "lnf_g", "lnf_b", "head_w", "head_b", "xz_w", "xz_b",
)


def _batch_spec(a):
    ndim = a.ndim

    def imap(b):
        return (b,) + (0,) * (ndim - 1)

    return pl.BlockSpec((1,) + a.shape[1:], imap)


def _shared_spec(a):
    ndim = a.ndim

    def imap(b):
        return (0,) * ndim

    return pl.BlockSpec(a.shape, imap)


def fused_transformer(params, x, noises, z, cond, prior, c0, c1, t_emb):
    """One pallas_call for the whole forward pass.  grid=(batch,), 'parallel'."""
    bsz, t, _ = x.shape

    batch_inputs = [x, noises, z, cond, prior, c0, c1, t_emb]
    shared_inputs = [params[name] for name in _SHARED_PARAM_ORDER]

    in_specs = ([_batch_spec(a) for a in batch_inputs]
                + [_shared_spec(a) for a in shared_inputs])

    out_shape = (
        jax.ShapeDtypeStruct((bsz, t, Z_DIM), jnp.float32),
        jax.ShapeDtypeStruct((bsz, t, X_DIM), jnp.float32),
    )
    out_specs = (
        pl.BlockSpec((1, t, Z_DIM), lambda b: (b, 0, 0)),
        pl.BlockSpec((1, t, X_DIM), lambda b: (b, 0, 0)),
    )

    return pl.pallas_call(
        _fused_kernel,
        grid=(bsz,),
        in_specs=in_specs,
        out_specs=out_specs,
        out_shape=out_shape,
        compiler_params=pltpu.CompilerParams(
            dimension_semantics=("parallel",),   # shard batch across TCs on v7x
        ),
    )(*batch_inputs, *shared_inputs)


# ----------------------------- host-side glue --------------------------------
def sinusoidal_emb(timesteps, dim):
    half = dim // 2
    freqs = jnp.exp(
        -math.log(10000.0) * jnp.arange(half, dtype=jnp.float32) / (half - 1)
    )
    args = timesteps.astype(jnp.float32)[:, None] * freqs[None, :]
    return jnp.concatenate([jnp.sin(args), jnp.cos(args)], axis=-1)


# ----------------------------- DiffusionTransitionModel.forward --------------
@functools.partial(jax.jit, static_argnames=())
def diffusion_transition_forward(params, z, x, cond, prior, noise_key, t_key):
    bsz = z.shape[0]
    noises = jax.random.normal(noise_key, x.shape, x.dtype)
    # matches the PyTorch module's forward: randint(1, num_train_timesteps)
    timesteps = jax.random.randint(t_key, (bsz,), 1, NUM_TRAIN_TIMESTEPS)

    # DDPMScheduler.add_noise coefficients (linear beta schedule) — scalar
    # gather is glue; the fused multiply-add happens inside the Pallas kernel.
    betas = jnp.linspace(BETA_START, BETA_END, NUM_TRAIN_TIMESTEPS, dtype=jnp.float32)
    alphas_cumprod = jnp.cumprod(1.0 - betas)
    acp_t = alphas_cumprod[timesteps]
    c0 = jnp.sqrt(acp_t)[:, None, None]          # (B, 1, 1)
    c1 = jnp.sqrt(1.0 - acp_t)[:, None, None]    # (B, 1, 1)

    t_emb = sinusoidal_emb(timesteps, N_EMB)[:, None, :]   # (B, 1, N_EMB)

    pred_z, pred_x = fused_transformer(params, x, noises, z, cond, prior, c0, c1, t_emb)

    # prediction_type == 'epsilon' -> target is the sampled noise
    target = noises
    return pred_z, pred_x, target


# ----------------------------- deterministic parameter init ------------------
def init_params(key):
    keys = iter(jax.random.split(key, 64))
    wdt = WEIGHT_DTYPE

    def w(shape, s=0.02):
        return (jax.random.normal(next(keys), shape, jnp.float32) * s).astype(wdt)

    def zeros(shape):
        return jnp.zeros(shape, wdt)

    def ones(shape):
        return jnp.ones(shape, wdt)

    L = N_LAYERS
    return {
        # input embeddings (fused bias for input_emb + z_emb)
        "in_x_w": w((X_DIM, N_EMB)),
        "in_z_w": w((Z_DIM, N_EMB)),
        "in_b": zeros((1, N_EMB)),
        "pos_emb": w((T, N_EMB)),
        "cond_w": w((COND_DIM, N_EMB)),
        "cond_b": zeros((1, N_EMB)),
        "prior_w": w((PRIOR_DIM, N_EMB)),
        "prior_b": zeros((1, N_EMB)),
        "cond_pos": w((LM, N_EMB)),
        # decoder layers, stacked over the layer axis; QKV / cross-KV fused
        "ln1_g": ones((L, 1, N_EMB)), "ln1_b": zeros((L, 1, N_EMB)),
        "sa_qkv_w": w((L, N_EMB, 3 * N_EMB)), "sa_qkv_b": zeros((L, 1, 3 * N_EMB)),
        "sa_o_w": w((L, N_EMB, N_EMB)), "sa_o_b": zeros((L, 1, N_EMB)),
        "ln2_g": ones((L, 1, N_EMB)), "ln2_b": zeros((L, 1, N_EMB)),
        "ca_q_w": w((L, N_EMB, N_EMB)), "ca_q_b": zeros((L, 1, N_EMB)),
        "ca_kv_w": w((L, N_EMB, 2 * N_EMB)), "ca_kv_b": zeros((L, 1, 2 * N_EMB)),
        "ca_o_w": w((L, N_EMB, N_EMB)), "ca_o_b": zeros((L, 1, N_EMB)),
        "ln3_g": ones((L, 1, N_EMB)), "ln3_b": zeros((L, 1, N_EMB)),
        "ffn_w1": w((L, N_EMB, FFN_DIM)), "ffn_b1": zeros((L, 1, FFN_DIM)),
        "ffn_w2": w((L, FFN_DIM, N_EMB)), "ffn_b2": zeros((L, 1, N_EMB)),
        # tail
        "lnf_g": ones((1, N_EMB)), "lnf_b": zeros((1, N_EMB)),
        "head_w": w((N_EMB, Z_DIM)), "head_b": zeros((1, Z_DIM)),
        "xz_w": w((Z_DIM, X_DIM)), "xz_b": zeros((1, X_DIM)),   # nn.Linear(z_dim, x_dim)
    }


# ----------------------------- demo -------------------------------------------
if __name__ == "__main__":
    key = jax.random.PRNGKey(0)
    kp, kz, kx, kc, kpr, kn, kt = jax.random.split(key, 7)

    params = init_params(kp)
    z = jax.random.normal(kz, (B, T, Z_DIM), jnp.float32)
    x = jax.random.normal(kx, (B, T, X_DIM), jnp.float32)
    cond = jax.random.normal(kc, (B, N_COND, COND_DIM), jnp.float32)
    prior = jax.random.normal(kpr, (B, T, PRIOR_DIM), jnp.float32)

    pred_z, pred_x, target = diffusion_transition_forward(params, z, x, cond, prior, kn, kt)
    jax.block_until_ready((pred_z, pred_x, target))

    assert pred_z.shape == (B, T, Z_DIM)
    assert pred_x.shape == (B, T, X_DIM)
    assert target.shape == x.shape
    assert bool(jnp.all(jnp.isfinite(pred_z))) and bool(jnp.all(jnp.isfinite(pred_x)))
    print("KERNEL_OK")
</pallas_src>

<mosaic_0001>
module attributes {stable_mosaic.version = 11 : i64} {
  func.func @_fused_kernel(%arg0: i32, %arg1: memref<1x10x4xf32, #tpu.memory_space<vmem>>, %arg2: memref<1x10x4xf32, #tpu.memory_space<vmem>>, %arg3: memref<1x10x64xf32, #tpu.memory_space<vmem>>, %arg4: memref<1x10x32xf32, #tpu.memory_space<vmem>>, %arg5: memref<1x10x4xf32, #tpu.memory_space<vmem>>, %arg6: memref<1x1x1xf32, #tpu.memory_space<vmem>>, %arg7: memref<1x1x1xf32, #tpu.memory_space<vmem>>, %arg8: memref<1x1x64xf32, #tpu.memory_space<vmem>>, %arg9: memref<4x64xbf16, #tpu.memory_space<vmem>>, %arg10: memref<64x64xbf16, #tpu.memory_space<vmem>>, %arg11: memref<1x64xbf16, #tpu.memory_space<vmem>>, %arg12: memref<10x64xbf16, #tpu.memory_space<vmem>>, %arg13: memref<32x64xbf16, #tpu.memory_space<vmem>>, %arg14: memref<1x64xbf16, #tpu.memory_space<vmem>>, %arg15: memref<4x64xbf16, #tpu.memory_space<vmem>>, %arg16: memref<1x64xbf16, #tpu.memory_space<vmem>>, %arg17: memref<21x64xbf16, #tpu.memory_space<vmem>>, %arg18: memref<2x1x64xbf16, #tpu.memory_space<vmem>>, %arg19: memref<2x1x64xbf16, #tpu.memory_space<vmem>>, %arg20: memref<2x64x192xbf16, #tpu.memory_space<vmem>>, %arg21: memref<2x1x192xbf16, #tpu.memory_space<vmem>>, %arg22: memref<2x64x64xbf16, #tpu.memory_space<vmem>>, %arg23: memref<2x1x64xbf16, #tpu.memory_space<vmem>>, %arg24: memref<2x1x64xbf16, #tpu.memory_space<vmem>>, %arg25: memref<2x1x64xbf16, #tpu.memory_space<vmem>>, %arg26: memref<2x64x64xbf16, #tpu.memory_space<vmem>>, %arg27: memref<2x1x64xbf16, #tpu.memory_space<vmem>>, %arg28: memref<2x64x128xbf16, #tpu.memory_space<vmem>>, %arg29: memref<2x1x128xbf16, #tpu.memory_space<vmem>>, %arg30: memref<2x64x64xbf16, #tpu.memory_space<vmem>>, %arg31: memref<2x1x64xbf16, #tpu.memory_space<vmem>>, %arg32: memref<2x1x64xbf16, #tpu.memory_space<vmem>>, %arg33: memref<2x1x64xbf16, #tpu.memory_space<vmem>>, %arg34: memref<2x64x256xbf16, #tpu.memory_space<vmem>>, %arg35: memref<2x1x256xbf16, #tpu.memory_space<vmem>>, %arg36: memref<2x256x64xbf16, #tpu.memory_space<vmem>>, %arg37: memref<2x1x64xbf16, #tpu.memory_space<vmem>>, %arg38: memref<1x64xbf16, #tpu.memory_space<vmem>>, %arg39: memref<1x64xbf16, #tpu.memory_space<vmem>>, %arg40: memref<64x64xbf16, #tpu.memory_space<vmem>>, %arg41: memref<1x64xbf16, #tpu.memory_space<vmem>>, %arg42: memref<64x4xbf16, #tpu.memory_space<vmem>>, %arg43: memref<1x4xbf16, #tpu.memory_space<vmem>>, %arg44: memref<1x10x64xf32, #tpu.memory_space<vmem>>, %arg45: memref<1x10x4xf32, #tpu.memory_space<vmem>>) attributes {dimension_semantics = [#tpu.dimension_semantics<parallel>], iteration_bounds = array<i64: 2>, scalar_prefetch = 0 : i64, scratch_operands = 0 : i64, tpu.core_type = #tpu.core_type<tc>, window_params = [{transform_indices = @transform_0, window_bounds = array<i64: 1, 10, 4>}, {transform_indices = @transform_1, window_bounds = array<i64: 1, 10, 4>}, {transform_indices = @transform_2, window_bounds = array<i64: 1, 10, 64>}, {transform_indices = @transform_3, window_bounds = array<i64: 1, 10, 32>}, {transform_indices = @transform_4, window_bounds = array<i64: 1, 10, 4>}, {transform_indices = @transform_5, window_bounds = array<i64: 1, 1, 1>}, {transform_indices = @transform_6, window_bounds = array<i64: 1, 1, 1>}, {transform_indices = @transform_7, window_bounds = array<i64: 1, 1, 64>}, {pipeline_mode = #tpu.pipeline_mode<synchronous>, transform_indices = @transform_8, window_bounds = array<i64: 4, 64>}, {pipeline_mode = #tpu.pipeline_mode<synchronous>, transform_indices = @transform_9, window_bounds = array<i64: 64, 64>}, {pipeline_mode = #tpu.pipeline_mode<synchronous>, transform_indices = @transform_10, window_bounds = array<i64: 1, 64>}, {pipeline_mode = #tpu.pipeline_mode<synchronous>, transform_indices = @transform_11, window_bounds = array<i64: 10, 64>}, {pipeline_mode = #tpu.pipeline_mode<synchronous>, transform_indices = @transform_12, window_bounds = array<i64: 32, 64>}, {pipeline_mode = #tpu.pipeline_mode<synchronous>, transform_indices = @transform_13, window_bounds = array<i64: 1, 64>}, {pipeline_mode = #tpu.pipeline_mode<synchronous>, transform_indices = @transform_14, window_bounds = array<i64: 4, 64>}, {pipeline_mode = #tpu.pipeline_mode<synchronous>, transform_indices = @transform_15, window_bounds = array<i64: 1, 64>}, {pipeline_mode = #tpu.pipeline_mode<synchronous>, transform_indices = @transform_16, window_bounds = array<i64: 21, 64>}, {pipeline_mode = #tpu.pipeline_mode<synchronous>, transform_indices = @transform_17, window_bounds = array<i64: 2, 1, 64>}, {pipeline_mode = #tpu.pipeline_mode<synchronous>, transform_indices = @transform_18, window_bounds = array<i64: 2, 1, 64>}, {pipeline_mode = #tpu.pipeline_mode<synchronous>, transform_indices = @transform_19, window_bounds = array<i64: 2, 64, 192>}, {pipeline_mode = #tpu.pipeline_mode<synchronous>, transform_indices = @transform_20, window_bounds = array<i64: 2, 1, 192>}, {pipeline_mode = #tpu.pipeline_mode<synchronous>, transform_indices = @transform_21, window_bounds = array<i64: 2, 64, 64>}, {pipeline_mode = #tpu.pipeline_mode<synchronous>, transform_indices = @transform_22, window_bounds = array<i64: 2, 1, 64>}, {pipeline_mode = #tpu.pipeline_mode<synchronous>, transform_indices = @transform_23, window_bounds = array<i64: 2, 1, 64>}, {pipeline_mode = #tpu.pipeline_mode<synchronous>, transform_indices = @transform_24, window_bounds = array<i64: 2, 1, 64>}, {pipeline_mode = #tpu.pipeline_mode<synchronous>, transform_indices = @transform_25, window_bounds = array<i64: 2, 64, 64>}, {pipeline_mode = #tpu.pipeline_mode<synchronous>, transform_indices = @transform_26, window_bounds = array<i64: 2, 1, 64>}, {pipeline_mode = #tpu.pipeline_mode<synchronous>, transform_indices = @transform_27, window_bounds = array<i64: 2, 64, 128>}, {pipeline_mode = #tpu.pipeline_mode<synchronous>, transform_indices = @transform_28, window_bounds = array<i64: 2, 1, 128>}, {pipeline_mode = #tpu.pipeline_mode<synchronous>, transform_indices = @transform_29, window_bounds = array<i64: 2, 64, 64>}, {pipeline_mode = #tpu.pipeline_mode<synchronous>, transform_indices = @transform_30, window_bounds = array<i64: 2, 1, 64>}, {pipeline_mode = #tpu.pipeline_mode<synchronous>, transform_indices = @transform_31, window_bounds = array<i64: 2, 1, 64>}, {pipeline_mode = #tpu.pipeline_mode<synchronous>, transform_indices = @transform_32, window_bounds = array<i64: 2, 1, 64>}, {pipeline_mode = #tpu.pipeline_mode<synchronous>, transform_indices = @transform_33, window_bounds = array<i64: 2, 64, 256>}, {pipeline_mode = #tpu.pipeline_mode<synchronous>, transform_indices = @transform_34, window_bounds = array<i64: 2, 1, 256>}, {pipeline_mode = #tpu.pipeline_mode<synchronous>, transform_indices = @transform_35, window_bounds = array<i64: 2, 256, 64>}, {pipeline_mode = #tpu.pipeline_mode<synchronous>, transform_indices = @transform_36, window_bounds = array<i64: 2, 1, 64>}, {pipeline_mode = #tpu.pipeline_mode<synchronous>, transform_indices = @transform_37, window_bounds = array<i64: 1, 64>}, {pipeline_mode = #tpu.pipeline_mode<synchronous>, transform_indices = @transform_38, window_bounds = array<i64: 1, 64>}, {pipeline_mode = #tpu.pipeline_mode<synchronous>, transform_indices = @transform_39, window_bounds = array<i64: 64, 64>}, {pipeline_mode = #tpu.pipeline_mode<synchronous>, transform_indices = @transform_40, window_bounds = array<i64: 1, 64>}, {pipeline_mode = #tpu.pipeline_mode<synchronous>, transform_indices = @transform_41, window_bounds = array<i64: 64, 4>}, {pipeline_mode = #tpu.pipeline_mode<synchronous>, transform_indices = @transform_42, window_bounds = array<i64: 1, 4>}, {transform_indices = @transform_43, window_bounds = array<i64: 1, 10, 64>}, {transform_indices = @transform_44, window_bounds = array<i64: 1, 10, 4>}]} {
    %c0 = arith.constant 0 : index
    %c0_0 = arith.constant 0 : index
    %c0_1 = arith.constant 0 : index
    %0 = vector.load %arg1[%c0, %c0_0, %c0_1] : memref<1x10x4xf32, #tpu.memory_space<vmem>>, vector<1x10x4xf32>
    %1 = vector.shape_cast %0 : vector<1x10x4xf32> to vector<10x4xf32>
    %c0_2 = arith.constant 0 : index
    %c0_3 = arith.constant 0 : index
    %c0_4 = arith.constant 0 : index
    %2 = vector.load %arg2[%c0_2, %c0_3, %c0_4] : memref<1x10x4xf32, #tpu.memory_space<vmem>>, vector<1x10x4xf32>
    %3 = vector.shape_cast %2 : vector<1x10x4xf32> to vector<10x4xf32>
    %c0_5 = arith.constant 0 : index
    %c0_6 = arith.constant 0 : index
    %c0_7 = arith.constant 0 : index
    %4 = vector.load %arg6[%c0_5, %c0_6, %c0_7] : memref<1x1x1xf32, #tpu.memory_space<vmem>>, vector<1x1x1xf32>
    %5 = vector.shape_cast %4 : vector<1x1x1xf32> to vector<1x1xf32>
    %6 = vector.broadcast %5 : vector<1x1xf32> to vector<10x4xf32>
    %7 = arith.mulf %6, %1 : vector<10x4xf32>
    %c0_8 = arith.constant 0 : index
    %c0_9 = arith.constant 0 : index
    %c0_10 = arith.constant 0 : index
    %8 = vector.load %arg7[%c0_8, %c0_9, %c0_10] : memref<1x1x1xf32, #tpu.memory_space<vmem>>, vector<1x1x1xf32>
    %9 = vector.shape_cast %8 : vector<1x1x1xf32> to vector<1x1xf32>
    %10 = vector.broadcast %9 : vector<1x1xf32> to vector<10x4xf32>
    %11 = arith.mulf %10, %3 : vector<10x4xf32>
    %12 = arith.addf %7, %11 : vector<10x4xf32>
    %c0_11 = arith.constant 0 : index
    %c0_12 = arith.constant 0 : index
    %c0_13 = arith.constant 0 : index
    %13 = vector.load %arg3[%c0_11, %c0_12, %c0_13] : memref<1x10x64xf32, #tpu.memory_space<vmem>>, vector<1x10x64xf32>
    %14 = vector.shape_cast %13 : vector<1x10x64xf32> to vector<10x64xf32>
    %c0_14 = arith.constant 0 : index
    %c0_15 = arith.constant 0 : index
    %15 = vector.load %arg9[%c0_14, %c0_15] : memref<4x64xbf16, #tpu.memory_space<vmem>>, vector<4x64xbf16>
    %16 = arith.truncf %12 : vector<10x4xf32> to vector<10x4xbf16>
    %cst = arith.constant dense<0.000000e+00> : vector<10x64xf32>
    %17 = tpu.matmul %16, %15, %cst {dimension_numbers = #tpu.dot_dimension_numbers<[1], [0], [0], [1], [0, 0, 1, 1], [], []>} : vector<10x4xbf16>, vector<4x64xbf16>, vector<10x64xf32> -> vector<10x64xf32>
    %c0_16 = arith.constant 0 : index
    %c0_17 = arith.constant 0 : index
    %18 = vector.load %arg10[%c0_16, %c0_17] : memref<64x64xbf16, #tpu.memory_space<vmem>>, vector<64x64xbf16>
    %19 = arith.truncf %14 : vector<10x64xf32> to vector<10x64xbf16>
    %cst_18 = arith.constant dense<0.000000e+00> : vector<10x64xf32>
    %20 = tpu.matmul %19, %18, %cst_18 {dimension_numbers = #tpu.dot_dimension_numbers<[1], [0], [0], [1], [0, 0, 1, 1], [], []>} : vector<10x64xbf16>, vector<64x64xbf16>, vector<10x64xf32> -> vector<10x64xf32>
    %21 = arith.addf %17, %20 : vector<10x64xf32>
    %c0_19 = arith.constant 0 : index
    %c0_20 = arith.constant 0 : index
    %22 = vector.load %arg11[%c0_19, %c0_20] : memref<1x64xbf16, #tpu.memory_space<vmem>>, vector<1x64xbf16>
    %23 = arith.extf %22 : vector<1x64xbf16> to vector<1x64xf32>
    %24 = vector.broadcast %23 : vector<1x64xf32> to vector<10x64xf32>
    %25 = arith.addf %21, %24 : vector<10x64xf32>
    %c0_21 = arith.constant 0 : index
    %c0_22 = arith.constant 0 : index
    %26 = vector.load %arg12[%c0_21, %c0_22] : memref<10x64xbf16, #tpu.memory_space<vmem>>, vector<10x64xbf16>
    %27 = arith.extf %26 : vector<10x64xbf16> to vector<10x64xf32>
    %28 = arith.addf %25, %27 : vector<10x64xf32>
    %c0_23 = arith.constant 0 : index
    %c0_24 = arith.constant 0 : index
    %c0_25 = arith.constant 0 : index
    %29 = vector.load %arg4[%c0_23, %c0_24, %c0_25] : memref<1x10x32xf32, #tpu.memory_space<vmem>>, vector<1x10x32xf32>
    %30 = vector.shape_cast %29 : vector<1x10x32xf32> to vector<10x32xf32>
    %c0_26 = arith.constant 0 : index
    %c0_27 = arith.constant 0 : index
    %31 = vector.load %arg13[%c0_26, %c0_27] : memref<32x64xbf16, #tpu.memory_space<vmem>>, vector<32x64xbf16>
    %c0_28 = arith.constant 0 : index
    %c0_29 = arith.constant 0 : index
    %32 = vector.load %arg14[%c0_28, %c0_29] : memref<1x64xbf16, #tpu.memory_space<vmem>>, vector<1x64xbf16>
    %33 = arith.truncf %30 : vector<10x32xf32> to vector<10x32xbf16>
    %cst_30 = arith.constant dense<0.000000e+00> : vector<10x64xf32>
    %34 = tpu.matmul %33, %31, %cst_30 {dimension_numbers = #tpu.dot_dimension_numbers<[1], [0], [0], [1], [0, 0, 1, 1], [], []>} : vector<10x32xbf16>, vector<32x64xbf16>, vector<10x64xf32> -> vector<10x64xf32>
    %35 = arith.extf %32 : vector<1x64xbf16> to vector<1x64xf32>
    %36 = vector.broadcast %35 : vector<1x64xf32> to vector<10x64xf32>
    %37 = arith.addf %34, %36 : vector<10x64xf32>
    %c0_31 = arith.constant 0 : index
    %c0_32 = arith.constant 0 : index
    %c0_33 = arith.constant 0 : index
    %38 = vector.load %arg5[%c0_31, %c0_32, %c0_33] : memref<1x10x4xf32, #tpu.memory_space<vmem>>, vector<1x10x4xf32>
    %39 = vector.shape_cast %38 : vector<1x10x4xf32> to vector<10x4xf32>
    %c0_34 = arith.constant 0 : index
    %c0_35 = arith.constant 0 : index
    %40 = vector.load %arg15[%c0_34, %c0_35] : memref<4x64xbf16, #tpu.memory_space<vmem>>, vector<4x64xbf16>
    %c0_36 = arith.constant 0 : index
    %c0_37 = arith.constant 0 : index
    %41 = vector.load %arg16[%c0_36, %c0_37] : memref<1x64xbf16, #tpu.memory_space<vmem>>, vector<1x64xbf16>
    %42 = arith.truncf %39 : vector<10x4xf32> to vector<10x4xbf16>
    %cst_38 = arith.constant dense<0.000000e+00> : vector<10x64xf32>
    %43 = tpu.matmul %42, %40, %cst_38 {dimension_numbers = #tpu.dot_dimension_numbers<[1], [0], [0], [1], [0, 0, 1, 1], [], []>} : vector<10x4xbf16>, vector<4x64xbf16>, vector<10x64xf32> -> vector<10x64xf32>
    %44 = arith.extf %41 : vector<1x64xbf16> to vector<1x64xf32>
    %45 = vector.broadcast %44 : vector<1x64xf32> to vector<10x64xf32>
    %46 = arith.addf %43, %45 : vector<10x64xf32>
    %c0_39 = arith.constant 0 : index
    %c0_40 = arith.constant 0 : index
    %c0_41 = arith.constant 0 : index
    %47 = vector.load %arg8[%c0_39, %c0_40, %c0_41] : memref<1x1x64xf32, #tpu.memory_space<vmem>>, vector<1x1x64xf32>
    %48 = vector.shape_cast %47 : vector<1x1x64xf32> to vector<1x64xf32>
    %49 = tpu.concatenate %48, %37, %46 in 0 : vector<1x64xf32>, vector<10x64xf32>, vector<10x64xf32> -> vector<21x64xf32>
    %c0_42 = arith.constant 0 : index
    %c0_43 = arith.constant 0 : index
    %50 = vector.load %arg17[%c0_42, %c0_43] : memref<21x64xbf16, #tpu.memory_space<vmem>>, vector<21x64xbf16>
    %51 = arith.extf %50 : vector<21x64xbf16> to vector<21x64xf32>
    %52 = arith.addf %49, %51 : vector<21x64xf32>
    %53 = tpu.iota {dimensions = array<i32: 0>} : vector<10x10xi32>
    %54 = tpu.iota {dimensions = array<i32: 1>} : vector<10x10xi32>
    %55 = arith.cmpi sle, %54, %53 : vector<10x10xi32>
    %cst_44 = arith.constant 0.000000e+00 : f32
    %cst_45 = arith.constant -1.000000e+09 : f32
    %56 = vector.broadcast %cst_44 : f32 to vector<10x10xf32>
    %57 = vector.broadcast %cst_45 : f32 to vector<10x10xf32>
    %58 = arith.select %55, %56, %57 : vector<10x10xi1>, vector<10x10xf32>
    %c0_46 = arith.constant 0 : index
    %c0_47 = arith.constant 0 : index
    %c0_48 = arith.constant 0 : index
    %59 = vector.load %arg18[%c0_46, %c0_47, %c0_48] : memref<2x1x64xbf16, #tpu.memory_space<vmem>>, vector<1x1x64xbf16>
    %60 = vector.shape_cast %59 : vector<1x1x64xbf16> to vector<1x64xbf16>
    %c0_49 = arith.constant 0 : index
    %c0_50 = arith.constant 0 : index
    %c0_51 = arith.constant 0 : index
    %61 = vector.load %arg19[%c0_49, %c0_50, %c0_51] : memref<2x1x64xbf16, #tpu.memory_space<vmem>>, vector<1x1x64xbf16>
    %62 = vector.shape_cast %61 : vector<1x1x64xbf16> to vector<1x64xbf16>
    %63 = arith.extf %60 : vector<1x64xbf16> to vector<1x64xf32>
    %64 = arith.extf %62 : vector<1x64xbf16> to vector<1x64xf32>
    %cst_52 = arith.constant dense<0.000000e+00> : vector<10xf32>
    %65 = vector.multi_reduction <add>, %28, %cst_52 [1] : vector<10x64xf32> to vector<10xf32>
    %66 = vector.shape_cast %65 : vector<10xf32> to vector<10x1xf32>
    %cst_53 = arith.constant 6.400000e+01 : f32
    %67 = vector.broadcast %cst_53 : f32 to vector<10x1xf32>
    %68 = arith.divf %66, %67 : vector<10x1xf32>
    %69 = vector.broadcast %68 : vector<10x1xf32> to vector<10x64xf32>
    %70 = arith.subf %28, %69 : vector<10x64xf32>
    %71 = arith.mulf %70, %70 : vector<10x64xf32>
    %cst_54 = arith.constant dense<0.000000e+00> : vector<10xf32>
    %72 = vector.multi_reduction <add>, %71, %cst_54 [1] : vector<10x64xf32> to vector<10xf32>
    %73 = vector.shape_cast %72 : vector<10xf32> to vector<10x1xf32>
    %cst_55 = arith.constant 6.400000e+01 : f32
    %74 = vector.broadcast %cst_55 : f32 to vector<10x1xf32>
    %75 = arith.divf %73, %74 : vector<10x1xf32>
    %76 = vector.broadcast %68 : vector<10x1xf32> to vector<10x64xf32>
    %77 = arith.subf %28, %76 : vector<10x64xf32>
    %cst_56 = arith.constant 9.99999974E-6 : f32
    %78 = vector.broadcast %cst_56 : f32 to vector<10x1xf32>
    %79 = arith.addf %75, %78 : vector<10x1xf32>
    %80 = math.rsqrt %79 : vector<10x1xf32>
    %81 = vector.broadcast %80 : vector<10x1xf32> to vector<10x64xf32>
    %82 = arith.mulf %77, %81 : vector<10x64xf32>
    %83 = vector.broadcast %63 : vector<1x64xf32> to vector<10x64xf32>
    %84 = arith.mulf %82, %83 : vector<10x64xf32>
    %85 = vector.broadcast %64 : vector<1x64xf32> to vector<10x64xf32>
    %86 = arith.addf %84, %85 : vector<10x64xf32>
    %c0_57 = arith.constant 0 : index
    %c0_58 = arith.constant 0 : index
    %c0_59 = arith.constant 0 : index
    %87 = vector.load %arg20[%c0_57, %c0_58, %c0_59] : memref<2x64x192xbf16, #tpu.memory_space<vmem>>, vector<1x64x192xbf16>
    %88 = vector.shape_cast %87 : vector<1x64x192xbf16> to vector<64x192xbf16>
    %c0_60 = arith.constant 0 : index
    %c0_61 = arith.constant 0 : index
    %c0_62 = arith.constant 0 : index
    %89 = vector.load %arg21[%c0_60, %c0_61, %c0_62] : memref<2x1x192xbf16, #tpu.memory_space<vmem>>, vector<1x1x192xbf16>
    %90 = vector.shape_cast %89 : vector<1x1x192xbf16> to vector<1x192xbf16>
    %91 = arith.truncf %86 : vector<10x64xf32> to vector<10x64xbf16>
    %cst_63 = arith.constant dense<0.000000e+00> : vector<10x192xf32>
    %92 = tpu.matmul %91, %88, %cst_63 {dimension_numbers = #tpu.dot_dimension_numbers<[1], [0], [0], [1], [0, 0, 1, 1], [], []>} : vector<10x64xbf16>, vector<64x192xbf16>, vector<10x192xf32> -> vector<10x192xf32>
    %93 = arith.extf %90 : vector<1x192xbf16> to vector<1x192xf32>
    %94 = vector.broadcast %93 : vector<1x192xf32> to vector<10x192xf32>
    %95 = arith.addf %92, %94 : vector<10x192xf32>
    %96 = vector.extract_strided_slice %95 {offsets = [0, 0], sizes = [10, 64], strides = [1, 1]} : vector<10x192xf32> to vector<10x64xf32>
    %97 = vector.extract_strided_slice %95 {offsets = [0, 64], sizes = [10, 64], strides = [1, 1]} : vector<10x192xf32> to vector<10x64xf32>
    %98 = vector.extract_strided_slice %95 {offsets = [0, 128], sizes = [10, 64], strides = [1, 1]} : vector<10x192xf32> to vector<10x64xf32>
    %99 = vector.extract_strided_slice %96 {offsets = [0, 0], sizes = [10, 16], strides = [1, 1]} : vector<10x64xf32> to vector<10x16xf32>
    %100 = arith.truncf %99 : vector<10x16xf32> to vector<10x16xbf16>
    %101 = vector.extract_strided_slice %97 {offsets = [0, 0], sizes = [10, 16], strides = [1, 1]} : vector<10x64xf32> to vector<10x16xf32>
    %102 = arith.truncf %101 : vector<10x16xf32> to vector<10x16xbf16>
    %103 = vector.extract_strided_slice %98 {offsets = [0, 0], sizes = [10, 16], strides = [1, 1]} : vector<10x64xf32> to vector<10x16xf32>
    %104 = arith.truncf %103 : vector<10x16xf32> to vector<10x16xbf16>
    "tpu.trace_start"() <{level = 10 : i32, message = "qd,kd->qk"}> : () -> ()
    %cst_64 = arith.constant dense<0.000000e+00> : vector<10x10xf32>
    %105 = tpu.matmul %100, %102, %cst_64 {dimension_numbers = #tpu.dot_dimension_numbers<[1], [1], [0], [0], [0, 0, 1, 0], [], []>} : vector<10x16xbf16>, vector<10x16xbf16>, vector<10x10xf32> -> vector<10x10xf32>
    "tpu.trace_stop"() : () -> ()
    %cst_65 = arith.constant 2.500000e-01 : f32
    %106 = vector.broadcast %cst_65 : f32 to vector<10x10xf32>
    %107 = arith.mulf %105, %106 : vector<10x10xf32>
    %108 = arith.addf %107, %58 : vector<10x10xf32>
    %cst_66 = arith.constant dense<0xFF800000> : vector<10xf32>
    %109 = vector.multi_reduction <maximumf>, %108, %cst_66 [1] : vector<10x10xf32> to vector<10xf32>
    %110 = vector.shape_cast %109 : vector<10xf32> to vector<10x1xf32>
    %111 = vector.broadcast %110 : vector<10x1xf32> to vector<10x10xf32>
    %112 = arith.subf %108, %111 : vector<10x10xf32>
    %113 = math.exp %112 : vector<10x10xf32>
    %cst_67 = arith.constant dense<0.000000e+00> : vector<10xf32>
    %114 = vector.multi_reduction <add>, %113, %cst_67 [1] : vector<10x10xf32> to vector<10xf32>
    %115 = vector.shape_cast %114 : vector<10xf32> to vector<10x1xf32>
    %116 = vector.broadcast %115 : vector<10x1xf32> to vector<10x10xf32>
    %117 = arith.divf %113, %116 : vector<10x10xf32>
    %118 = arith.truncf %117 : vector<10x10xf32> to vector<10x10xbf16>
    %cst_68 = arith.constant dense<0.000000e+00> : vector<10x16xf32>
    %119 = tpu.matmul %118, %104, %cst_68 {dimension_numbers = #tpu.dot_dimension_numbers<[1], [0], [0], [1], [0, 0, 1, 1], [], []>} : vector<10x10xbf16>, vector<10x16xbf16>, vector<10x16xf32> -> vector<10x16xf32>
    %120 = vector.extract_strided_slice %96 {offsets = [0, 16], sizes = [10, 16], strides = [1, 1]} : vector<10x64xf32> to vector<10x16xf32>
    %121 = arith.truncf %120 : vector<10x16xf32> to vector<10x16xbf16>
    %122 = vector.extract_strided_slice %97 {offsets = [0, 16], sizes = [10, 16], strides = [1, 1]} : vector<10x64xf32> to vector<10x16xf32>
    %123 = arith.truncf %122 : vector<10x16xf32> to vector<10x16xbf16>
    %124 = vector.extract_strided_slice %98 {offsets = [0, 16], sizes = [10, 16], strides = [1, 1]} : vector<10x64xf32> to vector<10x16xf32>
    %125 = arith.truncf %124 : vector<10x16xf32> to vector<10x16xbf16>
    "tpu.trace_start"() <{level = 10 : i32, message = "qd,kd->qk"}> : () -> ()
    %cst_69 = arith.constant dense<0.000000e+00> : vector<10x10xf32>
    %126 = tpu.matmul %121, %123, %cst_69 {dimension_numbers = #tpu.dot_dimension_numbers<[1], [1], [0], [0], [0, 0, 1, 0], [], []>} : vector<10x16xbf16>, vector<10x16xbf16>, vector<10x10xf32> -> vector<10x10xf32>
    "tpu.trace_stop"() : () -> ()
    %cst_70 = arith.constant 2.500000e-01 : f32
    %127 = vector.broadcast %cst_70 : f32 to vector<10x10xf32>
    %128 = arith.mulf %126, %127 : vector<10x10xf32>
    %129 = arith.addf %128, %58 : vector<10x10xf32>
    %cst_71 = arith.constant dense<0xFF800000> : vector<10xf32>
    %130 = vector.multi_reduction <maximumf>, %129, %cst_71 [1] : vector<10x10xf32> to vector<10xf32>
    %131 = vector.shape_cast %130 : vector<10xf32> to vector<10x1xf32>
    %132 = vector.broadcast %131 : vector<10x1xf32> to vector<10x10xf32>
    %133 = arith.subf %129, %132 : vector<10x10xf32>
    %134 = math.exp %133 : vector<10x10xf32>
    %cst_72 = arith.constant dense<0.000000e+00> : vector<10xf32>
    %135 = vector.multi_reduction <add>, %134, %cst_72 [1] : vector<10x10xf32> to vector<10xf32>
    %136 = vector.shape_cast %135 : vector<10xf32> to vector<10x1xf32>
    %137 = vector.broadcast %136 : vector<10x1xf32> to vector<10x10xf32>
    %138 = arith.divf %134, %137 : vector<10x10xf32>
    %139 = arith.truncf %138 : vector<10x10xf32> to vector<10x10xbf16>
    %cst_73 = arith.constant dense<0.000000e+00> : vector<10x16xf32>
    %140 = tpu.matmul %139, %125, %cst_73 {dimension_numbers = #tpu.dot_dimension_numbers<[1], [0], [0], [1], [0, 0, 1, 1], [], []>} : vector<10x10xbf16>, vector<10x16xbf16>, vector<10x16xf32> -> vector<10x16xf32>
    %141 = vector.extract_strided_slice %96 {offsets = [0, 32], sizes = [10, 16], strides = [1, 1]} : vector<10x64xf32> to vector<10x16xf32>
    %142 = arith.truncf %141 : vector<10x16xf32> to vector<10x16xbf16>
    %143 = vector.extract_strided_slice %97 {offsets = [0, 32], sizes = [10, 16], strides = [1, 1]} : vector<10x64xf32> to vector<10x16xf32>
    %144 = arith.truncf %143 : vector<10x16xf32> to vector<10x16xbf16>
    %145 = vector.extract_strided_slice %98 {offsets = [0, 32], sizes = [10, 16], strides = [1, 1]} : vector<10x64xf32> to vector<10x16xf32>
    %146 = arith.truncf %145 : vector<10x16xf32> to vector<10x16xbf16>
    "tpu.trace_start"() <{level = 10 : i32, message = "qd,kd->qk"}> : () -> ()
    %cst_74 = arith.constant dense<0.000000e+00> : vector<10x10xf32>
    %147 = tpu.matmul %142, %144, %cst_74 {dimension_numbers = #tpu.dot_dimension_numbers<[1], [1], [0], [0], [0, 0, 1, 0], [], []>} : vector<10x16xbf16>, vector<10x16xbf16>, vector<10x10xf32> -> vector<10x10xf32>
    "tpu.trace_stop"() : () -> ()
    %cst_75 = arith.constant 2.500000e-01 : f32
    %148 = vector.broadcast %cst_75 : f32 to vector<10x10xf32>
    %149 = arith.mulf %147, %148 : vector<10x10xf32>
    %150 = arith.addf %149, %58 : vector<10x10xf32>
    %cst_76 = arith.constant dense<0xFF800000> : vector<10xf32>
    %151 = vector.multi_reduction <maximumf>, %150, %cst_76 [1] : vector<10x10xf32> to vector<10xf32>
    %152 = vector.shape_cast %151 : vector<10xf32> to vector<10x1xf32>
    %153 = vector.broadcast %152 : vector<10x1xf32> to vector<10x10xf32>
    %154 = arith.subf %150, %153 : vector<10x10xf32>
    %155 = math.exp %154 : vector<10x10xf32>
    %cst_77 = arith.constant dense<0.000000e+00> : vector<10xf32>
    %156 = vector.multi_reduction <add>, %155, %cst_77 [1] : vector<10x10xf32> to vector<10xf32>
    %157 = vector.shape_cast %156 : vector<10xf32> to vector<10x1xf32>
    %158 = vector.broadcast %157 : vector<10x1xf32> to vector<10x10xf32>
    %159 = arith.divf %155, %158 : vector<10x10xf32>
    %160 = arith.truncf %159 : vector<10x10xf32> to vector<10x10xbf16>
    %cst_78 = arith.constant dense<0.000000e+00> : vector<10x16xf32>
    %161 = tpu.matmul %160, %146, %cst_78 {dimension_numbers = #tpu.dot_dimension_numbers<[1], [0], [0], [1], [0, 0, 1, 1], [], []>} : vector<10x10xbf16>, vector<10x16xbf16>, vector<10x16xf32> -> vector<10x16xf32>
    %162 = vector.extract_strided_slice %96 {offsets = [0, 48], sizes = [10, 16], strides = [1, 1]} : vector<10x64xf32> to vector<10x16xf32>
    %163 = arith.truncf %162 : vector<10x16xf32> to vector<10x16xbf16>
    %164 = vector.extract_strided_slice %97 {offsets = [0, 48], sizes = [10, 16], strides = [1, 1]} : vector<10x64xf32> to vector<10x16xf32>
    %165 = arith.truncf %164 : vector<10x16xf32> to vector<10x16xbf16>
    %166 = vector.extract_strided_slice %98 {offsets = [0, 48], sizes = [10, 16], strides = [1, 1]} : vector<10x64xf32> to vector<10x16xf32>
    %167 = arith.truncf %166 : vector<10x16xf32> to vector<10x16xbf16>
    "tpu.trace_start"() <{level = 10 : i32, message = "qd,kd->qk"}> : () -> ()
    %cst_79 = arith.constant dense<0.000000e+00> : vector<10x10xf32>
    %168 = tpu.matmul %163, %165, %cst_79 {dimension_numbers = #tpu.dot_dimension_numbers<[1], [1], [0], [0], [0, 0, 1, 0], [], []>} : vector<10x16xbf16>, vector<10x16xbf16>, vector<10x10xf32> -> vector<10x10xf32>
    "tpu.trace_stop"() : () -> ()
    %cst_80 = arith.constant 2.500000e-01 : f32
    %169 = vector.broadcast %cst_80 : f32 to vector<10x10xf32>
    %170 = arith.mulf %168, %169 : vector<10x10xf32>
    %171 = arith.addf %170, %58 : vector<10x10xf32>
    %cst_81 = arith.constant dense<0xFF800000> : vector<10xf32>
    %172 = vector.multi_reduction <maximumf>, %171, %cst_81 [1] : vector<10x10xf32> to vector<10xf32>
    %173 = vector.shape_cast %172 : vector<10xf32> to vector<10x1xf32>
    %174 = vector.broadcast %173 : vector<10x1xf32> to vector<10x10xf32>
    %175 = arith.subf %171, %174 : vector<10x10xf32>
    %176 = math.exp %175 : vector<10x10xf32>
    %cst_82 = arith.constant dense<0.000000e+00> : vector<10xf32>
    %177 = vector.multi_reduction <add>, %176, %cst_82 [1] : vector<10x10xf32> to vector<10xf32>
    %178 = vector.shape_cast %177 : vector<10xf32> to vector<10x1xf32>
    %179 = vector.broadcast %178 : vector<10x1xf32> to vector<10x10xf32>
    %180 = arith.divf %176, %179 : vector<10x10xf32>
    %181 = arith.truncf %180 : vector<10x10xf32> to vector<10x10xbf16>
    %cst_83 = arith.constant dense<0.000000e+00> : vector<10x16xf32>
    %182 = tpu.matmul %181, %167, %cst_83 {dimension_numbers = #tpu.dot_dimension_numbers<[1], [0], [0], [1], [0, 0, 1, 1], [], []>} : vector<10x10xbf16>, vector<10x16xbf16>, vector<10x16xf32> -> vector<10x16xf32>
    %183 = tpu.concatenate %119, %140, %161, %182 in 1 : vector<10x16xf32>, vector<10x16xf32>, vector<10x16xf32>, vector<10x16xf32> -> vector<10x64xf32>
    %c0_84 = arith.constant 0 : index
    %c0_85 = arith.constant 0 : index
    %c0_86 = arith.constant 0 : index
    %184 = vector.load %arg22[%c0_84, %c0_85, %c0_86] : memref<2x64x64xbf16, #tpu.memory_space<vmem>>, vector<1x64x64xbf16>
    %185 = vector.shape_cast %184 : vector<1x64x64xbf16> to vector<64x64xbf16>
    %c0_87 = arith.constant 0 : index
    %c0_88 = arith.constant 0 : index
    %c0_89 = arith.constant 0 : index
    %186 = vector.load %arg23[%c0_87, %c0_88, %c0_89] : memref<2x1x64xbf16, #tpu.memory_space<vmem>>, vector<1x1x64xbf16>
    %187 = vector.shape_cast %186 : vector<1x1x64xbf16> to vector<1x64xbf16>
    %188 = arith.truncf %183 : vector<10x64xf32> to vector<10x64xbf16>
    %cst_90 = arith.constant dense<0.000000e+00> : vector<10x64xf32>
    %189 = tpu.matmul %188, %185, %cst_90 {dimension_numbers = #tpu.dot_dimension_numbers<[1], [0], [0], [1], [0, 0, 1, 1], [], []>} : vector<10x64xbf16>, vector<64x64xbf16>, vector<10x64xf32> -> vector<10x64xf32>
    %190 = arith.extf %187 : vector<1x64xbf16> to vector<1x64xf32>
    %191 = vector.broadcast %190 : vector<1x64xf32> to vector<10x64xf32>
    %192 = arith.addf %189, %191 : vector<10x64xf32>
    %193 = arith.addf %28, %192 : vector<10x64xf32>
    %c0_91 = arith.constant 0 : index
    %c0_92 = arith.constant 0 : index
    %c0_93 = arith.constant 0 : index
    %194 = vector.load %arg24[%c0_91, %c0_92, %c0_93] : memref<2x1x64xbf16, #tpu.memory_space<vmem>>, vector<1x1x64xbf16>
    %195 = vector.shape_cast %194 : vector<1x1x64xbf16> to vector<1x64xbf16>
    %c0_94 = arith.constant 0 : index
    %c0_95 = arith.constant 0 : index
    %c0_96 = arith.constant 0 : index
    %196 = vector.load %arg25[%c0_94, %c0_95, %c0_96] : memref<2x1x64xbf16, #tpu.memory_space<vmem>>, vector<1x1x64xbf16>
    %197 = vector.shape_cast %196 : vector<1x1x64xbf16> to vector<1x64xbf16>
    %198 = arith.extf %195 : vector<1x64xbf16> to vector<1x64xf32>
    %199 = arith.extf %197 : vector<1x64xbf16> to vector<1x64xf32>
    %cst_97 = arith.constant dense<0.000000e+00> : vector<10xf32>
    %200 = vector.multi_reduction <add>, %193, %cst_97 [1] : vector<10x64xf32> to vector<10xf32>
    %201 = vector.shape_cast %200 : vector<10xf32> to vector<10x1xf32>
    %cst_98 = arith.constant 6.400000e+01 : f32
    %202 = vector.broadcast %cst_98 : f32 to vector<10x1xf32>
    %203 = arith.divf %201, %202 : vector<10x1xf32>
    %204 = vector.broadcast %203 : vector<10x1xf32> to vector<10x64xf32>
    %205 = arith.subf %193, %204 : vector<10x64xf32>
    %206 = arith.mulf %205, %205 : vector<10x64xf32>
    %cst_99 = arith.constant dense<0.000000e+00> : vector<10xf32>
    %207 = vector.multi_reduction <add>, %206, %cst_99 [1] : vector<10x64xf32> to vector<10xf32>
    %208 = vector.shape_cast %207 : vector<10xf32> to vector<10x1xf32>
    %cst_100 = arith.constant 6.400000e+01 : f32
    %209 = vector.broadcast %cst_100 : f32 to vector<10x1xf32>
    %210 = arith.divf %208, %209 : vector<10x1xf32>
    %211 = vector.broadcast %203 : vector<10x1xf32> to vector<10x64xf32>
    %212 = arith.subf %193, %211 : vector<10x64xf32>
    %cst_101 = arith.constant 9.99999974E-6 : f32
    %213 = vector.broadcast %cst_101 : f32 to vector<10x1xf32>
    %214 = arith.addf %210, %213 : vector<10x1xf32>
    %215 = math.rsqrt %214 : vector<10x1xf32>
    %216 = vector.broadcast %215 : vector<10x1xf32> to vector<10x64xf32>
    %217 = arith.mulf %212, %216 : vector<10x64xf32>
    %218 = vector.broadcast %198 : vector<1x64xf32> to vector<10x64xf32>
    %219 = arith.mulf %217, %218 : vector<10x64xf32>
    %220 = vector.broadcast %199 : vector<1x64xf32> to vector<10x64xf32>
    %221 = arith.addf %219, %220 : vector<10x64xf32>
    %c0_102 = arith.constant 0 : index
    %c0_103 = arith.constant 0 : index
    %c0_104 = arith.constant 0 : index
    %222 = vector.load %arg26[%c0_102, %c0_103, %c0_104] : memref<2x64x64xbf16, #tpu.memory_space<vmem>>, vector<1x64x64xbf16>
    %223 = vector.shape_cast %222 : vector<1x64x64xbf16> to vector<64x64xbf16>
    %c0_105 = arith.constant 0 : index
    %c0_106 = arith.constant 0 : index
    %c0_107 = arith.constant 0 : index
    %224 = vector.load %arg27[%c0_105, %c0_106, %c0_107] : memref<2x1x64xbf16, #tpu.memory_space<vmem>>, vector<1x1x64xbf16>
    %225 = vector.shape_cast %224 : vector<1x1x64xbf16> to vector<1x64xbf16>
    %226 = arith.truncf %221 : vector<10x64xf32> to vector<10x64xbf16>
    %cst_108 = arith.constant dense<0.000000e+00> : vector<10x64xf32>
    %227 = tpu.matmul %226, %223, %cst_108 {dimension_numbers = #tpu.dot_dimension_numbers<[1], [0], [0], [1], [0, 0, 1, 1], [], []>} : vector<10x64xbf16>, vector<64x64xbf16>, vector<10x64xf32> -> vector<10x64xf32>
    %228 = arith.extf %225 : vector<1x64xbf16> to vector<1x64xf32>
    %229 = vector.broadcast %228 : vector<1x64xf32> to vector<10x64xf32>
    %230 = arith.addf %227, %229 : vector<10x64xf32>
    %c0_109 = arith.constant 0 : index
    %c0_110 = arith.constant 0 : index
    %c0_111 = arith.constant 0 : index
    %231 = vector.load %arg28[%c0_109, %c0_110, %c0_111] : memref<2x64x128xbf16, #tpu.memory_space<vmem>>, vector<1x64x128xbf16>
    %232 = vector.shape_cast %231 : vector<1x64x128xbf16> to vector<64x128xbf16>
    %c0_112 = arith.constant 0 : index
    %c0_113 = arith.constant 0 : index
    %c0_114 = arith.constant 0 : index
    %233 = vector.load %arg29[%c0_112, %c0_113, %c0_114] : memref<2x1x128xbf16, #tpu.memory_space<vmem>>, vector<1x1x128xbf16>
    %234 = vector.shape_cast %233 : vector<1x1x128xbf16> to vector<1x128xbf16>
    %235 = arith.truncf %52 : vector<21x64xf32> to vector<21x64xbf16>
    %cst_115 = arith.constant dense<0.000000e+00> : vector<21x128xf32>
    %236 = tpu.matmul %235, %232, %cst_115 {dimension_numbers = #tpu.dot_dimension_numbers<[1], [0], [0], [1], [0, 0, 1, 1], [], []>} : vector<21x64xbf16>, vector<64x128xbf16>, vector<21x128xf32> -> vector<21x128xf32>
    %237 = arith.extf %234 : vector<1x128xbf16> to vector<1x128xf32>
    %238 = vector.broadcast %237 : vector<1x128xf32> to vector<21x128xf32>
    %239 = arith.addf %236, %238 : vector<21x128xf32>
    %240 = vector.extract_strided_slice %239 {offsets = [0, 0], sizes = [21, 64], strides = [1, 1]} : vector<21x128xf32> to vector<21x64xf32>
    %241 = vector.extract_strided_slice %239 {offsets = [0, 64], sizes = [21, 64], strides = [1, 1]} : vector<21x128xf32> to vector<21x64xf32>
    %242 = vector.extract_strided_slice %230 {offsets = [0, 0], sizes = [10, 16], strides = [1, 1]} : vector<10x64xf32> to vector<10x16xf32>
    %243 = arith.truncf %242 : vector<10x16xf32> to vector<10x16xbf16>
    %244 = vector.extract_strided_slice %240 {offsets = [0, 0], sizes = [21, 16], strides = [1, 1]} : vector<21x64xf32> to vector<21x16xf32>
    %245 = arith.truncf %244 : vector<21x16xf32> to vector<21x16xbf16>
    %246 = vector.extract_strided_slice %241 {offsets = [0, 0], sizes = [21, 16], strides = [1, 1]} : vector<21x64xf32> to vector<21x16xf32>
    %247 = arith.truncf %246 : vector<21x16xf32> to vector<21x16xbf16>
    "tpu.trace_start"() <{level = 10 : i32, message = "qd,kd->qk"}> : () -> ()
    %cst_116 = arith.constant dense<0.000000e+00> : vector<10x21xf32>
    %248 = tpu.matmul %243, %245, %cst_116 {dimension_numbers = #tpu.dot_dimension_numbers<[1], [1], [0], [0], [0, 0, 1, 0], [], []>} : vector<10x16xbf16>, vector<21x16xbf16>, vector<10x21xf32> -> vector<10x21xf32>
    "tpu.trace_stop"() : () -> ()
    %cst_117 = arith.constant 2.500000e-01 : f32
    %249 = vector.broadcast %cst_117 : f32 to vector<10x21xf32>
    %250 = arith.mulf %248, %249 : vector<10x21xf32>
    %cst_118 = arith.constant dense<0xFF800000> : vector<10xf32>
    %251 = vector.multi_reduction <maximumf>, %250, %cst_118 [1] : vector<10x21xf32> to vector<10xf32>
    %252 = vector.shape_cast %251 : vector<10xf32> to vector<10x1xf32>
    %253 = vector.broadcast %252 : vector<10x1xf32> to vector<10x21xf32>
    %254 = arith.subf %250, %253 : vector<10x21xf32>
    %255 = math.exp %254 : vector<10x21xf32>
    %cst_119 = arith.constant dense<0.000000e+00> : vector<10xf32>
    %256 = vector.multi_reduction <add>, %255, %cst_119 [1] : vector<10x21xf32> to vector<10xf32>
    %257 = vector.shape_cast %256 : vector<10xf32> to vector<10x1xf32>
    %258 = vector.broadcast %257 : vector<10x1xf32> to vector<10x21xf32>
    %259 = arith.divf %255, %258 : vector<10x21xf32>
    %260 = arith.truncf %259 : vector<10x21xf32> to vector<10x21xbf16>
    %cst_120 = arith.constant dense<0.000000e+00> : vector<10x16xf32>
    %261 = tpu.matmul %260, %247, %cst_120 {dimension_numbers = #tpu.dot_dimension_numbers<[1], [0], [0], [1], [0, 0, 1, 1], [], []>} : vector<10x21xbf16>, vector<21x16xbf16>, vector<10x16xf32> -> vector<10x16xf32>
    %262 = vector.extract_strided_slice %230 {offsets = [0, 16], sizes = [10, 16], strides = [1, 1]} : vector<10x64xf32> to vector<10x16xf32>
    %263 = arith.truncf %262 : vector<10x16xf32> to vector<10x16xbf16>
    %264 = vector.extract_strided_slice %240 {offsets = [0, 16], sizes = [21, 16], strides = [1, 1]} : vector<21x64xf32> to vector<21x16xf32>
    %265 = arith.truncf %264 : vector<21x16xf32> to vector<21x16xbf16>
    %266 = vector.extract_strided_slice %241 {offsets = [0, 16], sizes = [21, 16], strides = [1, 1]} : vector<21x64xf32> to vector<21x16xf32>
    %267 = arith.truncf %266 : vector<21x16xf32> to vector<21x16xbf16>
    "tpu.trace_start"() <{level = 10 : i32, message = "qd,kd->qk"}> : () -> ()
    %cst_121 = arith.constant dense<0.000000e+00> : vector<10x21xf32>
    %268 = tpu.matmul %263, %265, %cst_121 {dimension_numbers = #tpu.dot_dimension_numbers<[1], [1], [0], [0], [0, 0, 1, 0], [], []>} : vector<10x16xbf16>, vector<21x16xbf16>, vector<10x21xf32> -> vector<10x21xf32>
    "tpu.trace_stop"() : () -> ()
    %cst_122 = arith.constant 2.500000e-01 : f32
    %269 = vector.broadcast %cst_122 : f32 to vector<10x21xf32>
    %270 = arith.mulf %268, %269 : vector<10x21xf32>
    %cst_123 = arith.constant dense<0xFF800000> : vector<10xf32>
    %271 = vector.multi_reduction <maximumf>, %270, %cst_123 [1] : vector<10x21xf32> to vector<10xf32>
    %272 = vector.shape_cast %271 : vector<10xf32> to vector<10x1xf32>
    %273 = vector.broadcast %272 : vector<10x1xf32> to vector<10x21xf32>
    %274 = arith.subf %270, %273 : vector<10x21xf32>
    %275 = math.exp %274 : vector<10x21xf32>
    %cst_124 = arith.constant dense<0.000000e+00> : vector<10xf32>
    %276 = vector.multi_reduction <add>, %275, %cst_124 [1] : vector<10x21xf32> to vector<10xf32>
    %277 = vector.shape_cast %276 : vector<10xf32> to vector<10x1xf32>
    %278 = vector.broadcast %277 : vector<10x1xf32> to vector<10x21xf32>
    %279 = arith.divf %275, %278 : vector<10x21xf32>
    %280 = arith.truncf %279 : vector<10x21xf32> to vector<10x21xbf16>
    %cst_125 = arith.constant dense<0.000000e+00> : vector<10x16xf32>
    %281 = tpu.matmul %280, %267, %cst_125 {dimension_numbers = #tpu.dot_dimension_numbers<[1], [0], [0], [1], [0, 0, 1, 1], [], []>} : vector<10x21xbf16>, vector<21x16xbf16>, vector<10x16xf32> -> vector<10x16xf32>
    %282 = vector.extract_strided_slice %230 {offsets = [0, 32], sizes = [10, 16], strides = [1, 1]} : vector<10x64xf32> to vector<10x16xf32>
    %283 = arith.truncf %282 : vector<10x16xf32> to vector<10x16xbf16>
    %284 = vector.extract_strided_slice %240 {offsets = [0, 32], sizes = [21, 16], strides = [1, 1]} : vector<21x64xf32> to vector<21x16xf32>
    %285 = arith.truncf %284 : vector<21x16xf32> to vector<21x16xbf16>
    %286 = vector.extract_strided_slice %241 {offsets = [0, 32], sizes = [21, 16], strides = [1, 1]} : vector<21x64xf32> to vector<21x16xf32>
    %287 = arith.truncf %286 : vector<21x16xf32> to vector<21x16xbf16>
    "tpu.trace_start"() <{level = 10 : i32, message = "qd,kd->qk"}> : () -> ()
    %cst_126 = arith.constant dense<0.000000e+00> : vector<10x21xf32>
    %288 = tpu.matmul %283, %285, %cst_126 {dimension_numbers = #tpu.dot_dimension_numbers<[1], [1], [0], [0], [0, 0, 1, 0], [], []>} : vector<10x16xbf16>, vector<21x16xbf16>, vector<10x21xf32> -> vector<10x21xf32>
    "tpu.trace_stop"() : () -> ()
    %cst_127 = arith.constant 2.500000e-01 : f32
    %289 = vector.broadcast %cst_127 : f32 to vector<10x21xf32>
    %290 = arith.mulf %288, %289 : vector<10x21xf32>
    %cst_128 = arith.constant dense<0xFF800000> : vector<10xf32>
    %291 = vector.multi_reduction <maximumf>, %290, %cst_128 [1] : vector<10x21xf32> to vector<10xf32>
    %292 = vector.shape_cast %291 : vector<10xf32> to vector<10x1xf32>
    %293 = vector.broadcast %292 : vector<10x1xf32> to vector<10x21xf32>
    %294 = arith.subf %290, %293 : vector<10x21xf32>
    %295 = math.exp %294 : vector<10x21xf32>
    %cst_129 = arith.constant dense<0.000000e+00> : vector<10xf32>
    %296 = vector.multi_reduction <add>, %295, %cst_129 [1] : vector<10x21xf32> to vector<10xf32>
    %297 = vector.shape_cast %296 : vector<10xf32> to vector<10x1xf32>
    %298 = vector.broadcast %297 : vector<10x1xf32> to vector<10x21xf32>
    %299 = arith.divf %295, %298 : vector<10x21xf32>
    %300 = arith.truncf %299 : vector<10x21xf32> to vector<10x21xbf16>
    %cst_130 = arith.constant dense<0.000000e+00> : vector<10x16xf32>
    %301 = tpu.matmul %300, %287, %cst_130 {dimension_numbers = #tpu.dot_dimension_numbers<[1], [0], [0], [1], [0, 0, 1, 1], [], []>} : vector<10x21xbf16>, vector<21x16xbf16>, vector<10x16xf32> -> vector<10x16xf32>
    %302 = vector.extract_strided_slice %230 {offsets = [0, 48], sizes = [10, 16], strides = [1, 1]} : vector<10x64xf32> to vector<10x16xf32>
    %303 = arith.truncf %302 : vector<10x16xf32> to vector<10x16xbf16>
    %304 = vector.extract_strided_slice %240 {offsets = [0, 48], sizes = [21, 16], strides = [1, 1]} : vector<21x64xf32> to vector<21x16xf32>
    %305 = arith.truncf %304 : vector<21x16xf32> to vector<21x16xbf16>
    %306 = vector.extract_strided_slice %241 {offsets = [0, 48], sizes = [21, 16], strides = [1, 1]} : vector<21x64xf32> to vector<21x16xf32>
    %307 = arith.truncf %306 : vector<21x16xf32> to vector<21x16xbf16>
    "tpu.trace_start"() <{level = 10 : i32, message = "qd,kd->qk"}> : () -> ()
    %cst_131 = arith.constant dense<0.000000e+00> : vector<10x21xf32>
    %308 = tpu.matmul %303, %305, %cst_131 {dimension_numbers = #tpu.dot_dimension_numbers<[1], [1], [0], [0], [0, 0, 1, 0], [], []>} : vector<10x16xbf16>, vector<21x16xbf16>, vector<10x21xf32> -> vector<10x21xf32>
    "tpu.trace_stop"() : () -> ()
    %cst_132 = arith.constant 2.500000e-01 : f32
    %309 = vector.broadcast %cst_132 : f32 to vector<10x21xf32>
    %310 = arith.mulf %308, %309 : vector<10x21xf32>
    %cst_133 = arith.constant dense<0xFF800000> : vector<10xf32>
    %311 = vector.multi_reduction <maximumf>, %310, %cst_133 [1] : vector<10x21xf32> to vector<10xf32>
    %312 = vector.shape_cast %311 : vector<10xf32> to vector<10x1xf32>
    %313 = vector.broadcast %312 : vector<10x1xf32> to vector<10x21xf32>
    %314 = arith.subf %310, %313 : vector<10x21xf32>
    %315 = math.exp %314 : vector<10x21xf32>
    %cst_134 = arith.constant dense<0.000000e+00> : vector<10xf32>
    %316 = vector.multi_reduction <add>, %315, %cst_134 [1] : vector<10x21xf32> to vector<10xf32>
    %317 = vector.shape_cast %316 : vector<10xf32> to vector<10x1xf32>
    %318 = vector.broadcast %317 : vector<10x1xf32> to vector<10x21xf32>
    %319 = arith.divf %315, %318 : vector<10x21xf32>
    %320 = arith.truncf %319 : vector<10x21xf32> to vector<10x21xbf16>
    %cst_135 = arith.constant dense<0.000000e+00> : vector<10x16xf32>
    %321 = tpu.matmul %320, %307, %cst_135 {dimension_numbers = #tpu.dot_dimension_numbers<[1], [0], [0], [1], [0, 0, 1, 1], [], []>} : vector<10x21xbf16>, vector<21x16xbf16>, vector<10x16xf32> -> vector<10x16xf32>
    %322 = tpu.concatenate %261, %281, %301, %321 in 1 : vector<10x16xf32>, vector<10x16xf32>, vector<10x16xf32>, vector<10x16xf32> -> vector<10x64xf32>
    %c0_136 = arith.constant 0 : index
    %c0_137 = arith.constant 0 : index
    %c0_138 = arith.constant 0 : index
    %323 = vector.load %arg30[%c0_136, %c0_137, %c0_138] : memref<2x64x64xbf16, #tpu.memory_space<vmem>>, vector<1x64x64xbf16>
    %324 = vector.shape_cast %323 : vector<1x64x64xbf16> to vector<64x64xbf16>
    %c0_139 = arith.constant 0 : index
    %c0_140 = arith.constant 0 : index
    %c0_141 = arith.constant 0 : index
    %325 = vector.load %arg31[%c0_139, %c0_140, %c0_141] : memref<2x1x64xbf16, #tpu.memory_space<vmem>>, vector<1x1x64xbf16>
    %326 = vector.shape_cast %325 : vector<1x1x64xbf16> to vector<1x64xbf16>
    %327 = arith.truncf %322 : vector<10x64xf32> to vector<10x64xbf16>
    %cst_142 = arith.constant dense<0.000000e+00> : vector<10x64xf32>
    %328 = tpu.matmul %327, %324, %cst_142 {dimension_numbers = #tpu.dot_dimension_numbers<[1], [0], [0], [1], [0, 0, 1, 1], [], []>} : vector<10x64xbf16>, vector<64x64xbf16>, vector<10x64xf32> -> vector<10x64xf32>
    %329 = arith.extf %326 : vector<1x64xbf16> to vector<1x64xf32>
    %330 = vector.broadcast %329 : vector<1x64xf32> to vector<10x64xf32>
    %331 = arith.addf %328, %330 : vector<10x64xf32>
    %332 = arith.addf %193, %331 : vector<10x64xf32>
    %c0_143 = arith.constant 0 : index
    %c0_144 = arith.constant 0 : index
    %c0_145 = arith.constant 0 : index
    %333 = vector.load %arg32[%c0_143, %c0_144, %c0_145] : memref<2x1x64xbf16, #tpu.memory_space<vmem>>, vector<1x1x64xbf16>
    %334 = vector.shape_cast %333 : vector<1x1x64xbf16> to vector<1x64xbf16>
    %c0_146 = arith.constant 0 : index
    %c0_147 = arith.constant 0 : index
    %c0_148 = arith.constant 0 : index
    %335 = vector.load %arg33[%c0_146, %c0_147, %c0_148] : memref<2x1x64xbf16, #tpu.memory_space<vmem>>, vector<1x1x64xbf16>
    %336 = vector.shape_cast %335 : vector<1x1x64xbf16> to vector<1x64xbf16>
    %337 = arith.extf %334 : vector<1x64xbf16> to vector<1x64xf32>
    %338 = arith.extf %336 : vector<1x64xbf16> to vector<1x64xf32>
    %cst_149 = arith.constant dense<0.000000e+00> : vector<10xf32>
    %339 = vector.multi_reduction <add>, %332, %cst_149 [1] : vector<10x64xf32> to vector<10xf32>
    %340 = vector.shape_cast %339 : vector<10xf32> to vector<10x1xf32>
    %cst_150 = arith.constant 6.400000e+01 : f32
    %341 = vector.broadcast %cst_150 : f32 to vector<10x1xf32>
    %342 = arith.divf %340, %341 : vector<10x1xf32>
    %343 = vector.broadcast %342 : vector<10x1xf32> to vector<10x64xf32>
    %344 = arith.subf %332, %343 : vector<10x64xf32>
    %345 = arith.mulf %344, %344 : vector<10x64xf32>
    %cst_151 = arith.constant dense<0.000000e+00> : vector<10xf32>
    %346 = vector.multi_reduction <add>, %345, %cst_151 [1] : vector<10x64xf32> to vector<10xf32>
    %347 = vector.shape_cast %346 : vector<10xf32> to vector<10x1xf32>
    %cst_152 = arith.constant 6.400000e+01 : f32
    %348 = vector.broadcast %cst_152 : f32 to vector<10x1xf32>
    %349 = arith.divf %347, %348 : vector<10x1xf32>
    %350 = vector.broadcast %342 : vector<10x1xf32> to vector<10x64xf32>
    %351 = arith.subf %332, %350 : vector<10x64xf32>
    %cst_153 = arith.constant 9.99999974E-6 : f32
    %352 = vector.broadcast %cst_153 : f32 to vector<10x1xf32>
    %353 = arith.addf %349, %352 : vector<10x1xf32>
    %354 = math.rsqrt %353 : vector<10x1xf32>
    %355 = vector.broadcast %354 : vector<10x1xf32> to vector<10x64xf32>
    %356 = arith.mulf %351, %355 : vector<10x64xf32>
    %357 = vector.broadcast %337 : vector<1x64xf32> to vector<10x64xf32>
    %358 = arith.mulf %356, %357 : vector<10x64xf32>
    %359 = vector.broadcast %338 : vector<1x64xf32> to vector<10x64xf32>
    %360 = arith.addf %358, %359 : vector<10x64xf32>
    %c0_154 = arith.constant 0 : index
    %c0_155 = arith.constant 0 : index
    %c0_156 = arith.constant 0 : index
    %361 = vector.load %arg34[%c0_154, %c0_155, %c0_156] : memref<2x64x256xbf16, #tpu.memory_space<vmem>>, vector<1x64x256xbf16>
    %362 = vector.shape_cast %361 : vector<1x64x256xbf16> to vector<64x256xbf16>
    %c0_157 = arith.constant 0 : index
    %c0_158 = arith.constant 0 : index
    %c0_159 = arith.constant 0 : index
    %363 = vector.load %arg35[%c0_157, %c0_158, %c0_159] : memref<2x1x256xbf16, #tpu.memory_space<vmem>>, vector<1x1x256xbf16>
    %364 = vector.shape_cast %363 : vector<1x1x256xbf16> to vector<1x256xbf16>
    %365 = arith.truncf %360 : vector<10x64xf32> to vector<10x64xbf16>
    %cst_160 = arith.constant dense<0.000000e+00> : vector<10x256xf32>
    %366 = tpu.matmul %365, %362, %cst_160 {dimension_numbers = #tpu.dot_dimension_numbers<[1], [0], [0], [1], [0, 0, 1, 1], [], []>} : vector<10x64xbf16>, vector<64x256xbf16>, vector<10x256xf32> -> vector<10x256xf32>
    %367 = arith.extf %364 : vector<1x256xbf16> to vector<1x256xf32>
    %368 = vector.broadcast %367 : vector<1x256xf32> to vector<10x256xf32>
    %369 = arith.addf %366, %368 : vector<10x256xf32>
    %370 = arith.mulf %369, %369 : vector<10x256xf32>
    %371 = arith.mulf %369, %370 : vector<10x256xf32>
    %cst_161 = arith.constant 4.471500e-02 : f32
    %372 = vector.broadcast %cst_161 : f32 to vector<10x256xf32>
    %373 = arith.mulf %372, %371 : vector<10x256xf32>
    %374 = arith.addf %369, %373 : vector<10x256xf32>
    %cst_162 = arith.constant 0.797884583 : f32
    %375 = vector.broadcast %cst_162 : f32 to vector<10x256xf32>
    %376 = arith.mulf %375, %374 : vector<10x256xf32>
    %377 = math.tanh %376 : vector<10x256xf32>
    %cst_163 = arith.constant 1.000000e+00 : f32
    %378 = vector.broadcast %cst_163 : f32 to vector<10x256xf32>
    %379 = arith.addf %378, %377 : vector<10x256xf32>
    %cst_164 = arith.constant 5.000000e-01 : f32
    %380 = vector.broadcast %cst_164 : f32 to vector<10x256xf32>
    %381 = arith.mulf %380, %379 : vector<10x256xf32>
    %382 = arith.mulf %369, %381 : vector<10x256xf32>
    %c0_165 = arith.constant 0 : index
    %c0_166 = arith.constant 0 : index
    %c0_167 = arith.constant 0 : index
    %383 = vector.load %arg36[%c0_165, %c0_166, %c0_167] : memref<2x256x64xbf16, #tpu.memory_space<vmem>>, vector<1x256x64xbf16>
    %384 = vector.shape_cast %383 : vector<1x256x64xbf16> to vector<256x64xbf16>
    %c0_168 = arith.constant 0 : index
    %c0_169 = arith.constant 0 : index
    %c0_170 = arith.constant 0 : index
    %385 = vector.load %arg37[%c0_168, %c0_169, %c0_170] : memref<2x1x64xbf16, #tpu.memory_space<vmem>>, vector<1x1x64xbf16>
    %386 = vector.shape_cast %385 : vector<1x1x64xbf16> to vector<1x64xbf16>
    %387 = arith.truncf %382 : vector<10x256xf32> to vector<10x256xbf16>
    %cst_171 = arith.constant dense<0.000000e+00> : vector<10x64xf32>
    %388 = tpu.matmul %387, %384, %cst_171 {dimension_numbers = #tpu.dot_dimension_numbers<[1], [0], [0], [1], [0, 0, 1, 1], [], []>} : vector<10x256xbf16>, vector<256x64xbf16>, vector<10x64xf32> -> vector<10x64xf32>
    %389 = arith.extf %386 : vector<1x64xbf16> to vector<1x64xf32>
    %390 = vector.broadcast %389 : vector<1x64xf32> to vector<10x64xf32>
    %391 = arith.addf %388, %390 : vector<10x64xf32>
    %392 = arith.addf %332, %391 : vector<10x64xf32>
    %c1 = arith.constant 1 : index
    %c0_172 = arith.constant 0 : index
    %c0_173 = arith.constant 0 : index
    %393 = vector.load %arg18[%c1, %c0_172, %c0_173] : memref<2x1x64xbf16, #tpu.memory_space<vmem>>, vector<1x1x64xbf16>
    %394 = vector.shape_cast %393 : vector<1x1x64xbf16> to vector<1x64xbf16>
    %c1_174 = arith.constant 1 : index
    %c0_175 = arith.constant 0 : index
    %c0_176 = arith.constant 0 : index
    %395 = vector.load %arg19[%c1_174, %c0_175, %c0_176] : memref<2x1x64xbf16, #tpu.memory_space<vmem>>, vector<1x1x64xbf16>
    %396 = vector.shape_cast %395 : vector<1x1x64xbf16> to vector<1x64xbf16>
    %397 = arith.extf %394 : vector<1x64xbf16> to vector<1x64xf32>
    %398 = arith.extf %396 : vector<1x64xbf16> to vector<1x64xf32>
    %cst_177 = arith.constant dense<0.000000e+00> : vector<10xf32>
    %399 = vector.multi_reduction <add>, %392, %cst_177 [1] : vector<10x64xf32> to vector<10xf32>
    %400 = vector.shape_cast %399 : vector<10xf32> to vector<10x1xf32>
    %cst_178 = arith.constant 6.400000e+01 : f32
    %401 = vector.broadcast %cst_178 : f32 to vector<10x1xf32>
    %402 = arith.divf %400, %401 : vector<10x1xf32>
    %403 = vector.broadcast %402 : vector<10x1xf32> to vector<10x64xf32>
    %404 = arith.subf %392, %403 : vector<10x64xf32>
    %405 = arith.mulf %404, %404 : vector<10x64xf32>
    %cst_179 = arith.constant dense<0.000000e+00> : vector<10xf32>
    %406 = vector.multi_reduction <add>, %405, %cst_179 [1] : vector<10x64xf32> to vector<10xf32>
    %407 = vector.shape_cast %406 : vector<10xf32> to vector<10x1xf32>
    %cst_180 = arith.constant 6.400000e+01 : f32
    %408 = vector.broadcast %cst_180 : f32 to vector<10x1xf32>
    %409 = arith.divf %407, %408 : vector<10x1xf32>
    %410 = vector.broadcast %402 : vector<10x1xf32> to vector<10x64xf32>
    %411 = arith.subf %392, %410 : vector<10x64xf32>
    %cst_181 = arith.constant 9.99999974E-6 : f32
    %412 = vector.broadcast %cst_181 : f32 to vector<10x1xf32>
    %413 = arith.addf %409, %412 : vector<10x1xf32>
    %414 = math.rsqrt %413 : vector<10x1xf32>
    %415 = vector.broadcast %414 : vector<10x1xf32> to vector<10x64xf32>
    %416 = arith.mulf %411, %415 : vector<10x64xf32>
    %417 = vector.broadcast %397 : vector<1x64xf32> to vector<10x64xf32>
    %418 = arith.mulf %416, %417 : vector<10x64xf32>
    %419 = vector.broadcast %398 : vector<1x64xf32> to vector<10x64xf32>
    %420 = arith.addf %418, %419 : vector<10x64xf32>
    %c1_182 = arith.constant 1 : index
    %c0_183 = arith.constant 0 : index
    %c0_184 = arith.constant 0 : index
    %421 = vector.load %arg20[%c1_182, %c0_183, %c0_184] : memref<2x64x192xbf16, #tpu.memory_space<vmem>>, vector<1x64x192xbf16>
    %422 = vector.shape_cast %421 : vector<1x64x192xbf16> to vector<64x192xbf16>
    %c1_185 = arith.constant 1 : index
    %c0_186 = arith.constant 0 : index
    %c0_187 = arith.constant 0 : index
    %423 = vector.load %arg21[%c1_185, %c0_186, %c0_187] : memref<2x1x192xbf16, #tpu.memory_space<vmem>>, vector<1x1x192xbf16>
    %424 = vector.shape_cast %423 : vector<1x1x192xbf16> to vector<1x192xbf16>
    %425 = arith.truncf %420 : vector<10x64xf32> to vector<10x64xbf16>
    %cst_188 = arith.constant dense<0.000000e+00> : vector<10x192xf32>
    %426 = tpu.matmul %425, %422, %cst_188 {dimension_numbers = #tpu.dot_dimension_numbers<[1], [0], [0], [1], [0, 0, 1, 1], [], []>} : vector<10x64xbf16>, vector<64x192xbf16>, vector<10x192xf32> -> vector<10x192xf32>
    %427 = arith.extf %424 : vector<1x192xbf16> to vector<1x192xf32>
    %428 = vector.broadcast %427 : vector<1x192xf32> to vector<10x192xf32>
    %429 = arith.addf %426, %428 : vector<10x192xf32>
    %430 = vector.extract_strided_slice %429 {offsets = [0, 0], sizes = [10, 64], strides = [1, 1]} : vector<10x192xf32> to vector<10x64xf32>
    %431 = vector.extract_strided_slice %429 {offsets = [0, 64], sizes = [10, 64], strides = [1, 1]} : vector<10x192xf32> to vector<10x64xf32>
    %432 = vector.extract_strided_slice %429 {offsets = [0, 128], sizes = [10, 64], strides = [1, 1]} : vector<10x192xf32> to vector<10x64xf32>
    %433 = vector.extract_strided_slice %430 {offsets = [0, 0], sizes = [10, 16], strides = [1, 1]} : vector<10x64xf32> to vector<10x16xf32>
    %434 = arith.truncf %433 : vector<10x16xf32> to vector<10x16xbf16>
    %435 = vector.extract_strided_slice %431 {offsets = [0, 0], sizes = [10, 16], strides = [1, 1]} : vector<10x64xf32> to vector<10x16xf32>
    %436 = arith.truncf %435 : vector<10x16xf32> to vector<10x16xbf16>
    %437 = vector.extract_strided_slice %432 {offsets = [0, 0], sizes = [10, 16], strides = [1, 1]} : vector<10x64xf32> to vector<10x16xf32>
    %438 = arith.truncf %437 : vector<10x16xf32> to vector<10x16xbf16>
    "tpu.trace_start"() <{level = 10 : i32, message = "qd,kd->qk"}> : () -> ()
    %cst_189 = arith.constant dense<0.000000e+00> : vector<10x10xf32>
    %439 = tpu.matmul %434, %436, %cst_189 {dimension_numbers = #tpu.dot_dimension_numbers<[1], [1], [0], [0], [0, 0, 1, 0], [], []>} : vector<10x16xbf16>, vector<10x16xbf16>, vector<10x10xf32> -> vector<10x10xf32>
    "tpu.trace_stop"() : () -> ()
    %cst_190 = arith.constant 2.500000e-01 : f32
    %440 = vector.broadcast %cst_190 : f32 to vector<10x10xf32>
    %441 = arith.mulf %439, %440 : vector<10x10xf32>
    %442 = arith.addf %441, %58 : vector<10x10xf32>
    %cst_191 = arith.constant dense<0xFF800000> : vector<10xf32>
    %443 = vector.multi_reduction <maximumf>, %442, %cst_191 [1] : vector<10x10xf32> to vector<10xf32>
    %444 = vector.shape_cast %443 : vector<10xf32> to vector<10x1xf32>
    %445 = vector.broadcast %444 : vector<10x1xf32> to vector<10x10xf32>
    %446 = arith.subf %442, %445 : vector<10x10xf32>
    %447 = math.exp %446 : vector<10x10xf32>
    %cst_192 = arith.constant dense<0.000000e+00> : vector<10xf32>
    %448 = vector.multi_reduction <add>, %447, %cst_192 [1] : vector<10x10xf32> to vector<10xf32>
    %449 = vector.shape_cast %448 : vector<10xf32> to vector<10x1xf32>
    %450 = vector.broadcast %449 : vector<10x1xf32> to vector<10x10xf32>
    %451 = arith.divf %447, %450 : vector<10x10xf32>
    %452 = arith.truncf %451 : vector<10x10xf32> to vector<10x10xbf16>
    %cst_193 = arith.constant dense<0.000000e+00> : vector<10x16xf32>
    %453 = tpu.matmul %452, %438, %cst_193 {dimension_numbers = #tpu.dot_dimension_numbers<[1], [0], [0], [1], [0, 0, 1, 1], [], []>} : vector<10x10xbf16>, vector<10x16xbf16>, vector<10x16xf32> -> vector<10x16xf32>
    %454 = vector.extract_strided_slice %430 {offsets = [0, 16], sizes = [10, 16], strides = [1, 1]} : vector<10x64xf32> to vector<10x16xf32>
    %455 = arith.truncf %454 : vector<10x16xf32> to vector<10x16xbf16>
    %456 = vector.extract_strided_slice %431 {offsets = [0, 16], sizes = [10, 16], strides = [1, 1]} : vector<10x64xf32> to vector<10x16xf32>
    %457 = arith.truncf %456 : vector<10x16xf32> to vector<10x16xbf16>
    %458 = vector.extract_strided_slice %432 {offsets = [0, 16], sizes = [10, 16], strides = [1, 1]} : vector<10x64xf32> to vector<10x16xf32>
    %459 = arith.truncf %458 : vector<10x16xf32> to vector<10x16xbf16>
    "tpu.trace_start"() <{level = 10 : i32, message = "qd,kd->qk"}> : () -> ()
    %cst_194 = arith.constant dense<0.000000e+00> : vector<10x10xf32>
    %460 = tpu.matmul %455, %457, %cst_194 {dimension_numbers = #tpu.dot_dimension_numbers<[1], [1], [0], [0], [0, 0, 1, 0], [], []>} : vector<10x16xbf16>, vector<10x16xbf16>, vector<10x10xf32> -> vector<10x10xf32>
    "tpu.trace_stop"() : () -> ()
    %cst_195 = arith.constant 2.500000e-01 : f32
    %461 = vector.broadcast %cst_195 : f32 to vector<10x10xf32>
    %462 = arith.mulf %460, %461 : vector<10x10xf32>
    %463 = arith.addf %462, %58 : vector<10x10xf32>
    %cst_196 = arith.constant dense<0xFF800000> : vector<10xf32>
    %464 = vector.multi_reduction <maximumf>, %463, %cst_196 [1] : vector<10x10xf32> to vector<10xf32>
    %465 = vector.shape_cast %464 : vector<10xf32> to vector<10x1xf32>
    %466 = vector.broadcast %465 : vector<10x1xf32> to vector<10x10xf32>
    %467 = arith.subf %463, %466 : vector<10x10xf32>
    %468 = math.exp %467 : vector<10x10xf32>
    %cst_197 = arith.constant dense<0.000000e+00> : vector<10xf32>
    %469 = vector.multi_reduction <add>, %468, %cst_197 [1] : vector<10x10xf32> to vector<10xf32>
    %470 = vector.shape_cast %469 : vector<10xf32> to vector<10x1xf32>
    %471 = vector.broadcast %470 : vector<10x1xf32> to vector<10x10xf32>
    %472 = arith.divf %468, %471 : vector<10x10xf32>
    %473 = arith.truncf %472 : vector<10x10xf32> to vector<10x10xbf16>
    %cst_198 = arith.constant dense<0.000000e+00> : vector<10x16xf32>
    %474 = tpu.matmul %473, %459, %cst_198 {dimension_numbers = #tpu.dot_dimension_numbers<[1], [0], [0], [1], [0, 0, 1, 1], [], []>} : vector<10x10xbf16>, vector<10x16xbf16>, vector<10x16xf32> -> vector<10x16xf32>
    %475 = vector.extract_strided_slice %430 {offsets = [0, 32], sizes = [10, 16], strides = [1, 1]} : vector<10x64xf32> to vector<10x16xf32>
    %476 = arith.truncf %475 : vector<10x16xf32> to vector<10x16xbf16>
    %477 = vector.extract_strided_slice %431 {offsets = [0, 32], sizes = [10, 16], strides = [1, 1]} : vector<10x64xf32> to vector<10x16xf32>
    %478 = arith.truncf %477 : vector<10x16xf32> to vector<10x16xbf16>
    %479 = vector.extract_strided_slice %432 {offsets = [0, 32], sizes = [10, 16], strides = [1, 1]} : vector<10x64xf32> to vector<10x16xf32>
    %480 = arith.truncf %479 : vector<10x16xf32> to vector<10x16xbf16>
    "tpu.trace_start"() <{level = 10 : i32, message = "qd,kd->qk"}> : () -> ()
    %cst_199 = arith.constant dense<0.000000e+00> : vector<10x10xf32>
    %481 = tpu.matmul %476, %478, %cst_199 {dimension_numbers = #tpu.dot_dimension_numbers<[1], [1], [0], [0], [0, 0, 1, 0], [], []>} : vector<10x16xbf16>, vector<10x16xbf16>, vector<10x10xf32> -> vector<10x10xf32>
    "tpu.trace_stop"() : () -> ()
    %cst_200 = arith.constant 2.500000e-01 : f32
    %482 = vector.broadcast %cst_200 : f32 to vector<10x10xf32>
    %483 = arith.mulf %481, %482 : vector<10x10xf32>
    %484 = arith.addf %483, %58 : vector<10x10xf32>
    %cst_201 = arith.constant dense<0xFF800000> : vector<10xf32>
    %485 = vector.multi_reduction <maximumf>, %484, %cst_201 [1] : vector<10x10xf32> to vector<10xf32>
    %486 = vector.shape_cast %485 : vector<10xf32> to vector<10x1xf32>
    %487 = vector.broadcast %486 : vector<10x1xf32> to vector<10x10xf32>
    %488 = arith.subf %484, %487 : vector<10x10xf32>
    %489 = math.exp %488 : vector<10x10xf32>
    %cst_202 = arith.constant dense<0.000000e+00> : vector<10xf32>
    %490 = vector.multi_reduction <add>, %489, %cst_202 [1] : vector<10x10xf32> to vector<10xf32>
    %491 = vector.shape_cast %490 : vector<10xf32> to vector<10x1xf32>
    %492 = vector.broadcast %491 : vector<10x1xf32> to vector<10x10xf32>
    %493 = arith.divf %489, %492 : vector<10x10xf32>
    %494 = arith.truncf %493 : vector<10x10xf32> to vector<10x10xbf16>
    %cst_203 = arith.constant dense<0.000000e+00> : vector<10x16xf32>
    %495 = tpu.matmul %494, %480, %cst_203 {dimension_numbers = #tpu.dot_dimension_numbers<[1], [0], [0], [1], [0, 0, 1, 1], [], []>} : vector<10x10xbf16>, vector<10x16xbf16>, vector<10x16xf32> -> vector<10x16xf32>
    %496 = vector.extract_strided_slice %430 {offsets = [0, 48], sizes = [10, 16], strides = [1, 1]} : vector<10x64xf32> to vector<10x16xf32>
    %497 = arith.truncf %496 : vector<10x16xf32> to vector<10x16xbf16>
    %498 = vector.extract_strided_slice %431 {offsets = [0, 48], sizes = [10, 16], strides = [1, 1]} : vector<10x64xf32> to vector<10x16xf32>
    %499 = arith.truncf %498 : vector<10x16xf32> to vector<10x16xbf16>
    %500 = vector.extract_strided_slice %432 {offsets = [0, 48], sizes = [10, 16], strides = [1, 1]} : vector<10x64xf32> to vector<10x16xf32>
    %501 = arith.truncf %500 : vector<10x16xf32> to vector<10x16xbf16>
    "tpu.trace_start"() <{level = 10 : i32, message = "qd,kd->qk"}> : () -> ()
    %cst_204 = arith.constant dense<0.000000e+00> : vector<10x10xf32>
    %502 = tpu.matmul %497, %499, %cst_204 {dimension_numbers = #tpu.dot_dimension_numbers<[1], [1], [0], [0], [0, 0, 1, 0], [], []>} : vector<10x16xbf16>, vector<10x16xbf16>, vector<10x10xf32> -> vector<10x10xf32>
    "tpu.trace_stop"() : () -> ()
    %cst_205 = arith.constant 2.500000e-01 : f32
    %503 = vector.broadcast %cst_205 : f32 to vector<10x10xf32>
    %504 = arith.mulf %502, %503 : vector<10x10xf32>
    %505 = arith.addf %504, %58 : vector<10x10xf32>
    %cst_206 = arith.constant dense<0xFF800000> : vector<10xf32>
    %506 = vector.multi_reduction <maximumf>, %505, %cst_206 [1] : vector<10x10xf32> to vector<10xf32>
    %507 = vector.shape_cast %506 : vector<10xf32> to vector<10x1xf32>
    %508 = vector.broadcast %507 : vector<10x1xf32> to vector<10x10xf32>
    %509 = arith.subf %505, %508 : vector<10x10xf32>
    %510 = math.exp %509 : vector<10x10xf32>
    %cst_207 = arith.constant dense<0.000000e+00> : vector<10xf32>
    %511 = vector.multi_reduction <add>, %510, %cst_207 [1] : vector<10x10xf32> to vector<10xf32>
    %512 = vector.shape_cast %511 : vector<10xf32> to vector<10x1xf32>
    %513 = vector.broadcast %512 : vector<10x1xf32> to vector<10x10xf32>
    %514 = arith.divf %510, %513 : vector<10x10xf32>
    %515 = arith.truncf %514 : vector<10x10xf32> to vector<10x10xbf16>
    %cst_208 = arith.constant dense<0.000000e+00> : vector<10x16xf32>
    %516 = tpu.matmul %515, %501, %cst_208 {dimension_numbers = #tpu.dot_dimension_numbers<[1], [0], [0], [1], [0, 0, 1, 1], [], []>} : vector<10x10xbf16>, vector<10x16xbf16>, vector<10x16xf32> -> vector<10x16xf32>
    %517 = tpu.concatenate %453, %474, %495, %516 in 1 : vector<10x16xf32>, vector<10x16xf32>, vector<10x16xf32>, vector<10x16xf32> -> vector<10x64xf32>
    %c1_209 = arith.constant 1 : index
    %c0_210 = arith.constant 0 : index
    %c0_211 = arith.constant 0 : index
    %518 = vector.load %arg22[%c1_209, %c0_210, %c0_211] : memref<2x64x64xbf16, #tpu.memory_space<vmem>>, vector<1x64x64xbf16>
    %519 = vector.shape_cast %518 : vector<1x64x64xbf16> to vector<64x64xbf16>
    %c1_212 = arith.constant 1 : index
    %c0_213 = arith.constant 0 : index
    %c0_214 = arith.constant 0 : index
    %520 = vector.load %arg23[%c1_212, %c0_213, %c0_214] : memref<2x1x64xbf16, #tpu.memory_space<vmem>>, vector<1x1x64xbf16>
    %521 = vector.shape_cast %520 : vector<1x1x64xbf16> to vector<1x64xbf16>
    %522 = arith.truncf %517 : vector<10x64xf32> to vector<10x64xbf16>
    %cst_215 = arith.constant dense<0.000000e+00> : vector<10x64xf32>
    %523 = tpu.matmul %522, %519, %cst_215 {dimension_numbers = #tpu.dot_dimension_numbers<[1], [0], [0], [1], [0, 0, 1, 1], [], []>} : vector<10x64xbf16>, vector<64x64xbf16>, vector<10x64xf32> -> vector<10x64xf32>
    %524 = arith.extf %521 : vector<1x64xbf16> to vector<1x64xf32>
    %525 = vector.broadcast %524 : vector<1x64xf32> to vector<10x64xf32>
    %526 = arith.addf %523, %525 : vector<10x64xf32>
    %527 = arith.addf %392, %526 : vector<10x64xf32>
    %c1_216 = arith.constant 1 : index
    %c0_217 = arith.constant 0 : index
    %c0_218 = arith.constant 0 : index
    %528 = vector.load %arg24[%c1_216, %c0_217, %c0_218] : memref<2x1x64xbf16, #tpu.memory_space<vmem>>, vector<1x1x64xbf16>
    %529 = vector.shape_cast %528 : vector<1x1x64xbf16> to vector<1x64xbf16>
    %c1_219 = arith.constant 1 : index
    %c0_220 = arith.constant 0 : index
    %c0_221 = arith.constant 0 : index
    %530 = vector.load %arg25[%c1_219, %c0_220, %c0_221] : memref<2x1x64xbf16, #tpu.memory_space<vmem>>, vector<1x1x64xbf16>
    %531 = vector.shape_cast %530 : vector<1x1x64xbf16> to vector<1x64xbf16>
    %532 = arith.extf %529 : vector<1x64xbf16> to vector<1x64xf32>
    %533 = arith.extf %531 : vector<1x64xbf16> to vector<1x64xf32>
    %cst_222 = arith.constant dense<0.000000e+00> : vector<10xf32>
    %534 = vector.multi_reduction <add>, %527, %cst_222 [1] : vector<10x64xf32> to vector<10xf32>
    %535 = vector.shape_cast %534 : vector<10xf32> to vector<10x1xf32>
    %cst_223 = arith.constant 6.400000e+01 : f32
    %536 = vector.broadcast %cst_223 : f32 to vector<10x1xf32>
    %537 = arith.divf %535, %536 : vector<10x1xf32>
    %538 = vector.broadcast %537 : vector<10x1xf32> to vector<10x64xf32>
    %539 = arith.subf %527, %538 : vector<10x64xf32>
    %540 = arith.mulf %539, %539 : vector<10x64xf32>
    %cst_224 = arith.constant dense<0.000000e+00> : vector<10xf32>
    %541 = vector.multi_reduction <add>, %540, %cst_224 [1] : vector<10x64xf32> to vector<10xf32>
    %542 = vector.shape_cast %541 : vector<10xf32> to vector<10x1xf32>
    %cst_225 = arith.constant 6.400000e+01 : f32
    %543 = vector.broadcast %cst_225 : f32 to vector<10x1xf32>
    %544 = arith.divf %542, %543 : vector<10x1xf32>
    %545 = vector.broadcast %537 : vector<10x1xf32> to vector<10x64xf32>
    %546 = arith.subf %527, %545 : vector<10x64xf32>
    %cst_226 = arith.constant 9.99999974E-6 : f32
    %547 = vector.broadcast %cst_226 : f32 to vector<10x1xf32>
    %548 = arith.addf %544, %547 : vector<10x1xf32>
    %549 = math.rsqrt %548 : vector<10x1xf32>
    %550 = vector.broadcast %549 : vector<10x1xf32> to vector<10x64xf32>
    %551 = arith.mulf %546, %550 : vector<10x64xf32>
    %552 = vector.broadcast %532 : vector<1x64xf32> to vector<10x64xf32>
    %553 = arith.mulf %551, %552 : vector<10x64xf32>
    %554 = vector.broadcast %533 : vector<1x64xf32> to vector<10x64xf32>
    %555 = arith.addf %553, %554 : vector<10x64xf32>
    %c1_227 = arith.constant 1 : index
    %c0_228 = arith.constant 0 : index
    %c0_229 = arith.constant 0 : index
    %556 = vector.load %arg26[%c1_227, %c0_228, %c0_229] : memref<2x64x64xbf16, #tpu.memory_space<vmem>>, vector<1x64x64xbf16>
    %557 = vector.shape_cast %556 : vector<1x64x64xbf16> to vector<64x64xbf16>
    %c1_230 = arith.constant 1 : index
    %c0_231 = arith.constant 0 : index
    %c0_232 = arith.constant 0 : index
    %558 = vector.load %arg27[%c1_230, %c0_231, %c0_232] : memref<2x1x64xbf16, #tpu.memory_space<vmem>>, vector<1x1x64xbf16>
    %559 = vector.shape_cast %558 : vector<1x1x64xbf16> to vector<1x64xbf16>
    %560 = arith.truncf %555 : vector<10x64xf32> to vector<10x64xbf16>
    %cst_233 = arith.constant dense<0.000000e+00> : vector<10x64xf32>
    %561 = tpu.matmul %560, %557, %cst_233 {dimension_numbers = #tpu.dot_dimension_numbers<[1], [0], [0], [1], [0, 0, 1, 1], [], []>} : vector<10x64xbf16>, vector<64x64xbf16>, vector<10x64xf32> -> vector<10x64xf32>
    %562 = arith.extf %559 : vector<1x64xbf16> to vector<1x64xf32>
    %563 = vector.broadcast %562 : vector<1x64xf32> to vector<10x64xf32>
    %564 = arith.addf %561, %563 : vector<10x64xf32>
    %c1_234 = arith.constant 1 : index
    %c0_235 = arith.constant 0 : index
    %c0_236 = arith.constant 0 : index
    %565 = vector.load %arg28[%c1_234, %c0_235, %c0_236] : memref<2x64x128xbf16, #tpu.memory_space<vmem>>, vector<1x64x128xbf16>
    %566 = vector.shape_cast %565 : vector<1x64x128xbf16> to vector<64x128xbf16>
    %c1_237 = arith.constant 1 : index
    %c0_238 = arith.constant 0 : index
    %c0_239 = arith.constant 0 : index
    %567 = vector.load %arg29[%c1_237, %c0_238, %c0_239] : memref<2x1x128xbf16, #tpu.memory_space<vmem>>, vector<1x1x128xbf16>
    %568 = vector.shape_cast %567 : vector<1x1x128xbf16> to vector<1x128xbf16>
    %569 = arith.truncf %52 : vector<21x64xf32> to vector<21x64xbf16>
    %cst_240 = arith.constant dense<0.000000e+00> : vector<21x128xf32>
    %570 = tpu.matmul %569, %566, %cst_240 {dimension_numbers = #tpu.dot_dimension_numbers<[1], [0], [0], [1], [0, 0, 1, 1], [], []>} : vector<21x64xbf16>, vector<64x128xbf16>, vector<21x128xf32> -> vector<21x128xf32>
    %571 = arith.extf %568 : vector<1x128xbf16> to vector<1x128xf32>
    %572 = vector.broadcast %571 : vector<1x128xf32> to vector<21x128xf32>
    %573 = arith.addf %570, %572 : vector<21x128xf32>
    %574 = vector.extract_strided_slice %573 {offsets = [0, 0], sizes = [21, 64], strides = [1, 1]} : vector<21x128xf32> to vector<21x64xf32>
    %575 = vector.extract_strided_slice %573 {offsets = [0, 64], sizes = [21, 64], strides = [1, 1]} : vector<21x128xf32> to vector<21x64xf32>
    %576 = vector.extract_strided_slice %564 {offsets = [0, 0], sizes = [10, 16], strides = [1, 1]} : vector<10x64xf32> to vector<10x16xf32>
    %577 = arith.truncf %576 : vector<10x16xf32> to vector<10x16xbf16>
    %578 = vector.extract_strided_slice %574 {offsets = [0, 0], sizes = [21, 16], strides = [1, 1]} : vector<21x64xf32> to vector<21x16xf32>
    %579 = arith.truncf %578 : vector<21x16xf32> to vector<21x16xbf16>
    %580 = vector.extract_strided_slice %575 {offsets = [0, 0], sizes = [21, 16], strides = [1, 1]} : vector<21x64xf32> to vector<21x16xf32>
    %581 = arith.truncf %580 : vector<21x16xf32> to vector<21x16xbf16>
    "tpu.trace_start"() <{level = 10 : i32, message = "qd,kd->qk"}> : () -> ()
    %cst_241 = arith.constant dense<0.000000e+00> : vector<10x21xf32>
    %582 = tpu.matmul %577, %579, %cst_241 {dimension_numbers = #tpu.dot_dimension_numbers<[1], [1], [0], [0], [0, 0, 1, 0], [], []>} : vector<10x16xbf16>, vector<21x16xbf16>, vector<10x21xf32> -> vector<10x21xf32>
    "tpu.trace_stop"() : () -> ()
    %cst_242 = arith.constant 2.500000e-01 : f32
    %583 = vector.broadcast %cst_242 : f32 to vector<10x21xf32>
    %584 = arith.mulf %582, %583 : vector<10x21xf32>
    %cst_243 = arith.constant dense<0xFF800000> : vector<10xf32>
    %585 = vector.multi_reduction <maximumf>, %584, %cst_243 [1] : vector<10x21xf32> to vector<10xf32>
    %586 = vector.shape_cast %585 : vector<10xf32> to vector<10x1xf32>
    %587 = vector.broadcast %586 : vector<10x1xf32> to vector<10x21xf32>
    %588 = arith.subf %584, %587 : vector<10x21xf32>
    %589 = math.exp %588 : vector<10x21xf32>
    %cst_244 = arith.constant dense<0.000000e+00> : vector<10xf32>
    %590 = vector.multi_reduction <add>, %589, %cst_244 [1] : vector<10x21xf32> to vector<10xf32>
    %591 = vector.shape_cast %590 : vector<10xf32> to vector<10x1xf32>
    %592 = vector.broadcast %591 : vector<10x1xf32> to vector<10x21xf32>
    %593 = arith.divf %589, %592 : vector<10x21xf32>
    %594 = arith.truncf %593 : vector<10x21xf32> to vector<10x21xbf16>
    %cst_245 = arith.constant dense<0.000000e+00> : vector<10x16xf32>
    %595 = tpu.matmul %594, %581, %cst_245 {dimension_numbers = #tpu.dot_dimension_numbers<[1], [0], [0], [1], [0, 0, 1, 1], [], []>} : vector<10x21xbf16>, vector<21x16xbf16>, vector<10x16xf32> -> vector<10x16xf32>
    %596 = vector.extract_strided_slice %564 {offsets = [0, 16], sizes = [10, 16], strides = [1, 1]} : vector<10x64xf32> to vector<10x16xf32>
    %597 = arith.truncf %596 : vector<10x16xf32> to vector<10x16xbf16>
    %598 = vector.extract_strided_slice %574 {offsets = [0, 16], sizes = [21, 16], strides = [1, 1]} : vector<21x64xf32> to vector<21x16xf32>
    %599 = arith.truncf %598 : vector<21x16xf32> to vector<21x16xbf16>
    %600 = vector.extract_strided_slice %575 {offsets = [0, 16], sizes = [21, 16], strides = [1, 1]} : vector<21x64xf32> to vector<21x16xf32>
    %601 = arith.truncf %600 : vector<21x16xf32> to vector<21x16xbf16>
    "tpu.trace_start"() <{level = 10 : i32, message = "qd,kd->qk"}> : () -> ()
    %cst_246 = arith.constant dense<0.000000e+00> : vector<10x21xf32>
    %602 = tpu.matmul %597, %599, %cst_246 {dimension_numbers = #tpu.dot_dimension_numbers<[1], [1], [0], [0], [0, 0, 1, 0], [], []>} : vector<10x16xbf16>, vector<21x16xbf16>, vector<10x21xf32> -> vector<10x21xf32>
    "tpu.trace_stop"() : () -> ()
    %cst_247 = arith.constant 2.500000e-01 : f32
    %603 = vector.broadcast %cst_247 : f32 to vector<10x21xf32>
    %604 = arith.mulf %602, %603 : vector<10x21xf32>
    %cst_248 = arith.constant dense<0xFF800000> : vector<10xf32>
    %605 = vector.multi_reduction <maximumf>, %604, %cst_248 [1] : vector<10x21xf32> to vector<10xf32>
    %606 = vector.shape_cast %605 : vector<10xf32> to vector<10x1xf32>
    %607 = vector.broadcast %606 : vector<10x1xf32> to vector<10x21xf32>
    %608 = arith.subf %604, %607 : vector<10x21xf32>
    %609 = math.exp %608 : vector<10x21xf32>
    %cst_249 = arith.constant dense<0.000000e+00> : vector<10xf32>
    %610 = vector.multi_reduction <add>, %609, %cst_249 [1] : vector<10x21xf32> to vector<10xf32>
    %611 = vector.shape_cast %610 : vector<10xf32> to vector<10x1xf32>
    %612 = vector.broadcast %611 : vector<10x1xf32> to vector<10x21xf32>
    %613 = arith.divf %609, %612 : vector<10x21xf32>
    %614 = arith.truncf %613 : vector<10x21xf32> to vector<10x21xbf16>
    %cst_250 = arith.constant dense<0.000000e+00> : vector<10x16xf32>
    %615 = tpu.matmul %614, %601, %cst_250 {dimension_numbers = #tpu.dot_dimension_numbers<[1], [0], [0], [1], [0, 0, 1, 1], [], []>} : vector<10x21xbf16>, vector<21x16xbf16>, vector<10x16xf32> -> vector<10x16xf32>
    %616 = vector.extract_strided_slice %564 {offsets = [0, 32], sizes = [10, 16], strides = [1, 1]} : vector<10x64xf32> to vector<10x16xf32>
    %617 = arith.truncf %616 : vector<10x16xf32> to vector<10x16xbf16>
    %618 = vector.extract_strided_slice %574 {offsets = [0, 32], sizes = [21, 16], strides = [1, 1]} : vector<21x64xf32> to vector<21x16xf32>
    %619 = arith.truncf %618 : vector<21x16xf32> to vector<21x16xbf16>
    %620 = vector.extract_strided_slice %575 {offsets = [0, 32], sizes = [21, 16], strides = [1, 1]} : vector<21x64xf32> to vector<21x16xf32>
    %621 = arith.truncf %620 : vector<21x16xf32> to vector<21x16xbf16>
    "tpu.trace_start"() <{level = 10 : i32, message = "qd,kd->qk"}> : () -> ()
    %cst_251 = arith.constant dense<0.000000e+00> : vector<10x21xf32>
    %622 = tpu.matmul %617, %619, %cst_251 {dimension_numbers = #tpu.dot_dimension_numbers<[1], [1], [0], [0], [0, 0, 1, 0], [], []>} : vector<10x16xbf16>, vector<21x16xbf16>, vector<10x21xf32> -> vector<10x21xf32>
    "tpu.trace_stop"() : () -> ()
    %cst_252 = arith.constant 2.500000e-01 : f32
    %623 = vector.broadcast %cst_252 : f32 to vector<10x21xf32>
    %624 = arith.mulf %622, %623 : vector<10x21xf32>
    %cst_253 = arith.constant dense<0xFF800000> : vector<10xf32>
    %625 = vector.multi_reduction <maximumf>, %624, %cst_253 [1] : vector<10x21xf32> to vector<10xf32>
    %626 = vector.shape_cast %625 : vector<10xf32> to vector<10x1xf32>
    %627 = vector.broadcast %626 : vector<10x1xf32> to vector<10x21xf32>
    %628 = arith.subf %624, %627 : vector<10x21xf32>
    %629 = math.exp %628 : vector<10x21xf32>
    %cst_254 = arith.constant dense<0.000000e+00> : vector<10xf32>
    %630 = vector.multi_reduction <add>, %629, %cst_254 [1] : vector<10x21xf32> to vector<10xf32>
    %631 = vector.shape_cast %630 : vector<10xf32> to vector<10x1xf32>
    %632 = vector.broadcast %631 : vector<10x1xf32> to vector<10x21xf32>
    %633 = arith.divf %629, %632 : vector<10x21xf32>
    %634 = arith.truncf %633 : vector<10x21xf32> to vector<10x21xbf16>
    %cst_255 = arith.constant dense<0.000000e+00> : vector<10x16xf32>
    %635 = tpu.matmul %634, %621, %cst_255 {dimension_numbers = #tpu.dot_dimension_numbers<[1], [0], [0], [1], [0, 0, 1, 1], [], []>} : vector<10x21xbf16>, vector<21x16xbf16>, vector<10x16xf32> -> vector<10x16xf32>
    %636 = vector.extract_strided_slice %564 {offsets = [0, 48], sizes = [10, 16], strides = [1, 1]} : vector<10x64xf32> to vector<10x16xf32>
    %637 = arith.truncf %636 : vector<10x16xf32> to vector<10x16xbf16>
    %638 = vector.extract_strided_slice %574 {offsets = [0, 48], sizes = [21, 16], strides = [1, 1]} : vector<21x64xf32> to vector<21x16xf32>
    %639 = arith.truncf %638 : vector<21x16xf32> to vector<21x16xbf16>
    %640 = vector.extract_strided_slice %575 {offsets = [0, 48], sizes = [21, 16], strides = [1, 1]} : vector<21x64xf32> to vector<21x16xf32>
    %641 = arith.truncf %640 : vector<21x16xf32> to vector<21x16xbf16>
    "tpu.trace_start"() <{level = 10 : i32, message = "qd,kd->qk"}> : () -> ()
    %cst_256 = arith.constant dense<0.000000e+00> : vector<10x21xf32>
    %642 = tpu.matmul %637, %639, %cst_256 {dimension_numbers = #tpu.dot_dimension_numbers<[1], [1], [0], [0], [0, 0, 1, 0], [], []>} : vector<10x16xbf16>, vector<21x16xbf16>, vector<10x21xf32> -> vector<10x21xf32>
    "tpu.trace_stop"() : () -> ()
    %cst_257 = arith.constant 2.500000e-01 : f32
    %643 = vector.broadcast %cst_257 : f32 to vector<10x21xf32>
    %644 = arith.mulf %642, %643 : vector<10x21xf32>
    %cst_258 = arith.constant dense<0xFF800000> : vector<10xf32>
    %645 = vector.multi_reduction <maximumf>, %644, %cst_258 [1] : vector<10x21xf32> to vector<10xf32>
    %646 = vector.shape_cast %645 : vector<10xf32> to vector<10x1xf32>
    %647 = vector.broadcast %646 : vector<10x1xf32> to vector<10x21xf32>
    %648 = arith.subf %644, %647 : vector<10x21xf32>
    %649 = math.exp %648 : vector<10x21xf32>
    %cst_259 = arith.constant dense<0.000000e+00> : vector<10xf32>
    %650 = vector.multi_reduction <add>, %649, %cst_259 [1] : vector<10x21xf32> to vector<10xf32>
    %651 = vector.shape_cast %650 : vector<10xf32> to vector<10x1xf32>
    %652 = vector.broadcast %651 : vector<10x1xf32> to vector<10x21xf32>
    %653 = arith.divf %649, %652 : vector<10x21xf32>
    %654 = arith.truncf %653 : vector<10x21xf32> to vector<10x21xbf16>
    %cst_260 = arith.constant dense<0.000000e+00> : vector<10x16xf32>
    %655 = tpu.matmul %654, %641, %cst_260 {dimension_numbers = #tpu.dot_dimension_numbers<[1], [0], [0], [1], [0, 0, 1, 1], [], []>} : vector<10x21xbf16>, vector<21x16xbf16>, vector<10x16xf32> -> vector<10x16xf32>
    %656 = tpu.concatenate %595, %615, %635, %655 in 1 : vector<10x16xf32>, vector<10x16xf32>, vector<10x16xf32>, vector<10x16xf32> -> vector<10x64xf32>
    %c1_261 = arith.constant 1 : index
    %c0_262 = arith.constant 0 : index
    %c0_263 = arith.constant 0 : index
    %657 = vector.load %arg30[%c1_261, %c0_262, %c0_263] : memref<2x64x64xbf16, #tpu.memory_space<vmem>>, vector<1x64x64xbf16>
    %658 = vector.shape_cast %657 : vector<1x64x64xbf16> to vector<64x64xbf16>
    %c1_264 = arith.constant 1 : index
    %c0_265 = arith.constant 0 : index
    %c0_266 = arith.constant 0 : index
    %659 = vector.load %arg31[%c1_264, %c0_265, %c0_266] : memref<2x1x64xbf16, #tpu.memory_space<vmem>>, vector<1x1x64xbf16>
    %660 = vector.shape_cast %659 : vector<1x1x64xbf16> to vector<1x64xbf16>
    %661 = arith.truncf %656 : vector<10x64xf32> to vector<10x64xbf16>
    %cst_267 = arith.constant dense<0.000000e+00> : vector<10x64xf32>
    %662 = tpu.matmul %661, %658, %cst_267 {dimension_numbers = #tpu.dot_dimension_numbers<[1], [0], [0], [1], [0, 0, 1, 1], [], []>} : vector<10x64xbf16>, vector<64x64xbf16>, vector<10x64xf32> -> vector<10x64xf32>
    %663 = arith.extf %660 : vector<1x64xbf16> to vector<1x64xf32>
    %664 = vector.broadcast %663 : vector<1x64xf32> to vector<10x64xf32>
    %665 = arith.addf %662, %664 : vector<10x64xf32>
    %666 = arith.addf %527, %665 : vector<10x64xf32>
    %c1_268 = arith.constant 1 : index
    %c0_269 = arith.constant 0 : index
    %c0_270 = arith.constant 0 : index
    %667 = vector.load %arg32[%c1_268, %c0_269, %c0_270] : memref<2x1x64xbf16, #tpu.memory_space<vmem>>, vector<1x1x64xbf16>
    %668 = vector.shape_cast %667 : vector<1x1x64xbf16> to vector<1x64xbf16>
    %c1_271 = arith.constant 1 : index
    %c0_272 = arith.constant 0 : index
    %c0_273 = arith.constant 0 : index
    %669 = vector.load %arg33[%c1_271, %c0_272, %c0_273] : memref<2x1x64xbf16, #tpu.memory_space<vmem>>, vector<1x1x64xbf16>
    %670 = vector.shape_cast %669 : vector<1x1x64xbf16> to vector<1x64xbf16>
    %671 = arith.extf %668 : vector<1x64xbf16> to vector<1x64xf32>
    %672 = arith.extf %670 : vector<1x64xbf16> to vector<1x64xf32>
    %cst_274 = arith.constant dense<0.000000e+00> : vector<10xf32>
    %673 = vector.multi_reduction <add>, %666, %cst_274 [1] : vector<10x64xf32> to vector<10xf32>
    %674 = vector.shape_cast %673 : vector<10xf32> to vector<10x1xf32>
    %cst_275 = arith.constant 6.400000e+01 : f32
    %675 = vector.broadcast %cst_275 : f32 to vector<10x1xf32>
    %676 = arith.divf %674, %675 : vector<10x1xf32>
    %677 = vector.broadcast %676 : vector<10x1xf32> to vector<10x64xf32>
    %678 = arith.subf %666, %677 : vector<10x64xf32>
    %679 = arith.mulf %678, %678 : vector<10x64xf32>
    %cst_276 = arith.constant dense<0.000000e+00> : vector<10xf32>
    %680 = vector.multi_reduction <add>, %679, %cst_276 [1] : vector<10x64xf32> to vector<10xf32>
    %681 = vector.shape_cast %680 : vector<10xf32> to vector<10x1xf32>
    %cst_277 = arith.constant 6.400000e+01 : f32
    %682 = vector.broadcast %cst_277 : f32 to vector<10x1xf32>
    %683 = arith.divf %681, %682 : vector<10x1xf32>
    %684 = vector.broadcast %676 : vector<10x1xf32> to vector<10x64xf32>
    %685 = arith.subf %666, %684 : vector<10x64xf32>
    %cst_278 = arith.constant 9.99999974E-6 : f32
    %686 = vector.broadcast %cst_278 : f32 to vector<10x1xf32>
    %687 = arith.addf %683, %686 : vector<10x1xf32>
    %688 = math.rsqrt %687 : vector<10x1xf32>
    %689 = vector.broadcast %688 : vector<10x1xf32> to vector<10x64xf32>
    %690 = arith.mulf %685, %689 : vector<10x64xf32>
    %691 = vector.broadcast %671 : vector<1x64xf32> to vector<10x64xf32>
    %692 = arith.mulf %690, %691 : vector<10x64xf32>
    %693 = vector.broadcast %672 : vector<1x64xf32> to vector<10x64xf32>
    %694 = arith.addf %692, %693 : vector<10x64xf32>
    %c1_279 = arith.constant 1 : index
    %c0_280 = arith.constant 0 : index
    %c0_281 = arith.constant 0 : index
    %695 = vector.load %arg34[%c1_279, %c0_280, %c0_281] : memref<2x64x256xbf16, #tpu.memory_space<vmem>>, vector<1x64x256xbf16>
    %696 = vector.shape_cast %695 : vector<1x64x256xbf16> to vector<64x256xbf16>
    %c1_282 = arith.constant 1 : index
    %c0_283 = arith.constant 0 : index
    %c0_284 = arith.constant 0 : index
    %697 = vector.load %arg35[%c1_282, %c0_283, %c0_284] : memref<2x1x256xbf16, #tpu.memory_space<vmem>>, vector<1x1x256xbf16>
    %698 = vector.shape_cast %697 : vector<1x1x256xbf16> to vector<1x256xbf16>
    %699 = arith.truncf %694 : vector<10x64xf32> to vector<10x64xbf16>
    %cst_285 = arith.constant dense<0.000000e+00> : vector<10x256xf32>
    %700 = tpu.matmul %699, %696, %cst_285 {dimension_numbers = #tpu.dot_dimension_numbers<[1], [0], [0], [1], [0, 0, 1, 1], [], []>} : vector<10x64xbf16>, vector<64x256xbf16>, vector<10x256xf32> -> vector<10x256xf32>
    %701 = arith.extf %698 : vector<1x256xbf16> to vector<1x256xf32>
    %702 = vector.broadcast %701 : vector<1x256xf32> to vector<10x256xf32>
    %703 = arith.addf %700, %702 : vector<10x256xf32>
    %704 = arith.mulf %703, %703 : vector<10x256xf32>
    %705 = arith.mulf %703, %704 : vector<10x256xf32>
    %cst_286 = arith.constant 4.471500e-02 : f32
    %706 = vector.broadcast %cst_286 : f32 to vector<10x256xf32>
    %707 = arith.mulf %706, %705 : vector<10x256xf32>
    %708 = arith.addf %703, %707 : vector<10x256xf32>
    %cst_287 = arith.constant 0.797884583 : f32
    %709 = vector.broadcast %cst_287 : f32 to vector<10x256xf32>
    %710 = arith.mulf %709, %708 : vector<10x256xf32>
    %711 = math.tanh %710 : vector<10x256xf32>
    %cst_288 = arith.constant 1.000000e+00 : f32
    %712 = vector.broadcast %cst_288 : f32 to vector<10x256xf32>
    %713 = arith.addf %712, %711 : vector<10x256xf32>
    %cst_289 = arith.constant 5.000000e-01 : f32
    %714 = vector.broadcast %cst_289 : f32 to vector<10x256xf32>
    %715 = arith.mulf %714, %713 : vector<10x256xf32>
    %716 = arith.mulf %703, %715 : vector<10x256xf32>
    %c1_290 = arith.constant 1 : index
    %c0_291 = arith.constant 0 : index
    %c0_292 = arith.constant 0 : index
    %717 = vector.load %arg36[%c1_290, %c0_291, %c0_292] : memref<2x256x64xbf16, #tpu.memory_space<vmem>>, vector<1x256x64xbf16>
    %718 = vector.shape_cast %717 : vector<1x256x64xbf16> to vector<256x64xbf16>
    %c1_293 = arith.constant 1 : index
    %c0_294 = arith.constant 0 : index
    %c0_295 = arith.constant 0 : index
    %719 = vector.load %arg37[%c1_293, %c0_294, %c0_295] : memref<2x1x64xbf16, #tpu.memory_space<vmem>>, vector<1x1x64xbf16>
    %720 = vector.shape_cast %719 : vector<1x1x64xbf16> to vector<1x64xbf16>
    %721 = arith.truncf %716 : vector<10x256xf32> to vector<10x256xbf16>
    %cst_296 = arith.constant dense<0.000000e+00> : vector<10x64xf32>
    %722 = tpu.matmul %721, %718, %cst_296 {dimension_numbers = #tpu.dot_dimension_numbers<[1], [0], [0], [1], [0, 0, 1, 1], [], []>} : vector<10x256xbf16>, vector<256x64xbf16>, vector<10x64xf32> -> vector<10x64xf32>
    %723 = arith.extf %720 : vector<1x64xbf16> to vector<1x64xf32>
    %724 = vector.broadcast %723 : vector<1x64xf32> to vector<10x64xf32>
    %725 = arith.addf %722, %724 : vector<10x64xf32>
    %726 = arith.addf %666, %725 : vector<10x64xf32>
    %c0_297 = arith.constant 0 : index
    %c0_298 = arith.constant 0 : index
    %727 = vector.load %arg38[%c0_297, %c0_298] : memref<1x64xbf16, #tpu.memory_space<vmem>>, vector<1x64xbf16>
    %c0_299 = arith.constant 0 : index
    %c0_300 = arith.constant 0 : index
    %728 = vector.load %arg39[%c0_299, %c0_300] : memref<1x64xbf16, #tpu.memory_space<vmem>>, vector<1x64xbf16>
    %729 = arith.extf %727 : vector<1x64xbf16> to vector<1x64xf32>
    %730 = arith.extf %728 : vector<1x64xbf16> to vector<1x64xf32>
    %cst_301 = arith.constant dense<0.000000e+00> : vector<10xf32>
    %731 = vector.multi_reduction <add>, %726, %cst_301 [1] : vector<10x64xf32> to vector<10xf32>
    %732 = vector.shape_cast %731 : vector<10xf32> to vector<10x1xf32>
    %cst_302 = arith.constant 6.400000e+01 : f32
    %733 = vector.broadcast %cst_302 : f32 to vector<10x1xf32>
    %734 = arith.divf %732, %733 : vector<10x1xf32>
    %735 = vector.broadcast %734 : vector<10x1xf32> to vector<10x64xf32>
    %736 = arith.subf %726, %735 : vector<10x64xf32>
    %737 = arith.mulf %736, %736 : vector<10x64xf32>
    %cst_303 = arith.constant dense<0.000000e+00> : vector<10xf32>
    %738 = vector.multi_reduction <add>, %737, %cst_303 [1] : vector<10x64xf32> to vector<10xf32>
    %739 = vector.shape_cast %738 : vector<10xf32> to vector<10x1xf32>
    %cst_304 = arith.constant 6.400000e+01 : f32
    %740 = vector.broadcast %cst_304 : f32 to vector<10x1xf32>
    %741 = arith.divf %739, %740 : vector<10x1xf32>
    %742 = vector.broadcast %734 : vector<10x1xf32> to vector<10x64xf32>
    %743 = arith.subf %726, %742 : vector<10x64xf32>
    %cst_305 = arith.constant 9.99999974E-6 : f32
    %744 = vector.broadcast %cst_305 : f32 to vector<10x1xf32>
    %745 = arith.addf %741, %744 : vector<10x1xf32>
    %746 = math.rsqrt %745 : vector<10x1xf32>
    %747 = vector.broadcast %746 : vector<10x1xf32> to vector<10x64xf32>
    %748 = arith.mulf %743, %747 : vector<10x64xf32>
    %749 = vector.broadcast %729 : vector<1x64xf32> to vector<10x64xf32>
    %750 = arith.mulf %748, %749 : vector<10x64xf32>
    %751 = vector.broadcast %730 : vector<1x64xf32> to vector<10x64xf32>
    %752 = arith.addf %750, %751 : vector<10x64xf32>
    %c0_306 = arith.constant 0 : index
    %c0_307 = arith.constant 0 : index
    %753 = vector.load %arg40[%c0_306, %c0_307] : memref<64x64xbf16, #tpu.memory_space<vmem>>, vector<64x64xbf16>
    %c0_308 = arith.constant 0 : index
    %c0_309 = arith.constant 0 : index
    %754 = vector.load %arg41[%c0_308, %c0_309] : memref<1x64xbf16, #tpu.memory_space<vmem>>, vector<1x64xbf16>
    %755 = arith.truncf %752 : vector<10x64xf32> to vector<10x64xbf16>
    %cst_310 = arith.constant dense<0.000000e+00> : vector<10x64xf32>
    %756 = tpu.matmul %755, %753, %cst_310 {dimension_numbers = #tpu.dot_dimension_numbers<[1], [0], [0], [1], [0, 0, 1, 1], [], []>} : vector<10x64xbf16>, vector<64x64xbf16>, vector<10x64xf32> -> vector<10x64xf32>
    %757 = arith.extf %754 : vector<1x64xbf16> to vector<1x64xf32>
    %758 = vector.broadcast %757 : vector<1x64xf32> to vector<10x64xf32>
    %759 = arith.addf %756, %758 : vector<10x64xf32>
    %c0_311 = arith.constant 0 : index
    %c0_312 = arith.constant 0 : index
    %c0_313 = arith.constant 0 : index
    %760 = vector.load %arg44[%c0_311, %c0_312, %c0_313] : memref<1x10x64xf32, #tpu.memory_space<vmem>>, vector<1x10x64xf32>
    %761 = vector.shape_cast %760 : vector<1x10x64xf32> to vector<10x64xf32>
    %762 = vector.shape_cast %759 : vector<10x64xf32> to vector<1x10x64xf32>
    tpu.vector_store %arg44[%c0_311, %c0_312, %c0_313], %762 {strides = array<i32>} : memref<1x10x64xf32, #tpu.memory_space<vmem>>, vector<1x10x64xf32>,
    %c0_314 = arith.constant 0 : index
    %c0_315 = arith.constant 0 : index
    %763 = vector.load %arg42[%c0_314, %c0_315] : memref<64x4xbf16, #tpu.memory_space<vmem>>, vector<64x4xbf16>
    %c0_316 = arith.constant 0 : index
    %c0_317 = arith.constant 0 : index
    %764 = vector.load %arg43[%c0_316, %c0_317] : memref<1x4xbf16, #tpu.memory_space<vmem>>, vector<1x4xbf16>
    %765 = arith.truncf %759 : vector<10x64xf32> to vector<10x64xbf16>
    %cst_318 = arith.constant dense<0.000000e+00> : vector<10x4xf32>
    %766 = tpu.matmul %765, %763, %cst_318 {dimension_numbers = #tpu.dot_dimension_numbers<[1], [0], [0], [1], [0, 0, 1, 1], [], []>} : vector<10x64xbf16>, vector<64x4xbf16>, vector<10x4xf32> -> vector<10x4xf32>
    %767 = arith.extf %764 : vector<1x4xbf16> to vector<1x4xf32>
    %768 = vector.broadcast %767 : vector<1x4xf32> to vector<10x4xf32>
    %769 = arith.addf %766, %768 : vector<10x4xf32>
    %c0_319 = arith.constant 0 : index
    %c0_320 = arith.constant 0 : index
    %c0_321 = arith.constant 0 : index
    %770 = vector.load %arg45[%c0_319, %c0_320, %c0_321] : memref<1x10x4xf32, #tpu.memory_space<vmem>>, vector<1x10x4xf32>
    %771 = vector.shape_cast %770 : vector<1x10x4xf32> to vector<10x4xf32>
    %772 = vector.shape_cast %769 : vector<10x4xf32> to vector<1x10x4xf32>
    tpu.vector_store %arg45[%c0_319, %c0_320, %c0_321], %772 {strides = array<i32>} : memref<1x10x4xf32, #tpu.memory_space<vmem>>, vector<1x10x4xf32>,
    return
  }
  func.func @transform_0(%arg0: i32) -> (i32, i32, i32) {
    %c0_i32 = arith.constant 0 : i32
    %c0_i32_0 = arith.constant 0 : i32
    %c0_i32_1 = arith.constant 0 : i32
    return %arg0, %c0_i32, %c0_i32_0 : i32, i32, i32
  }
  func.func @transform_1(%arg0: i32) -> (i32, i32, i32) {
    %c0_i32 = arith.constant 0 : i32
    %c0_i32_0 = arith.constant 0 : i32
    %c0_i32_1 = arith.constant 0 : i32
    return %arg0, %c0_i32, %c0_i32_0 : i32, i32, i32
  }
  func.func @transform_2(%arg0: i32) -> (i32, i32, i32) {
    %c0_i32 = arith.constant 0 : i32
    %c0_i32_0 = arith.constant 0 : i32
    %c0_i32_1 = arith.constant 0 : i32
    return %arg0, %c0_i32, %c0_i32_0 : i32, i32, i32
  }
  func.func @transform_3(%arg0: i32) -> (i32, i32, i32) {
    %c0_i32 = arith.constant 0 : i32
    %c0_i32_0 = arith.constant 0 : i32
    %c0_i32_1 = arith.constant 0 : i32
    return %arg0, %c0_i32, %c0_i32_0 : i32, i32, i32
  }
  func.func @transform_4(%arg0: i32) -> (i32, i32, i32) {
    %c0_i32 = arith.constant 0 : i32
    %c0_i32_0 = arith.constant 0 : i32
    %c0_i32_1 = arith.constant 0 : i32
    return %arg0, %c0_i32, %c0_i32_0 : i32, i32, i32
  }
  func.func @transform_5(%arg0: i32) -> (i32, i32, i32) {
    %c0_i32 = arith.constant 0 : i32
    %c0_i32_0 = arith.constant 0 : i32
    %c0_i32_1 = arith.constant 0 : i32
    return %arg0, %c0_i32, %c0_i32_0 : i32, i32, i32
  }
  func.func @transform_6(%arg0: i32) -> (i32, i32, i32) {
    %c0_i32 = arith.constant 0 : i32
    %c0_i32_0 = arith.constant 0 : i32
    %c0_i32_1 = arith.constant 0 : i32
    return %arg0, %c0_i32, %c0_i32_0 : i32, i32, i32
  }
  func.func @transform_7(%arg0: i32) -> (i32, i32, i32) {
    %c0_i32 = arith.constant 0 : i32
    %c0_i32_0 = arith.constant 0 : i32
    %c0_i32_1 = arith.constant 0 : i32
    return %arg0, %c0_i32, %c0_i32_0 : i32, i32, i32
  }
  func.func @transform_8(%arg0: i32) -> (i32, i32) {
    %c0_i32 = arith.constant 0 : i32
    %c0_i32_0 = arith.constant 0 : i32
    %c0_i32_1 = arith.constant 0 : i32
    return %c0_i32, %c0_i32_0 : i32, i32
  }
  func.func @transform_9(%arg0: i32) -> (i32, i32) {
    %c0_i32 = arith.constant 0 : i32
    %c0_i32_0 = arith.constant 0 : i32
    %c0_i32_1 = arith.constant 0 : i32
    return %c0_i32, %c0_i32_0 : i32, i32
  }
  func.func @transform_10(%arg0: i32) -> (i32, i32) {
    %c0_i32 = arith.constant 0 : i32
    %c0_i32_0 = arith.constant 0 : i32
    %c0_i32_1 = arith.constant 0 : i32
    return %c0_i32, %c0_i32_0 : i32, i32
  }
  func.func @transform_11(%arg0: i32) -> (i32, i32) {
    %c0_i32 = arith.constant 0 : i32
    %c0_i32_0 = arith.constant 0 : i32
    %c0_i32_1 = arith.constant 0 : i32
    return %c0_i32, %c0_i32_0 : i32, i32
  }
  func.func @transform_12(%arg0: i32) -> (i32, i32) {
    %c0_i32 = arith.constant 0 : i32
    %c0_i32_0 = arith.constant 0 : i32
    %c0_i32_1 = arith.constant 0 : i32
    return %c0_i32, %c0_i32_0 : i32, i32
  }
  func.func @transform_13(%arg0: i32) -> (i32, i32) {
    %c0_i32 = arith.constant 0 : i32
    %c0_i32_0 = arith.constant 0 : i32
    %c0_i32_1 = arith.constant 0 : i32
    return %c0_i32, %c0_i32_0 : i32, i32
  }
  func.func @transform_14(%arg0: i32) -> (i32, i32) {
    %c0_i32 = arith.constant 0 : i32
    %c0_i32_0 = arith.constant 0 : i32
    %c0_i32_1 = arith.constant 0 : i32
    return %c0_i32, %c0_i32_0 : i32, i32
  }
  func.func @transform_15(%arg0: i32) -> (i32, i32) {
    %c0_i32 = arith.constant 0 : i32
    %c0_i32_0 = arith.constant 0 : i32
    %c0_i32_1 = arith.constant 0 : i32
    return %c0_i32, %c0_i32_0 : i32, i32
  }
  func.func @transform_16(%arg0: i32) -> (i32, i32) {
    %c0_i32 = arith.constant 0 : i32
    %c0_i32_0 = arith.constant 0 : i32
    %c0_i32_1 = arith.constant 0 : i32
    return %c0_i32, %c0_i32_0 : i32, i32
  }
  func.func @transform_17(%arg0: i32) -> (i32, i32, i32) {
    %c0_i32 = arith.constant 0 : i32
    %c0_i32_0 = arith.constant 0 : i32
    %c0_i32_1 = arith.constant 0 : i32
    %c0_i32_2 = arith.constant 0 : i32
    return %c0_i32, %c0_i32_0, %c0_i32_1 : i32, i32, i32
  }
  func.func @transform_18(%arg0: i32) -> (i32, i32, i32) {
    %c0_i32 = arith.constant 0 : i32
    %c0_i32_0 = arith.constant 0 : i32
    %c0_i32_1 = arith.constant 0 : i32
    %c0_i32_2 = arith.constant 0 : i32
    return %c0_i32, %c0_i32_0, %c0_i32_1 : i32, i32, i32
  }
  func.func @transform_19(%arg0: i32) -> (i32, i32, i32) {
    %c0_i32 = arith.constant 0 : i32
    %c0_i32_0 = arith.constant 0 : i32
    %c0_i32_1 = arith.constant 0 : i32
    %c0_i32_2 = arith.constant 0 : i32
    return %c0_i32, %c0_i32_0, %c0_i32_1 : i32, i32, i32
  }
  func.func @transform_20(%arg0: i32) -> (i32, i32, i32) {
    %c0_i32 = arith.constant 0 : i32
    %c0_i32_0 = arith.constant 0 : i32
    %c0_i32_1 = arith.constant 0 : i32
    %c0_i32_2 = arith.constant 0 : i32
    return %c0_i32, %c0_i32_0, %c0_i32_1 : i32, i32, i32
  }
  func.func @transform_21(%arg0: i32) -> (i32, i32, i32) {
    %c0_i32 = arith.constant 0 : i32
    %c0_i32_0 = arith.constant 0 : i32
    %c0_i32_1 = arith.constant 0 : i32
    %c0_i32_2 = arith.constant 0 : i32
    return %c0_i32, %c0_i32_0, %c0_i32_1 : i32, i32, i32
  }
  func.func @transform_22(%arg0: i32) -> (i32, i32, i32) {
    %c0_i32 = arith.constant 0 : i32
    %c0_i32_0 = arith.constant 0 : i32
    %c0_i32_1 = arith.constant 0 : i32
    %c0_i32_2 = arith.constant 0 : i32
    return %c0_i32, %c0_i32_0, %c0_i32_1 : i32, i32, i32
  }
  func.func @transform_23(%arg0: i32) -> (i32, i32, i32) {
    %c0_i32 = arith.constant 0 : i32
    %c0_i32_0 = arith.constant 0 : i32
    %c0_i32_1 = arith.constant 0 : i32
    %c0_i32_2 = arith.constant 0 : i32
    return %c0_i32, %c0_i32_0, %c0_i32_1 : i32, i32, i32
  }
  func.func @transform_24(%arg0: i32) -> (i32, i32, i32) {
    %c0_i32 = arith.constant 0 : i32
    %c0_i32_0 = arith.constant 0 : i32
    %c0_i32_1 = arith.constant 0 : i32
    %c0_i32_2 = arith.constant 0 : i32
    return %c0_i32, %c0_i32_0, %c0_i32_1 : i32, i32, i32
  }
  func.func @transform_25(%arg0: i32) -> (i32, i32, i32) {
    %c0_i32 = arith.constant 0 : i32
    %c0_i32_0 = arith.constant 0 : i32
    %c0_i32_1 = arith.constant 0 : i32
    %c0_i32_2 = arith.constant 0 : i32
    return %c0_i32, %c0_i32_0, %c0_i32_1 : i32, i32, i32
  }
  func.func @transform_26(%arg0: i32) -> (i32, i32, i32) {
    %c0_i32 = arith.constant 0 : i32
    %c0_i32_0 = arith.constant 0 : i32
    %c0_i32_1 = arith.constant 0 : i32
    %c0_i32_2 = arith.constant 0 : i32
    return %c0_i32, %c0_i32_0, %c0_i32_1 : i32, i32, i32
  }
  func.func @transform_27(%arg0: i32) -> (i32, i32, i32) {
    %c0_i32 = arith.constant 0 : i32
    %c0_i32_0 = arith.constant 0 : i32
    %c0_i32_1 = arith.constant 0 : i32
    %c0_i32_2 = arith.constant 0 : i32
    return %c0_i32, %c0_i32_0, %c0_i32_1 : i32, i32, i32
  }
  func.func @transform_28(%arg0: i32) -> (i32, i32, i32) {
    %c0_i32 = arith.constant 0 : i32
    %c0_i32_0 = arith.constant 0 : i32
    %c0_i32_1 = arith.constant 0 : i32
    %c0_i32_2 = arith.constant 0 : i32
    return %c0_i32, %c0_i32_0, %c0_i32_1 : i32, i32, i32
  }
  func.func @transform_29(%arg0: i32) -> (i32, i32, i32) {
    %c0_i32 = arith.constant 0 : i32
    %c0_i32_0 = arith.constant 0 : i32
    %c0_i32_1 = arith.constant 0 : i32
    %c0_i32_2 = arith.constant 0 : i32
    return %c0_i32, %c0_i32_0, %c0_i32_1 : i32, i32, i32
  }
  func.func @transform_30(%arg0: i32) -> (i32, i32, i32) {
    %c0_i32 = arith.constant 0 : i32
    %c0_i32_0 = arith.constant 0 : i32
    %c0_i32_1 = arith.constant 0 : i32
    %c0_i32_2 = arith.constant 0 : i32
    return %c0_i32, %c0_i32_0, %c0_i32_1 : i32, i32, i32
  }
  func.func @transform_31(%arg0: i32) -> (i32, i32, i32) {
    %c0_i32 = arith.constant 0 : i32
    %c0_i32_0 = arith.constant 0 : i32
    %c0_i32_1 = arith.constant 0 : i32
    %c0_i32_2 = arith.constant 0 : i32
    return %c0_i32, %c0_i32_0, %c0_i32_1 : i32, i32, i32
  }
  func.func @transform_32(%arg0: i32) -> (i32, i32, i32) {
    %c0_i32 = arith.constant 0 : i32
    %c0_i32_0 = arith.constant 0 : i32
    %c0_i32_1 = arith.constant 0 : i32
    %c0_i32_2 = arith.constant 0 : i32
    return %c0_i32, %c0_i32_0, %c0_i32_1 : i32, i32, i32
  }
  func.func @transform_33(%arg0: i32) -> (i32, i32, i32) {
    %c0_i32 = arith.constant 0 : i32
    %c0_i32_0 = arith.constant 0 : i32
    %c0_i32_1 = arith.constant 0 : i32
    %c0_i32_2 = arith.constant 0 : i32
    return %c0_i32, %c0_i32_0, %c0_i32_1 : i32, i32, i32
  }
  func.func @transform_34(%arg0: i32) -> (i32, i32, i32) {
    %c0_i32 = arith.constant 0 : i32
    %c0_i32_0 = arith.constant 0 : i32
    %c0_i32_1 = arith.constant 0 : i32
    %c0_i32_2 = arith.constant 0 : i32
    return %c0_i32, %c0_i32_0, %c0_i32_1 : i32, i32, i32
  }
  func.func @transform_35(%arg0: i32) -> (i32, i32, i32) {
    %c0_i32 = arith.constant 0 : i32
    %c0_i32_0 = arith.constant 0 : i32
    %c0_i32_1 = arith.constant 0 : i32
    %c0_i32_2 = arith.constant 0 : i32
    return %c0_i32, %c0_i32_0, %c0_i32_1 : i32, i32, i32
  }
  func.func @transform_36(%arg0: i32) -> (i32, i32, i32) {
    %c0_i32 = arith.constant 0 : i32
    %c0_i32_0 = arith.constant 0 : i32
    %c0_i32_1 = arith.constant 0 : i32
    %c0_i32_2 = arith.constant 0 : i32
    return %c0_i32, %c0_i32_0, %c0_i32_1 : i32, i32, i32
  }
  func.func @transform_37(%arg0: i32) -> (i32, i32) {
    %c0_i32 = arith.constant 0 : i32
    %c0_i32_0 = arith.constant 0 : i32
    %c0_i32_1 = arith.constant 0 : i32
    return %c0_i32, %c0_i32_0 : i32, i32
  }
  func.func @transform_38(%arg0: i32) -> (i32, i32) {
    %c0_i32 = arith.constant 0 : i32
    %c0_i32_0 = arith.constant 0 : i32
    %c0_i32_1 = arith.constant 0 : i32
    return %c0_i32, %c0_i32_0 : i32, i32
  }
  func.func @transform_39(%arg0: i32) -> (i32, i32) {
    %c0_i32 = arith.constant 0 : i32
    %c0_i32_0 = arith.constant 0 : i32
    %c0_i32_1 = arith.constant 0 : i32
    return %c0_i32, %c0_i32_0 : i32, i32
  }
  func.func @transform_40(%arg0: i32) -> (i32, i32) {
    %c0_i32 = arith.constant 0 : i32
    %c0_i32_0 = arith.constant 0 : i32
    %c0_i32_1 = arith.constant 0 : i32
    return %c0_i32, %c0_i32_0 : i32, i32
  }
  func.func @transform_41(%arg0: i32) -> (i32, i32) {
    %c0_i32 = arith.constant 0 : i32
    %c0_i32_0 = arith.constant 0 : i32
    %c0_i32_1 = arith.constant 0 : i32
    return %c0_i32, %c0_i32_0 : i32, i32
  }
  func.func @transform_42(%arg0: i32) -> (i32, i32) {
    %c0_i32 = arith.constant 0 : i32
    %c0_i32_0 = arith.constant 0 : i32
    %c0_i32_1 = arith.constant 0 : i32
    return %c0_i32, %c0_i32_0 : i32, i32
  }
  func.func @transform_43(%arg0: i32) -> (i32, i32, i32) {
    %c0_i32 = arith.constant 0 : i32
    %c0_i32_0 = arith.constant 0 : i32
    %c0_i32_1 = arith.constant 0 : i32
    return %arg0, %c0_i32, %c0_i32_0 : i32, i32, i32
  }
  func.func @transform_44(%arg0: i32) -> (i32, i32, i32) {
    %c0_i32 = arith.constant 0 : i32
    %c0_i32_0 = arith.constant 0 : i32
    %c0_i32_1 = arith.constant 0 : i32
    return %arg0, %c0_i32, %c0_i32_0 : i32, i32, i32
  }
}

</mosaic_0001>

<llo_original>
// kernel: diffusion_transition_forward.1
$region0: #{diffusion_transition_forward.1}
  #allocation0 [shape = 'u32[]', space=smem, size = 0x4, offset = 0x4, fixed_abs, tag = 'smem constant byte address 0x4 - core index']
  #allocation1 [shape = 'u32[144,128]{1,0:T(1,128)}', space=vmem, size = 0x12000, scoped, tag = 'internal scratch']
  %s0 = inlined_call_operand.smem [shape: u32[45], index: -1, kind: input, shape index: {}]
  %s1 = sld [smem:[%s0]]
  %s2 = scalar_lea.smem %s0, 1
  %s3 = sld [smem:[%s2]]
  %s4 = scalar_lea.smem %s0, 2
  %s5 = sld [smem:[%s4]]
  %s6 = scalar_lea.smem %s0, 3
  %s7 = sld [smem:[%s6]]
  %s8 = scalar_lea.smem %s0, 4
  %s9 = sld [smem:[%s8]]
  %s10 = scalar_lea.smem %s0, 5
  %s11 = sld [smem:[%s10]]
  %s12 = scalar_lea.smem %s0, 6
  %s13 = sld [smem:[%s12]]
  %s14 = scalar_lea.smem %s0, 7
  %s15 = sld [smem:[%s14]]
  %s16 = scalar_lea.smem %s0, 8
  %s17 = sld [smem:[%s16]]
  %s18 = scalar_lea.smem %s0, 9
  %s19 = sld [smem:[%s18]]
  %s20 = scalar_lea.smem %s0, 10
  %s21 = sld [smem:[%s20]]
  %s22 = scalar_lea.smem %s0, 11
  %s23 = sld [smem:[%s22]]
  %s24 = scalar_lea.smem %s0, 12
  %s25 = sld [smem:[%s24]]
  %s26 = scalar_lea.smem %s0, 13
  %s27 = sld [smem:[%s26]]
  %s28 = scalar_lea.smem %s0, 14
  %s29 = sld [smem:[%s28]]
  %s30 = scalar_lea.smem %s0, 15
  %s31 = sld [smem:[%s30]]
  %s32 = scalar_lea.smem %s0, 16
  %s33 = sld [smem:[%s32]]
  %s34 = scalar_lea.smem %s0, 17
  %s35 = sld [smem:[%s34]]
  %s36 = scalar_lea.smem %s0, 18
  %s37 = sld [smem:[%s36]]
  %s38 = scalar_lea.smem %s0, 19
  %s39 = sld [smem:[%s38]]
  %s40 = scalar_lea.smem %s0, 20
  %s41 = sld [smem:[%s40]]
  %s42 = scalar_lea.smem %s0, 21
  %s43 = sld [smem:[%s42]]
  %s44 = scalar_lea.smem %s0, 22
  %s45 = sld [smem:[%s44]]
  %s46 = scalar_lea.smem %s0, 23
  %s47 = sld [smem:[%s46]]
  %s48 = scalar_lea.smem %s0, 24
  %s49 = sld [smem:[%s48]]
  %s50 = scalar_lea.smem %s0, 25
  %s51 = sld [smem:[%s50]]
  %s52 = scalar_lea.smem %s0, 26
  %s53 = sld [smem:[%s52]]
  %s54 = scalar_lea.smem %s0, 27
  %s55 = sld [smem:[%s54]]
  %s56 = scalar_lea.smem %s0, 28
  %s57 = sld [smem:[%s56]]
  %s58 = scalar_lea.smem %s0, 29
  %s59 = sld [smem:[%s58]]
  %s60 = scalar_lea.smem %s0, 30
  %s61 = sld [smem:[%s60]]
  %s62 = scalar_lea.smem %s0, 31
  %s63 = sld [smem:[%s62]]
  %s64 = scalar_lea.smem %s0, 32
  %s65 = sld [smem:[%s64]]
  %s66 = scalar_lea.smem %s0, 33
  %s67 = sld [smem:[%s66]]
  %s68 = scalar_lea.smem %s0, 34
  %s69 = sld [smem:[%s68]]
  %s70 = scalar_lea.smem %s0, 35
  %s71 = sld [smem:[%s70]]
  %s72 = scalar_lea.smem %s0, 36
  %s73 = sld [smem:[%s72]]
  %s74 = scalar_lea.smem %s0, 37
  %s75 = sld [smem:[%s74]]
  %s76 = scalar_lea.smem %s0, 38
  %s77 = sld [smem:[%s76]]
  %s78 = scalar_lea.smem %s0, 39
  %s79 = sld [smem:[%s78]]
  %s80 = scalar_lea.smem %s0, 40
  %s81 = sld [smem:[%s80]]
  %s82 = scalar_lea.smem %s0, 41
  %s83 = sld [smem:[%s82]]
  %s84 = scalar_lea.smem %s0, 42
  %s85 = sld [smem:[%s84]]
  %s86 = scalar_lea.smem %s0, 43
  %s87 = sld [smem:[%s86]]
  %s88 = scalar_lea.smem %s0, 44
  %s89 = sld [smem:[%s88]]
  %90 = xla_tuple %s87, %s89
  %s91 = sld [smem:[#allocation0]]
  $region213: #{diffusion_transition_forward.1} parent=0
    _
  %s93 = ssub.s32 1, %s91
  %s94 = scalar_select 0, %s93, %s91
  loop: start=0, step=1, limit=4
  $region2: #{diffusion_transition_forward.1} parent=0 // loop_pre_header
    _
  $region3: #{diffusion_transition_forward.1} parent=0 // loop_header
    %s96 = sphi 0, %s100
    %p97 = scmp.ge.s32.totalorder %s96, 4
    %s106 = sphi 0, %s108
    %s109 = sphi 0, %s106
    %s110 = sphi 0, %s109
    %s126 = sphi 0, %s110
    %s132 = sphi 0, %s134
    %s135 = sphi 0, %s132
    %s136 = sphi 0, %s135
    %s152 = sphi 0, %s136
    %s158 = sphi 0, %s160
    %s161 = sphi 0, %s158
    %s162 = sphi 0, %s161
    %s178 = sphi 0, %s162
    %s184 = sphi 0, %s186
    %s187 = sphi 0, %s184
    %s188 = sphi 0, %s187
    %s204 = sphi 0, %s188
    %s210 = sphi 0, %s212
    %s213 = sphi 0, %s210
    %s214 = sphi 0, %s213
    %s230 = sphi 0, %s214
    %s236 = sphi 0, %s238
    %s239 = sphi 0, %s236
    %s240 = sphi 0, %s239
    %s256 = sphi 0, %s240
    %s262 = sphi 0, %s264
    %s265 = sphi 0, %s262
    %s266 = sphi 0, %s265
    %s282 = sphi 0, %s266
    %s288 = sphi 0, %s290
    %s291 = sphi 0, %s288
    %s292 = sphi 0, %s291
    %s308 = sphi 0, %s292
    %s312 = sphi 0, %s312
    %s314 = sphi 0, %s312
    %s315 = sphi 0, %s314
    %s329 = sphi 0, %s315
    %s333 = sphi 0, %s333
    %s335 = sphi 0, %s333
    %s336 = sphi 0, %s335
    %s350 = sphi 0, %s336
    %s354 = sphi 0, %s354
    %s356 = sphi 0, %s354
    %s357 = sphi 0, %s356
    %s371 = sphi 0, %s357
    %s375 = sphi 0, %s375
    %s377 = sphi 0, %s375
    %s378 = sphi 0, %s377
    %s392 = sphi 0, %s378
    %s396 = sphi 0, %s396
    %s398 = sphi 0, %s396
    %s399 = sphi 0, %s398
    %s413 = sphi 0, %s399
    %s417 = sphi 0, %s417
    %s419 = sphi 0, %s417
    %s420 = sphi 0, %s419
    %s434 = sphi 0, %s420
    %s438 = sphi 0, %s438
    %s440 = sphi 0, %s438
    %s441 = sphi 0, %s440
    %s455 = sphi 0, %s441
    %s459 = sphi 0, %s459
    %s461 = sphi 0, %s459
    %s462 = sphi 0, %s461
    %s476 = sphi 0, %s462
    %s480 = sphi 0, %s480
    %s482 = sphi 0, %s480
    %s483 = sphi 0, %s482
    %s497 = sphi 0, %s483
    %s501 = sphi 0, %s501
    %s503 = sphi 0, %s501
    %s504 = sphi 0, %s503
    %s518 = sphi 0, %s504
    %s522 = sphi 0, %s522
    %s524 = sphi 0, %s522
    %s525 = sphi 0, %s524
    %s539 = sphi 0, %s525
    %s543 = sphi 0, %s543
    %s545 = sphi 0, %s543
    %s546 = sphi 0, %s545
    %s560 = sphi 0, %s546
    %s564 = sphi 0, %s564
    %s566 = sphi 0, %s564
    %s567 = sphi 0, %s566
    %s581 = sphi 0, %s567
    %s585 = sphi 0, %s585
    %s587 = sphi 0, %s585
    %s588 = sphi 0, %s587
    %s602 = sphi 0, %s588
    %s606 = sphi 0, %s606
    %s608 = sphi 0, %s606
    %s609 = sphi 0, %s608
    %s623 = sphi 0, %s609
    %s627 = sphi 0, %s627
    %s629 = sphi 0, %s627
    %s630 = sphi 0, %s629
    %s644 = sphi 0, %s630
    %s648 = sphi 0, %s648
    %s650 = sphi 0, %s648
    %s651 = sphi 0, %s650
    %s665 = sphi 0, %s651
    %s669 = sphi 0, %s669
    %s671 = sphi 0, %s669
    %s672 = sphi 0, %s671
    %s686 = sphi 0, %s672
    %s690 = sphi 0, %s690
    %s692 = sphi 0, %s690
    %s693 = sphi 0, %s692
    %s707 = sphi 0, %s693
    %s711 = sphi 0, %s711
    %s713 = sphi 0, %s711
    %s714 = sphi 0, %s713
    %s728 = sphi 0, %s714
    %s732 = sphi 0, %s732
    %s734 = sphi 0, %s732
    %s735 = sphi 0, %s734
    %s749 = sphi 0, %s735
    %s753 = sphi 0, %s753
    %s755 = sphi 0, %s753
    %s756 = sphi 0, %s755
    %s770 = sphi 0, %s756
    %s774 = sphi 0, %s774
    %s776 = sphi 0, %s774
    %s777 = sphi 0, %s776
    %s791 = sphi 0, %s777
    %s795 = sphi 0, %s795
    %s797 = sphi 0, %s795
    %s798 = sphi 0, %s797
    %s812 = sphi 0, %s798
    %s816 = sphi 0, %s816
    %s818 = sphi 0, %s816
    %s819 = sphi 0, %s818
    %s833 = sphi 0, %s819
    %s837 = sphi 0, %s837
    %s839 = sphi 0, %s837
    %s840 = sphi 0, %s839
    %s854 = sphi 0, %s840
    %s858 = sphi 0, %s858
    %s860 = sphi 0, %s858
    %s861 = sphi 0, %s860
    %s875 = sphi 0, %s861
    %s879 = sphi 0, %s879
    %s881 = sphi 0, %s879
    %s882 = sphi 0, %s881
    %s896 = sphi 0, %s882
    %s900 = sphi 0, %s900
    %s902 = sphi 0, %s900
    %s903 = sphi 0, %s902
    %s917 = sphi 0, %s903
    %s921 = sphi 0, %s921
    %s923 = sphi 0, %s921
    %s924 = sphi 0, %s923
    %s938 = sphi 0, %s924
    %s942 = sphi 0, %s942
    %s944 = sphi 0, %s942
    %s945 = sphi 0, %s944
    %s959 = sphi 0, %s945
    %s963 = sphi 0, %s963
    %s965 = sphi 0, %s963
    %s966 = sphi 0, %s965
    %s980 = sphi 0, %s966
    %s984 = sphi 0, %s984
    %s986 = sphi 0, %s984
    %s987 = sphi 0, %s986
    %s1001 = sphi 0, %s987
    %s1005 = sphi 0, %s1005
    %s1007 = sphi 0, %s1005
    %s1008 = sphi 0, %s1007
    %s1022 = sphi 0, %s1008
    %s1026 = sphi 0, %s1026
    %s1028 = sphi 0, %s1026
    %s1029 = sphi 0, %s1028
    %s1043 = sphi 0, %s1029
    %s1049 = sphi 0, %s1051
    %s1052 = sphi 0, %s1049
    %s1053 = sphi 0, %s1052
    %s1069 = sphi 0, %s1053
    %s1075 = sphi 0, %s1077
    %s1078 = sphi 0, %s1075
    %s1079 = sphi 0, %s1078
    %s1095 = sphi 0, %s1079
  $region4: #{diffusion_transition_forward.1} parent=0 // loop_header_branch
    %99 = sbr.rel (%p97) target = $region8
  $region5: #{diffusion_transition_forward.1} parent=0 // loop_body
    %s101 = ssub.s32 %s96, 1
    %s102 = ssub.s32 %s96, 2
    %s103 = sadd.s32 %s96, 1
    %s104 = ssub.s32 %s96, %s103
    %p105 = scmp.eq.s32.totalorder %s104, 0
    %s107 = sadd.s32 %s106, 1
    %s108 = scalar_select %p105, %s106, %s107
    %p111 = pneg %p105
    %p112 = scmp.eq.s32.totalorder %s96, 1
    %p113 = por %p111, %p112
    %p114 = scmp.ne.s32.totalorder %s106, %s109
    %p115 = scmp.eq.s32.totalorder %s96, 0
    %p116 = por %p114, %p115
    %p117 = scmp.ne.s32.totalorder %s106, %s109
    %p118 = scmp.eq.s32.totalorder %s101, 1
    %p119 = por %p117, %p118
    %p120 = scmp.ne.s32.totalorder %s109, %s110
    %p121 = scmp.eq.s32.totalorder %s101, 0
    %p122 = por %p120, %p121
    %p123 = scmp.ne.s32.totalorder %s109, %s110
    %p124 = scmp.eq.s32.totalorder %s102, 1
    %p125 = por %p123, %p124
    %p127 = scmp.ne.s32.totalorder %s110, %s126
    %p128 = scmp.eq.s32.totalorder %s102, 0
    %p129 = por %p127, %p128
    %s130 = ssub.s32 %s96, %s103
    %p131 = scmp.eq.s32.totalorder %s130, 0
    %s133 = sadd.s32 %s132, 1
    %s134 = scalar_select %p131, %s132, %s133
    %p137 = pneg %p131
    %p138 = scmp.eq.s32.totalorder %s96, 1
    %p139 = por %p137, %p138
    %p140 = scmp.ne.s32.totalorder %s132, %s135
    %p141 = scmp.eq.s32.totalorder %s96, 0
    %p142 = por %p140, %p141
    %p143 = scmp.ne.s32.totalorder %s132, %s135
    %p144 = scmp.eq.s32.totalorder %s101, 1
    %p145 = por %p143, %p144
    %p146 = scmp.ne.s32.totalorder %s135, %s136
    %p147 = scmp.eq.s32.totalorder %s101, 0
    %p148 = por %p146, %p147
    %p149 = scmp.ne.s32.totalorder %s135, %s136
    %p150 = scmp.eq.s32.totalorder %s102, 1
    %p151 = por %p149, %p150
    %p153 = scmp.ne.s32.totalorder %s136, %s152
    %p154 = scmp.eq.s32.totalorder %s102, 0
    %p155 = por %p153, %p154
    %s156 = ssub.s32 %s96, %s103
    %p157 = scmp.eq.s32.totalorder %s156, 0
    %s159 = sadd.s32 %s158, 1
    %s160 = scalar_select %p157, %s158, %s159
    %p163 = pneg %p157
    %p164 = scmp.eq.s32.totalorder %s96, 1
    %p165 = por %p163, %p164
    %p166 = scmp.ne.s32.totalorder %s158, %s161
    %p167 = scmp.eq.s32.totalorder %s96, 0
    %p168 = por %p166, %p167
    %p169 = scmp.ne.s32.totalorder %s158, %s161
    %p170 = scmp.eq.s32.totalorder %s101, 1
    %p171 = por %p169, %p170
    %p172 = scmp.ne.s32.totalorder %s161, %s162
    %p173 = scmp.eq.s32.totalorder %s101, 0
    %p174 = por %p172, %p173
    %p175 = scmp.ne.s32.totalorder %s161, %s162
    %p176 = scmp.eq.s32.totalorder %s102, 1
    %p177 = por %p175, %p176
    %p179 = scmp.ne.s32.totalorder %s162, %s178
    %p180 = scmp.eq.s32.totalorder %s102, 0
    %p181 = por %p179, %p180
    %s182 = ssub.s32 %s96, %s103
    %p183 = scmp.eq.s32.totalorder %s182, 0
    %s185 = sadd.s32 %s184, 1
    %s186 = scalar_select %p183, %s184, %s185
    %p189 = pneg %p183
    %p190 = scmp.eq.s32.totalorder %s96, 1
    %p191 = por %p189, %p190
    %p192 = scmp.ne.s32.totalorder %s184, %s187
    %p193 = scmp.eq.s32.totalorder %s96, 0
    %p194 = por %p192, %p193
    %p195 = scmp.ne.s32.totalorder %s184, %s187
    %p196 = scmp.eq.s32.totalorder %s101, 1
    %p197 = por %p195, %p196
    %p198 = scmp.ne.s32.totalorder %s187, %s188
    %p199 = scmp.eq.s32.totalorder %s101, 0
    %p200 = por %p198, %p199
    %p201 = scmp.ne.s32.totalorder %s187, %s188
    %p202 = scmp.eq.s32.totalorder %s102, 1
    %p203 = por %p201, %p202
    %p205 = scmp.ne.s32.totalorder %s188, %s204
    %p206 = scmp.eq.s32.totalorder %s102, 0
    %p207 = por %p205, %p206
    %s208 = ssub.s32 %s96, %s103
    %p209 = scmp.eq.s32.totalorder %s208, 0
    %s211 = sadd.s32 %s210, 1
    %s212 = scalar_select %p209, %s210, %s211
    %p215 = pneg %p209
    %p216 = scmp.eq.s32.totalorder %s96, 1
    %p217 = por %p215, %p216
    %p218 = scmp.ne.s32.totalorder %s210, %s213
    %p219 = scmp.eq.s32.totalorder %s96, 0
    %p220 = por %p218, %p219
    %p221 = scmp.ne.s32.totalorder %s210, %s213
    %p222 = scmp.eq.s32.totalorder %s101, 1
    %p223 = por %p221, %p222
    %p224 = scmp.ne.s32.totalorder %s213, %s214
    %p225 = scmp.eq.s32.totalorder %s101, 0
    %p226 = por %p224, %p225
    %p227 = scmp.ne.s32.totalorder %s213, %s214
    %p228 = scmp.eq.s32.totalorder %s102, 1
    %p229 = por %p227, %p228
    %p231 = scmp.ne.s32.totalorder %s214, %s230
    %p232 = scmp.eq.s32.totalorder %s102, 0
    %p233 = por %p231, %p232
    %s234 = ssub.s32 %s96, %s103
    %p235 = scmp.eq.s32.totalorder %s234, 0
    %s237 = sadd.s32 %s236, 1
    %s238 = scalar_select %p235, %s236, %s237
    %p241 = pneg %p235
    %p242 = scmp.eq.s32.totalorder %s96, 1
    %p243 = por %p241, %p242
    %p244 = scmp.ne.s32.totalorder %s236, %s239
    %p245 = scmp.eq.s32.totalorder %s96, 0
    %p246 = por %p244, %p245
    %p247 = scmp.ne.s32.totalorder %s236, %s239
    %p248 = scmp.eq.s32.totalorder %s101, 1
    %p249 = por %p247, %p248
    %p250 = scmp.ne.s32.totalorder %s239, %s240
    %p251 = scmp.eq.s32.totalorder %s101, 0
    %p252 = por %p250, %p251
    %p253 = scmp.ne.s32.totalorder %s239, %s240
    %p254 = scmp.eq.s32.totalorder %s102, 1
    %p255 = por %p253, %p254
    %p257 = scmp.ne.s32.totalorder %s240, %s256
    %p258 = scmp.eq.s32.totalorder %s102, 0
    %p259 = por %p257, %p258
    %s260 = ssub.s32 %s96, %s103
    %p261 = scmp.eq.s32.totalorder %s260, 0
    %s263 = sadd.s32 %s262, 1
    %s264 = scalar_select %p261, %s262, %s263
    %p267 = pneg %p261
    %p268 = scmp.eq.s32.totalorder %s96, 1
    %p269 = por %p267, %p268
    %p270 = scmp.ne.s32.totalorder %s262, %s265
    %p271 = scmp.eq.s32.totalorder %s96, 0
    %p272 = por %p270, %p271
    %p273 = scmp.ne.s32.totalorder %s262, %s265
    %p274 = scmp.eq.s32.totalorder %s101, 1
    %p275 = por %p273, %p274
    %p276 = scmp.ne.s32.totalorder %s265, %s266
    %p277 = scmp.eq.s32.totalorder %s101, 0
    %p278 = por %p276, %p277
    %p279 = scmp.ne.s32.totalorder %s265, %s266
    %p280 = scmp.eq.s32.totalorder %s102, 1
    %p281 = por %p279, %p280
    %p283 = scmp.ne.s32.totalorder %s266, %s282
    %p284 = scmp.eq.s32.totalorder %s102, 0
    %p285 = por %p283, %p284
    %s286 = ssub.s32 %s96, %s103
    %p287 = scmp.eq.s32.totalorder %s286, 0
    %s289 = sadd.s32 %s288, 1
    %s290 = scalar_select %p287, %s288, %s289
    %p293 = pneg %p287
    %p294 = scmp.eq.s32.totalorder %s96, 1
    %p295 = por %p293, %p294
    %p296 = scmp.ne.s32.totalorder %s288, %s291
    %p297 = scmp.eq.s32.totalorder %s96, 0
    %p298 = por %p296, %p297
    %p299 = scmp.ne.s32.totalorder %s288, %s291
    %p300 = scmp.eq.s32.totalorder %s101, 1
    %p301 = por %p299, %p300
    %p302 = scmp.ne.s32.totalorder %s291, %s292
    %p303 = scmp.eq.s32.totalorder %s101, 0
    %p304 = por %p302, %p303
    %p305 = scmp.ne.s32.totalorder %s291, %s292
    %p306 = scmp.eq.s32.totalorder %s102, 1
    %p307 = por %p305, %p306
    %p309 = scmp.ne.s32.totalorder %s292, %s308
    %p310 = scmp.eq.s32.totalorder %s102, 0
    %p311 = por %p309, %p310
    %s313 = sadd.s32 %s312, 1
    %p316 = scmp.eq.s32.totalorder %s96, 1
    %p317 = scmp.ne.s32.totalorder %s312, %s314
    %p318 = scmp.eq.s32.totalorder %s96, 0
    %p319 = por %p317, %p318
    %p320 = scmp.ne.s32.totalorder %s312, %s314
    %p321 = scmp.eq.s32.totalorder %s101, 1
    %p322 = por %p320, %p321
    %p323 = scmp.ne.s32.totalorder %s314, %s315
    %p324 = scmp.eq.s32.totalorder %s101, 0
    %p325 = por %p323, %p324
    %p326 = scmp.ne.s32.totalorder %s314, %s315
    %p327 = scmp.eq.s32.totalorder %s102, 1
    %p328 = por %p326, %p327
    %p330 = scmp.ne.s32.totalorder %s315, %s329
    %p331 = scmp.eq.s32.totalorder %s102, 0
    %p332 = por %p330, %p331
    %s334 = sadd.s32 %s333, 1
    %p337 = scmp.eq.s32.totalorder %s96, 1
    %p338 = scmp.ne.s32.totalorder %s333, %s335
    %p339 = scmp.eq.s32.totalorder %s96, 0
    %p340 = por %p338, %p339
    %p341 = scmp.ne.s32.totalorder %s333, %s335
    %p342 = scmp.eq.s32.totalorder %s101, 1
    %p343 = por %p341, %p342
    %p344 = scmp.ne.s32.totalorder %s335, %s336
    %p345 = scmp.eq.s32.totalorder %s101, 0
    %p346 = por %p344, %p345
    %p347 = scmp.ne.s32.totalorder %s335, %s336
    %p348 = scmp.eq.s32.totalorder %s102, 1
    %p349 = por %p347, %p348
    %p351 = scmp.ne.s32.totalorder %s336, %s350
    %p352 = scmp.eq.s32.totalorder %s102, 0
    %p353 = por %p351, %p352
    %s355 = sadd.s32 %s354, 1
    %p358 = scmp.eq.s32.totalorder %s96, 1
    %p359 = scmp.ne.s32.totalorder %s354, %s356
    %p360 = scmp.eq.s32.totalorder %s96, 0
    %p361 = por %p359, %p360
    %p362 = scmp.ne.s32.totalorder %s354, %s356
    %p363 = scmp.eq.s32.totalorder %s101, 1
    %p364 = por %p362, %p363
    %p365 = scmp.ne.s32.totalorder %s356, %s357
    %p366 = scmp.eq.s32.totalorder %s101, 0
    %p367 = por %p365, %p366
    %p368 = scmp.ne.s32.totalorder %s356, %s357
    %p369 = scmp.eq.s32.totalorder %s102, 1
    %p370 = por %p368, %p369
    %p372 = scmp.ne.s32.totalorder %s357, %s371
    %p373 = scmp.eq.s32.totalorder %s102, 0
    %p374 = por %p372, %p373
    %s376 = sadd.s32 %s375, 1
    %p379 = scmp.eq.s32.totalorder %s96, 1
    %p380 = scmp.ne.s32.totalorder %s375, %s377
    %p381 = scmp.eq.s32.totalorder %s96, 0
    %p382 = por %p380, %p381
    %p383 = scmp.ne.s32.totalorder %s375, %s377
    %p384 = scmp.eq.s32.totalorder %s101, 1
    %p385 = por %p383, %p384
    %p386 = scmp.ne.s32.totalorder %s377, %s378
    %p387 = scmp.eq.s32.totalorder %s101, 0
    %p388 = por %p386, %p387
    %p389 = scmp.ne.s32.totalorder %s377, %s378
    %p390 = scmp.eq.s32.totalorder %s102, 1
    %p391 = por %p389, %p390
    %p393 = scmp.ne.s32.totalorder %s378, %s392
    %p394 = scmp.eq.s32.totalorder %s102, 0
    %p395 = por %p393, %p394
    %s397 = sadd.s32 %s396, 1
    %p400 = scmp.eq.s32.totalorder %s96, 1
    %p401 = scmp.ne.s32.totalorder %s396, %s398
    %p402 = scmp.eq.s32.totalorder %s96, 0
    %p403 = por %p401, %p402
    %p404 = scmp.ne.s32.totalorder %s396, %s398
    %p405 = scmp.eq.s32.totalorder %s101, 1
    %p406 = por %p404, %p405
    %p407 = scmp.ne.s32.totalorder %s398, %s399
    %p408 = scmp.eq.s32.totalorder %s101, 0
    %p409 = por %p407, %p408
    %p410 = scmp.ne.s32.totalorder %s398, %s399
    %p411 = scmp.eq.s32.totalorder %s102, 1
    %p412 = por %p410, %p411
    %p414 = scmp.ne.s32.totalorder %s399, %s413
    %p415 = scmp.eq.s32.totalorder %s102, 0
    %p416 = por %p414, %p415
    %s418 = sadd.s32 %s417, 1
    %p421 = scmp.eq.s32.totalorder %s96, 1
    %p422 = scmp.ne.s32.totalorder %s417, %s419
    %p423 = scmp.eq.s32.totalorder %s96, 0
    %p424 = por %p422, %p423
    %p425 = scmp.ne.s32.totalorder %s417, %s419
    %p426 = scmp.eq.s32.totalorder %s101, 1
    %p427 = por %p425, %p426
    %p428 = scmp.ne.s32.totalorder %s419, %s420
    %p429 = scmp.eq.s32.totalorder %s101, 0
    %p430 = por %p428, %p429
    %p431 = scmp.ne.s32.totalorder %s419, %s420
    %p432 = scmp.eq.s32.totalorder %s102, 1
    %p433 = por %p431, %p432
    %p435 = scmp.ne.s32.totalorder %s420, %s434
    %p436 = scmp.eq.s32.totalorder %s102, 0
    %p437 = por %p435, %p436
    %s439 = sadd.s32 %s438, 1
    %p442 = scmp.eq.s32.totalorder %s96, 1
    %p443 = scmp.ne.s32.totalorder %s438, %s440
    %p444 = scmp.eq.s32.totalorder %s96, 0
    %p445 = por %p443, %p444
    %p446 = scmp.ne.s32.totalorder %s438, %s440
    %p447 = scmp.eq.s32.totalorder %s101, 1
    %p448 = por %p446, %p447
    %p449 = scmp.ne.s32.totalorder %s440, %s441
    %p450 = scmp.eq.s32.totalorder %s101, 0
    %p451 = por %p449, %p450
    %p452 = scmp.ne.s32.totalorder %s440, %s441
    %p453 = scmp.eq.s32.totalorder %s102, 1
    %p454 = por %p452, %p453
    %p456 = scmp.ne.s32.totalorder %s441, %s455
    %p457 = scmp.eq.s32.totalorder %s102, 0
    %p458 = por %p456, %p457
    %s460 = sadd.s32 %s459, 1
    %p463 = scmp.eq.s32.totalorder %s96, 1
    %p464 = scmp.ne.s32.totalorder %s459, %s461
    %p465 = scmp.eq.s32.totalorder %s96, 0
    %p466 = por %p464, %p465
    %p467 = scmp.ne.s32.totalorder %s459, %s461
    %p468 = scmp.eq.s32.totalorder %s101, 1
    %p469 = por %p467, %p468
    %p470 = scmp.ne.s32.totalorder %s461, %s462
    %p471 = scmp.eq.s32.totalorder %s101, 0
    %p472 = por %p470, %p471
    %p473 = scmp.ne.s32.totalorder %s461, %s462
    %p474 = scmp.eq.s32.totalorder %s102, 1
    %p475 = por %p473, %p474
    %p477 = scmp.ne.s32.totalorder %s462, %s476
    %p478 = scmp.eq.s32.totalorder %s102, 0
    %p479 = por %p477, %p478
    %s481 = sadd.s32 %s480, 1
    %p484 = scmp.eq.s32.totalorder %s96, 1
    %p485 = scmp.ne.s32.totalorder %s480, %s482
    %p486 = scmp.eq.s32.totalorder %s96, 0
    %p487 = por %p485, %p486
    %p488 = scmp.ne.s32.totalorder %s480, %s482
    %p489 = scmp.eq.s32.totalorder %s101, 1
    %p490 = por %p488, %p489
    %p491 = scmp.ne.s32.totalorder %s482, %s483
    %p492 = scmp.eq.s32.totalorder %s101, 0
    %p493 = por %p491, %p492
    %p494 = scmp.ne.s32.totalorder %s482, %s483
    %p495 = scmp.eq.s32.totalorder %s102, 1
    %p496 = por %p494, %p495
    %p498 = scmp.ne.s32.totalorder %s483, %s497
    %p499 = scmp.eq.s32.totalorder %s102, 0
    %p500 = por %p498, %p499
    %s502 = sadd.s32 %s501, 1
    %p505 = scmp.eq.s32.totalorder %s96, 1
    %p506 = scmp.ne.s32.totalorder %s501, %s503
    %p507 = scmp.eq.s32.totalorder %s96, 0
    %p508 = por %p506, %p507
    %p509 = scmp.ne.s32.totalorder %s501, %s503
    %p510 = scmp.eq.s32.totalorder %s101, 1
    %p511 = por %p509, %p510
    %p512 = scmp.ne.s32.totalorder %s503, %s504
    %p513 = scmp.eq.s32.totalorder %s101, 0
    %p514 = por %p512, %p513
    %p515 = scmp.ne.s32.totalorder %s503, %s504
    %p516 = scmp.eq.s32.totalorder %s102, 1
    %p517 = por %p515, %p516
    %p519 = scmp.ne.s32.totalorder %s504, %s518
    %p520 = scmp.eq.s32.totalorder %s102, 0
    %p521 = por %p519, %p520
    %s523 = sadd.s32 %s522, 1
    %p526 = scmp.eq.s32.totalorder %s96, 1
    %p527 = scmp.ne.s32.totalorder %s522, %s524
    %p528 = scmp.eq.s32.totalorder %s96, 0
    %p529 = por %p527, %p528
    %p530 = scmp.ne.s32.totalorder %s522, %s524
    %p531 = scmp.eq.s32.totalorder %s101, 1
    %p532 = por %p530, %p531
    %p533 = scmp.ne.s32.totalorder %s524, %s525
    %p534 = scmp.eq.s32.totalorder %s101, 0
    %p535 = por %p533, %p534
    %p536 = scmp.ne.s32.totalorder %s524, %s525
    %p537 = scmp.eq.s32.totalorder %s102, 1
    %p538 = por %p536, %p537
    %p540 = scmp.ne.s32.totalorder %s525, %s539
    %p541 = scmp.eq.s32.totalorder %s102, 0
    %p542 = por %p540, %p541
    %s544 = sadd.s32 %s543, 1
    %p547 = scmp.eq.s32.totalorder %s96, 1
    %p548 = scmp.ne.s32.totalorder %s543, %s545
    %p549 = scmp.eq.s32.totalorder %s96, 0
    %p550 = por %p548, %p549
    %p551 = scmp.ne.s32.totalorder %s543, %s545
    %p552 = scmp.eq.s32.totalorder %s101, 1
    %p553 = por %p551, %p552
    %p554 = scmp.ne.s32.totalorder %s545, %s546
    %p555 = scmp.eq.s32.totalorder %s101, 0
    %p556 = por %p554, %p555
    %p557 = scmp.ne.s32.totalorder %s545, %s546
    %p558 = scmp.eq.s32.totalorder %s102, 1
    %p559 = por %p557, %p558
    %p561 = scmp.ne.s32.totalorder %s546, %s560
    %p562 = scmp.eq.s32.totalorder %s102, 0
    %p563 = por %p561, %p562
    %s565 = sadd.s32 %s564, 1
    %p568 = scmp.eq.s32.totalorder %s96, 1
    %p569 = scmp.ne.s32.totalorder %s564, %s566
    %p570 = scmp.eq.s32.totalorder %s96, 0
    %p571 = por %p569, %p570
    %p572 = scmp.ne.s32.totalorder %s564, %s566
    %p573 = scmp.eq.s32.totalorder %s101, 1
    %p574 = por %p572, %p573
    %p575 = scmp.ne.s32.totalorder %s566, %s567
    %p576 = scmp.eq.s32.totalorder %s101, 0
    %p577 = por %p575, %p576
    %p578 = scmp.ne.s32.totalorder %s566, %s567
    %p579 = scmp.eq.s32.totalorder %s102, 1
    %p580 = por %p578, %p579
    %p582 = scmp.ne.s32.totalorder %s567, %s581
    %p583 = scmp.eq.s32.totalorder %s102, 0
    %p584 = por %p582, %p583
    %s586 = sadd.s32 %s585, 1
    %p589 = scmp.eq.s32.totalorder %s96, 1
    %p590 = scmp.ne.s32.totalorder %s585, %s587
    %p591 = scmp.eq.s32.totalorder %s96, 0
    %p592 = por %p590, %p591
    %p593 = scmp.ne.s32.totalorder %s585, %s587
    %p594 = scmp.eq.s32.totalorder %s101, 1
    %p595 = por %p593, %p594
    %p596 = scmp.ne.s32.totalorder %s587, %s588
    %p597 = scmp.eq.s32.totalorder %s101, 0
    %p598 = por %p596, %p597
    %p599 = scmp.ne.s32.totalorder %s587, %s588
    %p600 = scmp.eq.s32.totalorder %s102, 1
    %p601 = por %p599, %p600
    %p603 = scmp.ne.s32.totalorder %s588, %s602
    %p604 = scmp.eq.s32.totalorder %s102, 0
    %p605 = por %p603, %p604
    %s607 = sadd.s32 %s606, 1
    %p610 = scmp.eq.s32.totalorder %s96, 1
    %p611 = scmp.ne.s32.totalorder %s606, %s608
    %p612 = scmp.eq.s32.totalorder %s96, 0
    %p613 = por %p611, %p612
    %p614 = scmp.ne.s32.totalorder %s606, %s608
    %p615 = scmp.eq.s32.totalorder %s101, 1
    %p616 = por %p614, %p615
    %p617 = scmp.ne.s32.totalorder %s608, %s609
    %p618 = scmp.eq.s32.totalorder %s101, 0
    %p619 = por %p617, %p618
    %p620 = scmp.ne.s32.totalorder %s608, %s609
    %p621 = scmp.eq.s32.totalorder %s102, 1
    %p622 = por %p620, %p621
    %p624 = scmp.ne.s32.totalorder %s609, %s623
    %p625 = scmp.eq.s32.totalorder %s102, 0
    %p626 = por %p624, %p625
    %s628 = sadd.s32 %s627, 1
    %p631 = scmp.eq.s32.totalorder %s96, 1
    %p632 = scmp.ne.s32.totalorder %s627, %s629
    %p633 = scmp.eq.s32.totalorder %s96, 0
    %p634 = por %p632, %p633
    %p635 = scmp.ne.s32.totalorder %s627, %s629
    %p636 = scmp.eq.s32.totalorder %s101, 1
    %p637 = por %p635, %p636
    %p638 = scmp.ne.s32.totalorder %s629, %s630
    %p639 = scmp.eq.s32.totalorder %s101, 0
    %p640 = por %p638, %p639
    %p641 = scmp.ne.s32.totalorder %s629, %s630
    %p642 = scmp.eq.s32.totalorder %s102, 1
    %p643 = por %p641, %p642
    %p645 = scmp.ne.s32.totalorder %s630, %s644
    %p646 = scmp.eq.s32.totalorder %s102, 0
    %p647 = por %p645, %p646
    %s649 = sadd.s32 %s648, 1
    %p652 = scmp.eq.s32.totalorder %s96, 1
    %p653 = scmp.ne.s32.totalorder %s648, %s650
    %p654 = scmp.eq.s32.totalorder %s96, 0
    %p655 = por %p653, %p654
    %p656 = scmp.ne.s32.totalorder %s648, %s650
    %p657 = scmp.eq.s32.totalorder %s101, 1
    %p658 = por %p656, %p657
    %p659 = scmp.ne.s32.totalorder %s650, %s651
    %p660 = scmp.eq.s32.totalorder %s101, 0
    %p661 = por %p659, %p660
    %p662 = scmp.ne.s32.totalorder %s650, %s651
    %p663 = scmp.eq.s32.totalorder %s102, 1
    %p664 = por %p662, %p663
    %p666 = scmp.ne.s32.totalorder %s651, %s665
    %p667 = scmp.eq.s32.totalorder %s102, 0
    %p668 = por %p666, %p667
    %s670 = sadd.s32 %s669, 1
    %p673 = scmp.eq.s32.totalorder %s96, 1
    %p674 = scmp.ne.s32.totalorder %s669, %s671
    %p675 = scmp.eq.s32.totalorder %s96, 0
    %p676 = por %p674, %p675
    %p677 = scmp.ne.s32.totalorder %s669, %s671
    %p678 = scmp.eq.s32.totalorder %s101, 1
    %p679 = por %p677, %p678
    %p680 = scmp.ne.s32.totalorder %s671, %s672
    %p681 = scmp.eq.s32.totalorder %s101, 0
    %p682 = por %p680, %p681
    %p683 = scmp.ne.s32.totalorder %s671, %s672
    %p684 = scmp.eq.s32.totalorder %s102, 1
    %p685 = por %p683, %p684
    %p687 = scmp.ne.s32.totalorder %s672, %s686
    %p688 = scmp.eq.s32.totalorder %s102, 0
    %p689 = por %p687, %p688
    %s691 = sadd.s32 %s690, 1
    %p694 = scmp.eq.s32.totalorder %s96, 1
    %p695 = scmp.ne.s32.totalorder %s690, %s692
    %p696 = scmp.eq.s32.totalorder %s96, 0
    %p697 = por %p695, %p696
    %p698 = scmp.ne.s32.totalorder %s690, %s692
    %p699 = scmp.eq.s32.totalorder %s101, 1
    %p700 = por %p698, %p699
    %p701 = scmp.ne.s32.totalorder %s692, %s693
    %p702 = scmp.eq.s32.totalorder %s101, 0
    %p703 = por %p701, %p702
    %p704 = scmp.ne.s32.totalorder %s692, %s693
    %p705 = scmp.eq.s32.totalorder %s102, 1
    %p706 = por %p704, %p705
    %p708 = scmp.ne.s32.totalorder %s693, %s707
    %p709 = scmp.eq.s32.totalorder %s102, 0
    %p710 = por %p708, %p709
    %s712 = sadd.s32 %s711, 1
    %p715 = scmp.eq.s32.totalorder %s96, 1
    %p716 = scmp.ne.s32.totalorder %s711, %s713
    %p717 = scmp.eq.s32.totalorder %s96, 0
    %p718 = por %p716, %p717
    %p719 = scmp.ne.s32.totalorder %s711, %s713
    %p720 = scmp.eq.s32.totalorder %s101, 1
    %p721 = por %p719, %p720
    %p722 = scmp.ne.s32.totalorder %s713, %s714
    %p723 = scmp.eq.s32.totalorder %s101, 0
    %p724 = por %p722, %p723
    %p725 = scmp.ne.s32.totalorder %s713, %s714
    %p726 = scmp.eq.s32.totalorder %s102, 1
    %p727 = por %p725, %p726
    %p729 = scmp.ne.s32.totalorder %s714, %s728
    %p730 = scmp.eq.s32.totalorder %s102, 0
    %p731 = por %p729, %p730
    %s733 = sadd.s32 %s732, 1
    %p736 = scmp.eq.s32.totalorder %s96, 1
    %p737 = scmp.ne.s32.totalorder %s732, %s734
    %p738 = scmp.eq.s32.totalorder %s96, 0
    %p739 = por %p737, %p738
    %p740 = scmp.ne.s32.totalorder %s732, %s734
    %p741 = scmp.eq.s32.totalorder %s101, 1
    %p742 = por %p740, %p741
    %p743 = scmp.ne.s32.totalorder %s734, %s735
    %p744 = scmp.eq.s32.totalorder %s101, 0
    %p745 = por %p743, %p744
    %p746 = scmp.ne.s32.totalorder %s734, %s735
    %p747 = scmp.eq.s32.totalorder %s102, 1
    %p748 = por %p746, %p747
    %p750 = scmp.ne.s32.totalorder %s735, %s749
    %p751 = scmp.eq.s32.totalorder %s102, 0
    %p752 = por %p750, %p751
    %s754 = sadd.s32 %s753, 1
    %p757 = scmp.eq.s32.totalorder %s96, 1
    %p758 = scmp.ne.s32.totalorder %s753, %s755
    %p759 = scmp.eq.s32.totalorder %s96, 0
    %p760 = por %p758, %p759
    %p761 = scmp.ne.s32.totalorder %s753, %s755
    %p762 = scmp.eq.s32.totalorder %s101, 1
    %p763 = por %p761, %p762
    %p764 = scmp.ne.s32.totalorder %s755, %s756
    %p765 = scmp.eq.s32.totalorder %s101, 0
    %p766 = por %p764, %p765
    %p767 = scmp.ne.s32.totalorder %s755, %s756
    %p768 = scmp.eq.s32.totalorder %s102, 1
    %p769 = por %p767, %p768
    %p771 = scmp.ne.s32.totalorder %s756, %s770
    %p772 = scmp.eq.s32.totalorder %s102, 0
    %p773 = por %p771, %p772
    %s775 = sadd.s32 %s774, 1
    %p778 = scmp.eq.s32.totalorder %s96, 1
    %p779 = scmp.ne.s32.totalorder %s774, %s776
    %p780 = scmp.eq.s32.totalorder %s96, 0
    %p781 = por %p779, %p780
    %p782 = scmp.ne.s32.totalorder %s774, %s776
    %p783 = scmp.eq.s32.totalorder %s101, 1
    %p784 = por %p782, %p783
    %p785 = scmp.ne.s32.totalorder %s776, %s777
    %p786 = scmp.eq.s32.totalorder %s101, 0
    %p787 = por %p785, %p786
    %p788 = scmp.ne.s32.totalorder %s776, %s777
    %p789 = scmp.eq.s32.totalorder %s102, 1
    %p790 = por %p788, %p789
    %p792 = scmp.ne.s32.totalorder %s777, %s791
    %p793 = scmp.eq.s32.totalorder %s102, 0
    %p794 = por %p792, %p793
    %s796 = sadd.s32 %s795, 1
    %p799 = scmp.eq.s32.totalorder %s96, 1
    %p800 = scmp.ne.s32.totalorder %s795, %s797
    %p801 = scmp.eq.s32.totalorder %s96, 0
    %p802 = por %p800, %p801
    %p803 = scmp.ne.s32.totalorder %s795, %s797
    %p804 = scmp.eq.s32.totalorder %s101, 1
    %p805 = por %p803, %p804
    %p806 = scmp.ne.s32.totalorder %s797, %s798
    %p807 = scmp.eq.s32.totalorder %s101, 0
    %p808 = por %p806, %p807
    %p809 = scmp.ne.s32.totalorder %s797, %s798
    %p810 = scmp.eq.s32.totalorder %s102, 1
    %p811 = por %p809, %p810
    %p813 = scmp.ne.s32.totalorder %s798, %s812
    %p814 = scmp.eq.s32.totalorder %s102, 0
    %p815 = por %p813, %p814
    %s817 = sadd.s32 %s816, 1
    %p820 = scmp.eq.s32.totalorder %s96, 1
    %p821 = scmp.ne.s32.totalorder %s816, %s818
    %p822 = scmp.eq.s32.totalorder %s96, 0
    %p823 = por %p821, %p822
    %p824 = scmp.ne.s32.totalorder %s816, %s818
    %p825 = scmp.eq.s32.totalorder %s101, 1
    %p826 = por %p824, %p825
    %p827 = scmp.ne.s32.totalorder %s818, %s819
    %p828 = scmp.eq.s32.totalorder %s101, 0
    %p829 = por %p827, %p828
    %p830 = scmp.ne.s32.totalorder %s818, %s819
    %p831 = scmp.eq.s32.totalorder %s102, 1
    %p832 = por %p830, %p831
    %p834 = scmp.ne.s32.totalorder %s819, %s833
    %p835 = scmp.eq.s32.totalorder %s102, 0
    %p836 = por %p834, %p835
    %s838 = sadd.s32 %s837, 1
    %p841 = scmp.eq.s32.totalorder %s96, 1
    %p842 = scmp.ne.s32.totalorder %s837, %s839
    %p843 = scmp.eq.s32.totalorder %s96, 0
    %p844 = por %p842, %p843
    %p845 = scmp.ne.s32.totalorder %s837, %s839
    %p846 = scmp.eq.s32.totalorder %s101, 1
    %p847 = por %p845, %p846
    %p848 = scmp.ne.s32.totalorder %s839, %s840
    %p849 = scmp.eq.s32.totalorder %s101, 0
    %p850 = por %p848, %p849
    %p851 = scmp.ne.s32.totalorder %s839, %s840
    %p852 = scmp.eq.s32.totalorder %s102, 1
    %p853 = por %p851, %p852
    %p855 = scmp.ne.s32.totalorder %s840, %s854
    %p856 = scmp.eq.s32.totalorder %s102, 0
    %p857 = por %p855, %p856
    %s859 = sadd.s32 %s858, 1
    %p862 = scmp.eq.s32.totalorder %s96, 1
    %p863 = scmp.ne.s32.totalorder %s858, %s860
    %p864 = scmp.eq.s32.totalorder %s96, 0
    %p865 = por %p863, %p864
    %p866 = scmp.ne.s32.totalorder %s858, %s860
    %p867 = scmp.eq.s32.totalorder %s101, 1
    %p868 = por %p866, %p867
    %p869 = scmp.ne.s32.totalorder %s860, %s861
    %p870 = scmp.eq.s32.totalorder %s101, 0
    %p871 = por %p869, %p870
    %p872 = scmp.ne.s32.totalorder %s860, %s861
    %p873 = scmp.eq.s32.totalorder %s102, 1
    %p874 = por %p872, %p873
    %p876 = scmp.ne.s32.totalorder %s861, %s875
    %p877 = scmp.eq.s32.totalorder %s102, 0
    %p878 = por %p876, %p877
    %s880 = sadd.s32 %s879, 1
    %p883 = scmp.eq.s32.totalorder %s96, 1
    %p884 = scmp.ne.s32.totalorder %s879, %s881
    %p885 = scmp.eq.s32.totalorder %s96, 0
    %p886 = por %p884, %p885
    %p887 = scmp.ne.s32.totalorder %s879, %s881
    %p888 = scmp.eq.s32.totalorder %s101, 1
    %p889 = por %p887, %p888
    %p890 = scmp.ne.s32.totalorder %s881, %s882
    %p891 = scmp.eq.s32.totalorder %s101, 0
    %p892 = por %p890, %p891
    %p893 = scmp.ne.s32.totalorder %s881, %s882
    %p894 = scmp.eq.s32.totalorder %s102, 1
    %p895 = por %p893, %p894
    %p897 = scmp.ne.s32.totalorder %s882, %s896
    %p898 = scmp.eq.s32.totalorder %s102, 0
    %p899 = por %p897, %p898
    %s901 = sadd.s32 %s900, 1
    %p904 = scmp.eq.s32.totalorder %s96, 1
    %p905 = scmp.ne.s32.totalorder %s900, %s902
    %p906 = scmp.eq.s32.totalorder %s96, 0
    %p907 = por %p905, %p906
    %p908 = scmp.ne.s32.totalorder %s900, %s902
    %p909 = scmp.eq.s32.totalorder %s101, 1
    %p910 = por %p908, %p909
    %p911 = scmp.ne.s32.totalorder %s902, %s903
    %p912 = scmp.eq.s32.totalorder %s101, 0
    %p913 = por %p911, %p912
    %p914 = scmp.ne.s32.totalorder %s902, %s903
    %p915 = scmp.eq.s32.totalorder %s102, 1
    %p916 = por %p914, %p915
    %p918 = scmp.ne.s32.totalorder %s903, %s917
    %p919 = scmp.eq.s32.totalorder %s102, 0
    %p920 = por %p918, %p919
    %s922 = sadd.s32 %s921, 1
    %p925 = scmp.eq.s32.totalorder %s96, 1
    %p926 = scmp.ne.s32.totalorder %s921, %s923
    %p927 = scmp.eq.s32.totalorder %s96, 0
    %p928 = por %p926, %p927
    %p929 = scmp.ne.s32.totalorder %s921, %s923
    %p930 = scmp.eq.s32.totalorder %s101, 1
    %p931 = por %p929, %p930
    %p932 = scmp.ne.s32.totalorder %s923, %s924
    %p933 = scmp.eq.s32.totalorder %s101, 0
    %p934 = por %p932, %p933
    %p935 = scmp.ne.s32.totalorder %s923, %s924
    %p936 = scmp.eq.s32.totalorder %s102, 1
    %p937 = por %p935, %p936
    %p939 = scmp.ne.s32.totalorder %s924, %s938
    %p940 = scmp.eq.s32.totalorder %s102, 0
    %p941 = por %p939, %p940
    %s943 = sadd.s32 %s942, 1
    %p946 = scmp.eq.s32.totalorder %s96, 1
    %p947 = scmp.ne.s32.totalorder %s942, %s944
    %p948 = scmp.eq.s32.totalorder %s96, 0
    %p949 = por %p947, %p948
    %p950 = scmp.ne.s32.totalorder %s942, %s944
    %p951 = scmp.eq.s32.totalorder %s101, 1
    %p952 = por %p950, %p951
    %p953 = scmp.ne.s32.totalorder %s944, %s945
    %p954 = scmp.eq.s32.totalorder %s101, 0
    %p955 = por %p953, %p954
    %p956 = scmp.ne.s32.totalorder %s944, %s945
    %p957 = scmp.eq.s32.totalorder %s102, 1
    %p958 = por %p956, %p957
    %p960 = scmp.ne.s32.totalorder %s945, %s959
    %p961 = scmp.eq.s32.totalorder %s102, 0
    %p962 = por %p960, %p961
    %s964 = sadd.s32 %s963, 1
    %p967 = scmp.eq.s32.totalorder %s96, 1
    %p968 = scmp.ne.s32.totalorder %s963, %s965
    %p969 = scmp.eq.s32.totalorder %s96, 0
    %p970 = por %p968, %p969
    %p971 = scmp.ne.s32.totalorder %s963, %s965
    %p972 = scmp.eq.s32.totalorder %s101, 1
    %p973 = por %p971, %p972
    %p974 = scmp.ne.s32.totalorder %s965, %s966
    %p975 = scmp.eq.s32.totalorder %s101, 0
    %p976 = por %p974, %p975
    %p977 = scmp.ne.s32.totalorder %s965, %s966
    %p978 = scmp.eq.s32.totalorder %s102, 1
    %p979 = por %p977, %p978
    %p981 = scmp.ne.s32.totalorder %s966, %s980
    %p982 = scmp.eq.s32.totalorder %s102, 0
    %p983 = por %p981, %p982
    %s985 = sadd.s32 %s984, 1
    %p988 = scmp.eq.s32.totalorder %s96, 1
    %p989 = scmp.ne.s32.totalorder %s984, %s986
    %p990 = scmp.eq.s32.totalorder %s96, 0
    %p991 = por %p989, %p990
    %p992 = scmp.ne.s32.totalorder %s984, %s986
    %p993 = scmp.eq.s32.totalorder %s101, 1
    %p994 = por %p992, %p993
    %p995 = scmp.ne.s32.totalorder %s986, %s987
    %p996 = scmp.eq.s32.totalorder %s101, 0
    %p997 = por %p995, %p996
    %p998 = scmp.ne.s32.totalorder %s986, %s987
    %p999 = scmp.eq.s32.totalorder %s102, 1
    %p1000 = por %p998, %p999
    %p1002 = scmp.ne.s32.totalorder %s987, %s1001
    %p1003 = scmp.eq.s32.totalorder %s102, 0
    %p1004 = por %p1002, %p1003
    %s1006 = sadd.s32 %s1005, 1
    %p1009 = scmp.eq.s32.totalorder %s96, 1
    %p1010 = scmp.ne.s32.totalorder %s1005, %s1007
    %p1011 = scmp.eq.s32.totalorder %s96, 0
    %p1012 = por %p1010, %p1011
    %p1013 = scmp.ne.s32.totalorder %s1005, %s1007
    %p1014 = scmp.eq.s32.totalorder %s101, 1
    %p1015 = por %p1013, %p1014
    %p1016 = scmp.ne.s32.totalorder %s1007, %s1008
    %p1017 = scmp.eq.s32.totalorder %s101, 0
    %p1018 = por %p1016, %p1017
    %p1019 = scmp.ne.s32.totalorder %s1007, %s1008
    %p1020 = scmp.eq.s32.totalorder %s102, 1
    %p1021 = por %p1019, %p1020
    %p1023 = scmp.ne.s32.totalorder %s1008, %s1022
    %p1024 = scmp.eq.s32.totalorder %s102, 0
    %p1025 = por %p1023, %p1024
    %s1027 = sadd.s32 %s1026, 1
    %p1030 = scmp.eq.s32.totalorder %s96, 1
    %p1031 = scmp.ne.s32.totalorder %s1026, %s1028
    %p1032 = scmp.eq.s32.totalorder %s96, 0
    %p1033 = por %p1031, %p1032
    %p1034 = scmp.ne.s32.totalorder %s1026, %s1028
    %p1035 = scmp.eq.s32.totalorder %s101, 1
    %p1036 = por %p1034, %p1035
    %p1037 = scmp.ne.s32.totalorder %s1028, %s1029
    %p1038 = scmp.eq.s32.totalorder %s101, 0
    %p1039 = por %p1037, %p1038
    %p1040 = scmp.ne.s32.totalorder %s1028, %s1029
    %p1041 = scmp.eq.s32.totalorder %s102, 1
    %p1042 = por %p1040, %p1041
    %p1044 = scmp.ne.s32.totalorder %s1029, %s1043
    %p1045 = scmp.eq.s32.totalorder %s102, 0
    %p1046 = por %p1044, %p1045
    %s1047 = ssub.s32 %s96, %s103
    %p1048 = scmp.eq.s32.totalorder %s1047, 0
    %s1050 = sadd.s32 %s1049, 1
    %s1051 = scalar_select %p1048, %s1049, %s1050
    %p1054 = pneg %p1048
    %p1055 = scmp.eq.s32.totalorder %s96, 1
    %p1056 = por %p1054, %p1055
    %p1057 = scmp.ne.s32.totalorder %s1049, %s1052
    %p1058 = scmp.eq.s32.totalorder %s96, 0
    %p1059 = por %p1057, %p1058
    %p1060 = scmp.ne.s32.totalorder %s1049, %s1052
    %p1061 = scmp.eq.s32.totalorder %s101, 1
    %p1062 = por %p1060, %p1061
    %p1063 = scmp.ne.s32.totalorder %s1052, %s1053
    %p1064 = scmp.eq.s32.totalorder %s101, 0
    %p1065 = por %p1063, %p1064
    %p1066 = scmp.ne.s32.totalorder %s1052, %s1053
    %p1067 = scmp.eq.s32.totalorder %s102, 1
    %p1068 = por %p1066, %p1067
    %p1070 = scmp.ne.s32.totalorder %s1053, %s1069
    %p1071 = scmp.eq.s32.totalorder %s102, 0
    %p1072 = por %p1070, %p1071
    %s1073 = ssub.s32 %s96, %s103
    %p1074 = scmp.eq.s32.totalorder %s1073, 0
    %s1076 = sadd.s32 %s1075, 1
    %s1077 = scalar_select %p1074, %s1075, %s1076
    %p1080 = pneg %p1074
    %p1081 = scmp.eq.s32.totalorder %s96, 1
    %p1082 = por %p1080, %p1081
    %p1083 = scmp.ne.s32.totalorder %s1075, %s1078
    %p1084 = scmp.eq.s32.totalorder %s96, 0
    %p1085 = por %p1083, %p1084
    %p1086 = scmp.ne.s32.totalorder %s1075, %s1078
    %p1087 = scmp.eq.s32.totalorder %s101, 1
    %p1088 = por %p1086, %p1087
    %p1089 = scmp.ne.s32.totalorder %s1078, %s1079
    %p1090 = scmp.eq.s32.totalorder %s101, 0
    %p1091 = por %p1089, %p1090
    %p1092 = scmp.ne.s32.totalorder %s1078, %s1079
    %p1093 = scmp.eq.s32.totalorder %s102, 1
    %p1094 = por %p1092, %p1093
    %p1096 = scmp.ne.s32.totalorder %s1079, %s1095
    %p1097 = scmp.eq.s32.totalorder %s102, 0
    %p1098 = por %p1096, %p1097
    %p1099 = scmp.le.s32.totalorder 1, %s96
    %p1100 = scmp.lt.s32.totalorder %s96, 3
    %p1101 = pnand %p1099, %p1100
    %p1102 = pneg %p1101
    // Predicated region
    $region9: #{diffusion_transition_forward.1} parent=5 // pred_check
      _
    $region10: #{diffusion_transition_forward.1} parent=5 // pred_check_branch
      %1104 = sbr.rel (%p1101) target = $region12
    $region11: #{diffusion_transition_forward.1} parent=5 // pred_region
      %s1105 = ssub.s32 %s96, 1
      // Predicated region
      $region13: #{diffusion_transition_forward.1} parent=11 // pred_check
        %p1106 = pneg %p325
      $region14: #{diffusion_transition_forward.1} parent=11 // pred_check_branch
        %1108 = sbr.rel (%p1106) target = $region16
      $region15: #{diffusion_transition_forward.1} parent=11 // pred_region
        _
      $region16: #{diffusion_transition_forward.1} parent=11 // pred_fallthru
        _
      // Predicated region
      $region17: #{diffusion_transition_forward.1} parent=11 // pred_check
        %p1109 = pneg %p346
      $region18: #{diffusion_transition_forward.1} parent=11 // pred_check_branch
        %1111 = sbr.rel (%p1109) target = $region20
      $region19: #{diffusion_transition_forward.1} parent=11 // pred_region
        _
      $region20: #{diffusion_transition_forward.1} parent=11 // pred_fallthru
        _
      // Predicated region
      $region21: #{diffusion_transition_forward.1} parent=11 // pred_check
        %p1112 = pneg %p367
      $region22: #{diffusion_transition_forward.1} parent=11 // pred_check_branch
        %1114 = sbr.rel (%p1112) target = $region24
      $region23: #{diffusion_transition_forward.1} parent=11 // pred_region
        _
      $region24: #{diffusion_transition_forward.1} parent=11 // pred_fallthru
        _
      // Predicated region
      $region25: #{diffusion_transition_forward.1} parent=11 // pred_check
        %p1115 = pneg %p388
      $region26: #{diffusion_transition_forward.1} parent=11 // pred_check_branch
        %1117 = sbr.rel (%p1115) target = $region28
      $region27: #{diffusion_transition_forward.1} parent=11 // pred_region
        _
      $region28: #{diffusion_transition_forward.1} parent=11 // pred_fallthru
        _
      // Predicated region
      $region29: #{diffusion_transition_forward.1} parent=11 // pred_check
        %p1118 = pneg %p409
      $region30: #{diffusion_transition_forward.1} parent=11 // pred_check_branch
        %1120 = sbr.rel (%p1118) target = $region32
      $region31: #{diffusion_transition_forward.1} parent=11 // pred_region
        _
      $region32: #{diffusion_transition_forward.1} parent=11 // pred_fallthru
        _
      // Predicated region
      $region33: #{diffusion_transition_forward.1} parent=11 // pred_check
        %p1121 = pneg %p430
      $region34: #{diffusion_transition_forward.1} parent=11 // pred_check_branch
        %1123 = sbr.rel (%p1121) target = $region36
      $region35: #{diffusion_transition_forward.1} parent=11 // pred_region
        _
      $region36: #{diffusion_transition_forward.1} parent=11 // pred_fallthru
        _
      // Predicated region
      $region37: #{diffusion_transition_forward.1} parent=11 // pred_check
        %p1124 = pneg %p451
      $region38: #{diffusion_transition_forward.1} parent=11 // pred_check_branch
        %1126 = sbr.rel (%p1124) target = $region40
      $region39: #{diffusion_transition_forward.1} parent=11 // pred_region
        _
      $region40: #{diffusion_transition_forward.1} parent=11 // pred_fallthru
        _
      // Predicated region
      $region41: #{diffusion_transition_forward.1} parent=11 // pred_check
        %p1127 = pneg %p472
      $region42: #{diffusion_transition_forward.1} parent=11 // pred_check_branch
        %1129 = sbr.rel (%p1127) target = $region44
      $region43: #{diffusion_transition_forward.1} parent=11 // pred_region
        _
      $region44: #{diffusion_transition_forward.1} parent=11 // pred_fallthru
        _
      // Predicated region
      $region45: #{diffusion_transition_forward.1} parent=11 // pred_check
        %p1130 = pneg %p493
      $region46: #{diffusion_transition_forward.1} parent=11 // pred_check_branch
        %1132 = sbr.rel (%p1130) target = $region48
      $region47: #{diffusion_transition_forward.1} parent=11 // pred_region
        _
      $region48: #{diffusion_transition_forward.1} parent=11 // pred_fallthru
        _
      // Predicated region
      $region49: #{diffusion_transition_forward.1} parent=11 // pred_check
        %p1133 = pneg %p514
      $region50: #{diffusion_transition_forward.1} parent=11 // pred_check_branch
        %1135 = sbr.rel (%p1133) target = $region52
      $region51: #{diffusion_transition_forward.1} parent=11 // pred_region
        _
      $region52: #{diffusion_transition_forward.1} parent=11 // pred_fallthru
        _
      // Predicated region
      $region53: #{diffusion_transition_forward.1} parent=11 // pred_check
        %p1136 = pneg %p535
      $region54: #{diffusion_transition_forward.1} parent=11 // pred_check_branch
        %1138 = sbr.rel (%p1136) target = $region56
      $region55: #{diffusion_transition_forward.1} parent=11 // pred_region
        _
      $region56: #{diffusion_transition_forward.1} parent=11 // pred_fallthru
        _
      // Predicated region
      $region57: #{diffusion_transition_forward.1} parent=11 // pred_check
        %p1139 = pneg %p556
      $region58: #{diffusion_transition_forward.1} parent=11 // pred_check_branch
        %1141 = sbr.rel (%p1139) target = $region60
      $region59: #{diffusion_transition_forward.1} parent=11 // pred_region
        _
      $region60: #{diffusion_transition_forward.1} parent=11 // pred_fallthru
        _
      // Predicated region
      $region61: #{diffusion_transition_forward.1} parent=11 // pred_check
        %p1142 = pneg %p577
      $region62: #{diffusion_transition_forward.1} parent=11 // pred_check_branch
        %1144 = sbr.rel (%p1142) target = $region64
      $region63: #{diffusion_transition_forward.1} parent=11 // pred_region
        _
      $region64: #{diffusion_transition_forward.1} parent=11 // pred_fallthru
        _
      // Predicated region
      $region65: #{diffusion_transition_forward.1} parent=11 // pred_check
        %p1145 = pneg %p598
      $region66: #{diffusion_transition_forward.1} parent=11 // pred_check_branch
        %1147 = sbr.rel (%p1145) target = $region68
      $region67: #{diffusion_transition_forward.1} parent=11 // pred_region
        _
      $region68: #{diffusion_transition_forward.1} parent=11 // pred_fallthru
        _
      // Predicated region
      $region69: #{diffusion_transition_forward.1} parent=11 // pred_check
        %p1148 = pneg %p619
      $region70: #{diffusion_transition_forward.1} parent=11 // pred_check_branch
        %1150 = sbr.rel (%p1148) target = $region72
      $region71: #{diffusion_transition_forward.1} parent=11 // pred_region
        _
      $region72: #{diffusion_transition_forward.1} parent=11 // pred_fallthru
        _
      // Predicated region
      $region73: #{diffusion_transition_forward.1} parent=11 // pred_check
        %p1151 = pneg %p640
      $region74: #{diffusion_transition_forward.1} parent=11 // pred_check_branch
        %1153 = sbr.rel (%p1151) target = $region76
      $region75: #{diffusion_transition_forward.1} parent=11 // pred_region
        _
      $region76: #{diffusion_transition_forward.1} parent=11 // pred_fallthru
        _
      // Predicated region
      $region77: #{diffusion_transition_forward.1} parent=11 // pred_check
        %p1154 = pneg %p661
      $region78: #{diffusion_transition_forward.1} parent=11 // pred_check_branch
        %1156 = sbr.rel (%p1154) target = $region80
      $region79: #{diffusion_transition_forward.1} parent=11 // pred_region
        _
      $region80: #{diffusion_transition_forward.1} parent=11 // pred_fallthru
        _
      // Predicated region
      $region81: #{diffusion_transition_forward.1} parent=11 // pred_check
        %p1157 = pneg %p682
      $region82: #{diffusion_transition_forward.1} parent=11 // pred_check_branch
        %1159 = sbr.rel (%p1157) target = $region84
      $region83: #{diffusion_transition_forward.1} parent=11 // pred_region
        _
      $region84: #{diffusion_transition_forward.1} parent=11 // pred_fallthru
        _
      // Predicated region
      $region85: #{diffusion_transition_forward.1} parent=11 // pred_check
        %p1160 = pneg %p703
      $region86: #{diffusion_transition_forward.1} parent=11 // pred_check_branch
        %1162 = sbr.rel (%p1160) target = $region88
      $region87: #{diffusion_transition_forward.1} parent=11 // pred_region
        _
      $region88: #{diffusion_transition_forward.1} parent=11 // pred_fallthru
        _
      // Predicated region
      $region89: #{diffusion_transition_forward.1} parent=11 // pred_check
        %p1163 = pneg %p724
      $region90: #{diffusion_transition_forward.1} parent=11 // pred_check_branch
        %1165 = sbr.rel (%p1163) target = $region92
      $region91: #{diffusion_transition_forward.1} parent=11 // pred_region
        _
      $region92: #{diffusion_transition_forward.1} parent=11 // pred_fallthru
        _
      // Predicated region
      $region93: #{diffusion_transition_forward.1} parent=11 // pred_check
        %p1166 = pneg %p745
      $region94: #{diffusion_transition_forward.1} parent=11 // pred_check_branch
        %1168 = sbr.rel (%p1166) target = $region96
      $region95: #{diffusion_transition_forward.1} parent=11 // pred_region
        _
      $region96: #{diffusion_transition_forward.1} parent=11 // pred_fallthru
        _
      // Predicated region
      $region97: #{diffusion_transition_forward.1} parent=11 // pred_check
        %p1169 = pneg %p766
      $region98: #{diffusion_transition_forward.1} parent=11 // pred_check_branch
        %1171 = sbr.rel (%p1169) target = $region100
      $region99: #{diffusion_transition_forward.1} parent=11 // pred_region
        _
      $region100: #{diffusion_transition_forward.1} parent=11 // pred_fallthru
        _
      // Predicated region
      $region101: #{diffusion_transition_forward.1} parent=11 // pred_check
        %p1172 = pneg %p787
      $region102: #{diffusion_transition_forward.1} parent=11 // pred_check_branch
        %1174 = sbr.rel (%p1172) target = $region104
      $region103: #{diffusion_transition_forward.1} parent=11 // pred_region
        _
      $region104: #{diffusion_transition_forward.1} parent=11 // pred_fallthru
        _
      // Predicated region
      $region105: #{diffusion_transition_forward.1} parent=11 // pred_check
        %p1175 = pneg %p808
      $region106: #{diffusion_transition_forward.1} parent=11 // pred_check_branch
        %1177 = sbr.rel (%p1175) target = $region108
      $region107: #{diffusion_transition_forward.1} parent=11 // pred_region
        _
      $region108: #{diffusion_transition_forward.1} parent=11 // pred_fallthru
        _
      // Predicated region
      $region109: #{diffusion_transition_forward.1} parent=11 // pred_check
        %p1178 = pneg %p829
      $region110: #{diffusion_transition_forward.1} parent=11 // pred_check_branch
        %1180 = sbr.rel (%p1178) target = $region112
      $region111: #{diffusion_transition_forward.1} parent=11 // pred_region
        _
      $region112: #{diffusion_transition_forward.1} parent=11 // pred_fallthru
        _
      // Predicated region
      $region113: #{diffusion_transition_forward.1} parent=11 // pred_check
        %p1181 = pneg %p850
      $region114: #{diffusion_transition_forward.1} parent=11 // pred_check_branch
        %1183 = sbr.rel (%p1181) target = $region116
      $region115: #{diffusion_transition_forward.1} parent=11 // pred_region
        _
      $region116: #{diffusion_transition_forward.1} parent=11 // pred_fallthru
        _
      // Predicated region
      $region117: #{diffusion_transition_forward.1} parent=11 // pred_check
        %p1184 = pneg %p871
      $region118: #{diffusion_transition_forward.1} parent=11 // pred_check_branch
        %1186 = sbr.rel (%p1184) target = $region120
      $region119: #{diffusion_transition_forward.1} parent=11 // pred_region
        _
      $region120: #{diffusion_transition_forward.1} parent=11 // pred_fallthru
        _
      // Predicated region
      $region121: #{diffusion_transition_forward.1} parent=11 // pred_check
        %p1187 = pneg %p892
      $region122: #{diffusion_transition_forward.1} parent=11 // pred_check_branch
        %1189 = sbr.rel (%p1187) target = $region124
      $region123: #{diffusion_transition_forward.1} parent=11 // pred_region
        _
      $region124: #{diffusion_transition_forward.1} parent=11 // pred_fallthru
        _
      // Predicated region
      $region125: #{diffusion_transition_forward.1} parent=11 // pred_check
        %p1190 = pneg %p913
      $region126: #{diffusion_transition_forward.1} parent=11 // pred_check_branch
        %1192 = sbr.rel (%p1190) target = $region128
      $region127: #{diffusion_transition_forward.1} parent=11 // pred_region
        _
      $region128: #{diffusion_transition_forward.1} parent=11 // pred_fallthru
        _
      // Predicated region
      $region129: #{diffusion_transition_forward.1} parent=11 // pred_check
        %p1193 = pneg %p934
      $region130: #{diffusion_transition_forward.1} parent=11 // pred_check_branch
        %1195 = sbr.rel (%p1193) target = $region132
      $region131: #{diffusion_transition_forward.1} parent=11 // pred_region
        _
      $region132: #{diffusion_transition_forward.1} parent=11 // pred_fallthru
        _
      // Predicated region
      $region133: #{diffusion_transition_forward.1} parent=11 // pred_check
        %p1196 = pneg %p955
      $region134: #{diffusion_transition_forward.1} parent=11 // pred_check_branch
        %1198 = sbr.rel (%p1196) target = $region136
      $region135: #{diffusion_transition_forward.1} parent=11 // pred_region
        _
      $region136: #{diffusion_transition_forward.1} parent=11 // pred_fallthru
        _
      // Predicated region
      $region137: #{diffusion_transition_forward.1} parent=11 // pred_check
        %p1199 = pneg %p976
      $region138: #{diffusion_transition_forward.1} parent=11 // pred_check_branch
        %1201 = sbr.rel (%p1199) target = $region140
      $region139: #{diffusion_transition_forward.1} parent=11 // pred_region
        _
      $region140: #{diffusion_transition_forward.1} parent=11 // pred_fallthru
        _
      // Predicated region
      $region141: #{diffusion_transition_forward.1} parent=11 // pred_check
        %p1202 = pneg %p997
      $region142: #{diffusion_transition_forward.1} parent=11 // pred_check_branch
        %1204 = sbr.rel (%p1202) target = $region144
      $region143: #{diffusion_transition_forward.1} parent=11 // pred_region
        _
      $region144: #{diffusion_transition_forward.1} parent=11 // pred_fallthru
        _
      // Predicated region
      $region145: #{diffusion_transition_forward.1} parent=11 // pred_check
        %p1205 = pneg %p1018
      $region146: #{diffusion_transition_forward.1} parent=11 // pred_check_branch
        %1207 = sbr.rel (%p1205) target = $region148
      $region147: #{diffusion_transition_forward.1} parent=11 // pred_region
        _
      $region148: #{diffusion_transition_forward.1} parent=11 // pred_fallthru
        _
      // Predicated region
      $region149: #{diffusion_transition_forward.1} parent=11 // pred_check
        %p1208 = pneg %p1039
      $region150: #{diffusion_transition_forward.1} parent=11 // pred_check_branch
        %1210 = sbr.rel (%p1208) target = $region152
      $region151: #{diffusion_transition_forward.1} parent=11 // pred_region
        _
      $region152: #{diffusion_transition_forward.1} parent=11 // pred_fallthru
        _
    $region12: #{diffusion_transition_forward.1} parent=5 // pred_fallthru
      _
    %p1211 = scmp.lt.s32.totalorder %s96, 2
    // Predicated region
    $region153: #{diffusion_transition_forward.1} parent=5 // pred_check
      %p1212 = pneg %p1211
    $region154: #{diffusion_transition_forward.1} parent=5 // pred_check_branch
      %1214 = sbr.rel (%p1212) target = $region156
    $region155: #{diffusion_transition_forward.1} parent=5 // pred_region
      // Predicated region
      $region157: #{diffusion_transition_forward.1} parent=155 // pred_check
        %p1215 = pneg %p116
      $region158: #{diffusion_transition_forward.1} parent=155 // pred_check_branch
        %1217 = sbr.rel (%p1215) target = $region160
      $region159: #{diffusion_transition_forward.1} parent=155 // pred_region
        %p1218 = scmp.lt.s32.totalorder %s96, 1
        %s1219 = scalar_select %p1218, %s96, 1
        %s1220 = smul.addr %s1219, 2
        %s1221 = smul.addr %s1220, 8
        %s1222 = scalar_lea.vmem %s1, %s1221
      $region160: #{diffusion_transition_forward.1} parent=155 // pred_fallthru
        _
      // Predicated region
      $region161: #{diffusion_transition_forward.1} parent=155 // pred_check
        %p1223 = pneg %p142
      $region162: #{diffusion_transition_forward.1} parent=155 // pred_check_branch
        %1225 = sbr.rel (%p1223) target = $region164
      $region163: #{diffusion_transition_forward.1} parent=155 // pred_region
        %p1226 = scmp.lt.s32.totalorder %s96, 1
        %s1227 = scalar_select %p1226, %s96, 1
        %s1228 = smul.addr %s1227, 2
        %s1229 = smul.addr %s1228, 8
        %s1230 = scalar_lea.vmem %s3, %s1229
      $region164: #{diffusion_transition_forward.1} parent=155 // pred_fallthru
        _
      // Predicated region
      $region165: #{diffusion_transition_forward.1} parent=155 // pred_check
        %p1231 = pneg %p168
      $region166: #{diffusion_transition_forward.1} parent=155 // pred_check_branch
        %1233 = sbr.rel (%p1231) target = $region168
      $region167: #{diffusion_transition_forward.1} parent=155 // pred_region
        %p1234 = scmp.lt.s32.totalorder %s96, 1
        %s1235 = scalar_select %p1234, %s96, 1
        %s1236 = smul.addr %s1235, 2
        %s1237 = smul.addr %s1236, 8
        %s1238 = scalar_lea.vmem %s5, %s1237
      $region168: #{diffusion_transition_forward.1} parent=155 // pred_fallthru
        _
      // Predicated region
      $region169: #{diffusion_transition_forward.1} parent=155 // pred_check
        %p1239 = pneg %p194
      $region170: #{diffusion_transition_forward.1} parent=155 // pred_check_branch
        %1241 = sbr.rel (%p1239) target = $region172
      $region171: #{diffusion_transition_forward.1} parent=155 // pred_region
        %p1242 = scmp.lt.s32.totalorder %s96, 1
        %s1243 = scalar_select %p1242, %s96, 1
        %s1244 = smul.addr %s1243, 2
        %s1245 = smul.addr %s1244, 8
        %s1246 = scalar_lea.vmem %s7, %s1245
      $region172: #{diffusion_transition_forward.1} parent=155 // pred_fallthru
        _
      // Predicated region
      $region173: #{diffusion_transition_forward.1} parent=155 // pred_check
        %p1247 = pneg %p220
      $region174: #{diffusion_transition_forward.1} parent=155 // pred_check_branch
        %1249 = sbr.rel (%p1247) target = $region176
      $region175: #{diffusion_transition_forward.1} parent=155 // pred_region
        %p1250 = scmp.lt.s32.totalorder %s96, 1
        %s1251 = scalar_select %p1250, %s96, 1
        %s1252 = smul.addr %s1251, 2
        %s1253 = smul.addr %s1252, 8
        %s1254 = scalar_lea.vmem %s9, %s1253
      $region176: #{diffusion_transition_forward.1} parent=155 // pred_fallthru
        _
      // Predicated region
      $region177: #{diffusion_transition_forward.1} parent=155 // pred_check
        %p1255 = pneg %p246
      $region178: #{diffusion_transition_forward.1} parent=155 // pred_check_branch
        %1257 = sbr.rel (%p1255) target = $region180
      $region179: #{diffusion_transition_forward.1} parent=155 // pred_region
        %p1258 = scmp.lt.s32.totalorder %s96, 1
        %s1259 = scalar_select %p1258, %s96, 1
        %s1260 = scalar_lea.vmem %s11, %s1259
      $region180: #{diffusion_transition_forward.1} parent=155 // pred_fallthru
        _
      // Predicated region
      $region181: #{diffusion_transition_forward.1} parent=155 // pred_check
        %p1261 = pneg %p272
      $region182: #{diffusion_transition_forward.1} parent=155 // pred_check_branch
        %1263 = sbr.rel (%p1261) target = $region184
      $region183: #{diffusion_transition_forward.1} parent=155 // pred_region
        %p1264 = scmp.lt.s32.totalorder %s96, 1
        %s1265 = scalar_select %p1264, %s96, 1
        %s1266 = scalar_lea.vmem %s13, %s1265
      $region184: #{diffusion_transition_forward.1} parent=155 // pred_fallthru
        _
      // Predicated region
      $region185: #{diffusion_transition_forward.1} parent=155 // pred_check
        %p1267 = pneg %p298
      $region186: #{diffusion_transition_forward.1} parent=155 // pred_check_branch
        %1269 = sbr.rel (%p1267) target = $region188
      $region187: #{diffusion_transition_forward.1} parent=155 // pred_region
        %p1270 = scmp.lt.s32.totalorder %s96, 1
        %s1271 = scalar_select %p1270, %s96, 1
        %s1272 = scalar_lea.vmem %s15, %s1271
      $region188: #{diffusion_transition_forward.1} parent=155 // pred_fallthru
        _
    $region156: #{diffusion_transition_forward.1} parent=5 // pred_fallthru
      _
    %p1273 = scmp.le.s32.totalorder 1, %s96
    %p1274 = scmp.lt.s32.totalorder %s96, 3
    %p1275 = pnand %p1273, %p1274
    %p1276 = pneg %p1275
    // Predicated region
    $region189: #{diffusion_transition_forward.1} parent=5 // pred_check
      _
    $region190: #{diffusion_transition_forward.1} parent=5 // pred_check_branch
      %1278 = sbr.rel (%p1275) target = $region192
    $region191: #{diffusion_transition_forward.1} parent=5 // pred_region
      %s1279 = ssub.s32 %s96, 1
      %p1280 = scmp.lt.s32.totalorder %s101, 1
      %s1281 = scalar_select %p1280, %s101, 1
      %s1282 = smul.addr %s1281, 2
      %s1283 = smul.addr %s1282, 8
      %s1284 = scalar_lea.vmem %s1, %s1283
      %p1285 = pneg %p122
      %p1286 = pneg %p119
      %p1287 = scmp.lt.s32.totalorder %s101, 1
      %s1288 = scalar_select %p1287, %s101, 1
      %s1289 = smul.addr %s1288, 2
      %s1290 = smul.addr %s1289, 8
      %s1291 = scalar_lea.vmem %s3, %s1290
      %p1292 = pneg %p148
      %p1293 = pneg %p145
      %p1294 = scmp.lt.s32.totalorder %s101, 1
      %s1295 = scalar_select %p1294, %s101, 1
      %s1296 = smul.addr %s1295, 2
      %s1297 = smul.addr %s1296, 8
      %s1298 = scalar_lea.vmem %s5, %s1297
      %p1299 = pneg %p174
      %p1300 = pneg %p171
      %p1301 = scmp.lt.s32.totalorder %s101, 1
      %s1302 = scalar_select %p1301, %s101, 1
      %s1303 = smul.addr %s1302, 2
      %s1304 = smul.addr %s1303, 8
      %s1305 = scalar_lea.vmem %s7, %s1304
      %p1306 = pneg %p200
      %p1307 = pneg %p197
      %p1308 = scmp.lt.s32.totalorder %s101, 1
      %s1309 = scalar_select %p1308, %s101, 1
      %s1310 = smul.addr %s1309, 2
      %s1311 = smul.addr %s1310, 8
      %s1312 = scalar_lea.vmem %s9, %s1311
      %p1313 = pneg %p226
      %p1314 = pneg %p223
      %p1315 = scmp.lt.s32.totalorder %s101, 1
      %s1316 = scalar_select %p1315, %s101, 1
      %s1317 = scalar_lea.vmem %s11, %s1316
      %p1318 = pneg %p252
      %p1319 = pneg %p249
      %p1320 = scmp.lt.s32.totalorder %s101, 1
      %s1321 = scalar_select %p1320, %s101, 1
      %s1322 = scalar_lea.vmem %s13, %s1321
      %p1323 = pneg %p278
      %p1324 = pneg %p275
      %p1325 = scmp.lt.s32.totalorder %s101, 1
      %s1326 = scalar_select %p1325, %s101, 1
      %s1327 = scalar_lea.vmem %s15, %s1326
      %p1328 = pneg %p304
      %p1329 = pneg %p301
      %p1330 = pneg %p325
      %p1331 = pneg %p322
      %p1332 = pneg %p346
      %p1333 = pneg %p343
      %p1334 = pneg %p367
      %p1335 = pneg %p364
      %p1336 = pneg %p388
      %p1337 = pneg %p385
      %p1338 = pneg %p409
      %p1339 = pneg %p406
      %p1340 = pneg %p430
      %p1341 = pneg %p427
      %p1342 = pneg %p451
      %p1343 = pneg %p448
      %p1344 = pneg %p472
      %p1345 = pneg %p469
      %p1346 = pneg %p493
      %p1347 = pneg %p490
      %p1348 = pneg %p514
      %p1349 = pneg %p511
      %p1350 = pneg %p535
      %p1351 = pneg %p532
      %p1352 = pneg %p556
      %p1353 = pneg %p553
      %p1354 = pneg %p577
      %p1355 = pneg %p574
      %p1356 = pneg %p598
      %p1357 = pneg %p595
      %p1358 = pneg %p619
      %p1359 = pneg %p616
      %p1360 = pneg %p640
      %p1361 = pneg %p637
      %p1362 = pneg %p661
      %p1363 = pneg %p658
      %p1364 = pneg %p682
      %p1365 = pneg %p679
      %p1366 = pneg %p703
      %p1367 = pneg %p700
      %p1368 = pneg %p724
      %p1369 = pneg %p721
      %p1370 = pneg %p745
      %p1371 = pneg %p742
      %p1372 = pneg %p766
      %p1373 = pneg %p763
      %p1374 = pneg %p787
      %p1375 = pneg %p784
      %p1376 = pneg %p808
      %p1377 = pneg %p805
      %p1378 = pneg %p829
      %p1379 = pneg %p826
      %p1380 = pneg %p850
      %p1381 = pneg %p847
      %p1382 = pneg %p871
      %p1383 = pneg %p868
      %p1384 = pneg %p892
      %p1385 = pneg %p889
      %p1386 = pneg %p913
      %p1387 = pneg %p910
      %p1388 = pneg %p934
      %p1389 = pneg %p931
      %p1390 = pneg %p955
      %p1391 = pneg %p952
      %p1392 = pneg %p976
      %p1393 = pneg %p973
      %p1394 = pneg %p997
      %p1395 = pneg %p994
      %p1396 = pneg %p1018
      %p1397 = pneg %p1015
      %p1398 = pneg %p1039
      %p1399 = pneg %p1036
      %p1400 = pneg %p1065
      %p1401 = pneg %p1062
      %p1402 = scmp.lt.s32.totalorder %s101, 1
      %s1403 = scalar_select %p1402, %s101, 1
      %s1404 = smul.addr %s1403, 2
      %s1405 = smul.addr %s1404, 8
      %s1406 = scalar_lea.vmem %s87, %s1405
      %p1407 = pneg %p1091
      %p1408 = pneg %p1088
      %p1409 = scmp.lt.s32.totalorder %s101, 1
      %s1410 = scalar_select %p1409, %s101, 1
      %s1411 = smul.addr %s1410, 2
      %s1412 = smul.addr %s1411, 8
      %s1413 = scalar_lea.vmem %s89, %s1412
      %p1414 = scmp.lt.s32.totalorder %s101, 1
      %s1415 = scalar_select %p1414, %s101, 1
      %s1416 = smul.addr %s1415, 2
      %s1417 = smul.addr %s1416, 8
      %s1418 = scalar_lea.vmem %s1, %s1417
      %p1419 = scmp.lt.s32.totalorder %s101, 1
      %s1420 = scalar_select %p1419, %s101, 1
      %s1421 = smul.addr %s1420, 2
      %s1422 = smul.addr %s1421, 8
      %s1423 = scalar_lea.vmem %s3, %s1422
      %p1424 = scmp.lt.s32.totalorder %s101, 1
      %s1425 = scalar_select %p1424, %s101, 1
      %s1426 = smul.addr %s1425, 2
      %s1427 = smul.addr %s1426, 8
      %s1428 = scalar_lea.vmem %s5, %s1427
      %p1429 = scmp.lt.s32.totalorder %s101, 1
      %s1430 = scalar_select %p1429, %s101, 1
      %s1431 = smul.addr %s1430, 2
      %s1432 = smul.addr %s1431, 8
      %s1433 = scalar_lea.vmem %s7, %s1432
      %p1434 = scmp.lt.s32.totalorder %s101, 1
      %s1435 = scalar_select %p1434, %s101, 1
      %s1436 = smul.addr %s1435, 2
      %s1437 = smul.addr %s1436, 8
      %s1438 = scalar_lea.vmem %s9, %s1437
      %p1439 = scmp.lt.s32.totalorder %s101, 1
      %s1440 = scalar_select %p1439, %s101, 1
      %s1441 = scalar_lea.vmem %s11, %s1440
      %p1442 = scmp.lt.s32.totalorder %s101, 1
      %s1443 = scalar_select %p1442, %s101, 1
      %s1444 = scalar_lea.vmem %s13, %s1443
      %p1445 = scmp.lt.s32.totalorder %s101, 1
      %s1446 = scalar_select %p1445, %s101, 1
      %s1447 = scalar_lea.vmem %s15, %s1446
      %p1448 = scmp.lt.s32.totalorder %s101, 1
      %s1449 = scalar_select %p1448, %s101, 1
      %s1450 = smul.addr %s1449, 2
      %s1451 = smul.addr %s1450, 8
      %s1452 = scalar_lea.vmem %s87, %s1451
      %p1453 = scmp.lt.s32.totalorder %s101, 1
      %s1454 = scalar_select %p1453, %s101, 1
      %s1455 = smul.addr %s1454, 2
      %s1456 = smul.addr %s1455, 8
      %s1457 = scalar_lea.vmem %s89, %s1456
      %v1459 = vld [vmem:[%s1418] sm:$0xff]
      %v1460 = vld [vmem:[%s1418 + $0x8] sm:$0x3]
      %v1461 = vld [vmem:[%s1423] sm:$0xff]
      %v1462 = vld [vmem:[%s1423 + $0x8] sm:$0x3]
      %v1463 = vld [vmem:[%s1441] sm:$0x1]
      %v1465 = vlaneseq
      %v1466 = vshrl.u32 %v1465, 7
      %v1467 = vsub.s32 0, %v1466
      %v1468 = vrot.slane %v1463, %v1467
      %1469 = vset.pattern.permute.xlu0 0
      %1470 = vperm.xlu0 %1469, %v1468
      %v1471 = vpop.permute.xlu0 %1470
      %v1473 = vmul.f32 %v1471, %v1459
      %v1474 = vmul.f32 %v1471, %v1460
      %v1475 = vld [vmem:[%s1444] sm:$0x1]
      %v1477 = vlaneseq
      %v1478 = vshrl.u32 %v1477, 7
      %v1479 = vsub.s32 0, %v1478
      %v1480 = vrot.slane %v1475, %v1479
      %1481 = vset.pattern.permute.xlu0 0
      %1482 = vperm.xlu0 %1481, %v1480
      %v1483 = vpop.permute.xlu0 %1482
      %v1485 = vmul.f32 %v1483, %v1461
      %v1486 = vmul.f32 %v1483, %v1462
      %v1487 = vadd.f32 %v1473, %v1485
      %v1488 = vadd.f32 %v1474, %v1486
      %v1489 = vld [vmem:[%s1428] sm:$0xff]
      %v1490 = vld [vmem:[%s1428 + $0x8] sm:$0x3]
      %v1491 = vld [vmem:[%s17] sm:$0x3]
      %v1492 = vpack.c.bf16 %v1488, %v1487
      %v1493 = vld [vmem:[%s19] sm:$0xf]
      %v1494 = vld [vmem:[%s19 + $0x4] sm:$0xf]
      %v1495 = vld [vmem:[%s19 + $0x8] sm:$0xf]
      %v1496 = vld [vmem:[%s19 + $0xc] sm:$0xf]
      %v1497 = vld [vmem:[%s19 + $0x10] sm:$0xf]
      %v1498 = vld [vmem:[%s19 + $0x14] sm:$0xf]
      %v1499 = vld [vmem:[%s19 + $0x18] sm:$0xf]
      %v1500 = vld [vmem:[%s19 + $0x1c] sm:$0xf]
      %v1501 = vpack.c.bf16 %v1490, %v1489
      %v1510 = vunpack.c.l.b16 %v1493
      %v1511 = vunpack.c.l.b16 %v1494
      %v1512 = vunpack.c.l.b16 %v1495
      %v1513 = vunpack.c.l.b16 %v1496
      %v1514 = vunpack.c.l.b16 %v1497
      %v1515 = vunpack.c.l.b16 %v1498
      %v1516 = vunpack.c.l.b16 %v1499
      %v1517 = vunpack.c.l.b16 %v1500
      %v1518 = vpack.c.b16 %v1511, %v1510
      %v1519 = vpack.c.b16 %v1513, %v1512
      %v1520 = vpack.c.b16 %v1515, %v1514
      %v1521 = vpack.c.b16 %v1517, %v1516
      %vm1526 = vcmask 523264
      %v1528 = vsel %vm1526, %v1501, 0
      %1530 = vmatprep.subr.bf16.mxu0 0
      %1531 = vmatpush1.bf16.msra.mxu0 %v1518
      %1532 = vmatprep.subr.bf16.mxu0 0
      %1533 = vmatpush1.bf16.msra.mxu0 %v1519
      %1534 = vmatprep.subr.bf16.mxu0 0
      %1535 = vmatpush1.bf16.msra.mxu0 %v1520
      %1536 = vmatprep.subr.bf16.mxu0 0
      %1537 = vmatpush1.bf16.msra.mxu0 %v1521
      %1538 = vmatprep.subr.bf16.mxu0 0
      %1539 = vmatpush1.bf16.msra.mxu0 0
      %1540 = vmatprep.subr.bf16.mxu0 0
      %1541 = vmatpush1.bf16.msra.mxu0 0
      %1542 = vmatprep.subr.bf16.mxu0 0
      %1543 = vmatpush1.bf16.msra.mxu0 0
      %1544 = vmatprep.subr.bf16.mxu0 0
      %1545 = vmatpush1.bf16.msra.mxu0 0
      %1546 = vmatprep.subr.bf16.mxu0 0
      %1547 = vmatpush1.bf16.msra.mxu0 0
      %1548 = vmatprep.subr.bf16.mxu0 0
      %1549 = vmatpush1.bf16.msra.mxu0 0
      %1550 = vmatprep.subr.bf16.mxu0 0
      %1551 = vmatpush1.bf16.msra.mxu0 0
      %1552 = vmatprep.subr.bf16.mxu0 0
      %1553 = vmatpush1.bf16.msra.mxu0 0
      %1554 = vmatprep.subr.bf16.mxu0 0
      %1555 = vmatpush1.bf16.msra.mxu0 0
      %1556 = vmatprep.subr.bf16.mxu0 0
      %1557 = vmatpush1.bf16.msra.mxu0 0
      %1558 = vmatprep.subr.bf16.mxu0 0
      %1559 = vmatpush1.bf16.msra.mxu0 0
      %1560 = vmatprep.subr.bf16.mxu0 0
      %1561 = vmatpush1.bf16.msra.mxu0 0
      %1562 = vmatprep.mubr.bf16.mxu0 0
      %1563 = vmatmul.mubr.bf16.gmra.mrb[0].mxu0 %v1528
      %v1564 = vpop.f32.mrb[0].mxu0
      %v1565 = vadd.f32 0.0, %v1564
      %v1566 = vpop.f32.mrb[0].mxu0
      %v1567 = vpop.f32.mrb[0].mxu0
      %v1568 = vadd.f32 0.0, %v1567
      %v1569 = vpop.f32.mrb[0].mxu0
      %1570 = vdwg.mxu0
      %vm1571 = vcmask 31744
      %v1573 = vsel %vm1571, %v1492, 0
      %vm1575 = vcmask 1041408
      %v1577 = vsel %vm1575, %v1491, 0
      %1579 = vmatprep.subr.bf16.mxu0 0
      %1580 = vmatpush1.bf16.msra.mxu0 %v1577
      %1581 = vmatprep.subr.bf16.mxu0 0
      %1582 = vmatpush1.bf16.msra.mxu0 0
      %1583 = vmatprep.subr.bf16.mxu0 0
      %1584 = vmatpush1.bf16.msra.mxu0 0
      %1585 = vmatprep.subr.bf16.mxu0 0
      %1586 = vmatpush1.bf16.msra.mxu0 0
      %1587 = vmatprep.subr.bf16.mxu0 0
      %1588 = vmatpush1.bf16.msra.mxu0 0
      %1589 = vmatprep.subr.bf16.mxu0 0
      %1590 = vmatpush1.bf16.msra.mxu0 0
      %1591 = vmatprep.subr.bf16.mxu0 0
      %1592 = vmatpush1.bf16.msra.mxu0 0
      %1593 = vmatprep.subr.bf16.mxu0 0
      %1594 = vmatpush1.bf16.msra.mxu0 0
      %1595 = vmatprep.subr.bf16.mxu0 0
      %1596 = vmatpush1.bf16.msra.mxu0 0
      %1597 = vmatprep.subr.bf16.mxu0 0
      %1598 = vmatpush1.bf16.msra.mxu0 0
      %1599 = vmatprep.subr.bf16.mxu0 0
      %1600 = vmatpush1.bf16.msra.mxu0 0
      %1601 = vmatprep.subr.bf16.mxu0 0
      %1602 = vmatpush1.bf16.msra.mxu0 0
      %1603 = vmatprep.subr.bf16.mxu0 0
      %1604 = vmatpush1.bf16.msra.mxu0 0
      %1605 = vmatprep.subr.bf16.mxu0 0
      %1606 = vmatpush1.bf16.msra.mxu0 0
      %1607 = vmatprep.subr.bf16.mxu0 0
      %1608 = vmatpush1.bf16.msra.mxu0 0
      %1609 = vmatprep.subr.bf16.mxu0 0
      %1610 = vmatpush1.bf16.msra.mxu0 0
      %1611 = vmatprep.mubr.bf16.mxu0 0
      %1612 = vmatmul.mubr.bf16.gmra.mrb[0].mxu0 %v1573
      %v1613 = vpop.f32.mrb[0].mxu0
      %v1614 = vadd.f32 %v1565, %v1613
      %v1615 = vpop.f32.mrb[0].mxu0
      %v1616 = vpop.f32.mrb[0].mxu0
      %v1617 = vadd.f32 %v1568, %v1616
      %v1618 = vpop.f32.mrb[0].mxu0
      %1619 = vdwg.mxu0
      %v1620 = vld [vmem:[%s21] sm:$0x1]
      %v1621 = vunpack.c.l.bf16 %v1620
      %v1622 = vlaneseq
      %v1623 = vshrl.u32 %v1622, 7
      %v1624 = vsub.s32 0, %v1623
      %v1625 = vrot.slane %v1621, %v1624
      %v1626 = vadd.f32 %v1614, %v1625
      %v1627 = vadd.f32 %v1617, %v1625
      %v1628 = vld [vmem:[%s23] sm:$0xf]
      %v1629 = vld [vmem:[%s23 + $0x4] sm:$0x1]
      %v1630 = vunpack.c.l.bf16 %v1628
      %v1631 = vunpack.c.l.bf16 %v1629
      %v1632 = vadd.f32 %v1626, %v1630
      %v1633 = vadd.f32 %v1627, %v1631
      %v1634 = vld [vmem:[%s1433] sm:$0xff]
      %v1635 = vld [vmem:[%s1433 + $0x8] sm:$0x3]
      %v1636 = vld [vmem:[%s25] sm:$0xf]
      %v1637 = vld [vmem:[%s25 + $0x4] sm:$0xf]
      %v1638 = vld [vmem:[%s25 + $0x8] sm:$0xf]
      %v1639 = vld [vmem:[%s25 + $0xc] sm:$0xf]
      %v1640 = vld [vmem:[%s27] sm:$0x1]
      %v1641 = vpack.c.bf16 %v1635, %v1634
      %v1642 = vunpack.c.l.bf16 %v1640
      %v1643 = vlaneseq
      %v1644 = vshrl.u32 %v1643, 7
      %v1645 = vsub.s32 0, %v1644
      %v1646 = vrot.slane %v1642, %v1645
      %v1651 = vunpack.c.l.b16 %v1636
      %v1652 = vunpack.c.l.b16 %v1637
      %v1653 = vunpack.c.l.b16 %v1638
      %v1654 = vunpack.c.l.b16 %v1639
      %v1655 = vpack.c.b16 %v1652, %v1651
      %v1656 = vpack.c.b16 %v1654, %v1653
      %vm1659 = vcmask 261120
      %v1661 = vsel %vm1659, %v1641, 0
      %1663 = vmatprep.subr.bf16.mxu0 0
      %1664 = vmatpush1.bf16.msra.mxu0 %v1655
      %1665 = vmatprep.subr.bf16.mxu0 0
      %1666 = vmatpush1.bf16.msra.mxu0 %v1656
      %1667 = vmatprep.subr.bf16.mxu0 0
      %1668 = vmatpush1.bf16.msra.mxu0 0
      %1669 = vmatprep.subr.bf16.mxu0 0
      %1670 = vmatpush1.bf16.msra.mxu0 0
      %1671 = vmatprep.subr.bf16.mxu0 0
      %1672 = vmatpush1.bf16.msra.mxu0 0
      %1673 = vmatprep.subr.bf16.mxu0 0
      %1674 = vmatpush1.bf16.msra.mxu0 0
      %1675 = vmatprep.subr.bf16.mxu0 0
      %1676 = vmatpush1.bf16.msra.mxu0 0
      %1677 = vmatprep.subr.bf16.mxu0 0
      %1678 = vmatpush1.bf16.msra.mxu0 0
      %1679 = vmatprep.subr.bf16.mxu0 0
      %1680 = vmatpush1.bf16.msra.mxu0 0
      %1681 = vmatprep.subr.bf16.mxu0 0
      %1682 = vmatpush1.bf16.msra.mxu0 0
      %1683 = vmatprep.subr.bf16.mxu0 0
      %1684 = vmatpush1.bf16.msra.mxu0 0
      %1685 = vmatprep.subr.bf16.mxu0 0
      %1686 = vmatpush1.bf16.msra.mxu0 0
      %1687 = vmatprep.subr.bf16.mxu0 0
      %1688 = vmatpush1.bf16.msra.mxu0 0
      %1689 = vmatprep.subr.bf16.mxu0 0
      %1690 = vmatpush1.bf16.msra.mxu0 0
      %1691 = vmatprep.subr.bf16.mxu0 0
      %1692 = vmatpush1.bf16.msra.mxu0 0
      %1693 = vmatprep.subr.bf16.mxu0 0
      %1694 = vmatpush1.bf16.msra.mxu0 0
      %1695 = vmatprep.mubr.bf16.mxu0 0
      %1696 = vmatmul.mubr.bf16.gmra.mrb[0].mxu0 %v1661
      %v1697 = vpop.f32.mrb[0].mxu0
      %v1698 = vadd.f32 %v1646, %v1697
      %v1699 = vpop.f32.mrb[0].mxu0
      %v1700 = vpop.f32.mrb[0].mxu0
      %v1701 = vadd.f32 %v1646, %v1700
      %v1702 = vpop.f32.mrb[0].mxu0
      %1703 = vdwg.mxu0
      %v1704 = vld [vmem:[%s1438] sm:$0xff]
      %v1705 = vld [vmem:[%s1438 + $0x8] sm:$0x3]
      %v1706 = vld [vmem:[%s29] sm:$0x3]
      %v1707 = vld [vmem:[%s31] sm:$0x1]
      %v1708 = vpack.c.bf16 %v1705, %v1704
      %v1709 = vunpack.c.l.bf16 %v1707
      %v1710 = vlaneseq
      %v1711 = vshrl.u32 %v1710, 7
      %v1712 = vsub.s32 0, %v1711
      %v1713 = vrot.slane %v1709, %v1712
      %v1715 = vsel %vm1571, %v1708, 0
      %v1718 = vsel %vm1575, %v1706, 0
      %1720 = vmatprep.subr.bf16.mxu0 0
      %1721 = vmatpush1.bf16.msra.mxu0 %v1718
      %1722 = vmatprep.subr.bf16.mxu0 0
      %1723 = vmatpush1.bf16.msra.mxu0 0
      %1724 = vmatprep.subr.bf16.mxu0 0
      %1725 = vmatpush1.bf16.msra.mxu0 0
      %1726 = vmatprep.subr.bf16.mxu0 0
      %1727 = vmatpush1.bf16.msra.mxu0 0
      %1728 = vmatprep.subr.bf16.mxu0 0
      %1729 = vmatpush1.bf16.msra.mxu0 0
      %1730 = vmatprep.subr.bf16.mxu0 0
      %1731 = vmatpush1.bf16.msra.mxu0 0
      %1732 = vmatprep.subr.bf16.mxu0 0
      %1733 = vmatpush1.bf16.msra.mxu0 0
      %1734 = vmatprep.subr.bf16.mxu0 0
      %1735 = vmatpush1.bf16.msra.mxu0 0
      %1736 = vmatprep.subr.bf16.mxu0 0
      %1737 = vmatpush1.bf16.msra.mxu0 0
      %1738 = vmatprep.subr.bf16.mxu0 0
      %1739 = vmatpush1.bf16.msra.mxu0 0
      %1740 = vmatprep.subr.bf16.mxu0 0
      %1741 = vmatpush1.bf16.msra.mxu0 0
      %1742 = vmatprep.subr.bf16.mxu0 0
      %1743 = vmatpush1.bf16.msra.mxu0 0
      %1744 = vmatprep.subr.bf16.mxu0 0
      %1745 = vmatpush1.bf16.msra.mxu0 0
      %1746 = vmatprep.subr.bf16.mxu0 0
      %1747 = vmatpush1.bf16.msra.mxu0 0
      %1748 = vmatprep.subr.bf16.mxu0 0
      %1749 = vmatpush1.bf16.msra.mxu0 0
      %1750 = vmatprep.subr.bf16.mxu0 0
      %1751 = vmatpush1.bf16.msra.mxu0 0
      %1752 = vmatprep.mubr.bf16.mxu0 0
      %1753 = vmatmul.mubr.bf16.gmra.mrb[0].mxu0 %v1715
      %v1754 = vpop.f32.mrb[0].mxu0
      %v1755 = vadd.f32 %v1713, %v1754
      %v1756 = vpop.f32.mrb[0].mxu0
      %v1757 = vpop.f32.mrb[0].mxu0
      %v1758 = vadd.f32 %v1713, %v1757
      %v1759 = vpop.f32.mrb[0].mxu0
      %1760 = vdwg.mxu0
      %v1761 = vld [vmem:[%s1447] sm:$0x1]
      %vm1764 = vcmask 1040384
      %v1765 = vrot.slane %v1698, 7
      %v1766 = vrot.slane %v1701, 7
      %v1767 = vsel %vm1764, %v1765, %v1766
      %vm1772 = vcmask 1042432
      %v1773 = vrot.slane %v1755, 5
      %v1774 = vrot.slane %v1758, 5
      %v1775 = vsel %vm1772, %v1773, %v1774
      %v1778 = vsel %vm1764, %v1761, %v1765
      %v1779 = vsel %vm1772, %v1767, %v1773
      %v1780 = vld [vmem:[%s33] sm:$0xf]
      %v1781 = vld [vmem:[%s33 + $0x4] sm:$0xf]
      %v1782 = vld [vmem:[%s33 + $0x8] sm:$0x7]
      %v1783 = vunpack.c.l.bf16 %v1780
      %v1784 = vunpack.c.l.bf16 %v1781
      %v1785 = vunpack.c.l.bf16 %v1782
      %v1786 = vadd.f32 %v1778, %v1783
      %v1787 = vadd.f32 %v1779, %v1784
      %v1788 = vadd.f32 %v1775, %v1785
      %v1789 = vlaneseq
      %v1790 = vshrl.u32 %v1789, 7
      %v1791 = vadd.s32 %v1790, 8
      %v1792 = vlaneseq
      %v1793 = vand.u32 %v1792, 127
      %vm1794 = vcmp.le.s32.totalorder %v1793, %v1790
      %vm1795 = vcmp.le.s32.totalorder %v1793, %v1791
      %v1796 = vsel %vm1794, 0.0, -1e+09
      %v1797 = vsel %vm1795, 0.0, -1e+09
      %v1798 = vld [vmem:[%s35] sm:$0x1]
      %v1799 = vld [vmem:[%s37] sm:$0x1]
      %v1800 = vunpack.c.l.bf16 %v1798
      %v1801 = vunpack.c.l.bf16 %v1799
      %v1802 = vsel %vm1526, %v1632, 0.0
      %1803 = vadd.xlane.f32.xlu0 %v1802
      %v1804 = vpop.xlane.xlu0 %1803
      %vm1805 = vcmask 517120
      %v1806 = vsel %vm1805, %v1633, 0.0
      %1807 = vadd.xlane.f32.xlu0 %v1806
      %v1808 = vpop.xlane.xlu0 %1807
      %v1809 = vrcp.pop 64.0
      %v1810 = vmul.f32 %v1804, %v1809
      %v1811 = vmul.f32 %v1808, %v1809
      %v1812 = vsub.f32 %v1632, %v1810
      %v1813 = vsub.f32 %v1633, %v1811
      %v1814 = vmul.f32 %v1812, %v1812
      %v1815 = vmul.f32 %v1813, %v1813
      %v1816 = vsel %vm1526, %v1814, 0.0
      %1817 = vadd.xlane.f32.xlu0 %v1816
      %v1818 = vpop.xlane.xlu0 %1817
      %v1819 = vsel %vm1805, %v1815, 0.0
      %1820 = vadd.xlane.f32.xlu0 %v1819
      %v1821 = vpop.xlane.xlu0 %1820
      %v1822 = vmul.f32 %v1818, %v1809
      %v1823 = vmul.f32 %v1821, %v1809
      %v1824 = vadd.f32 %v1822, 1e-05
      %v1825 = vadd.f32 %v1823, 1e-05
      %v1826 = vrsqrt.pop %v1824
      %v1827 = vrsqrt.pop %v1825
      %v1828 = vmul.f32 %v1812, %v1826
      %v1829 = vmul.f32 %v1813, %v1827
      %v1830 = vlaneseq
      %v1831 = vshrl.u32 %v1830, 7
      %v1832 = vsub.s32 0, %v1831
      %v1833 = vrot.slane %v1800, %v1832
      %v1834 = vmul.f32 %v1828, %v1833
      %v1835 = vmul.f32 %v1829, %v1833
      %v1836 = vlaneseq
      %v1837 = vshrl.u32 %v1836, 7
      %v1838 = vsub.s32 0, %v1837
      %v1839 = vrot.slane %v1801, %v1838
      %v1840 = vadd.f32 %v1834, %v1839
      %v1841 = vadd.f32 %v1835, %v1839
      %v1842 = vld [vmem:[%s39] sm:$0xff]
      %v1843 = vld [vmem:[%s39 + $0x8] sm:$0xff]
      %v1844 = vld [vmem:[%s39 + $0x10] sm:$0xff]
      %v1845 = vld [vmem:[%s39 + $0x18] sm:$0xff]
      %v1846 = vld [vmem:[%s39 + $0x20] sm:$0xff]
      %v1847 = vld [vmem:[%s39 + $0x28] sm:$0xff]
      %v1848 = vld [vmem:[%s39 + $0x30] sm:$0xff]
      %v1849 = vld [vmem:[%s39 + $0x38] sm:$0xff]
      %v1850 = vld [vmem:[%s41] sm:$0x3]
      %v1851 = vpack.c.bf16 %v1841, %v1840
      %v1852 = vunpack.c.l.bf16 %v1850
      %v1854 = vlaneseq
      %v1855 = vshrl.u32 %v1854, 7
      %v1856 = vsub.s32 0, %v1855
      %v1857 = vrot.slane %v1852, %v1856
      %v1858 = vlaneseq
      %v1859 = vshrl.u32 %v1858, 7
      %v1860 = vsub.s32 2, %v1859
      %v1861 = vrot.slane %v1852, %v1860
      %v1864 = vlaneseq
      %v1865 = vshrl.u32 %v1864, 7
      %v1866 = vsub.s32 0, %v1865
      %v1867 = vrot.slane %v1857, %v1866
      %v1868 = vlaneseq
      %v1869 = vshrl.u32 %v1868, 7
      %v1870 = vsub.s32 0, %v1869
      %v1871 = vrot.slane %v1861, %v1870
      %v1880 = vunpack.c.l.b16 %v1842
      %v1881 = vunpack.c.h.b16 %v1842
      %v1882 = vunpack.c.l.b16 %v1843
      %v1883 = vunpack.c.h.b16 %v1843
      %v1884 = vunpack.c.l.b16 %v1844
      %v1885 = vunpack.c.h.b16 %v1844
      %v1886 = vunpack.c.l.b16 %v1845
      %v1887 = vunpack.c.h.b16 %v1845
      %v1888 = vunpack.c.l.b16 %v1846
      %v1889 = vunpack.c.h.b16 %v1846
      %v1890 = vunpack.c.l.b16 %v1847
      %v1891 = vunpack.c.h.b16 %v1847
      %v1892 = vunpack.c.l.b16 %v1848
      %v1893 = vunpack.c.h.b16 %v1848
      %v1894 = vunpack.c.l.b16 %v1849
      %v1895 = vunpack.c.h.b16 %v1849
      %v1896 = vpack.c.b16 %v1882, %v1880
      %v1897 = vpack.c.b16 %v1883, %v1881
      %v1898 = vpack.c.b16 %v1886, %v1884
      %v1899 = vpack.c.b16 %v1887, %v1885
      %v1900 = vpack.c.b16 %v1890, %v1888
      %v1901 = vpack.c.b16 %v1891, %v1889
      %v1902 = vpack.c.b16 %v1894, %v1892
      %v1903 = vpack.c.b16 %v1895, %v1893
      %v1913 = vsel %vm1526, %v1851, 0
      %1915 = vmatprep.subr.bf16.mxu0 %v1897
      %1916 = vmatpush1.bf16.msra.mxu0 %v1896
      %1917 = vmatprep.subr.bf16.mxu0 %v1899
      %1918 = vmatpush1.bf16.msra.mxu0 %v1898
      %1919 = vmatprep.subr.bf16.mxu0 %v1901
      %1920 = vmatpush1.bf16.msra.mxu0 %v1900
      %1921 = vmatprep.subr.bf16.mxu0 %v1903
      %1922 = vmatpush1.bf16.msra.mxu0 %v1902
      %1923 = vmatprep.subr.bf16.mxu0 0
      %1924 = vmatpush1.bf16.msra.mxu0 0
      %1925 = vmatprep.subr.bf16.mxu0 0
      %1926 = vmatpush1.bf16.msra.mxu0 0
      %1927 = vmatprep.subr.bf16.mxu0 0
      %1928 = vmatpush1.bf16.msra.mxu0 0
      %1929 = vmatprep.subr.bf16.mxu0 0
      %1930 = vmatpush1.bf16.msra.mxu0 0
      %1931 = vmatprep.subr.bf16.mxu0 0
      %1932 = vmatpush1.bf16.msra.mxu0 0
      %1933 = vmatprep.subr.bf16.mxu0 0
      %1934 = vmatpush1.bf16.msra.mxu0 0
      %1935 = vmatprep.subr.bf16.mxu0 0
      %1936 = vmatpush1.bf16.msra.mxu0 0
      %1937 = vmatprep.subr.bf16.mxu0 0
      %1938 = vmatpush1.bf16.msra.mxu0 0
      %1939 = vmatprep.subr.bf16.mxu0 0
      %1940 = vmatpush1.bf16.msra.mxu0 0
      %1941 = vmatprep.subr.bf16.mxu0 0
      %1942 = vmatpush1.bf16.msra.mxu0 0
      %1943 = vmatprep.subr.bf16.mxu0 0
      %1944 = vmatpush1.bf16.msra.mxu0 0
      %1945 = vmatprep.subr.bf16.mxu0 0
      %1946 = vmatpush1.bf16.msra.mxu0 0
      %1947 = vmatprep.mubr.bf16.mxu0 0
      %1948 = vmatmul.mubr.bf16.gmra.mrb[0].mxu0 %v1913
      %v1949 = vpop.f32.mrb[0].mxu0
      %v1950 = vadd.f32 %v1867, %v1949
      %v1951 = vpop.f32.mrb[0].mxu0
      %v1952 = vadd.f32 %v1871, %v1951
      %v1953 = vpop.f32.mrb[0].mxu0
      %v1954 = vadd.f32 %v1867, %v1953
      %v1955 = vpop.f32.mrb[0].mxu0
      %v1956 = vadd.f32 %v1871, %v1955
      %1957 = vdwg.mxu0
      %v1958 = vpack.c.bf16 %v1954, %v1950
      %v1959 = vpack.c.bf16 %v1956, %v1952
      %1961 = vrot.lane.b32.xlu0 %v1958, 64
      %v1962 = vpop.permute.xlu0 %1961
      %vm1963 = vcmask 130048
      %v1965 = vsel %vm1963, %v1958, 0
      %v1968 = vsel %vm1963, %v1962, 0
      %1970 = vmatprep.subr.bf16.mxu0 0
      %1971 = vmatpush1.bf16.xpose.msra.mxu0 %v1968
      %1972 = vmatprep.subr.bf16.mxu0 0
      %1973 = vmatpush1.bf16.xpose.msra.mxu0 0
      %1974 = vmatprep.subr.bf16.mxu0 0
      %1975 = vmatpush1.bf16.xpose.msra.mxu0 0
      %1976 = vmatprep.subr.bf16.mxu0 0
      %1977 = vmatpush1.bf16.xpose.msra.mxu0 0
      %1978 = vmatprep.subr.bf16.mxu0 0
      %1979 = vmatpush1.bf16.xpose.msra.mxu0 0
      %1980 = vmatprep.subr.bf16.mxu0 0
      %1981 = vmatpush1.bf16.xpose.msra.mxu0 0
      %1982 = vmatprep.subr.bf16.mxu0 0
      %1983 = vmatpush1.bf16.xpose.msra.mxu0 0
      %1984 = vmatprep.subr.bf16.mxu0 0
      %1985 = vmatpush1.bf16.xpose.msra.mxu0 0
      %1986 = vmatprep.subr.bf16.mxu0 0
      %1987 = vmatpush1.bf16.xpose.msra.mxu0 0
      %1988 = vmatprep.subr.bf16.mxu0 0
      %1989 = vmatpush1.bf16.xpose.msra.mxu0 0
      %1990 = vmatprep.subr.bf16.mxu0 0
      %1991 = vmatpush1.bf16.xpose.msra.mxu0 0
      %1992 = vmatprep.subr.bf16.mxu0 0
      %1993 = vmatpush1.bf16.xpose.msra.mxu0 0
      %1994 = vmatprep.subr.bf16.mxu0 0
      %1995 = vmatpush1.bf16.xpose.msra.mxu0 0
      %1996 = vmatprep.subr.bf16.mxu0 0
      %1997 = vmatpush1.bf16.xpose.msra.mxu0 0
      %1998 = vmatprep.subr.bf16.mxu0 0
      %1999 = vmatpush1.bf16.xpose.msra.mxu0 0
      %2000 = vmatprep.subr.bf16.mxu0 0
      %2001 = vmatpush1.bf16.xpose.msra.mxu0 0
      %2002 = vmatprep.mubr.bf16.mxu0 0
      %2003 = vmatmul.mubr.bf16.gmra.mrb[0].mxu0 %v1965
      %v2004 = vpop.f32.mrb[0].mxu0
      %v2005 = vadd.f32 0.0, %v2004
      %v2006 = vpop.f32.mrb[0].mxu0
      %v2007 = vpop.f32.mrb[0].mxu0
      %v2008 = vadd.f32 0.0, %v2007
      %v2009 = vpop.f32.mrb[0].mxu0
      %2010 = vdwg.mxu0
      %v2011 = vmul.f32 %v2005, 0.25
      %v2012 = vmul.f32 %v2008, 0.25
      %v2013 = vadd.f32 %v2011, %v1796
      %v2014 = vadd.f32 %v2012, %v1797
      %vm2015 = vcmask 80896
      %v2016 = vsel %vm2015, %v2013, -inf
      %2017 = vmax.xlane.f32.xlu0 %v2016
      %v2018 = vpop.xlane.xlu0 %2017
      %vm2019 = vcmask 74752
      %v2020 = vsel %vm2019, %v2014, -inf
      %2021 = vmax.xlane.f32.xlu0 %v2020
      %v2022 = vpop.xlane.xlu0 %2021
      %v2023 = vsub.f32 %v2013, %v2018
      %v2024 = vsub.f32 %v2014, %v2022
      %v2025 = vmul.f32 %v2023, 1.442695
      %v2026 = vpow.pop %v2025
      %v2027 = vmul.f32 %v2024, 1.442695
      %v2028 = vpow.pop %v2027
      %v2029 = vsel %vm2015, %v2026, 0.0
      %2030 = vadd.xlane.f32.xlu0 %v2029
      %v2031 = vpop.xlane.xlu0 %2030
      %v2032 = vsel %vm2019, %v2028, 0.0
      %2033 = vadd.xlane.f32.xlu0 %v2032
      %v2034 = vpop.xlane.xlu0 %2033
      %v2035 = vrcp.pop %v2031
      %v2036 = vmul.f32 %v2026, %v2035
      %v2037 = vrcp.pop %v2034
      %v2038 = vmul.f32 %v2028, %v2037
      %v2039 = vpack.c.bf16 %v2038, %v2036
      %v2041 = vsel %vm2015, %v2039, 0
      %vm2043 = vcmask 1044480
      %v2045 = vsel %vm2043, %v1959, 0
      %2047 = vmatprep.subr.bf16.mxu0 0
      %2048 = vmatpush1.bf16.msra.mxu0 %v2045
      %2049 = vmatprep.subr.bf16.mxu0 0
      %2050 = vmatpush1.bf16.msra.mxu0 0
      %2051 = vmatprep.subr.bf16.mxu0 0
      %2052 = vmatpush1.bf16.msra.mxu0 0
      %2053 = vmatprep.subr.bf16.mxu0 0
      %2054 = vmatpush1.bf16.msra.mxu0 0
      %2055 = vmatprep.subr.bf16.mxu0 0
      %2056 = vmatpush1.bf16.msra.mxu0 0
      %2057 = vmatprep.subr.bf16.mxu0 0
      %2058 = vmatpush1.bf16.msra.mxu0 0
      %2059 = vmatprep.subr.bf16.mxu0 0
      %2060 = vmatpush1.bf16.msra.mxu0 0
      %2061 = vmatprep.subr.bf16.mxu0 0
      %2062 = vmatpush1.bf16.msra.mxu0 0
      %2063 = vmatprep.subr.bf16.mxu0 0
      %2064 = vmatpush1.bf16.msra.mxu0 0
      %2065 = vmatprep.subr.bf16.mxu0 0
      %2066 = vmatpush1.bf16.msra.mxu0 0
      %2067 = vmatprep.subr.bf16.mxu0 0
      %2068 = vmatpush1.bf16.msra.mxu0 0
      %2069 = vmatprep.subr.bf16.mxu0 0
      %2070 = vmatpush1.bf16.msra.mxu0 0
      %2071 = vmatprep.subr.bf16.mxu0 0
      %2072 = vmatpush1.bf16.msra.mxu0 0
      %2073 = vmatprep.subr.bf16.mxu0 0
      %2074 = vmatpush1.bf16.msra.mxu0 0
      %2075 = vmatprep.subr.bf16.mxu0 0
      %2076 = vmatpush1.bf16.msra.mxu0 0
      %2077 = vmatprep.subr.bf16.mxu0 0
      %2078 = vmatpush1.bf16.msra.mxu0 0
      %2079 = vmatprep.mubr.bf16.mxu0 0
      %2080 = vmatmul.mubr.bf16.gmra.mrb[0].mxu0 %v2041
      %v2081 = vpop.f32.mrb[0].mxu0
      %v2082 = vadd.f32 0.0, %v2081
      %v2083 = vpop.f32.mrb[0].mxu0
      %v2084 = vpop.f32.mrb[0].mxu0
      %v2085 = vadd.f32 0.0, %v2084
      %v2086 = vpop.f32.mrb[0].mxu0
      %2087 = vdwg.mxu0
      %2088 = vrot.lane.b32.xlu0 %v1958, 112
      %v2089 = vpop.permute.xlu0 %2088
      %2090 = vrot.lane.b32.xlu0 %v1958, 48
      %v2091 = vpop.permute.xlu0 %2090
      %v2093 = vsel %vm1963, %v2089, 0
      %v2096 = vsel %vm1963, %v2091, 0
      %2098 = vmatprep.subr.bf16.mxu0 0
      %2099 = vmatpush1.bf16.xpose.msra.mxu0 %v2096
      %2100 = vmatprep.subr.bf16.mxu0 0
      %2101 = vmatpush1.bf16.xpose.msra.mxu0 0
      %2102 = vmatprep.subr.bf16.mxu0 0
      %2103 = vmatpush1.bf16.xpose.msra.mxu0 0
      %2104 = vmatprep.subr.bf16.mxu0 0
      %2105 = vmatpush1.bf16.xpose.msra.mxu0 0
      %2106 = vmatprep.subr.bf16.mxu0 0
      %2107 = vmatpush1.bf16.xpose.msra.mxu0 0
      %2108 = vmatprep.subr.bf16.mxu0 0
      %2109 = vmatpush1.bf16.xpose.msra.mxu0 0
      %2110 = vmatprep.subr.bf16.mxu0 0
      %2111 = vmatpush1.bf16.xpose.msra.mxu0 0
      %2112 = vmatprep.subr.bf16.mxu0 0
      %2113 = vmatpush1.bf16.xpose.msra.mxu0 0
      %2114 = vmatprep.subr.bf16.mxu0 0
      %2115 = vmatpush1.bf16.xpose.msra.mxu0 0
      %2116 = vmatprep.subr.bf16.mxu0 0
      %2117 = vmatpush1.bf16.xpose.msra.mxu0 0
      %2118 = vmatprep.subr.bf16.mxu0 0
      %2119 = vmatpush1.bf16.xpose.msra.mxu0 0
      %2120 = vmatprep.subr.bf16.mxu0 0
      %2121 = vmatpush1.bf16.xpose.msra.mxu0 0
      %2122 = vmatprep.subr.bf16.mxu0 0
      %2123 = vmatpush1.bf16.xpose.msra.mxu0 0
      %2124 = vmatprep.subr.bf16.mxu0 0
      %2125 = vmatpush1.bf16.xpose.msra.mxu0 0
      %2126 = vmatprep.subr.bf16.mxu0 0
      %2127 = vmatpush1.bf16.xpose.msra.mxu0 0
      %2128 = vmatprep.subr.bf16.mxu0 0
      %2129 = vmatpush1.bf16.xpose.msra.mxu0 0
      %2130 = vmatprep.mubr.bf16.mxu0 0
      %2131 = vmatmul.mubr.bf16.gmra.mrb[0].mxu0 %v2093
      %v2132 = vpop.f32.mrb[0].mxu0
      %v2133 = vadd.f32 0.0, %v2132
      %v2134 = vpop.f32.mrb[0].mxu0
      %v2135 = vpop.f32.mrb[0].mxu0
      %v2136 = vadd.f32 0.0, %v2135
      %v2137 = vpop.f32.mrb[0].mxu0
      %2138 = vdwg.mxu0
      %v2139 = vmul.f32 %v2133, 0.25
      %v2140 = vmul.f32 %v2136, 0.25
      %v2141 = vadd.f32 %v2139, %v1796
      %v2142 = vadd.f32 %v2140, %v1797
      %v2143 = vsel %vm2015, %v2141, -inf
      %2144 = vmax.xlane.f32.xlu0 %v2143
      %v2145 = vpop.xlane.xlu0 %2144
      %v2146 = vsel %vm2019, %v2142, -inf
      %2147 = vmax.xlane.f32.xlu0 %v2146
      %v2148 = vpop.xlane.xlu0 %2147
      %v2149 = vsub.f32 %v2141, %v2145
      %v2150 = vsub.f32 %v2142, %v2148
      %v2151 = vmul.f32 %v2149, 1.442695
      %v2152 = vpow.pop %v2151
      %v2153 = vmul.f32 %v2150, 1.442695
      %v2154 = vpow.pop %v2153
      %v2155 = vsel %vm2015, %v2152, 0.0
      %2156 = vadd.xlane.f32.xlu0 %v2155
      %v2157 = vpop.xlane.xlu0 %2156
      %v2158 = vsel %vm2019, %v2154, 0.0
      %2159 = vadd.xlane.f32.xlu0 %v2158
      %v2160 = vpop.xlane.xlu0 %2159
      %v2161 = vrcp.pop %v2157
      %v2162 = vmul.f32 %v2152, %v2161
      %v2163 = vrcp.pop %v2160
      %v2164 = vmul.f32 %v2154, %v2163
      %v2165 = vpack.c.bf16 %v2164, %v2162
      %2167 = vrot.lane.b32.xlu0 %v1959, 112
      %v2168 = vpop.permute.xlu0 %2167
      %v2170 = vsel %vm2015, %v2165, 0
      %v2173 = vsel %vm2043, %v2168, 0
      %2175 = vmatprep.subr.bf16.mxu0 0
      %2176 = vmatpush1.bf16.msra.mxu0 %v2173
      %2177 = vmatprep.subr.bf16.mxu0 0
      %2178 = vmatpush1.bf16.msra.mxu0 0
      %2179 = vmatprep.subr.bf16.mxu0 0
      %2180 = vmatpush1.bf16.msra.mxu0 0
      %2181 = vmatprep.subr.bf16.mxu0 0
      %2182 = vmatpush1.bf16.msra.mxu0 0
      %2183 = vmatprep.subr.bf16.mxu0 0
      %2184 = vmatpush1.bf16.msra.mxu0 0
      %2185 = vmatprep.subr.bf16.mxu0 0
      %2186 = vmatpush1.bf16.msra.mxu0 0
      %2187 = vmatprep.subr.bf16.mxu0 0
      %2188 = vmatpush1.bf16.msra.mxu0 0
      %2189 = vmatprep.subr.bf16.mxu0 0
      %2190 = vmatpush1.bf16.msra.mxu0 0
      %2191 = vmatprep.subr.bf16.mxu0 0
      %2192 = vmatpush1.bf16.msra.mxu0 0
      %2193 = vmatprep.subr.bf16.mxu0 0
      %2194 = vmatpush1.bf16.msra.mxu0 0
      %2195 = vmatprep.subr.bf16.mxu0 0
      %2196 = vmatpush1.bf16.msra.mxu0 0
      %2197 = vmatprep.subr.bf16.mxu0 0
      %2198 = vmatpush1.bf16.msra.mxu0 0
      %2199 = vmatprep.subr.bf16.mxu0 0
      %2200 = vmatpush1.bf16.msra.mxu0 0
      %2201 = vmatprep.subr.bf16.mxu0 0
      %2202 = vmatpush1.bf16.msra.mxu0 0
      %2203 = vmatprep.subr.bf16.mxu0 0
      %2204 = vmatpush1.bf16.msra.mxu0 0
      %2205 = vmatprep.subr.bf16.mxu0 0
      %2206 = vmatpush1.bf16.msra.mxu0 0
      %2207 = vmatprep.mubr.bf16.mxu0 0
      %2208 = vmatmul.mubr.bf16.gmra.mrb[0].mxu0 %v2170
      %v2209 = vpop.f32.mrb[0].mxu0
      %v2210 = vadd.f32 0.0, %v2209
      %v2211 = vpop.f32.mrb[0].mxu0
      %v2212 = vpop.f32.mrb[0].mxu0
      %v2213 = vadd.f32 0.0, %v2212
      %v2214 = vpop.f32.mrb[0].mxu0
      %2215 = vdwg.mxu0
      %2216 = vrot.lane.b32.xlu0 %v1958, 96
      %v2217 = vpop.permute.xlu0 %2216
      %2218 = vrot.lane.b32.xlu0 %v1958, 32
      %v2219 = vpop.permute.xlu0 %2218
      %v2221 = vsel %vm1963, %v2217, 0
      %v2224 = vsel %vm1963, %v2219, 0
      %2226 = vmatprep.subr.bf16.mxu0 0
      %2227 = vmatpush1.bf16.xpose.msra.mxu0 %v2224
      %2228 = vmatprep.subr.bf16.mxu0 0
      %2229 = vmatpush1.bf16.xpose.msra.mxu0 0
      %2230 = vmatprep.subr.bf16.mxu0 0
      %2231 = vmatpush1.bf16.xpose.msra.mxu0 0
      %2232 = vmatprep.subr.bf16.mxu0 0
      %2233 = vmatpush1.bf16.xpose.msra.mxu0 0
      %2234 = vmatprep.subr.bf16.mxu0 0
      %2235 = vmatpush1.bf16.xpose.msra.mxu0 0
      %2236 = vmatprep.subr.bf16.mxu0 0
      %2237 = vmatpush1.bf16.xpose.msra.mxu0 0
      %2238 = vmatprep.subr.bf16.mxu0 0
      %2239 = vmatpush1.bf16.xpose.msra.mxu0 0
      %2240 = vmatprep.subr.bf16.mxu0 0
      %2241 = vmatpush1.bf16.xpose.msra.mxu0 0
      %2242 = vmatprep.subr.bf16.mxu0 0
      %2243 = vmatpush1.bf16.xpose.msra.mxu0 0
      %2244 = vmatprep.subr.bf16.mxu0 0
      %2245 = vmatpush1.bf16.xpose.msra.mxu0 0
      %2246 = vmatprep.subr.bf16.mxu0 0
      %2247 = vmatpush1.bf16.xpose.msra.mxu0 0
      %2248 = vmatprep.subr.bf16.mxu0 0
      %2249 = vmatpush1.bf16.xpose.msra.mxu0 0
      %2250 = vmatprep.subr.bf16.mxu0 0
      %2251 = vmatpush1.bf16.xpose.msra.mxu0 0
      %2252 = vmatprep.subr.bf16.mxu0 0
      %2253 = vmatpush1.bf16.xpose.msra.mxu0 0
      %2254 = vmatprep.subr.bf16.mxu0 0
      %2255 = vmatpush1.bf16.xpose.msra.mxu0 0
      %2256 = vmatprep.subr.bf16.mxu0 0
      %2257 = vmatpush1.bf16.xpose.msra.mxu0 0
      %2258 = vmatprep.mubr.bf16.mxu0 0
      %2259 = vmatmul.mubr.bf16.gmra.mrb[0].mxu0 %v2221
      %v2260 = vpop.f32.mrb[0].mxu0
      %v2261 = vadd.f32 0.0, %v2260
      %v2262 = vpop.f32.mrb[0].mxu0
      %v2263 = vpop.f32.mrb[0].mxu0
      %v2264 = vadd.f32 0.0, %v2263
      %v2265 = vpop.f32.mrb[0].mxu0
      %2266 = vdwg.mxu0
      %v2267 = vmul.f32 %v2261, 0.25
      %v2268 = vmul.f32 %v2264, 0.25
      %v2269 = vadd.f32 %v2267, %v1796
      %v2270 = vadd.f32 %v2268, %v1797
      %v2271 = vsel %vm2015, %v2269, -inf
      %2272 = vmax.xlane.f32.xlu0 %v2271
      %v2273 = vpop.xlane.xlu0 %2272
      %v2274 = vsel %vm2019, %v2270, -inf
      %2275 = vmax.xlane.f32.xlu0 %v2274
      %v2276 = vpop.xlane.xlu0 %2275
      %v2277 = vsub.f32 %v2269, %v2273
      %v2278 = vsub.f32 %v2270, %v2276
      %v2279 = vmul.f32 %v2277, 1.442695
      %v2280 = vpow.pop %v2279
      %v2281 = vmul.f32 %v2278, 1.442695
      %v2282 = vpow.pop %v2281
      %v2283 = vsel %vm2015, %v2280, 0.0
      %2284 = vadd.xlane.f32.xlu0 %v2283
      %v2285 = vpop.xlane.xlu0 %2284
      %v2286 = vsel %vm2019, %v2282, 0.0
      %2287 = vadd.xlane.f32.xlu0 %v2286
      %v2288 = vpop.xlane.xlu0 %2287
      %v2289 = vrcp.pop %v2285
      %v2290 = vmul.f32 %v2280, %v2289
      %v2291 = vrcp.pop %v2288
      %v2292 = vmul.f32 %v2282, %v2291
      %v2293 = vpack.c.bf16 %v2292, %v2290
      %2294 = vrot.lane.b32.xlu0 %v1959, 96
      %v2295 = vpop.permute.xlu0 %2294
      %v2297 = vsel %vm2015, %v2293, 0
      %v2300 = vsel %vm2043, %v2295, 0
      %2302 = vmatprep.subr.bf16.mxu0 0
      %2303 = vmatpush1.bf16.msra.mxu0 %v2300
      %2304 = vmatprep.subr.bf16.mxu0 0
      %2305 = vmatpush1.bf16.msra.mxu0 0
      %2306 = vmatprep.subr.bf16.mxu0 0
      %2307 = vmatpush1.bf16.msra.mxu0 0
      %2308 = vmatprep.subr.bf16.mxu0 0
      %2309 = vmatpush1.bf16.msra.mxu0 0
      %2310 = vmatprep.subr.bf16.mxu0 0
      %2311 = vmatpush1.bf16.msra.mxu0 0
      %2312 = vmatprep.subr.bf16.mxu0 0
      %2313 = vmatpush1.bf16.msra.mxu0 0
      %2314 = vmatprep.subr.bf16.mxu0 0
      %2315 = vmatpush1.bf16.msra.mxu0 0
      %2316 = vmatprep.subr.bf16.mxu0 0
      %2317 = vmatpush1.bf16.msra.mxu0 0
      %2318 = vmatprep.subr.bf16.mxu0 0
      %2319 = vmatpush1.bf16.msra.mxu0 0
      %2320 = vmatprep.subr.bf16.mxu0 0
      %2321 = vmatpush1.bf16.msra.mxu0 0
      %2322 = vmatprep.subr.bf16.mxu0 0
      %2323 = vmatpush1.bf16.msra.mxu0 0
      %2324 = vmatprep.subr.bf16.mxu0 0
      %2325 = vmatpush1.bf16.msra.mxu0 0
      %2326 = vmatprep.subr.bf16.mxu0 0
      %2327 = vmatpush1.bf16.msra.mxu0 0
      %2328 = vmatprep.subr.bf16.mxu0 0
      %2329 = vmatpush1.bf16.msra.mxu0 0
      %2330 = vmatprep.subr.bf16.mxu0 0
      %2331 = vmatpush1.bf16.msra.mxu0 0
      %2332 = vmatprep.subr.bf16.mxu0 0
      %2333 = vmatpush1.bf16.msra.mxu0 0
      %2334 = vmatprep.mubr.bf16.mxu0 0
      %2335 = vmatmul.mubr.bf16.gmra.mrb[0].mxu0 %v2297
      %v2336 = vpop.f32.mrb[0].mxu0
      %v2337 = vadd.f32 0.0, %v2336
      %v2338 = vpop.f32.mrb[0].mxu0
      %v2339 = vpop.f32.mrb[0].mxu0
      %v2340 = vadd.f32 0.0, %v2339
      %v2341 = vpop.f32.mrb[0].mxu0
      %2342 = vdwg.mxu0
      %2343 = vrot.lane.b32.xlu0 %v1958, 80
      %v2344 = vpop.permute.xlu0 %2343
      %2345 = vrot.lane.b32.xlu0 %v1958, 16
      %v2346 = vpop.permute.xlu0 %2345
      %v2348 = vsel %vm1963, %v2344, 0
      %v2351 = vsel %vm1963, %v2346, 0
      %2353 = vmatprep.subr.bf16.mxu0 0
      %2354 = vmatpush1.bf16.xpose.msra.mxu0 %v2351
      %2355 = vmatprep.subr.bf16.mxu0 0
      %2356 = vmatpush1.bf16.xpose.msra.mxu0 0
      %2357 = vmatprep.subr.bf16.mxu0 0
      %2358 = vmatpush1.bf16.xpose.msra.mxu0 0
      %2359 = vmatprep.subr.bf16.mxu0 0
      %2360 = vmatpush1.bf16.xpose.msra.mxu0 0
      %2361 = vmatprep.subr.bf16.mxu0 0
      %2362 = vmatpush1.bf16.xpose.msra.mxu0 0
      %2363 = vmatprep.subr.bf16.mxu0 0
      %2364 = vmatpush1.bf16.xpose.msra.mxu0 0
      %2365 = vmatprep.subr.bf16.mxu0 0
      %2366 = vmatpush1.bf16.xpose.msra.mxu0 0
      %2367 = vmatprep.subr.bf16.mxu0 0
      %2368 = vmatpush1.bf16.xpose.msra.mxu0 0
      %2369 = vmatprep.subr.bf16.mxu0 0
      %2370 = vmatpush1.bf16.xpose.msra.mxu0 0
      %2371 = vmatprep.subr.bf16.mxu0 0
      %2372 = vmatpush1.bf16.xpose.msra.mxu0 0
      %2373 = vmatprep.subr.bf16.mxu0 0
      %2374 = vmatpush1.bf16.xpose.msra.mxu0 0
      %2375 = vmatprep.subr.bf16.mxu0 0
      %2376 = vmatpush1.bf16.xpose.msra.mxu0 0
      %2377 = vmatprep.subr.bf16.mxu0 0
      %2378 = vmatpush1.bf16.xpose.msra.mxu0 0
      %2379 = vmatprep.subr.bf16.mxu0 0
      %2380 = vmatpush1.bf16.xpose.msra.mxu0 0
      %2381 = vmatprep.subr.bf16.mxu0 0
      %2382 = vmatpush1.bf16.xpose.msra.mxu0 0
      %2383 = vmatprep.subr.bf16.mxu0 0
      %2384 = vmatpush1.bf16.xpose.msra.mxu0 0
      %2385 = vmatprep.mubr.bf16.mxu0 0
      %2386 = vmatmul.mubr.bf16.gmra.mrb[0].mxu0 %v2348
      %v2387 = vpop.f32.mrb[0].mxu0
      %v2388 = vadd.f32 0.0, %v2387
      %v2389 = vpop.f32.mrb[0].mxu0
      %v2390 = vpop.f32.mrb[0].mxu0
      %v2391 = vadd.f32 0.0, %v2390
      %v2392 = vpop.f32.mrb[0].mxu0
      %2393 = vdwg.mxu0
      %v2394 = vmul.f32 %v2388, 0.25
      %v2395 = vmul.f32 %v2391, 0.25
      %v2396 = vadd.f32 %v2394, %v1796
      %v2397 = vadd.f32 %v2395, %v1797
      %v2398 = vsel %vm2015, %v2396, -inf
      %2399 = vmax.xlane.f32.xlu0 %v2398
      %v2400 = vpop.xlane.xlu0 %2399
      %v2401 = vsel %vm2019, %v2397, -inf
      %2402 = vmax.xlane.f32.xlu0 %v2401
      %v2403 = vpop.xlane.xlu0 %2402
      %v2404 = vsub.f32 %v2396, %v2400
      %v2405 = vsub.f32 %v2397, %v2403
      %v2406 = vmul.f32 %v2404, 1.442695
      %v2407 = vpow.pop %v2406
      %v2408 = vmul.f32 %v2405, 1.442695
      %v2409 = vpow.pop %v2408
      %v2410 = vsel %vm2015, %v2407, 0.0
      %2411 = vadd.xlane.f32.xlu0 %v2410
      %v2412 = vpop.xlane.xlu0 %2411
      %v2413 = vsel %vm2019, %v2409, 0.0
      %2414 = vadd.xlane.f32.xlu0 %v2413
      %v2415 = vpop.xlane.xlu0 %2414
      %v2416 = vrcp.pop %v2412
      %v2417 = vmul.f32 %v2407, %v2416
      %v2418 = vrcp.pop %v2415
      %v2419 = vmul.f32 %v2409, %v2418
      %v2420 = vpack.c.bf16 %v2419, %v2417
      %2421 = vrot.lane.b32.xlu0 %v1959, 80
      %v2422 = vpop.permute.xlu0 %2421
      %v2424 = vsel %vm2015, %v2420, 0
      %v2427 = vsel %vm2043, %v2422, 0
      %2429 = vmatprep.subr.bf16.mxu0 0
      %2430 = vmatpush1.bf16.msra.mxu0 %v2427
      %2431 = vmatprep.subr.bf16.mxu0 0
      %2432 = vmatpush1.bf16.msra.mxu0 0
      %2433 = vmatprep.subr.bf16.mxu0 0
      %2434 = vmatpush1.bf16.msra.mxu0 0
      %2435 = vmatprep.subr.bf16.mxu0 0
      %2436 = vmatpush1.bf16.msra.mxu0 0
      %2437 = vmatprep.subr.bf16.mxu0 0
      %2438 = vmatpush1.bf16.msra.mxu0 0
      %2439 = vmatprep.subr.bf16.mxu0 0
      %2440 = vmatpush1.bf16.msra.mxu0 0
      %2441 = vmatprep.subr.bf16.mxu0 0
      %2442 = vmatpush1.bf16.msra.mxu0 0
      %2443 = vmatprep.subr.bf16.mxu0 0
      %2444 = vmatpush1.bf16.msra.mxu0 0
      %2445 = vmatprep.subr.bf16.mxu0 0
      %2446 = vmatpush1.bf16.msra.mxu0 0
      %2447 = vmatprep.subr.bf16.mxu0 0
      %2448 = vmatpush1.bf16.msra.mxu0 0
      %2449 = vmatprep.subr.bf16.mxu0 0
      %2450 = vmatpush1.bf16.msra.mxu0 0
      %2451 = vmatprep.subr.bf16.mxu0 0
      %2452 = vmatpush1.bf16.msra.mxu0 0
      %2453 = vmatprep.subr.bf16.mxu0 0
      %2454 = vmatpush1.bf16.msra.mxu0 0
      %2455 = vmatprep.subr.bf16.mxu0 0
      %2456 = vmatpush1.bf16.msra.mxu0 0
      %2457 = vmatprep.subr.bf16.mxu0 0
      %2458 = vmatpush1.bf16.msra.mxu0 0
      %2459 = vmatprep.subr.bf16.mxu0 0
      %2460 = vmatpush1.bf16.msra.mxu0 0
      %2461 = vmatprep.mubr.bf16.mxu0 0
      %2462 = vmatmul.mubr.bf16.gmra.mrb[0].mxu0 %v2424
      %v2463 = vpop.f32.mrb[0].mxu0
      %v2464 = vadd.f32 0.0, %v2463
      %v2465 = vpop.f32.mrb[0].mxu0
      %v2466 = vpop.f32.mrb[0].mxu0
      %v2467 = vadd.f32 0.0, %v2466
      %v2468 = vpop.f32.mrb[0].mxu0
      %2469 = vdwg.mxu0
      %2472 = vrot.lane.b32.xlu0 %v2210, 16
      %v2473 = vpop.permute.xlu0 %2472
      %2474 = vrot.lane.b32.xlu0 %v2213, 16
      %v2475 = vpop.permute.xlu0 %2474
      %2480 = vrot.lane.b32.xlu0 %v2337, 32
      %v2481 = vpop.permute.xlu0 %2480
      %2482 = vrot.lane.b32.xlu0 %v2340, 32
      %v2483 = vpop.permute.xlu0 %2482
      %2488 = vrot.lane.b32.xlu0 %v2464, 48
      %v2489 = vpop.permute.xlu0 %2488
      %2490 = vrot.lane.b32.xlu0 %v2467, 48
      %v2491 = vpop.permute.xlu0 %2490
      %v2494 = vsel %vm1963, %v2082, %v2473
      %v2495 = vsel %vm1963, %v2085, %v2475
      %v2496 = vsel %vm1659, %v2494, %v2481
      %v2497 = vsel %vm1659, %v2495, %v2483
      %vm2498 = vcmask 392192
      %v2499 = vsel %vm2498, %v2496, %v2489
      %v2500 = vsel %vm2498, %v2497, %v2491
      %v2501 = vld [vmem:[%s43] sm:$0xf]
      %v2502 = vld [vmem:[%s43 + $0x4] sm:$0xf]
      %v2503 = vld [vmem:[%s43 + $0x8] sm:$0xf]
      %v2504 = vld [vmem:[%s43 + $0xc] sm:$0xf]
      %v2505 = vld [vmem:[%s43 + $0x10] sm:$0xf]
      %v2506 = vld [vmem:[%s43 + $0x14] sm:$0xf]
      %v2507 = vld [vmem:[%s43 + $0x18] sm:$0xf]
      %v2508 = vld [vmem:[%s43 + $0x1c] sm:$0xf]
      %v2509 = vld [vmem:[%s45] sm:$0x1]
      %v2510 = vpack.c.bf16 %v2500, %v2499
      %v2511 = vunpack.c.l.bf16 %v2509
      %v2512 = vlaneseq
      %v2513 = vshrl.u32 %v2512, 7
      %v2514 = vsub.s32 0, %v2513
      %v2515 = vrot.slane %v2511, %v2514
      %v2524 = vunpack.c.l.b16 %v2501
      %v2525 = vunpack.c.l.b16 %v2502
      %v2526 = vunpack.c.l.b16 %v2503
      %v2527 = vunpack.c.l.b16 %v2504
      %v2528 = vunpack.c.l.b16 %v2505
      %v2529 = vunpack.c.l.b16 %v2506
      %v2530 = vunpack.c.l.b16 %v2507
      %v2531 = vunpack.c.l.b16 %v2508
      %v2532 = vpack.c.b16 %v2525, %v2524
      %v2533 = vpack.c.b16 %v2527, %v2526
      %v2534 = vpack.c.b16 %v2529, %v2528
      %v2535 = vpack.c.b16 %v2531, %v2530
      %v2541 = vsel %vm1526, %v2510, 0
      %2543 = vmatprep.subr.bf16.mxu0 0
      %2544 = vmatpush1.bf16.msra.mxu0 %v2532
      %2545 = vmatprep.subr.bf16.mxu0 0
      %2546 = vmatpush1.bf16.msra.mxu0 %v2533
      %2547 = vmatprep.subr.bf16.mxu0 0
      %2548 = vmatpush1.bf16.msra.mxu0 %v2534
      %2549 = vmatprep.subr.bf16.mxu0 0
      %2550 = vmatpush1.bf16.msra.mxu0 %v2535
      %2551 = vmatprep.subr.bf16.mxu0 0
      %2552 = vmatpush1.bf16.msra.mxu0 0
      %2553 = vmatprep.subr.bf16.mxu0 0
      %2554 = vmatpush1.bf16.msra.mxu0 0
      %2555 = vmatprep.subr.bf16.mxu0 0
      %2556 = vmatpush1.bf16.msra.mxu0 0
      %2557 = vmatprep.subr.bf16.mxu0 0
      %2558 = vmatpush1.bf16.msra.mxu0 0
      %2559 = vmatprep.subr.bf16.mxu0 0
      %2560 = vmatpush1.bf16.msra.mxu0 0
      %2561 = vmatprep.subr.bf16.mxu0 0
      %2562 = vmatpush1.bf16.msra.mxu0 0
      %2563 = vmatprep.subr.bf16.mxu0 0
      %2564 = vmatpush1.bf16.msra.mxu0 0
      %2565 = vmatprep.subr.bf16.mxu0 0
      %2566 = vmatpush1.bf16.msra.mxu0 0
      %2567 = vmatprep.subr.bf16.mxu0 0
      %2568 = vmatpush1.bf16.msra.mxu0 0
      %2569 = vmatprep.subr.bf16.mxu0 0
      %2570 = vmatpush1.bf16.msra.mxu0 0
      %2571 = vmatprep.subr.bf16.mxu0 0
      %2572 = vmatpush1.bf16.msra.mxu0 0
      %2573 = vmatprep.subr.bf16.mxu0 0
      %2574 = vmatpush1.bf16.msra.mxu0 0
      %2575 = vmatprep.mubr.bf16.mxu0 0
      %2576 = vmatmul.mubr.bf16.gmra.mrb[0].mxu0 %v2541
      %v2577 = vpop.f32.mrb[0].mxu0
      %v2578 = vadd.f32 %v2515, %v2577
      %v2579 = vpop.f32.mrb[0].mxu0
      %v2580 = vpop.f32.mrb[0].mxu0
      %v2581 = vadd.f32 %v2515, %v2580
      %v2582 = vpop.f32.mrb[0].mxu0
      %2583 = vdwg.mxu0
      %v2584 = vadd.f32 %v1632, %v2578
      %v2585 = vadd.f32 %v1633, %v2581
      %v2586 = vld [vmem:[%s47] sm:$0x1]
      %v2587 = vld [vmem:[%s49] sm:$0x1]
      %v2588 = vunpack.c.l.bf16 %v2586
      %v2589 = vunpack.c.l.bf16 %v2587
      %v2590 = vsel %vm1526, %v2584, 0.0
      %2591 = vadd.xlane.f32.xlu0 %v2590
      %v2592 = vpop.xlane.xlu0 %2591
      %v2593 = vsel %vm1805, %v2585, 0.0
      %2594 = vadd.xlane.f32.xlu0 %v2593
      %v2595 = vpop.xlane.xlu0 %2594
      %v2596 = vmul.f32 %v2592, %v1809
      %v2597 = vmul.f32 %v2595, %v1809
      %v2598 = vsub.f32 %v2584, %v2596
      %v2599 = vsub.f32 %v2585, %v2597
      %v2600 = vmul.f32 %v2598, %v2598
      %v2601 = vmul.f32 %v2599, %v2599
      %v2602 = vsel %vm1526, %v2600, 0.0
      %2603 = vadd.xlane.f32.xlu0 %v2602
      %v2604 = vpop.xlane.xlu0 %2603
      %v2605 = vsel %vm1805, %v2601, 0.0
      %2606 = vadd.xlane.f32.xlu0 %v2605
      %v2607 = vpop.xlane.xlu0 %2606
      %v2608 = vmul.f32 %v2604, %v1809
      %v2609 = vmul.f32 %v2607, %v1809
      %v2610 = vadd.f32 %v2608, 1e-05
      %v2611 = vadd.f32 %v2609, 1e-05
      %v2612 = vrsqrt.pop %v2610
      %v2613 = vrsqrt.pop %v2611
      %v2614 = vmul.f32 %v2598, %v2612
      %v2615 = vmul.f32 %v2599, %v2613
      %v2616 = vlaneseq
      %v2617 = vshrl.u32 %v2616, 7
      %v2618 = vsub.s32 0, %v2617
      %v2619 = vrot.slane %v2588, %v2618
      %v2620 = vmul.f32 %v2614, %v2619
      %v2621 = vmul.f32 %v2615, %v2619
      %v2622 = vlaneseq
      %v2623 = vshrl.u32 %v2622, 7
      %v2624 = vsub.s32 0, %v2623
      %v2625 = vrot.slane %v2589, %v2624
      %v2626 = vadd.f32 %v2620, %v2625
      %v2627 = vadd.f32 %v2621, %v2625
      %v2628 = vld [vmem:[%s51] sm:$0xf]
      %v2629 = vld [vmem:[%s51 + $0x4] sm:$0xf]
      %v2630 = vld [vmem:[%s51 + $0x8] sm:$0xf]
      %v2631 = vld [vmem:[%s51 + $0xc] sm:$0xf]
      %v2632 = vld [vmem:[%s51 + $0x10] sm:$0xf]
      %v2633 = vld [vmem:[%s51 + $0x14] sm:$0xf]
      %v2634 = vld [vmem:[%s51 + $0x18] sm:$0xf]
      %v2635 = vld [vmem:[%s51 + $0x1c] sm:$0xf]
      %v2636 = vld [vmem:[%s53] sm:$0x1]
      %v2637 = vpack.c.bf16 %v2627, %v2626
      %v2638 = vunpack.c.l.bf16 %v2636
      %v2639 = vlaneseq
      %v2640 = vshrl.u32 %v2639, 7
      %v2641 = vsub.s32 0, %v2640
      %v2642 = vrot.slane %v2638, %v2641
      %v2651 = vunpack.c.l.b16 %v2628
      %v2652 = vunpack.c.l.b16 %v2629
      %v2653 = vunpack.c.l.b16 %v2630
      %v2654 = vunpack.c.l.b16 %v2631
      %v2655 = vunpack.c.l.b16 %v2632
      %v2656 = vunpack.c.l.b16 %v2633
      %v2657 = vunpack.c.l.b16 %v2634
      %v2658 = vunpack.c.l.b16 %v2635
      %v2659 = vpack.c.b16 %v2652, %v2651
      %v2660 = vpack.c.b16 %v2654, %v2653
      %v2661 = vpack.c.b16 %v2656, %v2655
      %v2662 = vpack.c.b16 %v2658, %v2657
      %v2668 = vsel %vm1526, %v2637, 0
      %2670 = vmatprep.subr.bf16.mxu0 0
      %2671 = vmatpush1.bf16.msra.mxu0 %v2659
      %2672 = vmatprep.subr.bf16.mxu0 0
      %2673 = vmatpush1.bf16.msra.mxu0 %v2660
      %2674 = vmatprep.subr.bf16.mxu0 0
      %2675 = vmatpush1.bf16.msra.mxu0 %v2661
      %2676 = vmatprep.subr.bf16.mxu0 0
      %2677 = vmatpush1.bf16.msra.mxu0 %v2662
      %2678 = vmatprep.subr.bf16.mxu0 0
      %2679 = vmatpush1.bf16.msra.mxu0 0
      %2680 = vmatprep.subr.bf16.mxu0 0
      %2681 = vmatpush1.bf16.msra.mxu0 0
      %2682 = vmatprep.subr.bf16.mxu0 0
      %2683 = vmatpush1.bf16.msra.mxu0 0
      %2684 = vmatprep.subr.bf16.mxu0 0
      %2685 = vmatpush1.bf16.msra.mxu0 0
      %2686 = vmatprep.subr.bf16.mxu0 0
      %2687 = vmatpush1.bf16.msra.mxu0 0
      %2688 = vmatprep.subr.bf16.mxu0 0
      %2689 = vmatpush1.bf16.msra.mxu0 0
      %2690 = vmatprep.subr.bf16.mxu0 0
      %2691 = vmatpush1.bf16.msra.mxu0 0
      %2692 = vmatprep.subr.bf16.mxu0 0
      %2693 = vmatpush1.bf16.msra.mxu0 0
      %2694 = vmatprep.subr.bf16.mxu0 0
      %2695 = vmatpush1.bf16.msra.mxu0 0
      %2696 = vmatprep.subr.bf16.mxu0 0
      %2697 = vmatpush1.bf16.msra.mxu0 0
      %2698 = vmatprep.subr.bf16.mxu0 0
      %2699 = vmatpush1.bf16.msra.mxu0 0
      %2700 = vmatprep.subr.bf16.mxu0 0
      %2701 = vmatpush1.bf16.msra.mxu0 0
      %2702 = vmatprep.mubr.bf16.mxu0 0
      %2703 = vmatmul.mubr.bf16.gmra.mrb[0].mxu0 %v2668
      %v2704 = vpop.f32.mrb[0].mxu0
      %v2705 = vadd.f32 %v2642, %v2704
      %v2706 = vpop.f32.mrb[0].mxu0
      %v2707 = vpop.f32.mrb[0].mxu0
      %v2708 = vadd.f32 %v2642, %v2707
      %v2709 = vpop.f32.mrb[0].mxu0
      %2710 = vdwg.mxu0
      %v2711 = vld [vmem:[%s55] sm:$0xf]
      %v2712 = vld [vmem:[%s55 + $0x4] sm:$0xf]
      %v2713 = vld [vmem:[%s55 + $0x8] sm:$0xf]
      %v2714 = vld [vmem:[%s55 + $0xc] sm:$0xf]
      %v2715 = vld [vmem:[%s55 + $0x10] sm:$0xf]
      %v2716 = vld [vmem:[%s55 + $0x14] sm:$0xf]
      %v2717 = vld [vmem:[%s55 + $0x18] sm:$0xf]
      %v2718 = vld [vmem:[%s55 + $0x1c] sm:$0xf]
      %v2719 = vld [vmem:[%s57] sm:$0x1]
      %v2720 = vpack.c.bf16 %v1787, %v1786
      %v2721 = vpack.c.bf16 %v1788, %v1788
      %v2722 = vunpack.c.l.bf16 %v2719
      %v2723 = vlaneseq
      %v2724 = vshrl.u32 %v2723, 7
      %v2725 = vsub.s32 0, %v2724
      %v2726 = vrot.slane %v2722, %v2725
      %v2735 = vunpack.c.l.b16 %v2711
      %v2736 = vunpack.c.l.b16 %v2712
      %v2737 = vunpack.c.l.b16 %v2713
      %v2738 = vunpack.c.l.b16 %v2714
      %v2739 = vunpack.c.l.b16 %v2715
      %v2740 = vunpack.c.l.b16 %v2716
      %v2741 = vunpack.c.l.b16 %v2717
      %v2742 = vunpack.c.l.b16 %v2718
      %v2743 = vpack.c.b16 %v2736, %v2735
      %v2744 = vpack.c.b16 %v2738, %v2737
      %v2745 = vpack.c.b16 %v2740, %v2739
      %v2746 = vpack.c.b16 %v2742, %v2741
      %v2752 = vsel %vm1526, %v2720, 0
      %v2755 = vsel %vm1526, %v2721, 0
      %2757 = vmatprep.subr.bf16.mxu0 0
      %2758 = vmatpush1.bf16.msra.mxu0 %v2743
      %2759 = vmatprep.subr.bf16.mxu0 0
      %2760 = vmatpush1.bf16.msra.mxu0 %v2744
      %2761 = vmatprep.subr.bf16.mxu0 0
      %2762 = vmatpush1.bf16.msra.mxu0 %v2745
      %2763 = vmatprep.subr.bf16.mxu0 0
      %2764 = vmatpush1.bf16.msra.mxu0 %v2746
      %2765 = vmatprep.subr.bf16.mxu0 0
      %2766 = vmatpush1.bf16.msra.mxu0 0
      %2767 = vmatprep.subr.bf16.mxu0 0
      %2768 = vmatpush1.bf16.msra.mxu0 0
      %2769 = vmatprep.subr.bf16.mxu0 0
      %2770 = vmatpush1.bf16.msra.mxu0 0
      %2771 = vmatprep.subr.bf16.mxu0 0
      %2772 = vmatpush1.bf16.msra.mxu0 0
      %2773 = vmatprep.subr.bf16.mxu0 0
      %2774 = vmatpush1.bf16.msra.mxu0 0
      %2775 = vmatprep.subr.bf16.mxu0 0
      %2776 = vmatpush1.bf16.msra.mxu0 0
      %2777 = vmatprep.subr.bf16.mxu0 0
      %2778 = vmatpush1.bf16.msra.mxu0 0
      %2779 = vmatprep.subr.bf16.mxu0 0
      %2780 = vmatpush1.bf16.msra.mxu0 0
      %2781 = vmatprep.subr.bf16.mxu0 0
      %2782 = vmatpush1.bf16.msra.mxu0 0
      %2783 = vmatprep.subr.bf16.mxu0 0
      %2784 = vmatpush1.bf16.msra.mxu0 0
      %2785 = vmatprep.subr.bf16.mxu0 0
      %2786 = vmatpush1.bf16.msra.mxu0 0
      %2787 = vmatprep.subr.bf16.mxu0 0
      %2788 = vmatpush1.bf16.msra.mxu0 0
      %2789 = vmatprep.mubr.bf16.mxu0 0
      %2790 = vmatmul.mubr.bf16.gmra.mrb[0].mxu0 %v2752
      %v2791 = vpop.f32.mrb[0].mxu0
      %v2792 = vadd.f32 %v2726, %v2791
      %v2793 = vpop.f32.mrb[0].mxu0
      %v2794 = vpop.f32.mrb[0].mxu0
      %v2795 = vadd.f32 %v2726, %v2794
      %v2796 = vpop.f32.mrb[0].mxu0
      %2797 = vmatprep.mubr.bf16.mxu0 0
      %2798 = vmatmul.mubr.bf16.gmra.mrb[0].mxu0 %v2755
      %v2799 = vpop.f32.mrb[0].mxu0
      %v2800 = vadd.f32 %v2726, %v2799
      %v2801 = vpop.f32.mrb[0].mxu0
      %v2802 = vpop.f32.mrb[0].mxu0
      %v2803 = vpop.f32.mrb[0].mxu0
      %2804 = vdwg.mxu0
      %v2805 = vpack.c.bf16 %v2708, %v2705
      %v2806 = vpack.c.bf16 %v2795, %v2792
      %v2807 = vpack.c.bf16 %v2800, %v2800
      %v2809 = vsel %vm1963, %v2805, 0
      %v2812 = vsel %vm1963, %v2806, 0
      %v2815 = vsel %vm1963, %v2807, 0
      %2817 = vmatprep.subr.bf16.mxu0 0
      %2818 = vmatpush1.bf16.xpose.msra.mxu0 %v2812
      %2819 = vmatprep.subr.bf16.mxu0 0
      %2820 = vmatpush1.bf16.xpose.msra.mxu0 %v2815
      %2821 = vmatprep.subr.bf16.mxu0 0
      %2822 = vmatpush1.bf16.xpose.msra.mxu0 0
      %2823 = vmatprep.subr.bf16.mxu0 0
      %2824 = vmatpush1.bf16.xpose.msra.mxu0 0
      %2825 = vmatprep.subr.bf16.mxu0 0
      %2826 = vmatpush1.bf16.xpose.msra.mxu0 0
      %2827 = vmatprep.subr.bf16.mxu0 0
      %2828 = vmatpush1.bf16.xpose.msra.mxu0 0
      %2829 = vmatprep.subr.bf16.mxu0 0
      %2830 = vmatpush1.bf16.xpose.msra.mxu0 0
      %2831 = vmatprep.subr.bf16.mxu0 0
      %2832 = vmatpush1.bf16.xpose.msra.mxu0 0
      %2833 = vmatprep.subr.bf16.mxu0 0
      %2834 = vmatpush1.bf16.xpose.msra.mxu0 0
      %2835 = vmatprep.subr.bf16.mxu0 0
      %2836 = vmatpush1.bf16.xpose.msra.mxu0 0
      %2837 = vmatprep.subr.bf16.mxu0 0
      %2838 = vmatpush1.bf16.xpose.msra.mxu0 0
      %2839 = vmatprep.subr.bf16.mxu0 0
      %2840 = vmatpush1.bf16.xpose.msra.mxu0 0
      %2841 = vmatprep.subr.bf16.mxu0 0
      %2842 = vmatpush1.bf16.xpose.msra.mxu0 0
      %2843 = vmatprep.subr.bf16.mxu0 0
      %2844 = vmatpush1.bf16.xpose.msra.mxu0 0
      %2845 = vmatprep.subr.bf16.mxu0 0
      %2846 = vmatpush1.bf16.xpose.msra.mxu0 0
      %2847 = vmatprep.subr.bf16.mxu0 0
      %2848 = vmatpush1.bf16.xpose.msra.mxu0 0
      %2849 = vmatprep.mubr.bf16.mxu0 0
      %2850 = vmatmul.mubr.bf16.gmra.mrb[0].mxu0 %v2809
      %v2851 = vpop.f32.mrb[0].mxu0
      %v2852 = vadd.f32 0.0, %v2851
      %v2853 = vpop.f32.mrb[0].mxu0
      %v2854 = vpop.f32.mrb[0].mxu0
      %v2855 = vadd.f32 0.0, %v2854
      %v2856 = vpop.f32.mrb[0].mxu0
      %2857 = vdwg.mxu0
      %v2858 = vmul.f32 %v2852, 0.25
      %v2859 = vmul.f32 %v2855, 0.25
      %vm2860 = vcmask 171008
      %v2861 = vsel %vm2860, %v2858, -inf
      %2862 = vmax.xlane.f32.xlu0 %v2861
      %v2863 = vpop.xlane.xlu0 %2862
      %vm2864 = vcmask 164864
      %v2865 = vsel %vm2864, %v2859, -inf
      %2866 = vmax.xlane.f32.xlu0 %v2865
      %v2867 = vpop.xlane.xlu0 %2866
      %v2868 = vsub.f32 %v2858, %v2863
      %v2869 = vsub.f32 %v2859, %v2867
      %v2870 = vmul.f32 %v2868, 1.442695
      %v2871 = vpow.pop %v2870
      %v2872 = vmul.f32 %v2869, 1.442695
      %v2873 = vpow.pop %v2872
      %v2874 = vsel %vm2860, %v2871, 0.0
      %2875 = vadd.xlane.f32.xlu0 %v2874
      %v2876 = vpop.xlane.xlu0 %2875
      %v2877 = vsel %vm2864, %v2873, 0.0
      %2878 = vadd.xlane.f32.xlu0 %v2877
      %v2879 = vpop.xlane.xlu0 %2878
      %v2880 = vrcp.pop %v2876
      %v2881 = vmul.f32 %v2871, %v2880
      %v2882 = vrcp.pop %v2879
      %v2883 = vmul.f32 %v2873, %v2882
      %v2884 = vpack.c.bf16 %v2883, %v2881
      %2887 = vrot.lane.b32.xlu0 %v2806, 64
      %v2888 = vpop.permute.xlu0 %2887
      %2889 = vrot.lane.b32.xlu0 %v2807, 64
      %v2890 = vpop.permute.xlu0 %2889
      %v2893 = vsel %vm2860, %v2884, 0
      %v2895 = vsel %vm1575, 4294967295, 65535
      %v2896 = vsel %vm1772, %v2895, 0
      %v2898 = vand.u32 %v2890, %v2896
      %2900 = vmatprep.subr.bf16.mxu0 0
      %2901 = vmatpush1.bf16.msra.mxu0 %v2888
      %2902 = vmatprep.subr.bf16.mxu0 0
      %2903 = vmatpush1.bf16.msra.mxu0 %v2898
      %2904 = vmatprep.subr.bf16.mxu0 0
      %2905 = vmatpush1.bf16.msra.mxu0 0
      %2906 = vmatprep.subr.bf16.mxu0 0
      %2907 = vmatpush1.bf16.msra.mxu0 0
      %2908 = vmatprep.subr.bf16.mxu0 0
      %2909 = vmatpush1.bf16.msra.mxu0 0
      %2910 = vmatprep.subr.bf16.mxu0 0
      %2911 = vmatpush1.bf16.msra.mxu0 0
      %2912 = vmatprep.subr.bf16.mxu0 0
      %2913 = vmatpush1.bf16.msra.mxu0 0
      %2914 = vmatprep.subr.bf16.mxu0 0
      %2915 = vmatpush1.bf16.msra.mxu0 0
      %2916 = vmatprep.subr.bf16.mxu0 0
      %2917 = vmatpush1.bf16.msra.mxu0 0
      %2918 = vmatprep.subr.bf16.mxu0 0
      %2919 = vmatpush1.bf16.msra.mxu0 0
      %2920 = vmatprep.subr.bf16.mxu0 0
      %2921 = vmatpush1.bf16.msra.mxu0 0
      %2922 = vmatprep.subr.bf16.mxu0 0
      %2923 = vmatpush1.bf16.msra.mxu0 0
      %2924 = vmatprep.subr.bf16.mxu0 0
      %2925 = vmatpush1.bf16.msra.mxu0 0
      %2926 = vmatprep.subr.bf16.mxu0 0
      %2927 = vmatpush1.bf16.msra.mxu0 0
      %2928 = vmatprep.subr.bf16.mxu0 0
      %2929 = vmatpush1.bf16.msra.mxu0 0
      %2930 = vmatprep.subr.bf16.mxu0 0
      %2931 = vmatpush1.bf16.msra.mxu0 0
      %2932 = vmatprep.mubr.bf16.mxu0 0
      %2933 = vmatmul.mubr.bf16.gmra.mrb[0].mxu0 %v2893
      %v2934 = vpop.f32.mrb[0].mxu0
      %v2935 = vadd.f32 0.0, %v2934
      %v2936 = vpop.f32.mrb[0].mxu0
      %v2937 = vpop.f32.mrb[0].mxu0
      %v2938 = vadd.f32 0.0, %v2937
      %v2939 = vpop.f32.mrb[0].mxu0
      %2940 = vdwg.mxu0
      %2942 = vrot.lane.b32.xlu0 %v2805, 112
      %v2943 = vpop.permute.xlu0 %2942
      %2944 = vrot.lane.b32.xlu0 %v2806, 112
      %v2945 = vpop.permute.xlu0 %2944
      %2946 = vrot.lane.b32.xlu0 %v2807, 112
      %v2947 = vpop.permute.xlu0 %2946
      %v2949 = vsel %vm1963, %v2943, 0
      %v2952 = vsel %vm1963, %v2945, 0
      %v2955 = vsel %vm1963, %v2947, 0
      %2957 = vmatprep.subr.bf16.mxu0 0
      %2958 = vmatpush1.bf16.xpose.msra.mxu0 %v2952
      %2959 = vmatprep.subr.bf16.mxu0 0
      %2960 = vmatpush1.bf16.xpose.msra.mxu0 %v2955
      %2961 = vmatprep.subr.bf16.mxu0 0
      %2962 = vmatpush1.bf16.xpose.msra.mxu0 0
      %2963 = vmatprep.subr.bf16.mxu0 0
      %2964 = vmatpush1.bf16.xpose.msra.mxu0 0
      %2965 = vmatprep.subr.bf16.mxu0 0
      %2966 = vmatpush1.bf16.xpose.msra.mxu0 0
      %2967 = vmatprep.subr.bf16.mxu0 0
      %2968 = vmatpush1.bf16.xpose.msra.mxu0 0
      %2969 = vmatprep.subr.bf16.mxu0 0
      %2970 = vmatpush1.bf16.xpose.msra.mxu0 0
      %2971 = vmatprep.subr.bf16.mxu0 0
      %2972 = vmatpush1.bf16.xpose.msra.mxu0 0
      %2973 = vmatprep.subr.bf16.mxu0 0
      %2974 = vmatpush1.bf16.xpose.msra.mxu0 0
      %2975 = vmatprep.subr.bf16.mxu0 0
      %2976 = vmatpush1.bf16.xpose.msra.mxu0 0
      %2977 = vmatprep.subr.bf16.mxu0 0
      %2978 = vmatpush1.bf16.xpose.msra.mxu0 0
      %2979 = vmatprep.subr.bf16.mxu0 0
      %2980 = vmatpush1.bf16.xpose.msra.mxu0 0
      %2981 = vmatprep.subr.bf16.mxu0 0
      %2982 = vmatpush1.bf16.xpose.msra.mxu0 0
      %2983 = vmatprep.subr.bf16.mxu0 0
      %2984 = vmatpush1.bf16.xpose.msra.mxu0 0
      %2985 = vmatprep.subr.bf16.mxu0 0
      %2986 = vmatpush1.bf16.xpose.msra.mxu0 0
      %2987 = vmatprep.subr.bf16.mxu0 0
      %2988 = vmatpush1.bf16.xpose.msra.mxu0 0
      %2989 = vmatprep.mubr.bf16.mxu0 0
      %2990 = vmatmul.mubr.bf16.gmra.mrb[0].mxu0 %v2949
      %v2991 = vpop.f32.mrb[0].mxu0
      %v2992 = vadd.f32 0.0, %v2991
      %v2993 = vpop.f32.mrb[0].mxu0
      %v2994 = vpop.f32.mrb[0].mxu0
      %v2995 = vadd.f32 0.0, %v2994
      %v2996 = vpop.f32.mrb[0].mxu0
      %2997 = vdwg.mxu0
      %v2998 = vmul.f32 %v2992, 0.25
      %v2999 = vmul.f32 %v2995, 0.25
      %v3000 = vsel %vm2860, %v2998, -inf
      %3001 = vmax.xlane.f32.xlu0 %v3000
      %v3002 = vpop.xlane.xlu0 %3001
      %v3003 = vsel %vm2864, %v2999, -inf
      %3004 = vmax.xlane.f32.xlu0 %v3003
      %v3005 = vpop.xlane.xlu0 %3004
      %v3006 = vsub.f32 %v2998, %v3002
      %v3007 = vsub.f32 %v2999, %v3005
      %v3008 = vmul.f32 %v3006, 1.442695
      %v3009 = vpow.pop %v3008
      %v3010 = vmul.f32 %v3007, 1.442695
      %v3011 = vpow.pop %v3010
      %v3012 = vsel %vm2860, %v3009, 0.0
      %3013 = vadd.xlane.f32.xlu0 %v3012
      %v3014 = vpop.xlane.xlu0 %3013
      %v3015 = vsel %vm2864, %v3011, 0.0
      %3016 = vadd.xlane.f32.xlu0 %v3015
      %v3017 = vpop.xlane.xlu0 %3016
      %v3018 = vrcp.pop %v3014
      %v3019 = vmul.f32 %v3009, %v3018
      %v3020 = vrcp.pop %v3017
      %v3021 = vmul.f32 %v3011, %v3020
      %v3022 = vpack.c.bf16 %v3021, %v3019
      %3023 = vrot.lane.b32.xlu0 %v2806, 48
      %v3024 = vpop.permute.xlu0 %3023
      %3025 = vrot.lane.b32.xlu0 %v2807, 48
      %v3026 = vpop.permute.xlu0 %3025
      %v3029 = vsel %vm2860, %v3022, 0
      %v3032 = vand.u32 %v3026, %v2896
      %3034 = vmatprep.subr.bf16.mxu0 0
      %3035 = vmatpush1.bf16.msra.mxu0 %v3024
      %3036 = vmatprep.subr.bf16.mxu0 0
      %3037 = vmatpush1.bf16.msra.mxu0 %v3032
      %3038 = vmatprep.subr.bf16.mxu0 0
      %3039 = vmatpush1.bf16.msra.mxu0 0
      %3040 = vmatprep.subr.bf16.mxu0 0
      %3041 = vmatpush1.bf16.msra.mxu0 0
      %3042 = vmatprep.subr.bf16.mxu0 0
      %3043 = vmatpush1.bf16.msra.mxu0 0
      %3044 = vmatprep.subr.bf16.mxu0 0
      %3045 = vmatpush1.bf16.msra.mxu0 0
      %3046 = vmatprep.subr.bf16.mxu0 0
      %3047 = vmatpush1.bf16.msra.mxu0 0
      %3048 = vmatprep.subr.bf16.mxu0 0
      %3049 = vmatpush1.bf16.msra.mxu0 0
      %3050 = vmatprep.subr.bf16.mxu0 0
      %3051 = vmatpush1.bf16.msra.mxu0 0
      %3052 = vmatprep.subr.bf16.mxu0 0
      %3053 = vmatpush1.bf16.msra.mxu0 0
      %3054 = vmatprep.subr.bf16.mxu0 0
      %3055 = vmatpush1.bf16.msra.mxu0 0
      %3056 = vmatprep.subr.bf16.mxu0 0
      %3057 = vmatpush1.bf16.msra.mxu0 0
      %3058 = vmatprep.subr.bf16.mxu0 0
      %3059 = vmatpush1.bf16.msra.mxu0 0
      %3060 = vmatprep.subr.bf16.mxu0 0
      %3061 = vmatpush1.bf16.msra.mxu0 0
      %3062 = vmatprep.subr.bf16.mxu0 0
      %3063 = vmatpush1.bf16.msra.mxu0 0
      %3064 = vmatprep.subr.bf16.mxu0 0
      %3065 = vmatpush1.bf16.msra.mxu0 0
      %3066 = vmatprep.mubr.bf16.mxu0 0
      %3067 = vmatmul.mubr.bf16.gmra.mrb[0].mxu0 %v3029
      %v3068 = vpop.f32.mrb[0].mxu0
      %v3069 = vadd.f32 0.0, %v3068
      %v3070 = vpop.f32.mrb[0].mxu0
      %v3071 = vpop.f32.mrb[0].mxu0
      %v3072 = vadd.f32 0.0, %v3071
      %v3073 = vpop.f32.mrb[0].mxu0
      %3074 = vdwg.mxu0
      %3075 = vrot.lane.b32.xlu0 %v2805, 96
      %v3076 = vpop.permute.xlu0 %3075
      %3077 = vrot.lane.b32.xlu0 %v2806, 96
      %v3078 = vpop.permute.xlu0 %3077
      %3079 = vrot.lane.b32.xlu0 %v2807, 96
      %v3080 = vpop.permute.xlu0 %3079
      %v3082 = vsel %vm1963, %v3076, 0
      %v3085 = vsel %vm1963, %v3078, 0
      %v3088 = vsel %vm1963, %v3080, 0
      %3090 = vmatprep.subr.bf16.mxu0 0
      %3091 = vmatpush1.bf16.xpose.msra.mxu0 %v3085
      %3092 = vmatprep.subr.bf16.mxu0 0
      %3093 = vmatpush1.bf16.xpose.msra.mxu0 %v3088
      %3094 = vmatprep.subr.bf16.mxu0 0
      %3095 = vmatpush1.bf16.xpose.msra.mxu0 0
      %3096 = vmatprep.subr.bf16.mxu0 0
      %3097 = vmatpush1.bf16.xpose.msra.mxu0 0
      %3098 = vmatprep.subr.bf16.mxu0 0
      %3099 = vmatpush1.bf16.xpose.msra.mxu0 0
      %3100 = vmatprep.subr.bf16.mxu0 0
      %3101 = vmatpush1.bf16.xpose.msra.mxu0 0
      %3102 = vmatprep.subr.bf16.mxu0 0
      %3103 = vmatpush1.bf16.xpose.msra.mxu0 0
      %3104 = vmatprep.subr.bf16.mxu0 0
      %3105 = vmatpush1.bf16.xpose.msra.mxu0 0
      %3106 = vmatprep.subr.bf16.mxu0 0
      %3107 = vmatpush1.bf16.xpose.msra.mxu0 0
      %3108 = vmatprep.subr.bf16.mxu0 0
      %3109 = vmatpush1.bf16.xpose.msra.mxu0 0
      %3110 = vmatprep.subr.bf16.mxu0 0
      %3111 = vmatpush1.bf16.xpose.msra.mxu0 0
      %3112 = vmatprep.subr.bf16.mxu0 0
      %3113 = vmatpush1.bf16.xpose.msra.mxu0 0
      %3114 = vmatprep.subr.bf16.mxu0 0
      %3115 = vmatpush1.bf16.xpose.msra.mxu0 0
      %3116 = vmatprep.subr.bf16.mxu0 0
      %3117 = vmatpush1.bf16.xpose.msra.mxu0 0
      %3118 = vmatprep.subr.bf16.mxu0 0
      %3119 = vmatpush1.bf16.xpose.msra.mxu0 0
      %3120 = vmatprep.subr.bf16.mxu0 0
      %3121 = vmatpush1.bf16.xpose.msra.mxu0 0
      %3122 = vmatprep.mubr.bf16.mxu0 0
      %3123 = vmatmul.mubr.bf16.gmra.mrb[0].mxu0 %v3082
      %v3124 = vpop.f32.mrb[0].mxu0
      %v3125 = vadd.f32 0.0, %v3124
      %v3126 = vpop.f32.mrb[0].mxu0
      %v3127 = vpop.f32.mrb[0].mxu0
      %v3128 = vadd.f32 0.0, %v3127
      %v3129 = vpop.f32.mrb[0].mxu0
      %3130 = vdwg.mxu0
      %v3131 = vmul.f32 %v3125, 0.25
      %v3132 = vmul.f32 %v3128, 0.25
      %v3133 = vsel %vm2860, %v3131, -inf
      %3134 = vmax.xlane.f32.xlu0 %v3133
      %v3135 = vpop.xlane.xlu0 %3134
      %v3136 = vsel %vm2864, %v3132, -inf
      %3137 = vmax.xlane.f32.xlu0 %v3136
      %v3138 = vpop.xlane.xlu0 %3137
      %v3139 = vsub.f32 %v3131, %v3135
      %v3140 = vsub.f32 %v3132, %v3138
      %v3141 = vmul.f32 %v3139, 1.442695
      %v3142 = vpow.pop %v3141
      %v3143 = vmul.f32 %v3140, 1.442695
      %v3144 = vpow.pop %v3143
      %v3145 = vsel %vm2860, %v3142, 0.0
      %3146 = vadd.xlane.f32.xlu0 %v3145
      %v3147 = vpop.xlane.xlu0 %3146
      %v3148 = vsel %vm2864, %v3144, 0.0
      %3149 = vadd.xlane.f32.xlu0 %v3148
      %v3150 = vpop.xlane.xlu0 %3149
      %v3151 = vrcp.pop %v3147
      %v3152 = vmul.f32 %v3142, %v3151
      %v3153 = vrcp.pop %v3150
      %v3154 = vmul.f32 %v3144, %v3153
      %v3155 = vpack.c.bf16 %v3154, %v3152
      %3156 = vrot.lane.b32.xlu0 %v2806, 32
      %v3157 = vpop.permute.xlu0 %3156
      %3158 = vrot.lane.b32.xlu0 %v2807, 32
      %v3159 = vpop.permute.xlu0 %3158
      %v3162 = vsel %vm2860, %v3155, 0
      %v3165 = vand.u32 %v3159, %v2896
      %3167 = vmatprep.subr.bf16.mxu0 0
      %3168 = vmatpush1.bf16.msra.mxu0 %v3157
      %3169 = vmatprep.subr.bf16.mxu0 0
      %3170 = vmatpush1.bf16.msra.mxu0 %v3165
      %3171 = vmatprep.subr.bf16.mxu0 0
      %3172 = vmatpush1.bf16.msra.mxu0 0
      %3173 = vmatprep.subr.bf16.mxu0 0
      %3174 = vmatpush1.bf16.msra.mxu0 0
      %3175 = vmatprep.subr.bf16.mxu0 0
      %3176 = vmatpush1.bf16.msra.mxu0 0
      %3177 = vmatprep.subr.bf16.mxu0 0
      %3178 = vmatpush1.bf16.msra.mxu0 0
      %3179 = vmatprep.subr.bf16.mxu0 0
      %3180 = vmatpush1.bf16.msra.mxu0 0
      %3181 = vmatprep.subr.bf16.mxu0 0
      %3182 = vmatpush1.bf16.msra.mxu0 0
      %3183 = vmatprep.subr.bf16.mxu0 0
      %3184 = vmatpush1.bf16.msra.mxu0 0
      %3185 = vmatprep.subr.bf16.mxu0 0
      %3186 = vmatpush1.bf16.msra.mxu0 0
      %3187 = vmatprep.subr.bf16.mxu0 0
      %3188 = vmatpush1.bf16.msra.mxu0 0
      %3189 = vmatprep.subr.bf16.mxu0 0
      %3190 = vmatpush1.bf16.msra.mxu0 0
      %3191 = vmatprep.subr.bf16.mxu0 0
      %3192 = vmatpush1.bf16.msra.mxu0 0
      %3193 = vmatprep.subr.bf16.mxu0 0
      %3194 = vmatpush1.bf16.msra.mxu0 0
      %3195 = vmatprep.subr.bf16.mxu0 0
      %3196 = vmatpush1.bf16.msra.mxu0 0
      %3197 = vmatprep.subr.bf16.mxu0 0
      %3198 = vmatpush1.bf16.msra.mxu0 0
      %3199 = vmatprep.mubr.bf16.mxu0 0
      %3200 = vmatmul.mubr.bf16.gmra.mrb[0].mxu0 %v3162
      %v3201 = vpop.f32.mrb[0].mxu0
      %v3202 = vadd.f32 0.0, %v3201
      %v3203 = vpop.f32.mrb[0].mxu0
      %v3204 = vpop.f32.mrb[0].mxu0
      %v3205 = vadd.f32 0.0, %v3204
      %v3206 = vpop.f32.mrb[0].mxu0
      %3207 = vdwg.mxu0
      %3208 = vrot.lane.b32.xlu0 %v2805, 80
      %v3209 = vpop.permute.xlu0 %3208
      %3210 = vrot.lane.b32.xlu0 %v2806, 80
      %v3211 = vpop.permute.xlu0 %3210
      %3212 = vrot.lane.b32.xlu0 %v2807, 80
      %v3213 = vpop.permute.xlu0 %3212
      %v3215 = vsel %vm1963, %v3209, 0
      %v3218 = vsel %vm1963, %v3211, 0
      %v3221 = vsel %vm1963, %v3213, 0
      %3223 = vmatprep.subr.bf16.mxu0 0
      %3224 = vmatpush1.bf16.xpose.msra.mxu0 %v3218
      %3225 = vmatprep.subr.bf16.mxu0 0
      %3226 = vmatpush1.bf16.xpose.msra.mxu0 %v3221
      %3227 = vmatprep.subr.bf16.mxu0 0
      %3228 = vmatpush1.bf16.xpose.msra.mxu0 0
      %3229 = vmatprep.subr.bf16.mxu0 0
      %3230 = vmatpush1.bf16.xpose.msra.mxu0 0
      %3231 = vmatprep.subr.bf16.mxu0 0
      %3232 = vmatpush1.bf16.xpose.msra.mxu0 0
      %3233 = vmatprep.subr.bf16.mxu0 0
      %3234 = vmatpush1.bf16.xpose.msra.mxu0 0
      %3235 = vmatprep.subr.bf16.mxu0 0
      %3236 = vmatpush1.bf16.xpose.msra.mxu0 0
      %3237 = vmatprep.subr.bf16.mxu0 0
      %3238 = vmatpush1.bf16.xpose.msra.mxu0 0
      %3239 = vmatprep.subr.bf16.mxu0 0
      %3240 = vmatpush1.bf16.xpose.msra.mxu0 0
      %3241 = vmatprep.subr.bf16.mxu0 0
      %3242 = vmatpush1.bf16.xpose.msra.mxu0 0
      %3243 = vmatprep.subr.bf16.mxu0 0
      %3244 = vmatpush1.bf16.xpose.msra.mxu0 0
      %3245 = vmatprep.subr.bf16.mxu0 0
      %3246 = vmatpush1.bf16.xpose.msra.mxu0 0
      %3247 = vmatprep.subr.bf16.mxu0 0
      %3248 = vmatpush1.bf16.xpose.msra.mxu0 0
      %3249 = vmatprep.subr.bf16.mxu0 0
      %3250 = vmatpush1.bf16.xpose.msra.mxu0 0
      %3251 = vmatprep.subr.bf16.mxu0 0
      %3252 = vmatpush1.bf16.xpose.msra.mxu0 0
      %3253 = vmatprep.subr.bf16.mxu0 0
      %3254 = vmatpush1.bf16.xpose.msra.mxu0 0
      %3255 = vmatprep.mubr.bf16.mxu0 0
      %3256 = vmatmul.mubr.bf16.gmra.mrb[0].mxu0 %v3215
      %v3257 = vpop.f32.mrb[0].mxu0
      %v3258 = vadd.f32 0.0, %v3257
      %v3259 = vpop.f32.mrb[0].mxu0
      %v3260 = vpop.f32.mrb[0].mxu0
      %v3261 = vadd.f32 0.0, %v3260
      %v3262 = vpop.f32.mrb[0].mxu0
      %3263 = vdwg.mxu0
      %v3264 = vmul.f32 %v3258, 0.25
      %v3265 = vmul.f32 %v3261, 0.25
      %v3266 = vsel %vm2860, %v3264, -inf
      %3267 = vmax.xlane.f32.xlu0 %v3266
      %v3268 = vpop.xlane.xlu0 %3267
      %v3269 = vsel %vm2864, %v3265, -inf
      %3270 = vmax.xlane.f32.xlu0 %v3269
      %v3271 = vpop.xlane.xlu0 %3270
      %v3272 = vsub.f32 %v3264, %v3268
      %v3273 = vsub.f32 %v3265, %v3271
      %v3274 = vmul.f32 %v3272, 1.442695
      %v3275 = vpow.pop %v3274
      %v3276 = vmul.f32 %v3273, 1.442695
      %v3277 = vpow.pop %v3276
      %v3278 = vsel %vm2860, %v3275, 0.0
      %3279 = vadd.xlane.f32.xlu0 %v3278
      %v3280 = vpop.xlane.xlu0 %3279
      %v3281 = vsel %vm2864, %v3277, 0.0
      %3282 = vadd.xlane.f32.xlu0 %v3281
      %v3283 = vpop.xlane.xlu0 %3282
      %v3284 = vrcp.pop %v3280
      %v3285 = vmul.f32 %v3275, %v3284
      %v3286 = vrcp.pop %v3283
      %v3287 = vmul.f32 %v3277, %v3286
      %v3288 = vpack.c.bf16 %v3287, %v3285
      %3289 = vrot.lane.b32.xlu0 %v2806, 16
      %v3290 = vpop.permute.xlu0 %3289
      %3291 = vrot.lane.b32.xlu0 %v2807, 16
      %v3292 = vpop.permute.xlu0 %3291
      %v3295 = vsel %vm2860, %v3288, 0
      %v3298 = vand.u32 %v3292, %v2896
      %3300 = vmatprep.subr.bf16.mxu0 0
      %3301 = vmatpush1.bf16.msra.mxu0 %v3290
      %3302 = vmatprep.subr.bf16.mxu0 0
      %3303 = vmatpush1.bf16.msra.mxu0 %v3298
      %3304 = vmatprep.subr.bf16.mxu0 0
      %3305 = vmatpush1.bf16.msra.mxu0 0
      %3306 = vmatprep.subr.bf16.mxu0 0
      %3307 = vmatpush1.bf16.msra.mxu0 0
      %3308 = vmatprep.subr.bf16.mxu0 0
      %3309 = vmatpush1.bf16.msra.mxu0 0
      %3310 = vmatprep.subr.bf16.mxu0 0
      %3311 = vmatpush1.bf16.msra.mxu0 0
      %3312 = vmatprep.subr.bf16.mxu0 0
      %3313 = vmatpush1.bf16.msra.mxu0 0
      %3314 = vmatprep.subr.bf16.mxu0 0
      %3315 = vmatpush1.bf16.msra.mxu0 0
      %3316 = vmatprep.subr.bf16.mxu0 0
      %3317 = vmatpush1.bf16.msra.mxu0 0
      %3318 = vmatprep.subr.bf16.mxu0 0
      %3319 = vmatpush1.bf16.msra.mxu0 0
      %3320 = vmatprep.subr.bf16.mxu0 0
      %3321 = vmatpush1.bf16.msra.mxu0 0
      %3322 = vmatprep.subr.bf16.mxu0 0
      %3323 = vmatpush1.bf16.msra.mxu0 0
      %3324 = vmatprep.subr.bf16.mxu0 0
      %3325 = vmatpush1.bf16.msra.mxu0 0
      %3326 = vmatprep.subr.bf16.mxu0 0
      %3327 = vmatpush1.bf16.msra.mxu0 0
      %3328 = vmatprep.subr.bf16.mxu0 0
      %3329 = vmatpush1.bf16.msra.mxu0 0
      %3330 = vmatprep.subr.bf16.mxu0 0
      %3331 = vmatpush1.bf16.msra.mxu0 0
      %3332 = vmatprep.mubr.bf16.mxu0 0
      %3333 = vmatmul.mubr.bf16.gmra.mrb[0].mxu0 %v3295
      %v3334 = vpop.f32.mrb[0].mxu0
      %v3335 = vadd.f32 0.0, %v3334
      %v3336 = vpop.f32.mrb[0].mxu0
      %v3337 = vpop.f32.mrb[0].mxu0
      %v3338 = vadd.f32 0.0, %v3337
      %v3339 = vpop.f32.mrb[0].mxu0
      %3340 = vdwg.mxu0
      %3343 = vrot.lane.b32.xlu0 %v3069, 16
      %v3344 = vpop.permute.xlu0 %3343
      %3345 = vrot.lane.b32.xlu0 %v3072, 16
      %v3346 = vpop.permute.xlu0 %3345
      %3351 = vrot.lane.b32.xlu0 %v3202, 32
      %v3352 = vpop.permute.xlu0 %3351
      %3353 = vrot.lane.b32.xlu0 %v3205, 32
      %v3354 = vpop.permute.xlu0 %3353
      %3359 = vrot.lane.b32.xlu0 %v3335, 48
      %v3360 = vpop.permute.xlu0 %3359
      %3361 = vrot.lane.b32.xlu0 %v3338, 48
      %v3362 = vpop.permute.xlu0 %3361
      %v3365 = vsel %vm1963, %v2935, %v3344
      %v3366 = vsel %vm1963, %v2938, %v3346
      %v3367 = vsel %vm1659, %v3365, %v3352
      %v3368 = vsel %vm1659, %v3366, %v3354
      %v3369 = vsel %vm2498, %v3367, %v3360
      %v3370 = vsel %vm2498, %v3368, %v3362
      %v3371 = vld [vmem:[%s59] sm:$0xf]
      %v3372 = vld [vmem:[%s59 + $0x4] sm:$0xf]
      %v3373 = vld [vmem:[%s59 + $0x8] sm:$0xf]
      %v3374 = vld [vmem:[%s59 + $0xc] sm:$0xf]
      %v3375 = vld [vmem:[%s59 + $0x10] sm:$0xf]
      %v3376 = vld [vmem:[%s59 + $0x14] sm:$0xf]
      %v3377 = vld [vmem:[%s59 + $0x18] sm:$0xf]
      %v3378 = vld [vmem:[%s59 + $0x1c] sm:$0xf]
      %v3379 = vld [vmem:[%s61] sm:$0x1]
      %v3380 = vpack.c.bf16 %v3370, %v3369
      %v3381 = vunpack.c.l.bf16 %v3379
      %v3382 = vlaneseq
      %v3383 = vshrl.u32 %v3382, 7
      %v3384 = vsub.s32 0, %v3383
      %v3385 = vrot.slane %v3381, %v3384
      %v3394 = vunpack.c.l.b16 %v3371
      %v3395 = vunpack.c.l.b16 %v3372
      %v3396 = vunpack.c.l.b16 %v3373
      %v3397 = vunpack.c.l.b16 %v3374
      %v3398 = vunpack.c.l.b16 %v3375
      %v3399 = vunpack.c.l.b16 %v3376
      %v3400 = vunpack.c.l.b16 %v3377
      %v3401 = vunpack.c.l.b16 %v3378
      %v3402 = vpack.c.b16 %v3395, %v3394
      %v3403 = vpack.c.b16 %v3397, %v3396
      %v3404 = vpack.c.b16 %v3399, %v3398
      %v3405 = vpack.c.b16 %v3401, %v3400
      %v3411 = vsel %vm1526, %v3380, 0
      %3413 = vmatprep.subr.bf16.mxu0 0
      %3414 = vmatpush1.bf16.msra.mxu0 %v3402
      %3415 = vmatprep.subr.bf16.mxu0 0
      %3416 = vmatpush1.bf16.msra.mxu0 %v3403
      %3417 = vmatprep.subr.bf16.mxu0 0
      %3418 = vmatpush1.bf16.msra.mxu0 %v3404
      %3419 = vmatprep.subr.bf16.mxu0 0
      %3420 = vmatpush1.bf16.msra.mxu0 %v3405
      %3421 = vmatprep.subr.bf16.mxu0 0
      %3422 = vmatpush1.bf16.msra.mxu0 0
      %3423 = vmatprep.subr.bf16.mxu0 0
      %3424 = vmatpush1.bf16.msra.mxu0 0
      %3425 = vmatprep.subr.bf16.mxu0 0
      %3426 = vmatpush1.bf16.msra.mxu0 0
      %3427 = vmatprep.subr.bf16.mxu0 0
      %3428 = vmatpush1.bf16.msra.mxu0 0
      %3429 = vmatprep.subr.bf16.mxu0 0
      %3430 = vmatpush1.bf16.msra.mxu0 0
      %3431 = vmatprep.subr.bf16.mxu0 0
      %3432 = vmatpush1.bf16.msra.mxu0 0
      %3433 = vmatprep.subr.bf16.mxu0 0
      %3434 = vmatpush1.bf16.msra.mxu0 0
      %3435 = vmatprep.subr.bf16.mxu0 0
      %3436 = vmatpush1.bf16.msra.mxu0 0
      %3437 = vmatprep.subr.bf16.mxu0 0
      %3438 = vmatpush1.bf16.msra.mxu0 0
      %3439 = vmatprep.subr.bf16.mxu0 0
      %3440 = vmatpush1.bf16.msra.mxu0 0
      %3441 = vmatprep.subr.bf16.mxu0 0
      %3442 = vmatpush1.bf16.msra.mxu0 0
      %3443 = vmatprep.subr.bf16.mxu0 0
      %3444 = vmatpush1.bf16.msra.mxu0 0
      %3445 = vmatprep.mubr.bf16.mxu0 0
      %3446 = vmatmul.mubr.bf16.gmra.mrb[0].mxu0 %v3411
      %v3447 = vpop.f32.mrb[0].mxu0
      %v3448 = vadd.f32 %v3385, %v3447
      %v3449 = vpop.f32.mrb[0].mxu0
      %v3450 = vpop.f32.mrb[0].mxu0
      %v3451 = vadd.f32 %v3385, %v3450
      %v3452 = vpop.f32.mrb[0].mxu0
      %3453 = vdwg.mxu0
      %v3454 = vadd.f32 %v2584, %v3448
      %v3455 = vadd.f32 %v2585, %v3451
      %v3456 = vld [vmem:[%s63] sm:$0x1]
      %v3457 = vld [vmem:[%s65] sm:$0x1]
      %v3458 = vunpack.c.l.bf16 %v3456
      %v3459 = vunpack.c.l.bf16 %v3457
      %v3460 = vsel %vm1526, %v3454, 0.0
      %3461 = vadd.xlane.f32.xlu0 %v3460
      %v3462 = vpop.xlane.xlu0 %3461
      %v3463 = vsel %vm1805, %v3455, 0.0
      %3464 = vadd.xlane.f32.xlu0 %v3463
      %v3465 = vpop.xlane.xlu0 %3464
      %v3466 = vmul.f32 %v3462, %v1809
      %v3467 = vmul.f32 %v3465, %v1809
      %v3468 = vsub.f32 %v3454, %v3466
      %v3469 = vsub.f32 %v3455, %v3467
      %v3470 = vmul.f32 %v3468, %v3468
      %v3471 = vmul.f32 %v3469, %v3469
      %v3472 = vsel %vm1526, %v3470, 0.0
      %3473 = vadd.xlane.f32.xlu0 %v3472
      %v3474 = vpop.xlane.xlu0 %3473
      %v3475 = vsel %vm1805, %v3471, 0.0
      %3476 = vadd.xlane.f32.xlu0 %v3475
      %v3477 = vpop.xlane.xlu0 %3476
      %v3478 = vmul.f32 %v3474, %v1809
      %v3479 = vmul.f32 %v3477, %v1809
      %v3480 = vadd.f32 %v3478, 1e-05
      %v3481 = vadd.f32 %v3479, 1e-05
      %v3482 = vrsqrt.pop %v3480
      %v3483 = vrsqrt.pop %v3481
      %v3484 = vmul.f32 %v3468, %v3482
      %v3485 = vmul.f32 %v3469, %v3483
      %v3486 = vlaneseq
      %v3487 = vshrl.u32 %v3486, 7
      %v3488 = vsub.s32 0, %v3487
      %v3489 = vrot.slane %v3458, %v3488
      %v3490 = vmul.f32 %v3484, %v3489
      %v3491 = vmul.f32 %v3485, %v3489
      %v3492 = vlaneseq
      %v3493 = vshrl.u32 %v3492, 7
      %v3494 = vsub.s32 0, %v3493
      %v3495 = vrot.slane %v3459, %v3494
      %v3496 = vadd.f32 %v3490, %v3495
      %v3497 = vadd.f32 %v3491, %v3495
      %v3498 = vld [vmem:[%s67] sm:$0xff]
      %v3499 = vld [vmem:[%s67 + $0x8] sm:$0xff]
      %v3500 = vld [vmem:[%s67 + $0x10] sm:$0xff]
      %v3501 = vld [vmem:[%s67 + $0x18] sm:$0xff]
      %v3502 = vld [vmem:[%s67 + $0x20] sm:$0xff]
      %v3503 = vld [vmem:[%s67 + $0x28] sm:$0xff]
      %v3504 = vld [vmem:[%s67 + $0x30] sm:$0xff]
      %v3505 = vld [vmem:[%s67 + $0x38] sm:$0xff]
      %v3506 = vld [vmem:[%s69] sm:$0x3]
      %v3507 = vpack.c.bf16 %v3497, %v3496
      %v3508 = vunpack.c.l.bf16 %v3506
      %v3510 = vlaneseq
      %v3511 = vshrl.u32 %v3510, 7
      %v3512 = vsub.s32 0, %v3511
      %v3513 = vrot.slane %v3508, %v3512
      %v3514 = vlaneseq
      %v3515 = vshrl.u32 %v3514, 7
      %v3516 = vsub.s32 2, %v3515
      %v3517 = vrot.slane %v3508, %v3516
      %v3520 = vlaneseq
      %v3521 = vshrl.u32 %v3520, 7
      %v3522 = vsub.s32 0, %v3521
      %v3523 = vrot.slane %v3513, %v3522
      %v3524 = vlaneseq
      %v3525 = vshrl.u32 %v3524, 7
      %v3526 = vsub.s32 0, %v3525
      %v3527 = vrot.slane %v3517, %v3526
      %v3536 = vunpack.c.l.b16 %v3498
      %v3537 = vunpack.c.h.b16 %v3498
      %v3538 = vunpack.c.l.b16 %v3499
      %v3539 = vunpack.c.h.b16 %v3499
      %v3540 = vunpack.c.l.b16 %v3500
      %v3541 = vunpack.c.h.b16 %v3500
      %v3542 = vunpack.c.l.b16 %v3501
      %v3543 = vunpack.c.h.b16 %v3501
      %v3544 = vunpack.c.l.b16 %v3502
      %v3545 = vunpack.c.h.b16 %v3502
      %v3546 = vunpack.c.l.b16 %v3503
      %v3547 = vunpack.c.h.b16 %v3503
      %v3548 = vunpack.c.l.b16 %v3504
      %v3549 = vunpack.c.h.b16 %v3504
      %v3550 = vunpack.c.l.b16 %v3505
      %v3551 = vunpack.c.h.b16 %v3505
      %v3552 = vpack.c.b16 %v3538, %v3536
      %v3553 = vpack.c.b16 %v3539, %v3537
      %v3554 = vpack.c.b16 %v3542, %v3540
      %v3555 = vpack.c.b16 %v3543, %v3541
      %v3556 = vpack.c.b16 %v3546, %v3544
      %v3557 = vpack.c.b16 %v3547, %v3545
      %v3558 = vpack.c.b16 %v3550, %v3548
      %v3559 = vpack.c.b16 %v3551, %v3549
      %v3569 = vsel %vm1526, %v3507, 0
      %3571 = vmatprep.subr.bf16.mxu0 %v3553
      %3572 = vmatpush1.bf16.msra.mxu0 %v3552
      %3573 = vmatprep.subr.bf16.mxu0 %v3555
      %3574 = vmatpush1.bf16.msra.mxu0 %v3554
      %3575 = vmatprep.subr.bf16.mxu0 %v3557
      %3576 = vmatpush1.bf16.msra.mxu0 %v3556
      %3577 = vmatprep.subr.bf16.mxu0 %v3559
      %3578 = vmatpush1.bf16.msra.mxu0 %v3558
      %3579 = vmatprep.subr.bf16.mxu0 0
      %3580 = vmatpush1.bf16.msra.mxu0 0
      %3581 = vmatprep.subr.bf16.mxu0 0
      %3582 = vmatpush1.bf16.msra.mxu0 0
      %3583 = vmatprep.subr.bf16.mxu0 0
      %3584 = vmatpush1.bf16.msra.mxu0 0
      %3585 = vmatprep.subr.bf16.mxu0 0
      %3586 = vmatpush1.bf16.msra.mxu0 0
      %3587 = vmatprep.subr.bf16.mxu0 0
      %3588 = vmatpush1.bf16.msra.mxu0 0
      %3589 = vmatprep.subr.bf16.mxu0 0
      %3590 = vmatpush1.bf16.msra.mxu0 0
      %3591 = vmatprep.subr.bf16.mxu0 0
      %3592 = vmatpush1.bf16.msra.mxu0 0
      %3593 = vmatprep.subr.bf16.mxu0 0
      %3594 = vmatpush1.bf16.msra.mxu0 0
      %3595 = vmatprep.subr.bf16.mxu0 0
      %3596 = vmatpush1.bf16.msra.mxu0 0
      %3597 = vmatprep.subr.bf16.mxu0 0
      %3598 = vmatpush1.bf16.msra.mxu0 0
      %3599 = vmatprep.subr.bf16.mxu0 0
      %3600 = vmatpush1.bf16.msra.mxu0 0
      %3601 = vmatprep.subr.bf16.mxu0 0
      %3602 = vmatpush1.bf16.msra.mxu0 0
      %3603 = vmatprep.mubr.bf16.mxu0 0
      %3604 = vmatmul.mubr.bf16.gmra.mrb[0].mxu0 %v3569
      %v3605 = vpop.f32.mrb[0].mxu0
      %v3606 = vadd.f32 %v3523, %v3605
      %v3607 = vpop.f32.mrb[0].mxu0
      %v3608 = vadd.f32 %v3527, %v3607
      %v3609 = vpop.f32.mrb[0].mxu0
      %v3610 = vadd.f32 %v3523, %v3609
      %v3611 = vpop.f32.mrb[0].mxu0
      %v3612 = vadd.f32 %v3527, %v3611
      %3613 = vdwg.mxu0
      %v3614 = vmul.f32 %v3606, %v3606
      %v3615 = vmul.f32 %v3608, %v3608
      %v3616 = vmul.f32 %v3610, %v3610
      %v3617 = vmul.f32 %v3612, %v3612
      %v3618 = vmul.f32 %v3606, %v3614
      %v3619 = vmul.f32 %v3608, %v3615
      %v3620 = vmul.f32 %v3610, %v3616
      %v3621 = vmul.f32 %v3612, %v3617
      %v3622 = vmul.f32 %v3618, 0.044715
      %v3623 = vmul.f32 %v3619, 0.044715
      %v3624 = vmul.f32 %v3620, 0.044715
      %v3625 = vmul.f32 %v3621, 0.044715
      %v3626 = vadd.f32 %v3606, %v3622
      %v3627 = vadd.f32 %v3608, %v3623
      %v3628 = vadd.f32 %v3610, %v3624
      %v3629 = vadd.f32 %v3612, %v3625
      %v3630 = vmul.f32 %v3626, 0.7978846
      %v3631 = vmul.f32 %v3627, 0.7978846
      %v3632 = vmul.f32 %v3628, 0.7978846
      %v3633 = vmul.f32 %v3629, 0.7978846
      %v3634 = vtanh.pop %v3630
      %v3635 = vtanh.pop %v3631
      %v3636 = vtanh.pop %v3632
      %v3637 = vtanh.pop %v3633
      %v3638 = vadd.f32 %v3634, 1.0
      %v3639 = vadd.f32 %v3635, 1.0
      %v3640 = vadd.f32 %v3636, 1.0
      %v3641 = vadd.f32 %v3637, 1.0
      %v3642 = vmul.f32 %v3638, 0.5
      %v3643 = vmul.f32 %v3639, 0.5
      %v3644 = vmul.f32 %v3640, 0.5
      %v3645 = vmul.f32 %v3641, 0.5
      %v3646 = vmul.f32 %v3606, %v3642
      %v3647 = vmul.f32 %v3608, %v3643
      %v3648 = vmul.f32 %v3610, %v3644
      %v3649 = vmul.f32 %v3612, %v3645
      %v3650 = vld [vmem:[%s71] sm:$0xf]
      %v3651 = vld [vmem:[%s71 + $0x4] sm:$0xf]
      %v3652 = vld [vmem:[%s71 + $0x8] sm:$0xf]
      %v3653 = vld [vmem:[%s71 + $0xc] sm:$0xf]
      %v3654 = vld [vmem:[%s71 + $0x10] sm:$0xf]
      %v3655 = vld [vmem:[%s71 + $0x14] sm:$0xf]
      %v3656 = vld [vmem:[%s71 + $0x18] sm:$0xf]
      %v3657 = vld [vmem:[%s71 + $0x1c] sm:$0xf]
      %v3658 = vld [vmem:[%s71 + $0x20] sm:$0xf]
      %v3659 = vld [vmem:[%s71 + $0x24] sm:$0xf]
      %v3660 = vld [vmem:[%s71 + $0x28] sm:$0xf]
      %v3661 = vld [vmem:[%s71 + $0x2c] sm:$0xf]
      %v3662 = vld [vmem:[%s71 + $0x30] sm:$0xf]
      %v3663 = vld [vmem:[%s71 + $0x34] sm:$0xf]
      %v3664 = vld [vmem:[%s71 + $0x38] sm:$0xf]
      %v3665 = vld [vmem:[%s71 + $0x3c] sm:$0xf]
      %v3666 = vld [vmem:[%s71 + $0x40] sm:$0xf]
      %v3667 = vld [vmem:[%s71 + $0x44] sm:$0xf]
      %v3668 = vld [vmem:[%s71 + $0x48] sm:$0xf]
      %v3669 = vld [vmem:[%s71 + $0x4c] sm:$0xf]
      %v3670 = vld [vmem:[%s71 + $0x50] sm:$0xf]
      %v3671 = vld [vmem:[%s71 + $0x54] sm:$0xf]
      %v3672 = vld [vmem:[%s71 + $0x58] sm:$0xf]
      %v3673 = vld [vmem:[%s71 + $0x5c] sm:$0xf]
      %v3674 = vld [vmem:[%s71 + $0x60] sm:$0xf]
      %v3675 = vld [vmem:[%s71 + $0x64] sm:$0xf]
      %v3676 = vld [vmem:[%s71 + $0x68] sm:$0xf]
      %v3677 = vld [vmem:[%s71 + $0x6c] sm:$0xf]
      %v3678 = vld [vmem:[%s71 + $0x70] sm:$0xf]
      %v3679 = vld [vmem:[%s71 + $0x74] sm:$0xf]
      %v3680 = vld [vmem:[%s71 + $0x78] sm:$0xf]
      %v3681 = vld [vmem:[%s71 + $0x7c] sm:$0xf]
      %v3682 = vld [vmem:[%s73] sm:$0x1]
      %v3683 = vpack.c.bf16 %v3648, %v3646
      %v3684 = vpack.c.bf16 %v3649, %v3647
      %v3685 = vunpack.c.l.bf16 %v3682
      %v3686 = vlaneseq
      %v3687 = vshrl.u32 %v3686, 7
      %v3688 = vsub.s32 0, %v3687
      %v3689 = vrot.slane %v3685, %v3688
      %v3722 = vunpack.c.l.b16 %v3650
      %v3723 = vunpack.c.l.b16 %v3651
      %v3724 = vunpack.c.l.b16 %v3652
      %v3725 = vunpack.c.l.b16 %v3653
      %v3726 = vunpack.c.l.b16 %v3654
      %v3727 = vunpack.c.l.b16 %v3655
      %v3728 = vunpack.c.l.b16 %v3656
      %v3729 = vunpack.c.l.b16 %v3657
      %v3730 = vunpack.c.l.b16 %v3658
      %v3731 = vunpack.c.l.b16 %v3659
      %v3732 = vunpack.c.l.b16 %v3660
      %v3733 = vunpack.c.l.b16 %v3661
      %v3734 = vunpack.c.l.b16 %v3662
      %v3735 = vunpack.c.l.b16 %v3663
      %v3736 = vunpack.c.l.b16 %v3664
      %v3737 = vunpack.c.l.b16 %v3665
      %v3738 = vunpack.c.l.b16 %v3666
      %v3739 = vunpack.c.l.b16 %v3667
      %v3740 = vunpack.c.l.b16 %v3668
      %v3741 = vunpack.c.l.b16 %v3669
      %v3742 = vunpack.c.l.b16 %v3670
      %v3743 = vunpack.c.l.b16 %v3671
      %v3744 = vunpack.c.l.b16 %v3672
      %v3745 = vunpack.c.l.b16 %v3673
      %v3746 = vunpack.c.l.b16 %v3674
      %v3747 = vunpack.c.l.b16 %v3675
      %v3748 = vunpack.c.l.b16 %v3676
      %v3749 = vunpack.c.l.b16 %v3677
      %v3750 = vunpack.c.l.b16 %v3678
      %v3751 = vunpack.c.l.b16 %v3679
      %v3752 = vunpack.c.l.b16 %v3680
      %v3753 = vunpack.c.l.b16 %v3681
      %v3754 = vpack.c.b16 %v3723, %v3722
      %v3755 = vpack.c.b16 %v3725, %v3724
      %v3756 = vpack.c.b16 %v3727, %v3726
      %v3757 = vpack.c.b16 %v3729, %v3728
      %v3758 = vpack.c.b16 %v3731, %v3730
      %v3759 = vpack.c.b16 %v3733, %v3732
      %v3760 = vpack.c.b16 %v3735, %v3734
      %v3761 = vpack.c.b16 %v3737, %v3736
      %v3762 = vpack.c.b16 %v3739, %v3738
      %v3763 = vpack.c.b16 %v3741, %v3740
      %v3764 = vpack.c.b16 %v3743, %v3742
      %v3765 = vpack.c.b16 %v3745, %v3744
      %v3766 = vpack.c.b16 %v3747, %v3746
      %v3767 = vpack.c.b16 %v3749, %v3748
      %v3768 = vpack.c.b16 %v3751, %v3750
      %v3769 = vpack.c.b16 %v3753, %v3752
      %3786 = vmatprep.subr.bf16.mxu0 0
      %3787 = vmatpush1.bf16.msra.mxu0 %v3754
      %3788 = vmatprep.subr.bf16.mxu0 0
      %3789 = vmatpush1.bf16.msra.mxu0 %v3755
      %3790 = vmatprep.subr.bf16.mxu0 0
      %3791 = vmatpush1.bf16.msra.mxu0 %v3756
      %3792 = vmatprep.subr.bf16.mxu0 0
      %3793 = vmatpush1.bf16.msra.mxu0 %v3757
      %3794 = vmatprep.subr.bf16.mxu0 0
      %3795 = vmatpush1.bf16.msra.mxu0 %v3758
      %3796 = vmatprep.subr.bf16.mxu0 0
      %3797 = vmatpush1.bf16.msra.mxu0 %v3759
      %3798 = vmatprep.subr.bf16.mxu0 0
      %3799 = vmatpush1.bf16.msra.mxu0 %v3760
      %3800 = vmatprep.subr.bf16.mxu0 0
      %3801 = vmatpush1.bf16.msra.mxu0 %v3761
      %3802 = vmatprep.subr.bf16.mxu0 0
      %3803 = vmatpush1.bf16.msra.mxu0 %v3762
      %3804 = vmatprep.subr.bf16.mxu0 0
      %3805 = vmatpush1.bf16.msra.mxu0 %v3763
      %3806 = vmatprep.subr.bf16.mxu0 0
      %3807 = vmatpush1.bf16.msra.mxu0 %v3764
      %3808 = vmatprep.subr.bf16.mxu0 0
      %3809 = vmatpush1.bf16.msra.mxu0 %v3765
      %3810 = vmatprep.subr.bf16.mxu0 0
      %3811 = vmatpush1.bf16.msra.mxu0 %v3766
      %3812 = vmatprep.subr.bf16.mxu0 0
      %3813 = vmatpush1.bf16.msra.mxu0 %v3767
      %3814 = vmatprep.subr.bf16.mxu0 0
      %3815 = vmatpush1.bf16.msra.mxu0 %v3768
      %3816 = vmatprep.subr.bf16.mxu0 0
      %3817 = vmatpush1.bf16.msra.mxu0 %v3769
      %3818 = vmatprep.mubr.bf16.mxu0 %v3684
      %3819 = vmatmul.mubr.bf16.gmra.mrb[0].mxu0 %v3683
      %v3820 = vpop.f32.mrb[0].mxu0
      %v3821 = vadd.f32 %v3689, %v3820
      %v3822 = vpop.f32.mrb[0].mxu0
      %v3823 = vpop.f32.mrb[0].mxu0
      %v3824 = vadd.f32 %v3689, %v3823
      %v3825 = vpop.f32.mrb[0].mxu0
      %3826 = vdwg.mxu0
      %v3827 = vadd.f32 %v3454, %v3821
      %v3828 = vadd.f32 %v3455, %v3824
      %s3829 = scalar_lea.vmem %s35, 1
      %v3830 = vld [vmem:[%s3829] sm:$0x1]
      %s3831 = scalar_lea.vmem %s37, 1
      %v3832 = vld [vmem:[%s3831] sm:$0x1]
      %v3833 = vunpack.c.l.bf16 %v3830
      %v3834 = vunpack.c.l.bf16 %v3832
      %v3835 = vsel %vm1526, %v3827, 0.0
      %3836 = vadd.xlane.f32.xlu0 %v3835
      %v3837 = vpop.xlane.xlu0 %3836
      %v3838 = vsel %vm1805, %v3828, 0.0
      %3839 = vadd.xlane.f32.xlu0 %v3838
      %v3840 = vpop.xlane.xlu0 %3839
      %v3841 = vmul.f32 %v3837, %v1809
      %v3842 = vmul.f32 %v3840, %v1809
      %v3843 = vsub.f32 %v3827, %v3841
      %v3844 = vsub.f32 %v3828, %v3842
      %v3845 = vmul.f32 %v3843, %v3843
      %v3846 = vmul.f32 %v3844, %v3844
      %v3847 = vsel %vm1526, %v3845, 0.0
      %3848 = vadd.xlane.f32.xlu0 %v3847
      %v3849 = vpop.xlane.xlu0 %3848
      %v3850 = vsel %vm1805, %v3846, 0.0
      %3851 = vadd.xlane.f32.xlu0 %v3850
      %v3852 = vpop.xlane.xlu0 %3851
      %v3853 = vmul.f32 %v3849, %v1809
      %v3854 = vmul.f32 %v3852, %v1809
      %v3855 = vadd.f32 %v3853, 1e-05
      %v3856 = vadd.f32 %v3854, 1e-05
      %v3857 = vrsqrt.pop %v3855
      %v3858 = vrsqrt.pop %v3856
      %v3859 = vmul.f32 %v3843, %v3857
      %v3860 = vmul.f32 %v3844, %v3858
      %v3861 = vlaneseq
      %v3862 = vshrl.u32 %v3861, 7
      %v3863 = vsub.s32 0, %v3862
      %v3864 = vrot.slane %v3833, %v3863
      %v3865 = vmul.f32 %v3859, %v3864
      %v3866 = vmul.f32 %v3860, %v3864
      %v3867 = vlaneseq
      %v3868 = vshrl.u32 %v3867, 7
      %v3869 = vsub.s32 0, %v3868
      %v3870 = vrot.slane %v3834, %v3869
      %v3871 = vadd.f32 %v3865, %v3870
      %v3872 = vadd.f32 %v3866, %v3870
      %s3873 = scalar_lea.vmem %s39, 64
      %v3874 = vld [vmem:[%s3873] sm:$0xff]
      %v3875 = vld [vmem:[%s3873 + $0x8] sm:$0xff]
      %v3876 = vld [vmem:[%s3873 + $0x10] sm:$0xff]
      %v3877 = vld [vmem:[%s3873 + $0x18] sm:$0xff]
      %v3878 = vld [vmem:[%s3873 + $0x20] sm:$0xff]
      %v3879 = vld [vmem:[%s3873 + $0x28] sm:$0xff]
      %v3880 = vld [vmem:[%s3873 + $0x30] sm:$0xff]
      %v3881 = vld [vmem:[%s3873 + $0x38] sm:$0xff]
      %s3882 = scalar_lea.vmem %s41, 2
      %v3883 = vld [vmem:[%s3882] sm:$0x3]
      %v3884 = vpack.c.bf16 %v3872, %v3871
      %v3885 = vunpack.c.l.bf16 %v3883
      %v3887 = vlaneseq
      %v3888 = vshrl.u32 %v3887, 7
      %v3889 = vsub.s32 0, %v3888
      %v3890 = vrot.slane %v3885, %v3889
      %v3891 = vlaneseq
      %v3892 = vshrl.u32 %v3891, 7
      %v3893 = vsub.s32 2, %v3892
      %v3894 = vrot.slane %v3885, %v3893
      %v3897 = vlaneseq
      %v3898 = vshrl.u32 %v3897, 7
      %v3899 = vsub.s32 0, %v3898
      %v3900 = vrot.slane %v3890, %v3899
      %v3901 = vlaneseq
      %v3902 = vshrl.u32 %v3901, 7
      %v3903 = vsub.s32 0, %v3902
      %v3904 = vrot.slane %v3894, %v3903
      %v3913 = vunpack.c.l.b16 %v3874
      %v3914 = vunpack.c.h.b16 %v3874
      %v3915 = vunpack.c.l.b16 %v3875
      %v3916 = vunpack.c.h.b16 %v3875
      %v3917 = vunpack.c.l.b16 %v3876
      %v3918 = vunpack.c.h.b16 %v3876
      %v3919 = vunpack.c.l.b16 %v3877
      %v3920 = vunpack.c.h.b16 %v3877
      %v3921 = vunpack.c.l.b16 %v3878
      %v3922 = vunpack.c.h.b16 %v3878
      %v3923 = vunpack.c.l.b16 %v3879
      %v3924 = vunpack.c.h.b16 %v3879
      %v3925 = vunpack.c.l.b16 %v3880
      %v3926 = vunpack.c.h.b16 %v3880
      %v3927 = vunpack.c.l.b16 %v3881
      %v3928 = vunpack.c.h.b16 %v3881
      %v3929 = vpack.c.b16 %v3915, %v3913
      %v3930 = vpack.c.b16 %v3916, %v3914
      %v3931 = vpack.c.b16 %v3919, %v3917
      %v3932 = vpack.c.b16 %v3920, %v3918
      %v3933 = vpack.c.b16 %v3923, %v3921
      %v3934 = vpack.c.b16 %v3924, %v3922
      %v3935 = vpack.c.b16 %v3927, %v3925
      %v3936 = vpack.c.b16 %v3928, %v3926
      %v3946 = vsel %vm1526, %v3884, 0
      %3948 = vmatprep.subr.bf16.mxu0 %v3930
      %3949 = vmatpush1.bf16.msra.mxu0 %v3929
      %3950 = vmatprep.subr.bf16.mxu0 %v3932
      %3951 = vmatpush1.bf16.msra.mxu0 %v3931
      %3952 = vmatprep.subr.bf16.mxu0 %v3934
      %3953 = vmatpush1.bf16.msra.mxu0 %v3933
      %3954 = vmatprep.subr.bf16.mxu0 %v3936
      %3955 = vmatpush1.bf16.msra.mxu0 %v3935
      %3956 = vmatprep.subr.bf16.mxu0 0
      %3957 = vmatpush1.bf16.msra.mxu0 0
      %3958 = vmatprep.subr.bf16.mxu0 0
      %3959 = vmatpush1.bf16.msra.mxu0 0
      %3960 = vmatprep.subr.bf16.mxu0 0
      %3961 = vmatpush1.bf16.msra.mxu0 0
      %3962 = vmatprep.subr.bf16.mxu0 0
      %3963 = vmatpush1.bf16.msra.mxu0 0
      %3964 = vmatprep.subr.bf16.mxu0 0
      %3965 = vmatpush1.bf16.msra.mxu0 0
      %3966 = vmatprep.subr.bf16.mxu0 0
      %3967 = vmatpush1.bf16.msra.mxu0 0
      %3968 = vmatprep.subr.bf16.mxu0 0
      %3969 = vmatpush1.bf16.msra.mxu0 0
      %3970 = vmatprep.subr.bf16.mxu0 0
      %3971 = vmatpush1.bf16.msra.mxu0 0
      %3972 = vmatprep.subr.bf16.mxu0 0
      %3973 = vmatpush1.bf16.msra.mxu0 0
      %3974 = vmatprep.subr.bf16.mxu0 0
      %3975 = vmatpush1.bf16.msra.mxu0 0
      %3976 = vmatprep.subr.bf16.mxu0 0
      %3977 = vmatpush1.bf16.msra.mxu0 0
      %3978 = vmatprep.subr.bf16.mxu0 0
      %3979 = vmatpush1.bf16.msra.mxu0 0
      %3980 = vmatprep.mubr.bf16.mxu0 0
      %3981 = vmatmul.mubr.bf16.gmra.mrb[0].mxu0 %v3946
      %v3982 = vpop.f32.mrb[0].mxu0
      %v3983 = vadd.f32 %v3900, %v3982
      %v3984 = vpop.f32.mrb[0].mxu0
      %v3985 = vadd.f32 %v3904, %v3984
      %v3986 = vpop.f32.mrb[0].mxu0
      %v3987 = vadd.f32 %v3900, %v3986
      %v3988 = vpop.f32.mrb[0].mxu0
      %v3989 = vadd.f32 %v3904, %v3988
      %3990 = vdwg.mxu0
      %v3991 = vpack.c.bf16 %v3987, %v3983
      %v3992 = vpack.c.bf16 %v3989, %v3985
      %3994 = vrot.lane.b32.xlu0 %v3991, 64
      %v3995 = vpop.permute.xlu0 %3994
      %v3997 = vsel %vm1963, %v3991, 0
      %v4000 = vsel %vm1963, %v3995, 0
      %4002 = vmatprep.subr.bf16.mxu0 0
      %4003 = vmatpush1.bf16.xpose.msra.mxu0 %v4000
      %4004 = vmatprep.subr.bf16.mxu0 0
      %4005 = vmatpush1.bf16.xpose.msra.mxu0 0
      %4006 = vmatprep.subr.bf16.mxu0 0
      %4007 = vmatpush1.bf16.xpose.msra.mxu0 0
      %4008 = vmatprep.subr.bf16.mxu0 0
      %4009 = vmatpush1.bf16.xpose.msra.mxu0 0
      %4010 = vmatprep.subr.bf16.mxu0 0
      %4011 = vmatpush1.bf16.xpose.msra.mxu0 0
      %4012 = vmatprep.subr.bf16.mxu0 0
      %4013 = vmatpush1.bf16.xpose.msra.mxu0 0
      %4014 = vmatprep.subr.bf16.mxu0 0
      %4015 = vmatpush1.bf16.xpose.msra.mxu0 0
      %4016 = vmatprep.subr.bf16.mxu0 0
      %4017 = vmatpush1.bf16.xpose.msra.mxu0 0
      %4018 = vmatprep.subr.bf16.mxu0 0
      %4019 = vmatpush1.bf16.xpose.msra.mxu0 0
      %4020 = vmatprep.subr.bf16.mxu0 0
      %4021 = vmatpush1.bf16.xpose.msra.mxu0 0
      %4022 = vmatprep.subr.bf16.mxu0 0
      %4023 = vmatpush1.bf16.xpose.msra.mxu0 0
      %4024 = vmatprep.subr.bf16.mxu0 0
      %4025 = vmatpush1.bf16.xpose.msra.mxu0 0
      %4026 = vmatprep.subr.bf16.mxu0 0
      %4027 = vmatpush1.bf16.xpose.msra.mxu0 0
      %4028 = vmatprep.subr.bf16.mxu0 0
      %4029 = vmatpush1.bf16.xpose.msra.mxu0 0
      %4030 = vmatprep.subr.bf16.mxu0 0
      %4031 = vmatpush1.bf16.xpose.msra.mxu0 0
      %4032 = vmatprep.subr.bf16.mxu0 0
      %4033 = vmatpush1.bf16.xpose.msra.mxu0 0
      %4034 = vmatprep.mubr.bf16.mxu0 0
      %4035 = vmatmul.mubr.bf16.gmra.mrb[0].mxu0 %v3997
      %v4036 = vpop.f32.mrb[0].mxu0
      %v4037 = vadd.f32 0.0, %v4036
      %v4038 = vpop.f32.mrb[0].mxu0
      %v4039 = vpop.f32.mrb[0].mxu0
      %v4040 = vadd.f32 0.0, %v4039
      %v4041 = vpop.f32.mrb[0].mxu0
      %4042 = vdwg.mxu0
      %v4043 = vmul.f32 %v4037, 0.25
      %v4044 = vmul.f32 %v4040, 0.25
      %v4045 = vadd.f32 %v4043, %v1796
      %v4046 = vadd.f32 %v4044, %v1797
      %v4047 = vsel %vm2015, %v4045, -inf
      %4048 = vmax.xlane.f32.xlu0 %v4047
      %v4049 = vpop.xlane.xlu0 %4048
      %v4050 = vsel %vm2019, %v4046, -inf
      %4051 = vmax.xlane.f32.xlu0 %v4050
      %v4052 = vpop.xlane.xlu0 %4051
      %v4053 = vsub.f32 %v4045, %v4049
      %v4054 = vsub.f32 %v4046, %v4052
      %v4055 = vmul.f32 %v4053, 1.442695
      %v4056 = vpow.pop %v4055
      %v4057 = vmul.f32 %v4054, 1.442695
      %v4058 = vpow.pop %v4057
      %v4059 = vsel %vm2015, %v4056, 0.0
      %4060 = vadd.xlane.f32.xlu0 %v4059
      %v4061 = vpop.xlane.xlu0 %4060
      %v4062 = vsel %vm2019, %v4058, 0.0
      %4063 = vadd.xlane.f32.xlu0 %v4062
      %v4064 = vpop.xlane.xlu0 %4063
      %v4065 = vrcp.pop %v4061
      %v4066 = vmul.f32 %v4056, %v4065
      %v4067 = vrcp.pop %v4064
      %v4068 = vmul.f32 %v4058, %v4067
      %v4069 = vpack.c.bf16 %v4068, %v4066
      %v4071 = vsel %vm2015, %v4069, 0
      %v4074 = vsel %vm2043, %v3992, 0
      %4076 = vmatprep.subr.bf16.mxu0 0
      %4077 = vmatpush1.bf16.msra.mxu0 %v4074
      %4078 = vmatprep.subr.bf16.mxu0 0
      %4079 = vmatpush1.bf16.msra.mxu0 0
      %4080 = vmatprep.subr.bf16.mxu0 0
      %4081 = vmatpush1.bf16.msra.mxu0 0
      %4082 = vmatprep.subr.bf16.mxu0 0
      %4083 = vmatpush1.bf16.msra.mxu0 0
      %4084 = vmatprep.subr.bf16.mxu0 0
      %4085 = vmatpush1.bf16.msra.mxu0 0
      %4086 = vmatprep.subr.bf16.mxu0 0
      %4087 = vmatpush1.bf16.msra.mxu0 0
      %4088 = vmatprep.subr.bf16.mxu0 0
      %4089 = vmatpush1.bf16.msra.mxu0 0
      %4090 = vmatprep.subr.bf16.mxu0 0
      %4091 = vmatpush1.bf16.msra.mxu0 0
      %4092 = vmatprep.subr.bf16.mxu0 0
      %4093 = vmatpush1.bf16.msra.mxu0 0
      %4094 = vmatprep.subr.bf16.mxu0 0
      %4095 = vmatpush1.bf16.msra.mxu0 0
      %4096 = vmatprep.subr.bf16.mxu0 0
      %4097 = vmatpush1.bf16.msra.mxu0 0
      %4098 = vmatprep.subr.bf16.mxu0 0
      %4099 = vmatpush1.bf16.msra.mxu0 0
      %4100 = vmatprep.subr.bf16.mxu0 0
      %4101 = vmatpush1.bf16.msra.mxu0 0
      %4102 = vmatprep.subr.bf16.mxu0 0
      %4103 = vmatpush1.bf16.msra.mxu0 0
      %4104 = vmatprep.subr.bf16.mxu0 0
      %4105 = vmatpush1.bf16.msra.mxu0 0
      %4106 = vmatprep.subr.bf16.mxu0 0
      %4107 = vmatpush1.bf16.msra.mxu0 0
      %4108 = vmatprep.mubr.bf16.mxu0 0
      %4109 = vmatmul.mubr.bf16.gmra.mrb[0].mxu0 %v4071
      %v4110 = vpop.f32.mrb[0].mxu0
      %v4111 = vadd.f32 0.0, %v4110
      %v4112 = vpop.f32.mrb[0].mxu0
      %v4113 = vpop.f32.mrb[0].mxu0
      %v4114 = vadd.f32 0.0, %v4113
      %v4115 = vpop.f32.mrb[0].mxu0
      %4116 = vdwg.mxu0
      %4117 = vrot.lane.b32.xlu0 %v3991, 112
      %v4118 = vpop.permute.xlu0 %4117
      %4119 = vrot.lane.b32.xlu0 %v3991, 48
      %v4120 = vpop.permute.xlu0 %4119
      %v4122 = vsel %vm1963, %v4118, 0
      %v4125 = vsel %vm1963, %v4120, 0
      %4127 = vmatprep.subr.bf16.mxu0 0
      %4128 = vmatpush1.bf16.xpose.msra.mxu0 %v4125
      %4129 = vmatprep.subr.bf16.mxu0 0
      %4130 = vmatpush1.bf16.xpose.msra.mxu0 0
      %4131 = vmatprep.subr.bf16.mxu0 0
      %4132 = vmatpush1.bf16.xpose.msra.mxu0 0
      %4133 = vmatprep.subr.bf16.mxu0 0
      %4134 = vmatpush1.bf16.xpose.msra.mxu0 0
      %4135 = vmatprep.subr.bf16.mxu0 0
      %4136 = vmatpush1.bf16.xpose.msra.mxu0 0
      %4137 = vmatprep.subr.bf16.mxu0 0
      %4138 = vmatpush1.bf16.xpose.msra.mxu0 0
      %4139 = vmatprep.subr.bf16.mxu0 0
      %4140 = vmatpush1.bf16.xpose.msra.mxu0 0
      %4141 = vmatprep.subr.bf16.mxu0 0
      %4142 = vmatpush1.bf16.xpose.msra.mxu0 0
      %4143 = vmatprep.subr.bf16.mxu0 0
      %4144 = vmatpush1.bf16.xpose.msra.mxu0 0
      %4145 = vmatprep.subr.bf16.mxu0 0
      %4146 = vmatpush1.bf16.xpose.msra.mxu0 0
      %4147 = vmatprep.subr.bf16.mxu0 0
      %4148 = vmatpush1.bf16.xpose.msra.mxu0 0
      %4149 = vmatprep.subr.bf16.mxu0 0
      %4150 = vmatpush1.bf16.xpose.msra.mxu0 0
      %4151 = vmatprep.subr.bf16.mxu0 0
      %4152 = vmatpush1.bf16.xpose.msra.mxu0 0
      %4153 = vmatprep.subr.bf16.mxu0 0
      %4154 = vmatpush1.bf16.xpose.msra.mxu0 0
      %4155 = vmatprep.subr.bf16.mxu0 0
      %4156 = vmatpush1.bf16.xpose.msra.mxu0 0
      %4157 = vmatprep.subr.bf16.mxu0 0
      %4158 = vmatpush1.bf16.xpose.msra.mxu0 0
      %4159 = vmatprep.mubr.bf16.mxu0 0
      %4160 = vmatmul.mubr.bf16.gmra.mrb[0].mxu0 %v4122
      %v4161 = vpop.f32.mrb[0].mxu0
      %v4162 = vadd.f32 0.0, %v4161
      %v4163 = vpop.f32.mrb[0].mxu0
      %v4164 = vpop.f32.mrb[0].mxu0
      %v4165 = vadd.f32 0.0, %v4164
      %v4166 = vpop.f32.mrb[0].mxu0
      %4167 = vdwg.mxu0
      %v4168 = vmul.f32 %v4162, 0.25
      %v4169 = vmul.f32 %v4165, 0.25
      %v4170 = vadd.f32 %v4168, %v1796
      %v4171 = vadd.f32 %v4169, %v1797
      %v4172 = vsel %vm2015, %v4170, -inf
      %4173 = vmax.xlane.f32.xlu0 %v4172
      %v4174 = vpop.xlane.xlu0 %4173
      %v4175 = vsel %vm2019, %v4171, -inf
      %4176 = vmax.xlane.f32.xlu0 %v4175
      %v4177 = vpop.xlane.xlu0 %4176
      %v4178 = vsub.f32 %v4170, %v4174
      %v4179 = vsub.f32 %v4171, %v4177
      %v4180 = vmul.f32 %v4178, 1.442695
      %v4181 = vpow.pop %v4180
      %v4182 = vmul.f32 %v4179, 1.442695
      %v4183 = vpow.pop %v4182
      %v4184 = vsel %vm2015, %v4181, 0.0
      %4185 = vadd.xlane.f32.xlu0 %v4184
      %v4186 = vpop.xlane.xlu0 %4185
      %v4187 = vsel %vm2019, %v4183, 0.0
      %4188 = vadd.xlane.f32.xlu0 %v4187
      %v4189 = vpop.xlane.xlu0 %4188
      %v4190 = vrcp.pop %v4186
      %v4191 = vmul.f32 %v4181, %v4190
      %v4192 = vrcp.pop %v4189
      %v4193 = vmul.f32 %v4183, %v4192
      %v4194 = vpack.c.bf16 %v4193, %v4191
      %4196 = vrot.lane.b32.xlu0 %v3992, 112
      %v4197 = vpop.permute.xlu0 %4196
      %v4199 = vsel %vm2015, %v4194, 0
      %v4202 = vsel %vm2043, %v4197, 0
      %4204 = vmatprep.subr.bf16.mxu0 0
      %4205 = vmatpush1.bf16.msra.mxu0 %v4202
      %4206 = vmatprep.subr.bf16.mxu0 0
      %4207 = vmatpush1.bf16.msra.mxu0 0
      %4208 = vmatprep.subr.bf16.mxu0 0
      %4209 = vmatpush1.bf16.msra.mxu0 0
      %4210 = vmatprep.subr.bf16.mxu0 0
      %4211 = vmatpush1.bf16.msra.mxu0 0
      %4212 = vmatprep.subr.bf16.mxu0 0
      %4213 = vmatpush1.bf16.msra.mxu0 0
      %4214 = vmatprep.subr.bf16.mxu0 0
      %4215 = vmatpush1.bf16.msra.mxu0 0
      %4216 = vmatprep.subr.bf16.mxu0 0
      %4217 = vmatpush1.bf16.msra.mxu0 0
      %4218 = vmatprep.subr.bf16.mxu0 0
      %4219 = vmatpush1.bf16.msra.mxu0 0
      %4220 = vmatprep.subr.bf16.mxu0 0
      %4221 = vmatpush1.bf16.msra.mxu0 0
      %4222 = vmatprep.subr.bf16.mxu0 0
      %4223 = vmatpush1.bf16.msra.mxu0 0
      %4224 = vmatprep.subr.bf16.mxu0 0
      %4225 = vmatpush1.bf16.msra.mxu0 0
      %4226 = vmatprep.subr.bf16.mxu0 0
      %4227 = vmatpush1.bf16.msra.mxu0 0
      %4228 = vmatprep.subr.bf16.mxu0 0
      %4229 = vmatpush1.bf16.msra.mxu0 0
      %4230 = vmatprep.subr.bf16.mxu0 0
      %4231 = vmatpush1.bf16.msra.mxu0 0
      %4232 = vmatprep.subr.bf16.mxu0 0
      %4233 = vmatpush1.bf16.msra.mxu0 0
      %4234 = vmatprep.subr.bf16.mxu0 0
      %4235 = vmatpush1.bf16.msra.mxu0 0
      %4236 = vmatprep.mubr.bf16.mxu0 0
      %4237 = vmatmul.mubr.bf16.gmra.mrb[0].mxu0 %v4199
      %v4238 = vpop.f32.mrb[0].mxu0
      %v4239 = vadd.f32 0.0, %v4238
      %v4240 = vpop.f32.mrb[0].mxu0
      %v4241 = vpop.f32.mrb[0].mxu0
      %v4242 = vadd.f32 0.0, %v4241
      %v4243 = vpop.f32.mrb[0].mxu0
      %4244 = vdwg.mxu0
      %4245 = vrot.lane.b32.xlu0 %v3991, 96
      %v4246 = vpop.permute.xlu0 %4245
      %4247 = vrot.lane.b32.xlu0 %v3991, 32
      %v4248 = vpop.permute.xlu0 %4247
      %v4250 = vsel %vm1963, %v4246, 0
      %v4253 = vsel %vm1963, %v4248, 0
      %4255 = vmatprep.subr.bf16.mxu0 0
      %4256 = vmatpush1.bf16.xpose.msra.mxu0 %v4253
      %4257 = vmatprep.subr.bf16.mxu0 0
      %4258 = vmatpush1.bf16.xpose.msra.mxu0 0
      %4259 = vmatprep.subr.bf16.mxu0 0
      %4260 = vmatpush1.bf16.xpose.msra.mxu0 0
      %4261 = vmatprep.subr.bf16.mxu0 0
      %4262 = vmatpush1.bf16.xpose.msra.mxu0 0
      %4263 = vmatprep.subr.bf16.mxu0 0
      %4264 = vmatpush1.bf16.xpose.msra.mxu0 0
      %4265 = vmatprep.subr.bf16.mxu0 0
      %4266 = vmatpush1.bf16.xpose.msra.mxu0 0
      %4267 = vmatprep.subr.bf16.mxu0 0
      %4268 = vmatpush1.bf16.xpose.msra.mxu0 0
      %4269 = vmatprep.subr.bf16.mxu0 0
      %4270 = vmatpush1.bf16.xpose.msra.mxu0 0
      %4271 = vmatprep.subr.bf16.mxu0 0
      %4272 = vmatpush1.bf16.xpose.msra.mxu0 0
      %4273 = vmatprep.subr.bf16.mxu0 0
      %4274 = vmatpush1.bf16.xpose.msra.mxu0 0
      %4275 = vmatprep.subr.bf16.mxu0 0
      %4276 = vmatpush1.bf16.xpose.msra.mxu0 0
      %4277 = vmatprep.subr.bf16.mxu0 0
      %4278 = vmatpush1.bf16.xpose.msra.mxu0 0
      %4279 = vmatprep.subr.bf16.mxu0 0
      %4280 = vmatpush1.bf16.xpose.msra.mxu0 0
      %4281 = vmatprep.subr.bf16.mxu0 0
      %4282 = vmatpush1.bf16.xpose.msra.mxu0 0
      %4283 = vmatprep.subr.bf16.mxu0 0
      %4284 = vmatpush1.bf16.xpose.msra.mxu0 0
      %4285 = vmatprep.subr.bf16.mxu0 0
      %4286 = vmatpush1.bf16.xpose.msra.mxu0 0
      %4287 = vmatprep.mubr.bf16.mxu0 0
      %4288 = vmatmul.mubr.bf16.gmra.mrb[0].mxu0 %v4250
      %v4289 = vpop.f32.mrb[0].mxu0
      %v4290 = vadd.f32 0.0, %v4289
      %v4291 = vpop.f32.mrb[0].mxu0
      %v4292 = vpop.f32.mrb[0].mxu0
      %v4293 = vadd.f32 0.0, %v4292
      %v4294 = vpop.f32.mrb[0].mxu0
      %4295 = vdwg.mxu0
      %v4296 = vmul.f32 %v4290, 0.25
      %v4297 = vmul.f32 %v4293, 0.25
      %v4298 = vadd.f32 %v4296, %v1796
      %v4299 = vadd.f32 %v4297, %v1797
      %v4300 = vsel %vm2015, %v4298, -inf
      %4301 = vmax.xlane.f32.xlu0 %v4300
      %v4302 = vpop.xlane.xlu0 %4301
      %v4303 = vsel %vm2019, %v4299, -inf
      %4304 = vmax.xlane.f32.xlu0 %v4303
      %v4305 = vpop.xlane.xlu0 %4304
      %v4306 = vsub.f32 %v4298, %v4302
      %v4307 = vsub.f32 %v4299, %v4305
      %v4308 = vmul.f32 %v4306, 1.442695
      %v4309 = vpow.pop %v4308
      %v4310 = vmul.f32 %v4307, 1.442695
      %v4311 = vpow.pop %v4310
      %v4312 = vsel %vm2015, %v4309, 0.0
      %4313 = vadd.xlane.f32.xlu0 %v4312
      %v4314 = vpop.xlane.xlu0 %4313
      %v4315 = vsel %vm2019, %v4311, 0.0
      %4316 = vadd.xlane.f32.xlu0 %v4315
      %v4317 = vpop.xlane.xlu0 %4316
      %v4318 = vrcp.pop %v4314
      %v4319 = vmul.f32 %v4309, %v4318
      %v4320 = vrcp.pop %v4317
      %v4321 = vmul.f32 %v4311, %v4320
      %v4322 = vpack.c.bf16 %v4321, %v4319
      %4323 = vrot.lane.b32.xlu0 %v3992, 96
      %v4324 = vpop.permute.xlu0 %4323
      %v4326 = vsel %vm2015, %v4322, 0
      %v4329 = vsel %vm2043, %v4324, 0
      %4331 = vmatprep.subr.bf16.mxu0 0
      %4332 = vmatpush1.bf16.msra.mxu0 %v4329
      %4333 = vmatprep.subr.bf16.mxu0 0
      %4334 = vmatpush1.bf16.msra.mxu0 0
      %4335 = vmatprep.subr.bf16.mxu0 0
      %4336 = vmatpush1.bf16.msra.mxu0 0
      %4337 = vmatprep.subr.bf16.mxu0 0
      %4338 = vmatpush1.bf16.msra.mxu0 0
      %4339 = vmatprep.subr.bf16.mxu0 0
      %4340 = vmatpush1.bf16.msra.mxu0 0
      %4341 = vmatprep.subr.bf16.mxu0 0
      %4342 = vmatpush1.bf16.msra.mxu0 0
      %4343 = vmatprep.subr.bf16.mxu0 0
      %4344 = vmatpush1.bf16.msra.mxu0 0
      %4345 = vmatprep.subr.bf16.mxu0 0
      %4346 = vmatpush1.bf16.msra.mxu0 0
      %4347 = vmatprep.subr.bf16.mxu0 0
      %4348 = vmatpush1.bf16.msra.mxu0 0
      %4349 = vmatprep.subr.bf16.mxu0 0
      %4350 = vmatpush1.bf16.msra.mxu0 0
      %4351 = vmatprep.subr.bf16.mxu0 0
      %4352 = vmatpush1.bf16.msra.mxu0 0
      %4353 = vmatprep.subr.bf16.mxu0 0
      %4354 = vmatpush1.bf16.msra.mxu0 0
      %4355 = vmatprep.subr.bf16.mxu0 0
      %4356 = vmatpush1.bf16.msra.mxu0 0
      %4357 = vmatprep.subr.bf16.mxu0 0
      %4358 = vmatpush1.bf16.msra.mxu0 0
      %4359 = vmatprep.subr.bf16.mxu0 0
      %4360 = vmatpush1.bf16.msra.mxu0 0
      %4361 = vmatprep.subr.bf16.mxu0 0
      %4362 = vmatpush1.bf16.msra.mxu0 0
      %4363 = vmatprep.mubr.bf16.mxu0 0
      %4364 = vmatmul.mubr.bf16.gmra.mrb[0].mxu0 %v4326
      %v4365 = vpop.f32.mrb[0].mxu0
      %v4366 = vadd.f32 0.0, %v4365
      %v4367 = vpop.f32.mrb[0].mxu0
      %v4368 = vpop.f32.mrb[0].mxu0
      %v4369 = vadd.f32 0.0, %v4368
      %v4370 = vpop.f32.mrb[0].mxu0
      %4371 = vdwg.mxu0
      %4372 = vrot.lane.b32.xlu0 %v3991, 80
      %v4373 = vpop.permute.xlu0 %4372
      %4374 = vrot.lane.b32.xlu0 %v3991, 16
      %v4375 = vpop.permute.xlu0 %4374
      %v4377 = vsel %vm1963, %v4373, 0
      %v4380 = vsel %vm1963, %v4375, 0
      %4382 = vmatprep.subr.bf16.mxu0 0
      %4383 = vmatpush1.bf16.xpose.msra.mxu0 %v4380
      %4384 = vmatprep.subr.bf16.mxu0 0
      %4385 = vmatpush1.bf16.xpose.msra.mxu0 0
      %4386 = vmatprep.subr.bf16.mxu0 0
      %4387 = vmatpush1.bf16.xpose.msra.mxu0 0
      %4388 = vmatprep.subr.bf16.mxu0 0
      %4389 = vmatpush1.bf16.xpose.msra.mxu0 0
      %4390 = vmatprep.subr.bf16.mxu0 0
      %4391 = vmatpush1.bf16.xpose.msra.mxu0 0
      %4392 = vmatprep.subr.bf16.mxu0 0
      %4393 = vmatpush1.bf16.xpose.msra.mxu0 0
      %4394 = vmatprep.subr.bf16.mxu0 0
      %4395 = vmatpush1.bf16.xpose.msra.mxu0 0
      %4396 = vmatprep.subr.bf16.mxu0 0
      %4397 = vmatpush1.bf16.xpose.msra.mxu0 0
      %4398 = vmatprep.subr.bf16.mxu0 0
      %4399 = vmatpush1.bf16.xpose.msra.mxu0 0
      %4400 = vmatprep.subr.bf16.mxu0 0
      %4401 = vmatpush1.bf16.xpose.msra.mxu0 0
      %4402 = vmatprep.subr.bf16.mxu0 0
      %4403 = vmatpush1.bf16.xpose.msra.mxu0 0
      %4404 = vmatprep.subr.bf16.mxu0 0
      %4405 = vmatpush1.bf16.xpose.msra.mxu0 0
      %4406 = vmatprep.subr.bf16.mxu0 0
      %4407 = vmatpush1.bf16.xpose.msra.mxu0 0
      %4408 = vmatprep.subr.bf16.mxu0 0
      %4409 = vmatpush1.bf16.xpose.msra.mxu0 0
      %4410 = vmatprep.subr.bf16.mxu0 0
      %4411 = vmatpush1.bf16.xpose.msra.mxu0 0
      %4412 = vmatprep.subr.bf16.mxu0 0
      %4413 = vmatpush1.bf16.xpose.msra.mxu0 0
      %4414 = vmatprep.mubr.bf16.mxu0 0
      %4415 = vmatmul.mubr.bf16.gmra.mrb[0].mxu0 %v4377
      %v4416 = vpop.f32.mrb[0].mxu0
      %v4417 = vadd.f32 0.0, %v4416
      %v4418 = vpop.f32.mrb[0].mxu0
      %v4419 = vpop.f32.mrb[0].mxu0
      %v4420 = vadd.f32 0.0, %v4419
      %v4421 = vpop.f32.mrb[0].mxu0
      %4422 = vdwg.mxu0
      %v4423 = vmul.f32 %v4417, 0.25
      %v4424 = vmul.f32 %v4420, 0.25
      %v4425 = vadd.f32 %v4423, %v1796
      %v4426 = vadd.f32 %v4424, %v1797
      %v4427 = vsel %vm2015, %v4425, -inf
      %4428 = vmax.xlane.f32.xlu0 %v4427
      %v4429 = vpop.xlane.xlu0 %4428
      %v4430 = vsel %vm2019, %v4426, -inf
      %4431 = vmax.xlane.f32.xlu0 %v4430
      %v4432 = vpop.xlane.xlu0 %4431
      %v4433 = vsub.f32 %v4425, %v4429
      %v4434 = vsub.f32 %v4426, %v4432
      %v4435 = vmul.f32 %v4433, 1.442695
      %v4436 = vpow.pop %v4435
      %v4437 = vmul.f32 %v4434, 1.442695
      %v4438 = vpow.pop %v4437
      %v4439 = vsel %vm2015, %v4436, 0.0
      %4440 = vadd.xlane.f32.xlu0 %v4439
      %v4441 = vpop.xlane.xlu0 %4440
      %v4442 = vsel %vm2019, %v4438, 0.0
      %4443 = vadd.xlane.f32.xlu0 %v4442
      %v4444 = vpop.xlane.xlu0 %4443
      %v4445 = vrcp.pop %v4441
      %v4446 = vmul.f32 %v4436, %v4445
      %v4447 = vrcp.pop %v4444
      %v4448 = vmul.f32 %v4438, %v4447
      %v4449 = vpack.c.bf16 %v4448, %v4446
      %4450 = vrot.lane.b32.xlu0 %v3992, 80
      %v4451 = vpop.permute.xlu0 %4450
      %v4453 = vsel %vm2015, %v4449, 0
      %v4456 = vsel %vm2043, %v4451, 0
      %4458 = vmatprep.subr.bf16.mxu0 0
      %4459 = vmatpush1.bf16.msra.mxu0 %v4456
      %4460 = vmatprep.subr.bf16.mxu0 0
      %4461 = vmatpush1.bf16.msra.mxu0 0
      %4462 = vmatprep.subr.bf16.mxu0 0
      %4463 = vmatpush1.bf16.msra.mxu0 0
      %4464 = vmatprep.subr.bf16.mxu0 0
      %4465 = vmatpush1.bf16.msra.mxu0 0
      %4466 = vmatprep.subr.bf16.mxu0 0
      %4467 = vmatpush1.bf16.msra.mxu0 0
      %4468 = vmatprep.subr.bf16.mxu0 0
      %4469 = vmatpush1.bf16.msra.mxu0 0
      %4470 = vmatprep.subr.bf16.mxu0 0
      %4471 = vmatpush1.bf16.msra.mxu0 0
      %4472 = vmatprep.subr.bf16.mxu0 0
      %4473 = vmatpush1.bf16.msra.mxu0 0
      %4474 = vmatprep.subr.bf16.mxu0 0
      %4475 = vmatpush1.bf16.msra.mxu0 0
      %4476 = vmatprep.subr.bf16.mxu0 0
      %4477 = vmatpush1.bf16.msra.mxu0 0
      %4478 = vmatprep.subr.bf16.mxu0 0
      %4479 = vmatpush1.bf16.msra.mxu0 0
      %4480 = vmatprep.subr.bf16.mxu0 0
      %4481 = vmatpush1.bf16.msra.mxu0 0
      %4482 = vmatprep.subr.bf16.mxu0 0
      %4483 = vmatpush1.bf16.msra.mxu0 0
      %4484 = vmatprep.subr.bf16.mxu0 0
      %4485 = vmatpush1.bf16.msra.mxu0 0
      %4486 = vmatprep.subr.bf16.mxu0 0
      %4487 = vmatpush1.bf16.msra.mxu0 0
      %4488 = vmatprep.subr.bf16.mxu0 0
      %4489 = vmatpush1.bf16.msra.mxu0 0
      %4490 = vmatprep.mubr.bf16.mxu0 0
      %4491 = vmatmul.mubr.bf16.gmra.mrb[0].mxu0 %v4453
      %v4492 = vpop.f32.mrb[0].mxu0
      %v4493 = vadd.f32 0.0, %v4492
      %v4494 = vpop.f32.mrb[0].mxu0
      %v4495 = vpop.f32.mrb[0].mxu0
      %v4496 = vadd.f32 0.0, %v4495
      %v4497 = vpop.f32.mrb[0].mxu0
      %4498 = vdwg.mxu0
      %4501 = vrot.lane.b32.xlu0 %v4239, 16
      %v4502 = vpop.permute.xlu0 %4501
      %4503 = vrot.lane.b32.xlu0 %v4242, 16
      %v4504 = vpop.permute.xlu0 %4503
      %4509 = vrot.lane.b32.xlu0 %v4366, 32
      %v4510 = vpop.permute.xlu0 %4509
      %4511 = vrot.lane.b32.xlu0 %v4369, 32
      %v4512 = vpop.permute.xlu0 %4511
      %4517 = vrot.lane.b32.xlu0 %v4493, 48
      %v4518 = vpop.permute.xlu0 %4517
      %4519 = vrot.lane.b32.xlu0 %v4496, 48
      %v4520 = vpop.permute.xlu0 %4519
      %v4523 = vsel %vm1963, %v4111, %v4502
      %v4524 = vsel %vm1963, %v4114, %v4504
      %v4525 = vsel %vm1659, %v4523, %v4510
      %v4526 = vsel %vm1659, %v4524, %v4512
      %v4527 = vsel %vm2498, %v4525, %v4518
      %v4528 = vsel %vm2498, %v4526, %v4520
      %s4529 = scalar_lea.vmem %s43, 32
      %v4530 = vld [vmem:[%s4529] sm:$0xf]
      %v4531 = vld [vmem:[%s4529 + $0x4] sm:$0xf]
      %v4532 = vld [vmem:[%s4529 + $0x8] sm:$0xf]
      %v4533 = vld [vmem:[%s4529 + $0xc] sm:$0xf]
      %v4534 = vld [vmem:[%s4529 + $0x10] sm:$0xf]
      %v4535 = vld [vmem:[%s4529 + $0x14] sm:$0xf]
      %v4536 = vld [vmem:[%s4529 + $0x18] sm:$0xf]
      %v4537 = vld [vmem:[%s4529 + $0x1c] sm:$0xf]
      %s4538 = scalar_lea.vmem %s45, 1
      %v4539 = vld [vmem:[%s4538] sm:$0x1]
      %v4540 = vpack.c.bf16 %v4528, %v4527
      %v4541 = vunpack.c.l.bf16 %v4539
      %v4542 = vlaneseq
      %v4543 = vshrl.u32 %v4542, 7
      %v4544 = vsub.s32 0, %v4543
      %v4545 = vrot.slane %v4541, %v4544
      %v4554 = vunpack.c.l.b16 %v4530
      %v4555 = vunpack.c.l.b16 %v4531
      %v4556 = vunpack.c.l.b16 %v4532
      %v4557 = vunpack.c.l.b16 %v4533
      %v4558 = vunpack.c.l.b16 %v4534
      %v4559 = vunpack.c.l.b16 %v4535
      %v4560 = vunpack.c.l.b16 %v4536
      %v4561 = vunpack.c.l.b16 %v4537
      %v4562 = vpack.c.b16 %v4555, %v4554
      %v4563 = vpack.c.b16 %v4557, %v4556
      %v4564 = vpack.c.b16 %v4559, %v4558
      %v4565 = vpack.c.b16 %v4561, %v4560
      %v4571 = vsel %vm1526, %v4540, 0
      %4573 = vmatprep.subr.bf16.mxu0 0
      %4574 = vmatpush1.bf16.msra.mxu0 %v4562
      %4575 = vmatprep.subr.bf16.mxu0 0
      %4576 = vmatpush1.bf16.msra.mxu0 %v4563
      %4577 = vmatprep.subr.bf16.mxu0 0
      %4578 = vmatpush1.bf16.msra.mxu0 %v4564
      %4579 = vmatprep.subr.bf16.mxu0 0
      %4580 = vmatpush1.bf16.msra.mxu0 %v4565
      %4581 = vmatprep.subr.bf16.mxu0 0
      %4582 = vmatpush1.bf16.msra.mxu0 0
      %4583 = vmatprep.subr.bf16.mxu0 0
      %4584 = vmatpush1.bf16.msra.mxu0 0
      %4585 = vmatprep.subr.bf16.mxu0 0
      %4586 = vmatpush1.bf16.msra.mxu0 0
      %4587 = vmatprep.subr.bf16.mxu0 0
      %4588 = vmatpush1.bf16.msra.mxu0 0
      %4589 = vmatprep.subr.bf16.mxu0 0
      %4590 = vmatpush1.bf16.msra.mxu0 0
      %4591 = vmatprep.subr.bf16.mxu0 0
      %4592 = vmatpush1.bf16.msra.mxu0 0
      %4593 = vmatprep.subr.bf16.mxu0 0
      %4594 = vmatpush1.bf16.msra.mxu0 0
      %4595 = vmatprep.subr.bf16.mxu0 0
      %4596 = vmatpush1.bf16.msra.mxu0 0
      %4597 = vmatprep.subr.bf16.mxu0 0
      %4598 = vmatpush1.bf16.msra.mxu0 0
      %4599 = vmatprep.subr.bf16.mxu0 0
      %4600 = vmatpush1.bf16.msra.mxu0 0
      %4601 = vmatprep.subr.bf16.mxu0 0
      %4602 = vmatpush1.bf16.msra.mxu0 0
      %4603 = vmatprep.subr.bf16.mxu0 0
      %4604 = vmatpush1.bf16.msra.mxu0 0
      %4605 = vmatprep.mubr.bf16.mxu0 0
      %4606 = vmatmul.mubr.bf16.gmra.mrb[0].mxu0 %v4571
      %v4607 = vpop.f32.mrb[0].mxu0
      %v4608 = vadd.f32 %v4545, %v4607
      %v4609 = vpop.f32.mrb[0].mxu0
      %v4610 = vpop.f32.mrb[0].mxu0
      %v4611 = vadd.f32 %v4545, %v4610
      %v4612 = vpop.f32.mrb[0].mxu0
      %4613 = vdwg.mxu0
      %v4614 = vadd.f32 %v3827, %v4608
      %v4615 = vadd.f32 %v3828, %v4611
      %s4616 = scalar_lea.vmem %s47, 1
      %v4617 = vld [vmem:[%s4616] sm:$0x1]
      %s4618 = scalar_lea.vmem %s49, 1
      %v4619 = vld [vmem:[%s4618] sm:$0x1]
      %v4620 = vunpack.c.l.bf16 %v4617
      %v4621 = vunpack.c.l.bf16 %v4619
      %v4622 = vsel %vm1526, %v4614, 0.0
      %4623 = vadd.xlane.f32.xlu0 %v4622
      %v4624 = vpop.xlane.xlu0 %4623
      %v4625 = vsel %vm1805, %v4615, 0.0
      %4626 = vadd.xlane.f32.xlu0 %v4625
      %v4627 = vpop.xlane.xlu0 %4626
      %v4628 = vmul.f32 %v4624, %v1809
      %v4629 = vmul.f32 %v4627, %v1809
      %v4630 = vsub.f32 %v4614, %v4628
      %v4631 = vsub.f32 %v4615, %v4629
      %v4632 = vmul.f32 %v4630, %v4630
      %v4633 = vmul.f32 %v4631, %v4631
      %v4634 = vsel %vm1526, %v4632, 0.0
      %4635 = vadd.xlane.f32.xlu0 %v4634
      %v4636 = vpop.xlane.xlu0 %4635
      %v4637 = vsel %vm1805, %v4633, 0.0
      %4638 = vadd.xlane.f32.xlu0 %v4637
      %v4639 = vpop.xlane.xlu0 %4638
      %v4640 = vmul.f32 %v4636, %v1809
      %v4641 = vmul.f32 %v4639, %v1809
      %v4642 = vadd.f32 %v4640, 1e-05
      %v4643 = vadd.f32 %v4641, 1e-05
      %v4644 = vrsqrt.pop %v4642
      %v4645 = vrsqrt.pop %v4643
      %v4646 = vmul.f32 %v4630, %v4644
      %v4647 = vmul.f32 %v4631, %v4645
      %v4648 = vlaneseq
      %v4649 = vshrl.u32 %v4648, 7
      %v4650 = vsub.s32 0, %v4649
      %v4651 = vrot.slane %v4620, %v4650
      %v4652 = vmul.f32 %v4646, %v4651
      %v4653 = vmul.f32 %v4647, %v4651
      %v4654 = vlaneseq
      %v4655 = vshrl.u32 %v4654, 7
      %v4656 = vsub.s32 0, %v4655
      %v4657 = vrot.slane %v4621, %v4656
      %v4658 = vadd.f32 %v4652, %v4657
      %v4659 = vadd.f32 %v4653, %v4657
      %s4660 = scalar_lea.vmem %s51, 32
      %v4661 = vld [vmem:[%s4660] sm:$0xf]
      %v4662 = vld [vmem:[%s4660 + $0x4] sm:$0xf]
      %v4663 = vld [vmem:[%s4660 + $0x8] sm:$0xf]
      %v4664 = vld [vmem:[%s4660 + $0xc] sm:$0xf]
      %v4665 = vld [vmem:[%s4660 + $0x10] sm:$0xf]
      %v4666 = vld [vmem:[%s4660 + $0x14] sm:$0xf]
      %v4667 = vld [vmem:[%s4660 + $0x18] sm:$0xf]
      %v4668 = vld [vmem:[%s4660 + $0x1c] sm:$0xf]
      %s4669 = scalar_lea.vmem %s53, 1
      %v4670 = vld [vmem:[%s4669] sm:$0x1]
      %v4671 = vpack.c.bf16 %v4659, %v4658
      %v4672 = vunpack.c.l.bf16 %v4670
      %v4673 = vlaneseq
      %v4674 = vshrl.u32 %v4673, 7
      %v4675 = vsub.s32 0, %v4674
      %v4676 = vrot.slane %v4672, %v4675
      %v4685 = vunpack.c.l.b16 %v4661
      %v4686 = vunpack.c.l.b16 %v4662
      %v4687 = vunpack.c.l.b16 %v4663
      %v4688 = vunpack.c.l.b16 %v4664
      %v4689 = vunpack.c.l.b16 %v4665
      %v4690 = vunpack.c.l.b16 %v4666
      %v4691 = vunpack.c.l.b16 %v4667
      %v4692 = vunpack.c.l.b16 %v4668
      %v4693 = vpack.c.b16 %v4686, %v4685
      %v4694 = vpack.c.b16 %v4688, %v4687
      %v4695 = vpack.c.b16 %v4690, %v4689
      %v4696 = vpack.c.b16 %v4692, %v4691
      %v4702 = vsel %vm1526, %v4671, 0
      %4704 = vmatprep.subr.bf16.mxu0 0
      %4705 = vmatpush1.bf16.msra.mxu0 %v4693
      %4706 = vmatprep.subr.bf16.mxu0 0
      %4707 = vmatpush1.bf16.msra.mxu0 %v4694
      %4708 = vmatprep.subr.bf16.mxu0 0
      %4709 = vmatpush1.bf16.msra.mxu0 %v4695
      %4710 = vmatprep.subr.bf16.mxu0 0
      %4711 = vmatpush1.bf16.msra.mxu0 %v4696
      %4712 = vmatprep.subr.bf16.mxu0 0
      %4713 = vmatpush1.bf16.msra.mxu0 0
      %4714 = vmatprep.subr.bf16.mxu0 0
      %4715 = vmatpush1.bf16.msra.mxu0 0
      %4716 = vmatprep.subr.bf16.mxu0 0
      %4717 = vmatpush1.bf16.msra.mxu0 0
      %4718 = vmatprep.subr.bf16.mxu0 0
      %4719 = vmatpush1.bf16.msra.mxu0 0
      %4720 = vmatprep.subr.bf16.mxu0 0
      %4721 = vmatpush1.bf16.msra.mxu0 0
      %4722 = vmatprep.subr.bf16.mxu0 0
      %4723 = vmatpush1.bf16.msra.mxu0 0
      %4724 = vmatprep.subr.bf16.mxu0 0
      %4725 = vmatpush1.bf16.msra.mxu0 0
      %4726 = vmatprep.subr.bf16.mxu0 0
      %4727 = vmatpush1.bf16.msra.mxu0 0
      %4728 = vmatprep.subr.bf16.mxu0 0
      %4729 = vmatpush1.bf16.msra.mxu0 0
      %4730 = vmatprep.subr.bf16.mxu0 0
      %4731 = vmatpush1.bf16.msra.mxu0 0
      %4732 = vmatprep.subr.bf16.mxu0 0
      %4733 = vmatpush1.bf16.msra.mxu0 0
      %4734 = vmatprep.subr.bf16.mxu0 0
      %4735 = vmatpush1.bf16.msra.mxu0 0
      %4736 = vmatprep.mubr.bf16.mxu0 0
      %4737 = vmatmul.mubr.bf16.gmra.mrb[0].mxu0 %v4702
      %v4738 = vpop.f32.mrb[0].mxu0
      %v4739 = vadd.f32 %v4676, %v4738
      %v4740 = vpop.f32.mrb[0].mxu0
      %v4741 = vpop.f32.mrb[0].mxu0
      %v4742 = vadd.f32 %v4676, %v4741
      %v4743 = vpop.f32.mrb[0].mxu0
      %4744 = vdwg.mxu0
      %s4745 = scalar_lea.vmem %s55, 32
      %v4746 = vld [vmem:[%s4745] sm:$0xf]
      %v4747 = vld [vmem:[%s4745 + $0x4] sm:$0xf]
      %v4748 = vld [vmem:[%s4745 + $0x8] sm:$0xf]
      %v4749 = vld [vmem:[%s4745 + $0xc] sm:$0xf]
      %v4750 = vld [vmem:[%s4745 + $0x10] sm:$0xf]
      %v4751 = vld [vmem:[%s4745 + $0x14] sm:$0xf]
      %v4752 = vld [vmem:[%s4745 + $0x18] sm:$0xf]
      %v4753 = vld [vmem:[%s4745 + $0x1c] sm:$0xf]
      %s4754 = scalar_lea.vmem %s57, 1
      %v4755 = vld [vmem:[%s4754] sm:$0x1]
      %v4756 = vunpack.c.l.bf16 %v4755
      %v4757 = vlaneseq
      %v4758 = vshrl.u32 %v4757, 7
      %v4759 = vsub.s32 0, %v4758
      %v4760 = vrot.slane %v4756, %v4759
      %v4769 = vunpack.c.l.b16 %v4746
      %v4770 = vunpack.c.l.b16 %v4747
      %v4771 = vunpack.c.l.b16 %v4748
      %v4772 = vunpack.c.l.b16 %v4749
      %v4773 = vunpack.c.l.b16 %v4750
      %v4774 = vunpack.c.l.b16 %v4751
      %v4775 = vunpack.c.l.b16 %v4752
      %v4776 = vunpack.c.l.b16 %v4753
      %v4777 = vpack.c.b16 %v4770, %v4769
      %v4778 = vpack.c.b16 %v4772, %v4771
      %v4779 = vpack.c.b16 %v4774, %v4773
      %v4780 = vpack.c.b16 %v4776, %v4775
      %4785 = vmatprep.subr.bf16.mxu0 0
      %4786 = vmatpush1.bf16.msra.mxu0 %v4777
      %4787 = vmatprep.subr.bf16.mxu0 0
      %4788 = vmatpush1.bf16.msra.mxu0 %v4778
      %4789 = vmatprep.subr.bf16.mxu0 0
      %4790 = vmatpush1.bf16.msra.mxu0 %v4779
      %4791 = vmatprep.subr.bf16.mxu0 0
      %4792 = vmatpush1.bf16.msra.mxu0 %v4780
      %4793 = vmatprep.subr.bf16.mxu0 0
      %4794 = vmatpush1.bf16.msra.mxu0 0
      %4795 = vmatprep.subr.bf16.mxu0 0
      %4796 = vmatpush1.bf16.msra.mxu0 0
      %4797 = vmatprep.subr.bf16.mxu0 0
      %4798 = vmatpush1.bf16.msra.mxu0 0
      %4799 = vmatprep.subr.bf16.mxu0 0
      %4800 = vmatpush1.bf16.msra.mxu0 0
      %4801 = vmatprep.subr.bf16.mxu0 0
      %4802 = vmatpush1.bf16.msra.mxu0 0
      %4803 = vmatprep.subr.bf16.mxu0 0
      %4804 = vmatpush1.bf16.msra.mxu0 0
      %4805 = vmatprep.subr.bf16.mxu0 0
      %4806 = vmatpush1.bf16.msra.mxu0 0
      %4807 = vmatprep.subr.bf16.mxu0 0
      %4808 = vmatpush1.bf16.msra.mxu0 0
      %4809 = vmatprep.subr.bf16.mxu0 0
      %4810 = vmatpush1.bf16.msra.mxu0 0
      %4811 = vmatprep.subr.bf16.mxu0 0
      %4812 = vmatpush1.bf16.msra.mxu0 0
      %4813 = vmatprep.subr.bf16.mxu0 0
      %4814 = vmatpush1.bf16.msra.mxu0 0
      %4815 = vmatprep.subr.bf16.mxu0 0
      %4816 = vmatpush1.bf16.msra.mxu0 0
      %4817 = vmatprep.mubr.bf16.mxu0 0
      %4818 = vmatmul.mubr.bf16.gmra.mrb[0].mxu0 %v2752
      %v4819 = vpop.f32.mrb[0].mxu0
      %v4820 = vadd.f32 %v4760, %v4819
      %v4821 = vpop.f32.mrb[0].mxu0
      %v4822 = vpop.f32.mrb[0].mxu0
      %v4823 = vadd.f32 %v4760, %v4822
      %v4824 = vpop.f32.mrb[0].mxu0
      %4825 = vmatprep.mubr.bf16.mxu0 0
      %4826 = vmatmul.mubr.bf16.gmra.mrb[0].mxu0 %v2755
      %v4827 = vpop.f32.mrb[0].mxu0
      %v4828 = vadd.f32 %v4760, %v4827
      %v4829 = vpop.f32.mrb[0].mxu0
      %v4830 = vpop.f32.mrb[0].mxu0
      %v4831 = vpop.f32.mrb[0].mxu0
      %4832 = vdwg.mxu0
      %v4833 = vpack.c.bf16 %v4742, %v4739
      %v4834 = vpack.c.bf16 %v4823, %v4820
      %v4835 = vpack.c.bf16 %v4828, %v4828
      %v4837 = vsel %vm1963, %v4833, 0
      %v4840 = vsel %vm1963, %v4834, 0
      %v4843 = vsel %vm1963, %v4835, 0
      %4845 = vmatprep.subr.bf16.mxu0 0
      %4846 = vmatpush1.bf16.xpose.msra.mxu0 %v4840
      %4847 = vmatprep.subr.bf16.mxu0 0
      %4848 = vmatpush1.bf16.xpose.msra.mxu0 %v4843
      %4849 = vmatprep.subr.bf16.mxu0 0
      %4850 = vmatpush1.bf16.xpose.msra.mxu0 0
      %4851 = vmatprep.subr.bf16.mxu0 0
      %4852 = vmatpush1.bf16.xpose.msra.mxu0 0
      %4853 = vmatprep.subr.bf16.mxu0 0
      %4854 = vmatpush1.bf16.xpose.msra.mxu0 0
      %4855 = vmatprep.subr.bf16.mxu0 0
      %4856 = vmatpush1.bf16.xpose.msra.mxu0 0
      %4857 = vmatprep.subr.bf16.mxu0 0
      %4858 = vmatpush1.bf16.xpose.msra.mxu0 0
      %4859 = vmatprep.subr.bf16.mxu0 0
      %4860 = vmatpush1.bf16.xpose.msra.mxu0 0
      %4861 = vmatprep.subr.bf16.mxu0 0
      %4862 = vmatpush1.bf16.xpose.msra.mxu0 0
      %4863 = vmatprep.subr.bf16.mxu0 0
      %4864 = vmatpush1.bf16.xpose.msra.mxu0 0
      %4865 = vmatprep.subr.bf16.mxu0 0
      %4866 = vmatpush1.bf16.xpose.msra.mxu0 0
      %4867 = vmatprep.subr.bf16.mxu0 0
      %4868 = vmatpush1.bf16.xpose.msra.mxu0 0
      %4869 = vmatprep.subr.bf16.mxu0 0
      %4870 = vmatpush1.bf16.xpose.msra.mxu0 0
      %4871 = vmatprep.subr.bf16.mxu0 0
      %4872 = vmatpush1.bf16.xpose.msra.mxu0 0
      %4873 = vmatprep.subr.bf16.mxu0 0
      %4874 = vmatpush1.bf16.xpose.msra.mxu0 0
      %4875 = vmatprep.subr.bf16.mxu0 0
      %4876 = vmatpush1.bf16.xpose.msra.mxu0 0
      %4877 = vmatprep.mubr.bf16.mxu0 0
      %4878 = vmatmul.mubr.bf16.gmra.mrb[0].mxu0 %v4837
      %v4879 = vpop.f32.mrb[0].mxu0
      %v4880 = vadd.f32 0.0, %v4879
      %v4881 = vpop.f32.mrb[0].mxu0
      %v4882 = vpop.f32.mrb[0].mxu0
      %v4883 = vadd.f32 0.0, %v4882
      %v4884 = vpop.f32.mrb[0].mxu0
      %4885 = vdwg.mxu0
      %v4886 = vmul.f32 %v4880, 0.25
      %v4887 = vmul.f32 %v4883, 0.25
      %v4888 = vsel %vm2860, %v4886, -inf
      %4889 = vmax.xlane.f32.xlu0 %v4888
      %v4890 = vpop.xlane.xlu0 %4889
      %v4891 = vsel %vm2864, %v4887, -inf
      %4892 = vmax.xlane.f32.xlu0 %v4891
      %v4893 = vpop.xlane.xlu0 %4892
      %v4894 = vsub.f32 %v4886, %v4890
      %v4895 = vsub.f32 %v4887, %v4893
      %v4896 = vmul.f32 %v4894, 1.442695
      %v4897 = vpow.pop %v4896
      %v4898 = vmul.f32 %v4895, 1.442695
      %v4899 = vpow.pop %v4898
      %v4900 = vsel %vm2860, %v4897, 0.0
      %4901 = vadd.xlane.f32.xlu0 %v4900
      %v4902 = vpop.xlane.xlu0 %4901
      %v4903 = vsel %vm2864, %v4899, 0.0
      %4904 = vadd.xlane.f32.xlu0 %v4903
      %v4905 = vpop.xlane.xlu0 %4904
      %v4906 = vrcp.pop %v4902
      %v4907 = vmul.f32 %v4897, %v4906
      %v4908 = vrcp.pop %v4905
      %v4909 = vmul.f32 %v4899, %v4908
      %v4910 = vpack.c.bf16 %v4909, %v4907
      %4913 = vrot.lane.b32.xlu0 %v4834, 64
      %v4914 = vpop.permute.xlu0 %4913
      %4915 = vrot.lane.b32.xlu0 %v4835, 64
      %v4916 = vpop.permute.xlu0 %4915
      %v4919 = vsel %vm2860, %v4910, 0
      %v4922 = vand.u32 %v4916, %v2896
      %4924 = vmatprep.subr.bf16.mxu0 0
      %4925 = vmatpush1.bf16.msra.mxu0 %v4914
      %4926 = vmatprep.subr.bf16.mxu0 0
      %4927 = vmatpush1.bf16.msra.mxu0 %v4922
      %4928 = vmatprep.subr.bf16.mxu0 0
      %4929 = vmatpush1.bf16.msra.mxu0 0
      %4930 = vmatprep.subr.bf16.mxu0 0
      %4931 = vmatpush1.bf16.msra.mxu0 0
      %4932 = vmatprep.subr.bf16.mxu0 0
      %4933 = vmatpush1.bf16.msra.mxu0 0
      %4934 = vmatprep.subr.bf16.mxu0 0
      %4935 = vmatpush1.bf16.msra.mxu0 0
      %4936 = vmatprep.subr.bf16.mxu0 0
      %4937 = vmatpush1.bf16.msra.mxu0 0
      %4938 = vmatprep.subr.bf16.mxu0 0
      %4939 = vmatpush1.bf16.msra.mxu0 0
      %4940 = vmatprep.subr.bf16.mxu0 0
      %4941 = vmatpush1.bf16.msra.mxu0 0
      %4942 = vmatprep.subr.bf16.mxu0 0
      %4943 = vmatpush1.bf16.msra.mxu0 0
      %4944 = vmatprep.subr.bf16.mxu0 0
      %4945 = vmatpush1.bf16.msra.mxu0 0
      %4946 = vmatprep.subr.bf16.mxu0 0
      %4947 = vmatpush1.bf16.msra.mxu0 0
      %4948 = vmatprep.subr.bf16.mxu0 0
      %4949 = vmatpush1.bf16.msra.mxu0 0
      %4950 = vmatprep.subr.bf16.mxu0 0
      %4951 = vmatpush1.bf16.msra.mxu0 0
      %4952 = vmatprep.subr.bf16.mxu0 0
      %4953 = vmatpush1.bf16.msra.mxu0 0
      %4954 = vmatprep.subr.bf16.mxu0 0
      %4955 = vmatpush1.bf16.msra.mxu0 0
      %4956 = vmatprep.mubr.bf16.mxu0 0
      %4957 = vmatmul.mubr.bf16.gmra.mrb[0].mxu0 %v4919
      %v4958 = vpop.f32.mrb[0].mxu0
      %v4959 = vadd.f32 0.0, %v4958
      %v4960 = vpop.f32.mrb[0].mxu0
      %v4961 = vpop.f32.mrb[0].mxu0
      %v4962 = vadd.f32 0.0, %v4961
      %v4963 = vpop.f32.mrb[0].mxu0
      %4964 = vdwg.mxu0
      %4966 = vrot.lane.b32.xlu0 %v4833, 112
      %v4967 = vpop.permute.xlu0 %4966
      %4968 = vrot.lane.b32.xlu0 %v4834, 112
      %v4969 = vpop.permute.xlu0 %4968
      %4970 = vrot.lane.b32.xlu0 %v4835, 112
      %v4971 = vpop.permute.xlu0 %4970
      %v4973 = vsel %vm1963, %v4967, 0
      %v4976 = vsel %vm1963, %v4969, 0
      %v4979 = vsel %vm1963, %v4971, 0
      %4981 = vmatprep.subr.bf16.mxu0 0
      %4982 = vmatpush1.bf16.xpose.msra.mxu0 %v4976
      %4983 = vmatprep.subr.bf16.mxu0 0
      %4984 = vmatpush1.bf16.xpose.msra.mxu0 %v4979
      %4985 = vmatprep.subr.bf16.mxu0 0
      %4986 = vmatpush1.bf16.xpose.msra.mxu0 0
      %4987 = vmatprep.subr.bf16.mxu0 0
      %4988 = vmatpush1.bf16.xpose.msra.mxu0 0
      %4989 = vmatprep.subr.bf16.mxu0 0
      %4990 = vmatpush1.bf16.xpose.msra.mxu0 0
      %4991 = vmatprep.subr.bf16.mxu0 0
      %4992 = vmatpush1.bf16.xpose.msra.mxu0 0
      %4993 = vmatprep.subr.bf16.mxu0 0
      %4994 = vmatpush1.bf16.xpose.msra.mxu0 0
      %4995 = vmatprep.subr.bf16.mxu0 0
      %4996 = vmatpush1.bf16.xpose.msra.mxu0 0
      %4997 = vmatprep.subr.bf16.mxu0 0
      %4998 = vmatpush1.bf16.xpose.msra.mxu0 0
      %4999 = vmatprep.subr.bf16.mxu0 0
      %5000 = vmatpush1.bf16.xpose.msra.mxu0 0
      %5001 = vmatprep.subr.bf16.mxu0 0
      %5002 = vmatpush1.bf16.xpose.msra.mxu0 0
      %5003 = vmatprep.subr.bf16.mxu0 0
      %5004 = vmatpush1.bf16.xpose.msra.mxu0 0
      %5005 = vmatprep.subr.bf16.mxu0 0
      %5006 = vmatpush1.bf16.xpose.msra.mxu0 0
      %5007 = vmatprep.subr.bf16.mxu0 0
      %5008 = vmatpush1.bf16.xpose.msra.mxu0 0
      %5009 = vmatprep.subr.bf16.mxu0 0
      %5010 = vmatpush1.bf16.xpose.msra.mxu0 0
      %5011 = vmatprep.subr.bf16.mxu0 0
      %5012 = vmatpush1.bf16.xpose.msra.mxu0 0
      %5013 = vmatprep.mubr.bf16.mxu0 0
      %5014 = vmatmul.mubr.bf16.gmra.mrb[0].mxu0 %v4973
      %v5015 = vpop.f32.mrb[0].mxu0
      %v5016 = vadd.f32 0.0, %v5015
      %v5017 = vpop.f32.mrb[0].mxu0
      %v5018 = vpop.f32.mrb[0].mxu0
      %v5019 = vadd.f32 0.0, %v5018
      %v5020 = vpop.f32.mrb[0].mxu0
      %5021 = vdwg.mxu0
      %v5022 = vmul.f32 %v5016, 0.25
      %v5023 = vmul.f32 %v5019, 0.25
      %v5024 = vsel %vm2860, %v5022, -inf
      %5025 = vmax.xlane.f32.xlu0 %v5024
      %v5026 = vpop.xlane.xlu0 %5025
      %v5027 = vsel %vm2864, %v5023, -inf
      %5028 = vmax.xlane.f32.xlu0 %v5027
      %v5029 = vpop.xlane.xlu0 %5028
      %v5030 = vsub.f32 %v5022, %v5026
      %v5031 = vsub.f32 %v5023, %v5029
      %v5032 = vmul.f32 %v5030, 1.442695
      %v5033 = vpow.pop %v5032
      %v5034 = vmul.f32 %v5031, 1.442695
      %v5035 = vpow.pop %v5034
      %v5036 = vsel %vm2860, %v5033, 0.0
      %5037 = vadd.xlane.f32.xlu0 %v5036
      %v5038 = vpop.xlane.xlu0 %5037
      %v5039 = vsel %vm2864, %v5035, 0.0
      %5040 = vadd.xlane.f32.xlu0 %v5039
      %v5041 = vpop.xlane.xlu0 %5040
      %v5042 = vrcp.pop %v5038
      %v5043 = vmul.f32 %v5033, %v5042
      %v5044 = vrcp.pop %v5041
      %v5045 = vmul.f32 %v5035, %v5044
      %v5046 = vpack.c.bf16 %v5045, %v5043
      %5047 = vrot.lane.b32.xlu0 %v4834, 48
      %v5048 = vpop.permute.xlu0 %5047
      %5049 = vrot.lane.b32.xlu0 %v4835, 48
      %v5050 = vpop.permute.xlu0 %5049
      %v5053 = vsel %vm2860, %v5046, 0
      %v5056 = vand.u32 %v5050, %v2896
      %5058 = vmatprep.subr.bf16.mxu0 0
      %5059 = vmatpush1.bf16.msra.mxu0 %v5048
      %5060 = vmatprep.subr.bf16.mxu0 0
      %5061 = vmatpush1.bf16.msra.mxu0 %v5056
      %5062 = vmatprep.subr.bf16.mxu0 0
      %5063 = vmatpush1.bf16.msra.mxu0 0
      %5064 = vmatprep.subr.bf16.mxu0 0
      %5065 = vmatpush1.bf16.msra.mxu0 0
      %5066 = vmatprep.subr.bf16.mxu0 0
      %5067 = vmatpush1.bf16.msra.mxu0 0
      %5068 = vmatprep.subr.bf16.mxu0 0
      %5069 = vmatpush1.bf16.msra.mxu0 0
      %5070 = vmatprep.subr.bf16.mxu0 0
      %5071 = vmatpush1.bf16.msra.mxu0 0
      %5072 = vmatprep.subr.bf16.mxu0 0
      %5073 = vmatpush1.bf16.msra.mxu0 0
      %5074 = vmatprep.subr.bf16.mxu0 0
      %5075 = vmatpush1.bf16.msra.mxu0 0
      %5076 = vmatprep.subr.bf16.mxu0 0
      %5077 = vmatpush1.bf16.msra.mxu0 0
      %5078 = vmatprep.subr.bf16.mxu0 0
      %5079 = vmatpush1.bf16.msra.mxu0 0
      %5080 = vmatprep.subr.bf16.mxu0 0
      %5081 = vmatpush1.bf16.msra.mxu0 0
      %5082 = vmatprep.subr.bf16.mxu0 0
      %5083 = vmatpush1.bf16.msra.mxu0 0
      %5084 = vmatprep.subr.bf16.mxu0 0
      %5085 = vmatpush1.bf16.msra.mxu0 0
      %5086 = vmatprep.subr.bf16.mxu0 0
      %5087 = vmatpush1.bf16.msra.mxu0 0
      %5088 = vmatprep.subr.bf16.mxu0 0
      %5089 = vmatpush1.bf16.msra.mxu0 0
      %5090 = vmatprep.mubr.bf16.mxu0 0
      %5091 = vmatmul.mubr.bf16.gmra.mrb[0].mxu0 %v5053
      %v5092 = vpop.f32.mrb[0].mxu0
      %v5093 = vadd.f32 0.0, %v5092
      %v5094 = vpop.f32.mrb[0].mxu0
      %v5095 = vpop.f32.mrb[0].mxu0
      %v5096 = vadd.f32 0.0, %v5095
      %v5097 = vpop.f32.mrb[0].mxu0
      %5098 = vdwg.mxu0
      %5099 = vrot.lane.b32.xlu0 %v4833, 96
      %v5100 = vpop.permute.xlu0 %5099
      %5101 = vrot.lane.b32.xlu0 %v4834, 96
      %v5102 = vpop.permute.xlu0 %5101
      %5103 = vrot.lane.b32.xlu0 %v4835, 96
      %v5104 = vpop.permute.xlu0 %5103
      %v5106 = vsel %vm1963, %v5100, 0
      %v5109 = vsel %vm1963, %v5102, 0
      %v5112 = vsel %vm1963, %v5104, 0
      %5114 = vmatprep.subr.bf16.mxu0 0
      %5115 = vmatpush1.bf16.xpose.msra.mxu0 %v5109
      %5116 = vmatprep.subr.bf16.mxu0 0
      %5117 = vmatpush1.bf16.xpose.msra.mxu0 %v5112
      %5118 = vmatprep.subr.bf16.mxu0 0
      %5119 = vmatpush1.bf16.xpose.msra.mxu0 0
      %5120 = vmatprep.subr.bf16.mxu0 0
      %5121 = vmatpush1.bf16.xpose.msra.mxu0 0
      %5122 = vmatprep.subr.bf16.mxu0 0
      %5123 = vmatpush1.bf16.xpose.msra.mxu0 0
      %5124 = vmatprep.subr.bf16.mxu0 0
      %5125 = vmatpush1.bf16.xpose.msra.mxu0 0
      %5126 = vmatprep.subr.bf16.mxu0 0
      %5127 = vmatpush1.bf16.xpose.msra.mxu0 0
      %5128 = vmatprep.subr.bf16.mxu0 0
      %5129 = vmatpush1.bf16.xpose.msra.mxu0 0
      %5130 = vmatprep.subr.bf16.mxu0 0
      %5131 = vmatpush1.bf16.xpose.msra.mxu0 0
      %5132 = vmatprep.subr.bf16.mxu0 0
      %5133 = vmatpush1.bf16.xpose.msra.mxu0 0
      %5134 = vmatprep.subr.bf16.mxu0 0
      %5135 = vmatpush1.bf16.xpose.msra.mxu0 0
      %5136 = vmatprep.subr.bf16.mxu0 0
      %5137 = vmatpush1.bf16.xpose.msra.mxu0 0
      %5138 = vmatprep.subr.bf16.mxu0 0
      %5139 = vmatpush1.bf16.xpose.msra.mxu0 0
      %5140 = vmatprep.subr.bf16.mxu0 0
      %5141 = vmatpush1.bf16.xpose.msra.mxu0 0
      %5142 = vmatprep.subr.bf16.mxu0 0
      %5143 = vmatpush1.bf16.xpose.msra.mxu0 0
      %5144 = vmatprep.subr.bf16.mxu0 0
      %5145 = vmatpush1.bf16.xpose.msra.mxu0 0
      %5146 = vmatprep.mubr.bf16.mxu0 0
      %5147 = vmatmul.mubr.bf16.gmra.mrb[0].mxu0 %v5106
      %v5148 = vpop.f32.mrb[0].mxu0
      %v5149 = vadd.f32 0.0, %v5148
      %v5150 = vpop.f32.mrb[0].mxu0
      %v5151 = vpop.f32.mrb[0].mxu0
      %v5152 = vadd.f32 0.0, %v5151
      %v5153 = vpop.f32.mrb[0].mxu0
      %5154 = vdwg.mxu0
      %v5155 = vmul.f32 %v5149, 0.25
      %v5156 = vmul.f32 %v5152, 0.25
      %v5157 = vsel %vm2860, %v5155, -inf
      %5158 = vmax.xlane.f32.xlu0 %v5157
      %v5159 = vpop.xlane.xlu0 %5158
      %v5160 = vsel %vm2864, %v5156, -inf
      %5161 = vmax.xlane.f32.xlu0 %v5160
      %v5162 = vpop.xlane.xlu0 %5161
      %v5163 = vsub.f32 %v5155, %v5159
      %v5164 = vsub.f32 %v5156, %v5162
      %v5165 = vmul.f32 %v5163, 1.442695
      %v5166 = vpow.pop %v5165
      %v5167 = vmul.f32 %v5164, 1.442695
      %v5168 = vpow.pop %v5167
      %v5169 = vsel %vm2860, %v5166, 0.0
      %5170 = vadd.xlane.f32.xlu0 %v5169
      %v5171 = vpop.xlane.xlu0 %5170
      %v5172 = vsel %vm2864, %v5168, 0.0
      %5173 = vadd.xlane.f32.xlu0 %v5172
      %v5174 = vpop.xlane.xlu0 %5173
      %v5175 = vrcp.pop %v5171
      %v5176 = vmul.f32 %v5166, %v5175
      %v5177 = vrcp.pop %v5174
      %v5178 = vmul.f32 %v5168, %v5177
      %v5179 = vpack.c.bf16 %v5178, %v5176
      %5180 = vrot.lane.b32.xlu0 %v4834, 32
      %v5181 = vpop.permute.xlu0 %5180
      %5182 = vrot.lane.b32.xlu0 %v4835, 32
      %v5183 = vpop.permute.xlu0 %5182
      %v5186 = vsel %vm2860, %v5179, 0
      %v5189 = vand.u32 %v5183, %v2896
      %5191 = vmatprep.subr.bf16.mxu0 0
      %5192 = vmatpush1.bf16.msra.mxu0 %v5181
      %5193 = vmatprep.subr.bf16.mxu0 0
      %5194 = vmatpush1.bf16.msra.mxu0 %v5189
      %5195 = vmatprep.subr.bf16.mxu0 0
      %5196 = vmatpush1.bf16.msra.mxu0 0
      %5197 = vmatprep.subr.bf16.mxu0 0
      %5198 = vmatpush1.bf16.msra.mxu0 0
      %5199 = vmatprep.subr.bf16.mxu0 0
      %5200 = vmatpush1.bf16.msra.mxu0 0
      %5201 = vmatprep.subr.bf16.mxu0 0
      %5202 = vmatpush1.bf16.msra.mxu0 0
      %5203 = vmatprep.subr.bf16.mxu0 0
      %5204 = vmatpush1.bf16.msra.mxu0 0
      %5205 = vmatprep.subr.bf16.mxu0 0
      %5206 = vmatpush1.bf16.msra.mxu0 0
      %5207 = vmatprep.subr.bf16.mxu0 0
      %5208 = vmatpush1.bf16.msra.mxu0 0
      %5209 = vmatprep.subr.bf16.mxu0 0
      %5210 = vmatpush1.bf16.msra.mxu0 0
      %5211 = vmatprep.subr.bf16.mxu0 0
      %5212 = vmatpush1.bf16.msra.mxu0 0
      %5213 = vmatprep.subr.bf16.mxu0 0
      %5214 = vmatpush1.bf16.msra.mxu0 0
      %5215 = vmatprep.subr.bf16.mxu0 0
      %5216 = vmatpush1.bf16.msra.mxu0 0
      %5217 = vmatprep.subr.bf16.mxu0 0
      %5218 = vmatpush1.bf16.msra.mxu0 0
      %5219 = vmatprep.subr.bf16.mxu0 0
      %5220 = vmatpush1.bf16.msra.mxu0 0
      %5221 = vmatprep.subr.bf16.mxu0 0
      %5222 = vmatpush1.bf16.msra.mxu0 0
      %5223 = vmatprep.mubr.bf16.mxu0 0
      %5224 = vmatmul.mubr.bf16.gmra.mrb[0].mxu0 %v5186
      %v5225 = vpop.f32.mrb[0].mxu0
      %v5226 = vadd.f32 0.0, %v5225
      %v5227 = vpop.f32.mrb[0].mxu0
      %v5228 = vpop.f32.mrb[0].mxu0
      %v5229 = vadd.f32 0.0, %v5228
      %v5230 = vpop.f32.mrb[0].mxu0
      %5231 = vdwg.mxu0
      %5232 = vrot.lane.b32.xlu0 %v4833, 80
      %v5233 = vpop.permute.xlu0 %5232
      %5234 = vrot.lane.b32.xlu0 %v4834, 80
      %v5235 = vpop.permute.xlu0 %5234
      %5236 = vrot.lane.b32.xlu0 %v4835, 80
      %v5237 = vpop.permute.xlu0 %5236
      %v5239 = vsel %vm1963, %v5233, 0
      %v5242 = vsel %vm1963, %v5235, 0
      %v5245 = vsel %vm1963, %v5237, 0
      %5247 = vmatprep.subr.bf16.mxu0 0
      %5248 = vmatpush1.bf16.xpose.msra.mxu0 %v5242
      %5249 = vmatprep.subr.bf16.mxu0 0
      %5250 = vmatpush1.bf16.xpose.msra.mxu0 %v5245
      %5251 = vmatprep.subr.bf16.mxu0 0
      %5252 = vmatpush1.bf16.xpose.msra.mxu0 0
      %5253 = vmatprep.subr.bf16.mxu0 0
      %5254 = vmatpush1.bf16.xpose.msra.mxu0 0
      %5255 = vmatprep.subr.bf16.mxu0 0
      %5256 = vmatpush1.bf16.xpose.msra.mxu0 0
      %5257 = vmatprep.subr.bf16.mxu0 0
      %5258 = vmatpush1.bf16.xpose.msra.mxu0 0
      %5259 = vmatprep.subr.bf16.mxu0 0
      %5260 = vmatpush1.bf16.xpose.msra.mxu0 0
      %5261 = vmatprep.subr.bf16.mxu0 0
      %5262 = vmatpush1.bf16.xpose.msra.mxu0 0
      %5263 = vmatprep.subr.bf16.mxu0 0
      %5264 = vmatpush1.bf16.xpose.msra.mxu0 0
      %5265 = vmatprep.subr.bf16.mxu0 0
      %5266 = vmatpush1.bf16.xpose.msra.mxu0 0
      %5267 = vmatprep.subr.bf16.mxu0 0
      %5268 = vmatpush1.bf16.xpose.msra.mxu0 0
      %5269 = vmatprep.subr.bf16.mxu0 0
      %5270 = vmatpush1.bf16.xpose.msra.mxu0 0
      %5271 = vmatprep.subr.bf16.mxu0 0
      %5272 = vmatpush1.bf16.xpose.msra.mxu0 0
      %5273 = vmatprep.subr.bf16.mxu0 0
      %5274 = vmatpush1.bf16.xpose.msra.mxu0 0
      %5275 = vmatprep.subr.bf16.mxu0 0
      %5276 = vmatpush1.bf16.xpose.msra.mxu0 0
      %5277 = vmatprep.subr.bf16.mxu0 0
      %5278 = vmatpush1.bf16.xpose.msra.mxu0 0
      %5279 = vmatprep.mubr.bf16.mxu0 0
      %5280 = vmatmul.mubr.bf16.gmra.mrb[0].mxu0 %v5239
      %v5281 = vpop.f32.mrb[0].mxu0
      %v5282 = vadd.f32 0.0, %v5281
      %v5283 = vpop.f32.mrb[0].mxu0
      %v5284 = vpop.f32.mrb[0].mxu0
      %v5285 = vadd.f32 0.0, %v5284
      %v5286 = vpop.f32.mrb[0].mxu0
      %5287 = vdwg.mxu0
      %v5288 = vmul.f32 %v5282, 0.25
      %v5289 = vmul.f32 %v5285, 0.25
      %v5290 = vsel %vm2860, %v5288, -inf
      %5291 = vmax.xlane.f32.xlu0 %v5290
      %v5292 = vpop.xlane.xlu0 %5291
      %v5293 = vsel %vm2864, %v5289, -inf
      %5294 = vmax.xlane.f32.xlu0 %v5293
      %v5295 = vpop.xlane.xlu0 %5294
      %v5296 = vsub.f32 %v5288, %v5292
      %v5297 = vsub.f32 %v5289, %v5295
      %v5298 = vmul.f32 %v5296, 1.442695
      %v5299 = vpow.pop %v5298
      %v5300 = vmul.f32 %v5297, 1.442695
      %v5301 = vpow.pop %v5300
      %v5302 = vsel %vm2860, %v5299, 0.0
      %5303 = vadd.xlane.f32.xlu0 %v5302
      %v5304 = vpop.xlane.xlu0 %5303
      %v5305 = vsel %vm2864, %v5301, 0.0
      %5306 = vadd.xlane.f32.xlu0 %v5305
      %v5307 = vpop.xlane.xlu0 %5306
      %v5308 = vrcp.pop %v5304
      %v5309 = vmul.f32 %v5299, %v5308
      %v5310 = vrcp.pop %v5307
      %v5311 = vmul.f32 %v5301, %v5310
      %v5312 = vpack.c.bf16 %v5311, %v5309
      %5313 = vrot.lane.b32.xlu0 %v4834, 16
      %v5314 = vpop.permute.xlu0 %5313
      %5315 = vrot.lane.b32.xlu0 %v4835, 16
      %v5316 = vpop.permute.xlu0 %5315
      %v5319 = vsel %vm2860, %v5312, 0
      %v5322 = vand.u32 %v5316, %v2896
      %5324 = vmatprep.subr.bf16.mxu0 0
      %5325 = vmatpush1.bf16.msra.mxu0 %v5314
      %5326 = vmatprep.subr.bf16.mxu0 0
      %5327 = vmatpush1.bf16.msra.mxu0 %v5322
      %5328 = vmatprep.subr.bf16.mxu0 0
      %5329 = vmatpush1.bf16.msra.mxu0 0
      %5330 = vmatprep.subr.bf16.mxu0 0
      %5331 = vmatpush1.bf16.msra.mxu0 0
      %5332 = vmatprep.subr.bf16.mxu0 0
      %5333 = vmatpush1.bf16.msra.mxu0 0
      %5334 = vmatprep.subr.bf16.mxu0 0
      %5335 = vmatpush1.bf16.msra.mxu0 0
      %5336 = vmatprep.subr.bf16.mxu0 0
      %5337 = vmatpush1.bf16.msra.mxu0 0
      %5338 = vmatprep.subr.bf16.mxu0 0
      %5339 = vmatpush1.bf16.msra.mxu0 0
      %5340 = vmatprep.subr.bf16.mxu0 0
      %5341 = vmatpush1.bf16.msra.mxu0 0
      %5342 = vmatprep.subr.bf16.mxu0 0
      %5343 = vmatpush1.bf16.msra.mxu0 0
      %5344 = vmatprep.subr.bf16.mxu0 0
      %5345 = vmatpush1.bf16.msra.mxu0 0
      %5346 = vmatprep.subr.bf16.mxu0 0
      %5347 = vmatpush1.bf16.msra.mxu0 0
      %5348 = vmatprep.subr.bf16.mxu0 0
      %5349 = vmatpush1.bf16.msra.mxu0 0
      %5350 = vmatprep.subr.bf16.mxu0 0
      %5351 = vmatpush1.bf16.msra.mxu0 0
      %5352 = vmatprep.subr.bf16.mxu0 0
      %5353 = vmatpush1.bf16.msra.mxu0 0
      %5354 = vmatprep.subr.bf16.mxu0 0
      %5355 = vmatpush1.bf16.msra.mxu0 0
      %5356 = vmatprep.mubr.bf16.mxu0 0
      %5357 = vmatmul.mubr.bf16.gmra.mrb[0].mxu0 %v5319
      %v5358 = vpop.f32.mrb[0].mxu0
      %v5359 = vadd.f32 0.0, %v5358
      %v5360 = vpop.f32.mrb[0].mxu0
      %v5361 = vpop.f32.mrb[0].mxu0
      %v5362 = vadd.f32 0.0, %v5361
      %v5363 = vpop.f32.mrb[0].mxu0
      %5364 = vdwg.mxu0
      %5367 = vrot.lane.b32.xlu0 %v5093, 16
      %v5368 = vpop.permute.xlu0 %5367
      %5369 = vrot.lane.b32.xlu0 %v5096, 16
      %v5370 = vpop.permute.xlu0 %5369
      %5375 = vrot.lane.b32.xlu0 %v5226, 32
      %v5376 = vpop.permute.xlu0 %5375
      %5377 = vrot.lane.b32.xlu0 %v5229, 32
      %v5378 = vpop.permute.xlu0 %5377
      %5383 = vrot.lane.b32.xlu0 %v5359, 48
      %v5384 = vpop.permute.xlu0 %5383
      %5385 = vrot.lane.b32.xlu0 %v5362, 48
      %v5386 = vpop.permute.xlu0 %5385
      %v5389 = vsel %vm1963, %v4959, %v5368
      %v5390 = vsel %vm1963, %v4962, %v5370
      %v5391 = vsel %vm1659, %v5389, %v5376
      %v5392 = vsel %vm1659, %v5390, %v5378
      %v5393 = vsel %vm2498, %v5391, %v5384
      %v5394 = vsel %vm2498, %v5392, %v5386
      %s5395 = scalar_lea.vmem %s59, 32
      %v5396 = vld [vmem:[%s5395] sm:$0xf]
      %v5397 = vld [vmem:[%s5395 + $0x4] sm:$0xf]
      %v5398 = vld [vmem:[%s5395 + $0x8] sm:$0xf]
      %v5399 = vld [vmem:[%s5395 + $0xc] sm:$0xf]
      %v5400 = vld [vmem:[%s5395 + $0x10] sm:$0xf]
      %v5401 = vld [vmem:[%s5395 + $0x14] sm:$0xf]
      %v5402 = vld [vmem:[%s5395 + $0x18] sm:$0xf]
      %v5403 = vld [vmem:[%s5395 + $0x1c] sm:$0xf]
      %s5404 = scalar_lea.vmem %s61, 1
      %v5405 = vld [vmem:[%s5404] sm:$0x1]
      %v5406 = vpack.c.bf16 %v5394, %v5393
      %v5407 = vunpack.c.l.bf16 %v5405
      %v5408 = vlaneseq
      %v5409 = vshrl.u32 %v5408, 7
      %v5410 = vsub.s32 0, %v5409
      %v5411 = vrot.slane %v5407, %v5410
      %v5420 = vunpack.c.l.b16 %v5396
      %v5421 = vunpack.c.l.b16 %v5397
      %v5422 = vunpack.c.l.b16 %v5398
      %v5423 = vunpack.c.l.b16 %v5399
      %v5424 = vunpack.c.l.b16 %v5400
      %v5425 = vunpack.c.l.b16 %v5401
      %v5426 = vunpack.c.l.b16 %v5402
      %v5427 = vunpack.c.l.b16 %v5403
      %v5428 = vpack.c.b16 %v5421, %v5420
      %v5429 = vpack.c.b16 %v5423, %v5422
      %v5430 = vpack.c.b16 %v5425, %v5424
      %v5431 = vpack.c.b16 %v5427, %v5426
      %v5437 = vsel %vm1526, %v5406, 0
      %5439 = vmatprep.subr.bf16.mxu0 0
      %5440 = vmatpush1.bf16.msra.mxu0 %v5428
      %5441 = vmatprep.subr.bf16.mxu0 0
      %5442 = vmatpush1.bf16.msra.mxu0 %v5429
      %5443 = vmatprep.subr.bf16.mxu0 0
      %5444 = vmatpush1.bf16.msra.mxu0 %v5430
      %5445 = vmatprep.subr.bf16.mxu0 0
      %5446 = vmatpush1.bf16.msra.mxu0 %v5431
      %5447 = vmatprep.subr.bf16.mxu0 0
      %5448 = vmatpush1.bf16.msra.mxu0 0
      %5449 = vmatprep.subr.bf16.mxu0 0
      %5450 = vmatpush1.bf16.msra.mxu0 0
      %5451 = vmatprep.subr.bf16.mxu0 0
      %5452 = vmatpush1.bf16.msra.mxu0 0
      %5453 = vmatprep.subr.bf16.mxu0 0
      %5454 = vmatpush1.bf16.msra.mxu0 0
      %5455 = vmatprep.subr.bf16.mxu0 0
      %5456 = vmatpush1.bf16.msra.mxu0 0
      %5457 = vmatprep.subr.bf16.mxu0 0
      %5458 = vmatpush1.bf16.msra.mxu0 0
      %5459 = vmatprep.subr.bf16.mxu0 0
      %5460 = vmatpush1.bf16.msra.mxu0 0
      %5461 = vmatprep.subr.bf16.mxu0 0
      %5462 = vmatpush1.bf16.msra.mxu0 0
      %5463 = vmatprep.subr.bf16.mxu0 0
      %5464 = vmatpush1.bf16.msra.mxu0 0
      %5465 = vmatprep.subr.bf16.mxu0 0
      %5466 = vmatpush1.bf16.msra.mxu0 0
      %5467 = vmatprep.subr.bf16.mxu0 0
      %5468 = vmatpush1.bf16.msra.mxu0 0
      %5469 = vmatprep.subr.bf16.mxu0 0
      %5470 = vmatpush1.bf16.msra.mxu0 0
      %5471 = vmatprep.mubr.bf16.mxu0 0
      %5472 = vmatmul.mubr.bf16.gmra.mrb[0].mxu0 %v5437
      %v5473 = vpop.f32.mrb[0].mxu0
      %v5474 = vadd.f32 %v5411, %v5473
      %v5475 = vpop.f32.mrb[0].mxu0
      %v5476 = vpop.f32.mrb[0].mxu0
      %v5477 = vadd.f32 %v5411, %v5476
      %v5478 = vpop.f32.mrb[0].mxu0
      %5479 = vdwg.mxu0
      %v5480 = vadd.f32 %v4614, %v5474
      %v5481 = vadd.f32 %v4615, %v5477
      %s5482 = scalar_lea.vmem %s63, 1
      %v5483 = vld [vmem:[%s5482] sm:$0x1]
      %s5484 = scalar_lea.vmem %s65, 1
      %v5485 = vld [vmem:[%s5484] sm:$0x1]
      %v5486 = vunpack.c.l.bf16 %v5483
      %v5487 = vunpack.c.l.bf16 %v5485
      %v5488 = vsel %vm1526, %v5480, 0.0
      %5489 = vadd.xlane.f32.xlu0 %v5488
      %v5490 = vpop.xlane.xlu0 %5489
      %v5491 = vsel %vm1805, %v5481, 0.0
      %5492 = vadd.xlane.f32.xlu0 %v5491
      %v5493 = vpop.xlane.xlu0 %5492
      %v5494 = vmul.f32 %v5490, %v1809
      %v5495 = vmul.f32 %v5493, %v1809
      %v5496 = vsub.f32 %v5480, %v5494
      %v5497 = vsub.f32 %v5481, %v5495
      %v5498 = vmul.f32 %v5496, %v5496
      %v5499 = vmul.f32 %v5497, %v5497
      %v5500 = vsel %vm1526, %v5498, 0.0
      %5501 = vadd.xlane.f32.xlu0 %v5500
      %v5502 = vpop.xlane.xlu0 %5501
      %v5503 = vsel %vm1805, %v5499, 0.0
      %5504 = vadd.xlane.f32.xlu0 %v5503
      %v5505 = vpop.xlane.xlu0 %5504
      %v5506 = vmul.f32 %v5502, %v1809
      %v5507 = vmul.f32 %v5505, %v1809
      %v5508 = vadd.f32 %v5506, 1e-05
      %v5509 = vadd.f32 %v5507, 1e-05
      %v5510 = vrsqrt.pop %v5508
      %v5511 = vrsqrt.pop %v5509
      %v5512 = vmul.f32 %v5496, %v5510
      %v5513 = vmul.f32 %v5497, %v5511
      %v5514 = vlaneseq
      %v5515 = vshrl.u32 %v5514, 7
      %v5516 = vsub.s32 0, %v5515
      %v5517 = vrot.slane %v5486, %v5516
      %v5518 = vmul.f32 %v5512, %v5517
      %v5519 = vmul.f32 %v5513, %v5517
      %v5520 = vlaneseq
      %v5521 = vshrl.u32 %v5520, 7
      %v5522 = vsub.s32 0, %v5521
      %v5523 = vrot.slane %v5487, %v5522
      %v5524 = vadd.f32 %v5518, %v5523
      %v5525 = vadd.f32 %v5519, %v5523
      %s5526 = scalar_lea.vmem %s67, 64
      %v5527 = vld [vmem:[%s5526] sm:$0xff]
      %v5528 = vld [vmem:[%s5526 + $0x8] sm:$0xff]
      %v5529 = vld [vmem:[%s5526 + $0x10] sm:$0xff]
      %v5530 = vld [vmem:[%s5526 + $0x18] sm:$0xff]
      %v5531 = vld [vmem:[%s5526 + $0x20] sm:$0xff]
      %v5532 = vld [vmem:[%s5526 + $0x28] sm:$0xff]
      %v5533 = vld [vmem:[%s5526 + $0x30] sm:$0xff]
      %v5534 = vld [vmem:[%s5526 + $0x38] sm:$0xff]
      %s5535 = scalar_lea.vmem %s69, 2
      %v5536 = vld [vmem:[%s5535] sm:$0x3]
      %v5537 = vpack.c.bf16 %v5525, %v5524
      %v5538 = vunpack.c.l.bf16 %v5536
      %v5540 = vlaneseq
      %v5541 = vshrl.u32 %v5540, 7
      %v5542 = vsub.s32 0, %v5541
      %v5543 = vrot.slane %v5538, %v5542
      %v5544 = vlaneseq
      %v5545 = vshrl.u32 %v5544, 7
      %v5546 = vsub.s32 2, %v5545
      %v5547 = vrot.slane %v5538, %v5546
      %v5550 = vlaneseq
      %v5551 = vshrl.u32 %v5550, 7
      %v5552 = vsub.s32 0, %v5551
      %v5553 = vrot.slane %v5543, %v5552
      %v5554 = vlaneseq
      %v5555 = vshrl.u32 %v5554, 7
      %v5556 = vsub.s32 0, %v5555
      %v5557 = vrot.slane %v5547, %v5556
      %v5566 = vunpack.c.l.b16 %v5527
      %v5567 = vunpack.c.h.b16 %v5527
      %v5568 = vunpack.c.l.b16 %v5528
      %v5569 = vunpack.c.h.b16 %v5528
      %v5570 = vunpack.c.l.b16 %v5529
      %v5571 = vunpack.c.h.b16 %v5529
      %v5572 = vunpack.c.l.b16 %v5530
      %v5573 = vunpack.c.h.b16 %v5530
      %v5574 = vunpack.c.l.b16 %v5531
      %v5575 = vunpack.c.h.b16 %v5531
      %v5576 = vunpack.c.l.b16 %v5532
      %v5577 = vunpack.c.h.b16 %v5532
      %v5578 = vunpack.c.l.b16 %v5533
      %v5579 = vunpack.c.h.b16 %v5533
      %v5580 = vunpack.c.l.b16 %v5534
      %v5581 = vunpack.c.h.b16 %v5534
      %v5582 = vpack.c.b16 %v5568, %v5566
      %v5583 = vpack.c.b16 %v5569, %v5567
      %v5584 = vpack.c.b16 %v5572, %v5570
      %v5585 = vpack.c.b16 %v5573, %v5571
      %v5586 = vpack.c.b16 %v5576, %v5574
      %v5587 = vpack.c.b16 %v5577, %v5575
      %v5588 = vpack.c.b16 %v5580, %v5578
      %v5589 = vpack.c.b16 %v5581, %v5579
      %v5599 = vsel %vm1526, %v5537, 0
      %5601 = vmatprep.subr.bf16.mxu0 %v5583
      %5602 = vmatpush1.bf16.msra.mxu0 %v5582
      %5603 = vmatprep.subr.bf16.mxu0 %v5585
      %5604 = vmatpush1.bf16.msra.mxu0 %v5584
      %5605 = vmatprep.subr.bf16.mxu0 %v5587
      %5606 = vmatpush1.bf16.msra.mxu0 %v5586
      %5607 = vmatprep.subr.bf16.mxu0 %v5589
      %5608 = vmatpush1.bf16.msra.mxu0 %v5588
      %5609 = vmatprep.subr.bf16.mxu0 0
      %5610 = vmatpush1.bf16.msra.mxu0 0
      %5611 = vmatprep.subr.bf16.mxu0 0
      %5612 = vmatpush1.bf16.msra.mxu0 0
      %5613 = vmatprep.subr.bf16.mxu0 0
      %5614 = vmatpush1.bf16.msra.mxu0 0
      %5615 = vmatprep.subr.bf16.mxu0 0
      %5616 = vmatpush1.bf16.msra.mxu0 0
      %5617 = vmatprep.subr.bf16.mxu0 0
      %5618 = vmatpush1.bf16.msra.mxu0 0
      %5619 = vmatprep.subr.bf16.mxu0 0
      %5620 = vmatpush1.bf16.msra.mxu0 0
      %5621 = vmatprep.subr.bf16.mxu0 0
      %5622 = vmatpush1.bf16.msra.mxu0 0
      %5623 = vmatprep.subr.bf16.mxu0 0
      %5624 = vmatpush1.bf16.msra.mxu0 0
      %5625 = vmatprep.subr.bf16.mxu0 0
      %5626 = vmatpush1.bf16.msra.mxu0 0
      %5627 = vmatprep.subr.bf16.mxu0 0
      %5628 = vmatpush1.bf16.msra.mxu0 0
      %5629 = vmatprep.subr.bf16.mxu0 0
      %5630 = vmatpush1.bf16.msra.mxu0 0
      %5631 = vmatprep.subr.bf16.mxu0 0
      %5632 = vmatpush1.bf16.msra.mxu0 0
      %5633 = vmatprep.mubr.bf16.mxu0 0
      %5634 = vmatmul.mubr.bf16.gmra.mrb[0].mxu0 %v5599
      %v5635 = vpop.f32.mrb[0].mxu0
      %v5636 = vadd.f32 %v5553, %v5635
      %v5637 = vpop.f32.mrb[0].mxu0
      %v5638 = vadd.f32 %v5557, %v5637
      %v5639 = vpop.f32.mrb[0].mxu0
      %v5640 = vadd.f32 %v5553, %v5639
      %v5641 = vpop.f32.mrb[0].mxu0
      %v5642 = vadd.f32 %v5557, %v5641
      %5643 = vdwg.mxu0
      %v5644 = vmul.f32 %v5636, %v5636
      %v5645 = vmul.f32 %v5638, %v5638
      %v5646 = vmul.f32 %v5640, %v5640
      %v5647 = vmul.f32 %v5642, %v5642
      %v5648 = vmul.f32 %v5636, %v5644
      %v5649 = vmul.f32 %v5638, %v5645
      %v5650 = vmul.f32 %v5640, %v5646
      %v5651 = vmul.f32 %v5642, %v5647
      %v5652 = vmul.f32 %v5648, 0.044715
      %v5653 = vmul.f32 %v5649, 0.044715
      %v5654 = vmul.f32 %v5650, 0.044715
      %v5655 = vmul.f32 %v5651, 0.044715
      %v5656 = vadd.f32 %v5636, %v5652
      %v5657 = vadd.f32 %v5638, %v5653
      %v5658 = vadd.f32 %v5640, %v5654
      %v5659 = vadd.f32 %v5642, %v5655
      %v5660 = vmul.f32 %v5656, 0.7978846
      %v5661 = vmul.f32 %v5657, 0.7978846
      %v5662 = vmul.f32 %v5658, 0.7978846
      %v5663 = vmul.f32 %v5659, 0.7978846
      %v5664 = vtanh.pop %v5660
      %v5665 = vtanh.pop %v5661
      %v5666 = vtanh.pop %v5662
      %v5667 = vtanh.pop %v5663
      %v5668 = vadd.f32 %v5664, 1.0
      %v5669 = vadd.f32 %v5665, 1.0
      %v5670 = vadd.f32 %v5666, 1.0
      %v5671 = vadd.f32 %v5667, 1.0
      %v5672 = vmul.f32 %v5668, 0.5
      %v5673 = vmul.f32 %v5669, 0.5
      %v5674 = vmul.f32 %v5670, 0.5
      %v5675 = vmul.f32 %v5671, 0.5
      %v5676 = vmul.f32 %v5636, %v5672
      %v5677 = vmul.f32 %v5638, %v5673
      %v5678 = vmul.f32 %v5640, %v5674
      %v5679 = vmul.f32 %v5642, %v5675
      %s5680 = scalar_lea.vmem %s71, 128
      %v5681 = vld [vmem:[%s5680] sm:$0xf]
      %v5682 = vld [vmem:[%s5680 + $0x4] sm:$0xf]
      %v5683 = vld [vmem:[%s5680 + $0x8] sm:$0xf]
      %v5684 = vld [vmem:[%s5680 + $0xc] sm:$0xf]
      %v5685 = vld [vmem:[%s5680 + $0x10] sm:$0xf]
      %v5686 = vld [vmem:[%s5680 + $0x14] sm:$0xf]
      %v5687 = vld [vmem:[%s5680 + $0x18] sm:$0xf]
      %v5688 = vld [vmem:[%s5680 + $0x1c] sm:$0xf]
      %v5689 = vld [vmem:[%s5680 + $0x20] sm:$0xf]
      %v5690 = vld [vmem:[%s5680 + $0x24] sm:$0xf]
      %v5691 = vld [vmem:[%s5680 + $0x28] sm:$0xf]
      %v5692 = vld [vmem:[%s5680 + $0x2c] sm:$0xf]
      %v5693 = vld [vmem:[%s5680 + $0x30] sm:$0xf]
      %v5694 = vld [vmem:[%s5680 + $0x34] sm:$0xf]
      %v5695 = vld [vmem:[%s5680 + $0x38] sm:$0xf]
      %v5696 = vld [vmem:[%s5680 + $0x3c] sm:$0xf]
      %v5697 = vld [vmem:[%s5680 + $0x40] sm:$0xf]
      %v5698 = vld [vmem:[%s5680 + $0x44] sm:$0xf]
      %v5699 = vld [vmem:[%s5680 + $0x48] sm:$0xf]
      %v5700 = vld [vmem:[%s5680 + $0x4c] sm:$0xf]
      %v5701 = vld [vmem:[%s5680 + $0x50] sm:$0xf]
      %v5702 = vld [vmem:[%s5680 + $0x54] sm:$0xf]
      %v5703 = vld [vmem:[%s5680 + $0x58] sm:$0xf]
      %v5704 = vld [vmem:[%s5680 + $0x5c] sm:$0xf]
      %v5705 = vld [vmem:[%s5680 + $0x60] sm:$0xf]
      %v5706 = vld [vmem:[%s5680 + $0x64] sm:$0xf]
      %v5707 = vld [vmem:[%s5680 + $0x68] sm:$0xf]
      %v5708 = vld [vmem:[%s5680 + $0x6c] sm:$0xf]
      %v5709 = vld [vmem:[%s5680 + $0x70] sm:$0xf]
      %v5710 = vld [vmem:[%s5680 + $0x74] sm:$0xf]
      %v5711 = vld [vmem:[%s5680 + $0x78] sm:$0xf]
      %v5712 = vld [vmem:[%s5680 + $0x7c] sm:$0xf]
      %s5713 = scalar_lea.vmem %s73, 1
      %v5714 = vld [vmem:[%s5713] sm:$0x1]
      %v5715 = vpack.c.bf16 %v5678, %v5676
      %v5716 = vpack.c.bf16 %v5679, %v5677
      %v5717 = vunpack.c.l.bf16 %v5714
      %v5718 = vlaneseq
      %v5719 = vshrl.u32 %v5718, 7
      %v5720 = vsub.s32 0, %v5719
      %v5721 = vrot.slane %v5717, %v5720
      %v5754 = vunpack.c.l.b16 %v5681
      %v5755 = vunpack.c.l.b16 %v5682
      %v5756 = vunpack.c.l.b16 %v5683
      %v5757 = vunpack.c.l.b16 %v5684
      %v5758 = vunpack.c.l.b16 %v5685
      %v5759 = vunpack.c.l.b16 %v5686
      %v5760 = vunpack.c.l.b16 %v5687
      %v5761 = vunpack.c.l.b16 %v5688
      %v5762 = vunpack.c.l.b16 %v5689
      %v5763 = vunpack.c.l.b16 %v5690
      %v5764 = vunpack.c.l.b16 %v5691
      %v5765 = vunpack.c.l.b16 %v5692
      %v5766 = vunpack.c.l.b16 %v5693
      %v5767 = vunpack.c.l.b16 %v5694
      %v5768 = vunpack.c.l.b16 %v5695
      %v5769 = vunpack.c.l.b16 %v5696
      %v5770 = vunpack.c.l.b16 %v5697
      %v5771 = vunpack.c.l.b16 %v5698
      %v5772 = vunpack.c.l.b16 %v5699
      %v5773 = vunpack.c.l.b16 %v5700
      %v5774 = vunpack.c.l.b16 %v5701
      %v5775 = vunpack.c.l.b16 %v5702
      %v5776 = vunpack.c.l.b16 %v5703
      %v5777 = vunpack.c.l.b16 %v5704
      %v5778 = vunpack.c.l.b16 %v5705
      %v5779 = vunpack.c.l.b16 %v5706
      %v5780 = vunpack.c.l.b16 %v5707
      %v5781 = vunpack.c.l.b16 %v5708
      %v5782 = vunpack.c.l.b16 %v5709
      %v5783 = vunpack.c.l.b16 %v5710
      %v5784 = vunpack.c.l.b16 %v5711
      %v5785 = vunpack.c.l.b16 %v5712
      %v5786 = vpack.c.b16 %v5755, %v5754
      %v5787 = vpack.c.b16 %v5757, %v5756
      %v5788 = vpack.c.b16 %v5759, %v5758
      %v5789 = vpack.c.b16 %v5761, %v5760
      %v5790 = vpack.c.b16 %v5763, %v5762
      %v5791 = vpack.c.b16 %v5765, %v5764
      %v5792 = vpack.c.b16 %v5767, %v5766
      %v5793 = vpack.c.b16 %v5769, %v5768
      %v5794 = vpack.c.b16 %v5771, %v5770
      %v5795 = vpack.c.b16 %v5773, %v5772
      %v5796 = vpack.c.b16 %v5775, %v5774
      %v5797 = vpack.c.b16 %v5777, %v5776
      %v5798 = vpack.c.b16 %v5779, %v5778
      %v5799 = vpack.c.b16 %v5781, %v5780
      %v5800 = vpack.c.b16 %v5783, %v5782
      %v5801 = vpack.c.b16 %v5785, %v5784
      %5818 = vmatprep.subr.bf16.mxu0 0
      %5819 = vmatpush1.bf16.msra.mxu0 %v5786
      %5820 = vmatprep.subr.bf16.mxu0 0
      %5821 = vmatpush1.bf16.msra.mxu0 %v5787
      %5822 = vmatprep.subr.bf16.mxu0 0
      %5823 = vmatpush1.bf16.msra.mxu0 %v5788
      %5824 = vmatprep.subr.bf16.mxu0 0
      %5825 = vmatpush1.bf16.msra.mxu0 %v5789
      %5826 = vmatprep.subr.bf16.mxu0 0
      %5827 = vmatpush1.bf16.msra.mxu0 %v5790
      %5828 = vmatprep.subr.bf16.mxu0 0
      %5829 = vmatpush1.bf16.msra.mxu0 %v5791
      %5830 = vmatprep.subr.bf16.mxu0 0
      %5831 = vmatpush1.bf16.msra.mxu0 %v5792
      %5832 = vmatprep.subr.bf16.mxu0 0
      %5833 = vmatpush1.bf16.msra.mxu0 %v5793
      %5834 = vmatprep.subr.bf16.mxu0 0
      %5835 = vmatpush1.bf16.msra.mxu0 %v5794
      %5836 = vmatprep.subr.bf16.mxu0 0
      %5837 = vmatpush1.bf16.msra.mxu0 %v5795
      %5838 = vmatprep.subr.bf16.mxu0 0
      %5839 = vmatpush1.bf16.msra.mxu0 %v5796
      %5840 = vmatprep.subr.bf16.mxu0 0
      %5841 = vmatpush1.bf16.msra.mxu0 %v5797
      %5842 = vmatprep.subr.bf16.mxu0 0
      %5843 = vmatpush1.bf16.msra.mxu0 %v5798
      %5844 = vmatprep.subr.bf16.mxu0 0
      %5845 = vmatpush1.bf16.msra.mxu0 %v5799
      %5846 = vmatprep.subr.bf16.mxu0 0
      %5847 = vmatpush1.bf16.msra.mxu0 %v5800
      %5848 = vmatprep.subr.bf16.mxu0 0
      %5849 = vmatpush1.bf16.msra.mxu0 %v5801
      %5850 = vmatprep.mubr.bf16.mxu0 %v5716
      %5851 = vmatmul.mubr.bf16.gmra.mrb[0].mxu0 %v5715
      %v5852 = vpop.f32.mrb[0].mxu0
      %v5853 = vadd.f32 %v5721, %v5852
      %v5854 = vpop.f32.mrb[0].mxu0
      %v5855 = vpop.f32.mrb[0].mxu0
      %v5856 = vadd.f32 %v5721, %v5855
      %v5857 = vpop.f32.mrb[0].mxu0
      %5858 = vdwg.mxu0
      %v5859 = vadd.f32 %v5480, %v5853
      %v5860 = vadd.f32 %v5481, %v5856
      %v5861 = vld [vmem:[%s75] sm:$0x1]
      %v5862 = vld [vmem:[%s77] sm:$0x1]
      %v5863 = vunpack.c.l.bf16 %v5861
      %v5864 = vunpack.c.l.bf16 %v5862
      %v5865 = vsel %vm1526, %v5859, 0.0
      %5866 = vadd.xlane.f32.xlu0 %v5865
      %v5867 = vpop.xlane.xlu0 %5866
      %v5868 = vsel %vm1805, %v5860, 0.0
      %5869 = vadd.xlane.f32.xlu0 %v5868
      %v5870 = vpop.xlane.xlu0 %5869
      %v5871 = vmul.f32 %v5867, %v1809
      %v5872 = vmul.f32 %v5870, %v1809
      %v5873 = vsub.f32 %v5859, %v5871
      %v5874 = vsub.f32 %v5860, %v5872
      %v5875 = vmul.f32 %v5873, %v5873
      %v5876 = vmul.f32 %v5874, %v5874
      %v5877 = vsel %vm1526, %v5875, 0.0
      %5878 = vadd.xlane.f32.xlu0 %v5877
      %v5879 = vpop.xlane.xlu0 %5878
      %v5880 = vsel %vm1805, %v5876, 0.0
      %5881 = vadd.xlane.f32.xlu0 %v5880
      %v5882 = vpop.xlane.xlu0 %5881
      %v5883 = vmul.f32 %v5879, %v1809
      %v5884 = vmul.f32 %v5882, %v1809
      %v5885 = vadd.f32 %v5883, 1e-05
      %v5886 = vadd.f32 %v5884, 1e-05
      %v5887 = vrsqrt.pop %v5885
      %v5888 = vrsqrt.pop %v5886
      %v5889 = vmul.f32 %v5873, %v5887
      %v5890 = vmul.f32 %v5874, %v5888
      %v5891 = vlaneseq
      %v5892 = vshrl.u32 %v5891, 7
      %v5893 = vsub.s32 0, %v5892
      %v5894 = vrot.slane %v5863, %v5893
      %v5895 = vmul.f32 %v5889, %v5894
      %v5896 = vmul.f32 %v5890, %v5894
      %v5897 = vlaneseq
      %v5898 = vshrl.u32 %v5897, 7
      %v5899 = vsub.s32 0, %v5898
      %v5900 = vrot.slane %v5864, %v5899
      %v5901 = vadd.f32 %v5895, %v5900
      %v5902 = vadd.f32 %v5896, %v5900
      %v5903 = vld [vmem:[%s79] sm:$0xf]
      %v5904 = vld [vmem:[%s79 + $0x4] sm:$0xf]
      %v5905 = vld [vmem:[%s79 + $0x8] sm:$0xf]
      %v5906 = vld [vmem:[%s79 + $0xc] sm:$0xf]
      %v5907 = vld [vmem:[%s79 + $0x10] sm:$0xf]
      %v5908 = vld [vmem:[%s79 + $0x14] sm:$0xf]
      %v5909 = vld [vmem:[%s79 + $0x18] sm:$0xf]
      %v5910 = vld [vmem:[%s79 + $0x1c] sm:$0xf]
      %v5911 = vld [vmem:[%s81] sm:$0x1]
      %v5912 = vpack.c.bf16 %v5902, %v5901
      %v5913 = vunpack.c.l.bf16 %v5911
      %v5914 = vlaneseq
      %v5915 = vshrl.u32 %v5914, 7
      %v5916 = vsub.s32 0, %v5915
      %v5917 = vrot.slane %v5913, %v5916
      %v5926 = vunpack.c.l.b16 %v5903
      %v5927 = vunpack.c.l.b16 %v5904
      %v5928 = vunpack.c.l.b16 %v5905
      %v5929 = vunpack.c.l.b16 %v5906
      %v5930 = vunpack.c.l.b16 %v5907
      %v5931 = vunpack.c.l.b16 %v5908
      %v5932 = vunpack.c.l.b16 %v5909
      %v5933 = vunpack.c.l.b16 %v5910
      %v5934 = vpack.c.b16 %v5927, %v5926
      %v5935 = vpack.c.b16 %v5929, %v5928
      %v5936 = vpack.c.b16 %v5931, %v5930
      %v5937 = vpack.c.b16 %v5933, %v5932
      %v5943 = vsel %vm1526, %v5912, 0
      %5945 = vmatprep.subr.bf16.mxu0 0
      %5946 = vmatpush1.bf16.msra.mxu0 %v5934
      %5947 = vmatprep.subr.bf16.mxu0 0
      %5948 = vmatpush1.bf16.msra.mxu0 %v5935
      %5949 = vmatprep.subr.bf16.mxu0 0
      %5950 = vmatpush1.bf16.msra.mxu0 %v5936
      %5951 = vmatprep.subr.bf16.mxu0 0
      %5952 = vmatpush1.bf16.msra.mxu0 %v5937
      %5953 = vmatprep.subr.bf16.mxu0 0
      %5954 = vmatpush1.bf16.msra.mxu0 0
      %5955 = vmatprep.subr.bf16.mxu0 0
      %5956 = vmatpush1.bf16.msra.mxu0 0
      %5957 = vmatprep.subr.bf16.mxu0 0
      %5958 = vmatpush1.bf16.msra.mxu0 0
      %5959 = vmatprep.subr.bf16.mxu0 0
      %5960 = vmatpush1.bf16.msra.mxu0 0
      %5961 = vmatprep.subr.bf16.mxu0 0
      %5962 = vmatpush1.bf16.msra.mxu0 0
      %5963 = vmatprep.subr.bf16.mxu0 0
      %5964 = vmatpush1.bf16.msra.mxu0 0
      %5965 = vmatprep.subr.bf16.mxu0 0
      %5966 = vmatpush1.bf16.msra.mxu0 0
      %5967 = vmatprep.subr.bf16.mxu0 0
      %5968 = vmatpush1.bf16.msra.mxu0 0
      %5969 = vmatprep.subr.bf16.mxu0 0
      %5970 = vmatpush1.bf16.msra.mxu0 0
      %5971 = vmatprep.subr.bf16.mxu0 0
      %5972 = vmatpush1.bf16.msra.mxu0 0
      %5973 = vmatprep.subr.bf16.mxu0 0
      %5974 = vmatpush1.bf16.msra.mxu0 0
      %5975 = vmatprep.subr.bf16.mxu0 0
      %5976 = vmatpush1.bf16.msra.mxu0 0
      %5977 = vmatprep.mubr.bf16.mxu0 0
      %5978 = vmatmul.mubr.bf16.gmra.mrb[0].mxu0 %v5943
      %v5979 = vpop.f32.mrb[0].mxu0
      %v5980 = vadd.f32 %v5917, %v5979
      %v5981 = vpop.f32.mrb[0].mxu0
      %v5982 = vpop.f32.mrb[0].mxu0
      %v5983 = vadd.f32 %v5917, %v5982
      %v5984 = vpop.f32.mrb[0].mxu0
      %5985 = vdwg.mxu0
      %5986 = vst.msk [vmem:[%s1452] sm:$0xff] %vm1526, %v5980
      %5987 = vst.msk [vmem:[%s1452 + $0x8] sm:$0x3] %vm1805, %v5983
      %v5988 = vld [vmem:[%s83] sm:$0xf]
      %v5989 = vld [vmem:[%s83 + $0x4] sm:$0xf]
      %v5990 = vld [vmem:[%s83 + $0x8] sm:$0xf]
      %v5991 = vld [vmem:[%s83 + $0xc] sm:$0xf]
      %v5992 = vld [vmem:[%s83 + $0x10] sm:$0xf]
      %v5993 = vld [vmem:[%s83 + $0x14] sm:$0xf]
      %v5994 = vld [vmem:[%s83 + $0x18] sm:$0xf]
      %v5995 = vld [vmem:[%s83 + $0x1c] sm:$0xf]
      %v5996 = vld [vmem:[%s85] sm:$0x1]
      %v5997 = vpack.c.bf16 %v5983, %v5980
      %v5998 = vunpack.c.l.bf16 %v5996
      %v5999 = vlaneseq
      %v6000 = vshrl.u32 %v5999, 7
      %v6001 = vsub.s32 0, %v6000
      %v6002 = vrot.slane %v5998, %v6001
      %v6011 = vunpack.c.l.b16 %v5988
      %v6012 = vunpack.c.l.b16 %v5989
      %v6013 = vunpack.c.l.b16 %v5990
      %v6014 = vunpack.c.l.b16 %v5991
      %v6015 = vunpack.c.l.b16 %v5992
      %v6016 = vunpack.c.l.b16 %v5993
      %v6017 = vunpack.c.l.b16 %v5994
      %v6018 = vunpack.c.l.b16 %v5995
      %v6019 = vpack.c.b16 %v6012, %v6011
      %v6020 = vpack.c.b16 %v6014, %v6013
      %v6021 = vpack.c.b16 %v6016, %v6015
      %v6022 = vpack.c.b16 %v6018, %v6017
      %v6028 = vsel %vm1526, %v5997, 0
      %6030 = vmatprep.subr.bf16.mxu0 0
      %6031 = vmatpush1.bf16.msra.mxu0 %v6019
      %6032 = vmatprep.subr.bf16.mxu0 0
      %6033 = vmatpush1.bf16.msra.mxu0 %v6020
      %6034 = vmatprep.subr.bf16.mxu0 0
      %6035 = vmatpush1.bf16.msra.mxu0 %v6021
      %6036 = vmatprep.subr.bf16.mxu0 0
      %6037 = vmatpush1.bf16.msra.mxu0 %v6022
      %6038 = vmatprep.subr.bf16.mxu0 0
      %6039 = vmatpush1.bf16.msra.mxu0 0
      %6040 = vmatprep.subr.bf16.mxu0 0
      %6041 = vmatpush1.bf16.msra.mxu0 0
      %6042 = vmatprep.subr.bf16.mxu0 0
      %6043 = vmatpush1.bf16.msra.mxu0 0
      %6044 = vmatprep.subr.bf16.mxu0 0
      %6045 = vmatpush1.bf16.msra.mxu0 0
      %6046 = vmatprep.subr.bf16.mxu0 0
      %6047 = vmatpush1.bf16.msra.mxu0 0
      %6048 = vmatprep.subr.bf16.mxu0 0
      %6049 = vmatpush1.bf16.msra.mxu0 0
      %6050 = vmatprep.subr.bf16.mxu0 0
      %6051 = vmatpush1.bf16.msra.mxu0 0
      %6052 = vmatprep.subr.bf16.mxu0 0
      %6053 = vmatpush1.bf16.msra.mxu0 0
      %6054 = vmatprep.subr.bf16.mxu0 0
      %6055 = vmatpush1.bf16.msra.mxu0 0
      %6056 = vmatprep.subr.bf16.mxu0 0
      %6057 = vmatpush1.bf16.msra.mxu0 0
      %6058 = vmatprep.subr.bf16.mxu0 0
      %6059 = vmatpush1.bf16.msra.mxu0 0
      %6060 = vmatprep.subr.bf16.mxu0 0
      %6061 = vmatpush1.bf16.msra.mxu0 0
      %6062 = vmatprep.mubr.bf16.mxu0 0
      %6063 = vmatmul.mubr.bf16.gmra.mrb[0].mxu0 %v6028
      %v6064 = vpop.f32.mrb[0].mxu0
      %v6065 = vadd.f32 %v6002, %v6064
      %v6066 = vpop.f32.mrb[0].mxu0
      %v6067 = vpop.f32.mrb[0].mxu0
      %v6068 = vadd.f32 %v6002, %v6067
      %v6069 = vpop.f32.mrb[0].mxu0
      %6070 = vdwg.mxu0
      %6071 = vst.msk [vmem:[%s1457] sm:$0xff] %vm1571, %v6065
      %vm6072 = vcmask 25600
      %6073 = vst.msk [vmem:[%s1457 + $0x8] sm:$0x3] %vm6072, %v6068
      %p6074 = scmp.lt.s32.totalorder %s101, 1
      %s6075 = scalar_select %p6074, %s101, 1
      %s6076 = smul.addr %s6075, 2
      %s6077 = smul.addr %s6076, 8
      %s6078 = scalar_lea.vmem %s87, %s6077
      %p6079 = scmp.lt.s32.totalorder %s101, 1
      %s6080 = scalar_select %p6079, %s101, 1
      %s6081 = smul.addr %s6080, 2
      %s6082 = smul.addr %s6081, 8
      %s6083 = scalar_lea.vmem %s89, %s6082
      // Predicated region
      $region193: #{diffusion_transition_forward.1} parent=191 // pred_check
        %p6084 = pneg %p1062
      $region194: #{diffusion_transition_forward.1} parent=191 // pred_check_branch
        %6086 = sbr.rel (%p6084) target = $region196
      $region195: #{diffusion_transition_forward.1} parent=191 // pred_region
        _
      $region196: #{diffusion_transition_forward.1} parent=191 // pred_fallthru
        _
      // Predicated region
      $region197: #{diffusion_transition_forward.1} parent=191 // pred_check
        %p6087 = pneg %p1088
      $region198: #{diffusion_transition_forward.1} parent=191 // pred_check_branch
        %6089 = sbr.rel (%p6087) target = $region200
      $region199: #{diffusion_transition_forward.1} parent=191 // pred_region
        _
      $region200: #{diffusion_transition_forward.1} parent=191 // pred_fallthru
        _
    $region192: #{diffusion_transition_forward.1} parent=5 // pred_fallthru
      _
    %p6090 = scmp.le.s32.totalorder 2, %s96
    // Predicated region
    $region201: #{diffusion_transition_forward.1} parent=5 // pred_check
      %p6091 = pneg %p6090
    $region202: #{diffusion_transition_forward.1} parent=5 // pred_check_branch
      %6093 = sbr.rel (%p6091) target = $region204
    $region203: #{diffusion_transition_forward.1} parent=5 // pred_region
      %s6094 = ssub.s32 %s96, 2
      // Predicated region
      $region205: #{diffusion_transition_forward.1} parent=203 // pred_check
        %p6095 = pneg %p1068
      $region206: #{diffusion_transition_forward.1} parent=203 // pred_check_branch
        %6097 = sbr.rel (%p6095) target = $region208
      $region207: #{diffusion_transition_forward.1} parent=203 // pred_region
        %p6098 = scmp.lt.s32.totalorder %s102, 1
        %s6099 = scalar_select %p6098, %s102, 1
        %s6100 = smul.addr %s6099, 2
        %s6101 = smul.addr %s6100, 8
        %s6102 = scalar_lea.vmem %s87, %s6101
      $region208: #{diffusion_transition_forward.1} parent=203 // pred_fallthru
        _
      // Predicated region
      $region209: #{diffusion_transition_forward.1} parent=203 // pred_check
        %p6103 = pneg %p1094
      $region210: #{diffusion_transition_forward.1} parent=203 // pred_check_branch
        %6105 = sbr.rel (%p6103) target = $region212
      $region211: #{diffusion_transition_forward.1} parent=203 // pred_region
        %p6106 = scmp.lt.s32.totalorder %s102, 1
        %s6107 = scalar_select %p6106, %s102, 1
        %s6108 = smul.addr %s6107, 2
        %s6109 = smul.addr %s6108, 8
        %s6110 = scalar_lea.vmem %s89, %s6109
      $region212: #{diffusion_transition_forward.1} parent=203 // pred_fallthru
        _
    $region204: #{diffusion_transition_forward.1} parent=5 // pred_fallthru
      _
  $region6: #{diffusion_transition_forward.1} parent=0 // loop_footer
    %s100 = sadd.s32 1, %s96
  $region7: #{diffusion_transition_forward.1} parent=0 // loop_footer_branch
    %95 = sbr.rel target = $region3
  $region8: #{diffusion_transition_forward.1} parent=0 // loop_exit
    _

</llo_original>
